<compile_context>
chip_gen: v6e
topology: v6e:2x2x1
jax: 0.10.0
libtpu: 0.0.40
codegen_flags: <defaults>
</compile_context>

<pallas_src>
import jax
import jax.numpy as jnp
from jax.experimental import pallas as pl
from jax.experimental.pallas import tpu as pltpu

# ---- module config (defaults of Bungee_NeRF_baseblock) -----------------
NET_DEPTH = 8
NET_WIDTH = 256
INPUT_CH = 3
INPUT_CH_VIEWS = 3
INPUT_CH_PLANE = 48
SKIPS = (4,)

IN0 = INPUT_CH + INPUT_CH_PLANE                         # 51
IN_SKIP = NET_WIDTH + INPUT_CH                          # 259
IN_VIEW = NET_WIDTH + INPUT_CH_VIEWS + INPUT_CH_PLANE   # 307

# fused-input layout (lane-padded to 128)
PTS_OFF = 0
VIEWS_OFF = INPUT_CH                                    # 3
PLANE_OFF = INPUT_CH + INPUT_CH_VIEWS                   # 6
FUSED_USED = INPUT_CH + INPUT_CH_VIEWS + INPUT_CH_PLANE # 54
FUSED_IN = 128                                          # lane-aligned pad
HEAD_W = 128                                            # rgb(3) | alpha(1) | pad
HALF_W = NET_WIDTH // 2                                 # 128
SKIP_STACK_IDX = 4          # stack index j (layer j+1 = pts_linears[5]) that
                            # consumes cat([pts, h]) in the reference


def _bungee_kernel(x_ref,
                   w_in_ref, b0_ref, bview_ref,
                   wh_ref, bh_ref,
                   wfeat_ref, bfeat_ref,
                   walpha_ref, wvfeat_ref, wrgb_ref, bhead_ref,
                   head_ref, h_ref):
    x = x_ref[...]                                            # [tn, 128] bf16

    # One fused matmul covers: layer-0 | skip-layer pts part | view-layer
    # (views|plane) part.  K=128, N=640, all lane-aligned.
    xw = jnp.dot(x, w_in_ref[...], preferred_element_type=jnp.float32)  # [tn,640]
    h = jnp.maximum(xw[:, 0:NET_WIDTH] + b0_ref[...], 0.0)              # layer 0
    pts_skip = xw[:, NET_WIDTH:2 * NET_WIDTH]                           # [tn,256]
    vp = xw[:, 2 * NET_WIDTH:2 * NET_WIDTH + HALF_W] + bview_ref[...]   # [tn,128]

    # pts_linears[1..7]: clean 256x256 matmuls; skip handled by one add.
    for j in range(NET_DEPTH - 1):
        acc = jnp.dot(h.astype(jnp.bfloat16), wh_ref[j],
                      preferred_element_type=jnp.float32)
        if j == SKIP_STACK_IDX:
            acc = acc + pts_skip
        h = jnp.maximum(acc + bh_ref[j], 0.0)

    h_bf = h.astype(jnp.bfloat16)

    # heads (alpha column folded into a lane-dense 128-wide head output)
    feature = (jnp.dot(h_bf, wfeat_ref[...],
                       preferred_element_type=jnp.float32) + bfeat_ref[...])
    alpha_part = jnp.dot(h_bf, walpha_ref[...],
                         preferred_element_type=jnp.float32)            # col 3

    h0 = jnp.maximum(
        jnp.dot(feature.astype(jnp.bfloat16), wvfeat_ref[...],
                preferred_element_type=jnp.float32) + vp, 0.0)          # [tn,128]
    head = (jnp.dot(h0.astype(jnp.bfloat16), wrgb_ref[...],
                    preferred_element_type=jnp.float32)
            + alpha_part + bhead_ref[...])                              # [tn,128]

    head_ref[...] = head
    h_ref[...] = h


def _prep_weights(params):
    """Rearrange torch-style weights into the fused / padded kernel layout."""
    f32, bf16 = jnp.float32, jnp.bfloat16

    # layer 0 (operates on cat([pts, plane])) mapped to fused-input layout
    w0, b0 = params["pts"][0]                                 # [51,256],[256]
    w0f = jnp.zeros((FUSED_IN, NET_WIDTH), f32)
    w0f = w0f.at[PTS_OFF:PTS_OFF + INPUT_CH].set(w0[0:INPUT_CH])
    w0f = w0f.at[PLANE_OFF:PLANE_OFF + INPUT_CH_PLANE].set(w0[INPUT_CH:IN0])

    # skip layer pts-rows mapped to fused-input layout
    w_skip_full, _ = params["pts"][SKIP_STACK_IDX + 1]        # [259,256]
    wskipf = jnp.zeros((FUSED_IN, NET_WIDTH), f32)
    wskipf = wskipf.at[PTS_OFF:PTS_OFF + INPUT_CH].set(w_skip_full[0:INPUT_CH])

    # view layer: split into feature-part [256,128] and (views|plane)-part
    wv, bview = params["views"]                               # [307,128],[128]
    wvpf = jnp.zeros((FUSED_IN, HALF_W), f32)
    wvpf = wvpf.at[VIEWS_OFF:VIEWS_OFF + INPUT_CH_VIEWS].set(
        wv[NET_WIDTH:NET_WIDTH + INPUT_CH_VIEWS])
    wvpf = wvpf.at[PLANE_OFF:PLANE_OFF + INPUT_CH_PLANE].set(
        wv[NET_WIDTH + INPUT_CH_VIEWS:IN_VIEW])
    wvfeat = wv[0:NET_WIDTH]                                  # [256,128]

    w_in = jnp.concatenate([w0f, wskipf, wvpf], axis=1)       # [128, 640]

    # hidden stack: pure [256,256] weights (skip layer drops its pts rows)
    wh_list, bh_list = [], []
    for j in range(NET_DEPTH - 1):
        w, b = params["pts"][j + 1]
        if j == SKIP_STACK_IDX:
            w = w[INPUT_CH:]                                  # h-part only
        wh_list.append(w)
        bh_list.append(b.reshape(1, -1))
    wh = jnp.stack(wh_list)                                   # [7,256,256]
    bh = jnp.stack(bh_list)                                   # [7,1,256]

    wfeat, bfeat = params["feature"]                          # [256,256],[256]
    walpha, balpha = params["alpha"]                          # [256,1],[1]
    wrgb, brgb = params["rgb"]                                # [128,3],[3]

    walpha_pad = jnp.zeros((NET_WIDTH, HEAD_W), f32).at[:, 3:4].set(walpha)
    wrgb_pad = jnp.zeros((HALF_W, HEAD_W), f32).at[:, 0:3].set(wrgb)
    bhead = (jnp.zeros((1, HEAD_W), f32)
             .at[0, 0:3].set(brgb)
             .at[0, 3].set(balpha[0]))

    return dict(
        w_in=w_in.astype(bf16),
        b0=b0.reshape(1, -1).astype(f32),
        bview=bview.reshape(1, -1).astype(f32),
        wh=wh.astype(bf16),
        bh=bh.astype(f32),
        wfeat=wfeat.astype(bf16),
        bfeat=bfeat.reshape(1, -1).astype(f32),
        walpha_pad=walpha_pad.astype(bf16),
        wvfeat=wvfeat.astype(bf16),
        wrgb_pad=wrgb_pad.astype(bf16),
        bhead=bhead,
    )


def bungee_nerf_baseblock(params, input_pts, input_views, input_plane, *,
                          tile_n=256):
    N = input_pts.shape[0]
    tile_n = min(tile_n, N)
    assert N % tile_n == 0, "batch must be a multiple of tile_n"

    prep = _prep_weights(params)

    # fuse pts|views|plane into one lane-aligned [N, 128] bf16 input
    x = jnp.concatenate([input_pts, input_views, input_plane], axis=-1)
    x = jnp.pad(x, ((0, 0), (0, FUSED_IN - x.shape[1]))).astype(jnp.bfloat16)

    grid = (N // tile_n,)
    row = lambda c: pl.BlockSpec((tile_n, c), lambda i: (i, 0))
    full = lambda a: pl.BlockSpec(a.shape, lambda i, _n=a.ndim: (0,) * _n)

    head, h = pl.pallas_call(
        _bungee_kernel,
        out_shape=(
            jax.ShapeDtypeStruct((N, HEAD_W), jnp.float32),     # rgb|alpha|pad
            jax.ShapeDtypeStruct((N, NET_WIDTH), jnp.float32),  # h
        ),
        grid_spec=pltpu.PrefetchScalarGridSpec(
            num_scalar_prefetch=0,
            grid=grid,
            in_specs=[
                row(FUSED_IN),                                   # fused input
                full(prep["w_in"]), full(prep["b0"]), full(prep["bview"]),
                full(prep["wh"]), full(prep["bh"]),
                full(prep["wfeat"]), full(prep["bfeat"]),
                full(prep["walpha_pad"]), full(prep["wvfeat"]),
                full(prep["wrgb_pad"]), full(prep["bhead"]),
            ],
            out_specs=[row(HEAD_W), row(NET_WIDTH)],
        ),
        compiler_params=pltpu.CompilerParams(
            dimension_semantics=("parallel",)),
    )(x, prep["w_in"], prep["b0"], prep["bview"], prep["wh"], prep["bh"],
      prep["wfeat"], prep["bfeat"], prep["walpha_pad"], prep["wvfeat"],
      prep["wrgb_pad"], prep["bhead"])

    rgb = head[:, 0:3]
    alpha = head[:, 3:4]
    return rgb, alpha, h


# --------------------- deterministic parameter init ----------------------
def init_params(key):
    def linear(k, fan_in, fan_out):
        kw, kb = jax.random.split(k)
        scale = 1.0 / jnp.sqrt(fan_in)
        w = jax.random.normal(kw, (fan_in, fan_out), jnp.float32) * scale
        b = jax.random.normal(kb, (fan_out,), jnp.float32) * 0.01
        return w, b

    keys = jax.random.split(key, NET_DEPTH + 4)
    pts = []
    for i in range(NET_DEPTH):
        if i == 0:
            fan_in = IN0
        elif (i - 1) in SKIPS:
            fan_in = IN_SKIP
        else:
            fan_in = NET_WIDTH
        pts.append(linear(keys[i], fan_in, NET_WIDTH))
    return {
        "pts": pts,
        "feature": linear(keys[NET_DEPTH + 0], NET_WIDTH, NET_WIDTH),
        "alpha": linear(keys[NET_DEPTH + 1], NET_WIDTH, 1),
        "views": linear(keys[NET_DEPTH + 2], IN_VIEW, HALF_W),
        "rgb": linear(keys[NET_DEPTH + 3], HALF_W, 3),
    }


# ------------------------ pure-JAX reference ------------------------------
def reference(params, pts, views, plane):
    h = jnp.concatenate([pts, plane], axis=-1)
    for i in range(NET_DEPTH):
        w, b = params["pts"][i]
        h = jax.nn.relu(h @ w + b)
        if i in SKIPS:
            h = jnp.concatenate([pts, h], axis=-1)
    wa, ba = params["alpha"]
    alpha = h @ wa + ba
    wf, bf = params["feature"]
    feature = h @ wf + bf
    h0 = jnp.concatenate([feature, views, plane], axis=-1)
    wv, bv = params["views"]
    h0 = jax.nn.relu(h0 @ wv + bv)
    wr, br = params["rgb"]
    rgb = h0 @ wr + br
    return rgb, alpha, h


if __name__ == "__main__":
    key = jax.random.PRNGKey(0)
    kp, kv, kpl, kparams = jax.random.split(key, 4)

    N = 512  # two 256-row tiles -> both TensorCores busy on v7x
    input_pts = jax.random.normal(kp, (N, INPUT_CH), jnp.float32)
    input_views = jax.random.normal(kv, (N, INPUT_CH_VIEWS), jnp.float32)
    input_plane = jax.random.normal(kpl, (N, INPUT_CH_PLANE), jnp.float32)

    params = init_params(kparams)

    rgb, alpha, h = bungee_nerf_baseblock(params, input_pts, input_views,
                                          input_plane)
    jax.block_until_ready((rgb, alpha, h))

    rgb_ref, alpha_ref, h_ref = reference(params, input_pts, input_views,
                                          input_plane)

    def close(a, b):  # bf16 matmuls with f32 accumulation -> loose tolerance
        return jnp.allclose(a, b, rtol=5e-2, atol=5e-2)

    if not (close(rgb, rgb_ref) and close(alpha, alpha_ref)
            and close(h, h_ref)):
        err = max(float(jnp.max(jnp.abs(rgb - rgb_ref))),
                  float(jnp.max(jnp.abs(alpha - alpha_ref))),
                  float(jnp.max(jnp.abs(h - h_ref))))
        raise AssertionError(f"Pallas kernel mismatch vs reference "
                             f"(max abs err = {err})")
    print("KERNEL_OK")
</pallas_src>

<mosaic_0001>
module attributes {stable_mosaic.version = 11 : i64} {
  func.func @_bungee_kernel(%arg0: i32, %arg1: memref<256x128xbf16, #tpu.memory_space<vmem>>, %arg2: memref<128x640xbf16, #tpu.memory_space<vmem>>, %arg3: memref<1x256xf32, #tpu.memory_space<vmem>>, %arg4: memref<1x128xf32, #tpu.memory_space<vmem>>, %arg5: memref<7x256x256xbf16, #tpu.memory_space<vmem>>, %arg6: memref<7x1x256xf32, #tpu.memory_space<vmem>>, %arg7: memref<256x256xbf16, #tpu.memory_space<vmem>>, %arg8: memref<1x256xf32, #tpu.memory_space<vmem>>, %arg9: memref<256x128xbf16, #tpu.memory_space<vmem>>, %arg10: memref<256x128xbf16, #tpu.memory_space<vmem>>, %arg11: memref<128x128xbf16, #tpu.memory_space<vmem>>, %arg12: memref<1x128xf32, #tpu.memory_space<vmem>>, %arg13: memref<256x128xf32, #tpu.memory_space<vmem>>, %arg14: memref<256x256xf32, #tpu.memory_space<vmem>>) attributes {dimension_semantics = [#tpu.dimension_semantics<parallel>], iteration_bounds = array<i64: 2>, scalar_prefetch = 0 : i64, scratch_operands = 0 : i64, tpu.core_type = #tpu.core_type<tc>, window_params = [{transform_indices = @transform_0, window_bounds = array<i64: 256, 128>}, {pipeline_mode = #tpu.pipeline_mode<synchronous>, transform_indices = @transform_1, window_bounds = array<i64: 128, 640>}, {pipeline_mode = #tpu.pipeline_mode<synchronous>, transform_indices = @transform_2, window_bounds = array<i64: 1, 256>}, {pipeline_mode = #tpu.pipeline_mode<synchronous>, transform_indices = @transform_3, window_bounds = array<i64: 1, 128>}, {pipeline_mode = #tpu.pipeline_mode<synchronous>, transform_indices = @transform_4, window_bounds = array<i64: 7, 256, 256>}, {pipeline_mode = #tpu.pipeline_mode<synchronous>, transform_indices = @transform_5, window_bounds = array<i64: 7, 1, 256>}, {pipeline_mode = #tpu.pipeline_mode<synchronous>, transform_indices = @transform_6, window_bounds = array<i64: 256, 256>}, {pipeline_mode = #tpu.pipeline_mode<synchronous>, transform_indices = @transform_7, window_bounds = array<i64: 1, 256>}, {pipeline_mode = #tpu.pipeline_mode<synchronous>, transform_indices = @transform_8, window_bounds = array<i64: 256, 128>}, {pipeline_mode = #tpu.pipeline_mode<synchronous>, transform_indices = @transform_9, window_bounds = array<i64: 256, 128>}, {pipeline_mode = #tpu.pipeline_mode<synchronous>, transform_indices = @transform_10, window_bounds = array<i64: 128, 128>}, {pipeline_mode = #tpu.pipeline_mode<synchronous>, transform_indices = @transform_11, window_bounds = array<i64: 1, 128>}, {transform_indices = @transform_12, window_bounds = array<i64: 256, 128>}, {transform_indices = @transform_13, window_bounds = array<i64: 256, 256>}]} {
    %c0 = arith.constant 0 : index
    %c0_0 = arith.constant 0 : index
    %0 = vector.load %arg1[%c0, %c0_0] : memref<256x128xbf16, #tpu.memory_space<vmem>>, vector<256x128xbf16>
    %c0_1 = arith.constant 0 : index
    %c0_2 = arith.constant 0 : index
    %1 = vector.load %arg2[%c0_1, %c0_2] : memref<128x640xbf16, #tpu.memory_space<vmem>>, vector<128x640xbf16>
    %cst = arith.constant dense<0.000000e+00> : vector<256x640xf32>
    %2 = tpu.matmul %0, %1, %cst {dimension_numbers = #tpu.dot_dimension_numbers<[1], [0], [0], [1], [0, 0, 1, 1], [], []>} : vector<256x128xbf16>, vector<128x640xbf16>, vector<256x640xf32> -> vector<256x640xf32>
    %3 = vector.extract_strided_slice %2 {offsets = [0, 0], sizes = [256, 256], strides = [1, 1]} : vector<256x640xf32> to vector<256x256xf32>
    %c0_3 = arith.constant 0 : index
    %c0_4 = arith.constant 0 : index
    %4 = vector.load %arg3[%c0_3, %c0_4] : memref<1x256xf32, #tpu.memory_space<vmem>>, vector<1x256xf32>
    %5 = vector.broadcast %4 : vector<1x256xf32> to vector<256x256xf32>
    %6 = arith.addf %3, %5 : vector<256x256xf32>
    %cst_5 = arith.constant 0.000000e+00 : f32
    %7 = vector.broadcast %cst_5 : f32 to vector<256x256xf32>
    %8 = arith.maximumf %6, %7 : vector<256x256xf32>
    %9 = vector.extract_strided_slice %2 {offsets = [0, 256], sizes = [256, 256], strides = [1, 1]} : vector<256x640xf32> to vector<256x256xf32>
    %10 = vector.extract_strided_slice %2 {offsets = [0, 512], sizes = [256, 128], strides = [1, 1]} : vector<256x640xf32> to vector<256x128xf32>
    %c0_6 = arith.constant 0 : index
    %c0_7 = arith.constant 0 : index
    %11 = vector.load %arg4[%c0_6, %c0_7] : memref<1x128xf32, #tpu.memory_space<vmem>>, vector<1x128xf32>
    %12 = vector.broadcast %11 : vector<1x128xf32> to vector<256x128xf32>
    %13 = arith.addf %10, %12 : vector<256x128xf32>
    %14 = arith.truncf %8 : vector<256x256xf32> to vector<256x256xbf16>
    %c0_8 = arith.constant 0 : index
    %c0_9 = arith.constant 0 : index
    %c0_10 = arith.constant 0 : index
    %15 = vector.load %arg5[%c0_8, %c0_9, %c0_10] : memref<7x256x256xbf16, #tpu.memory_space<vmem>>, vector<1x256x256xbf16>
    %16 = vector.shape_cast %15 : vector<1x256x256xbf16> to vector<256x256xbf16>
    %cst_11 = arith.constant dense<0.000000e+00> : vector<256x256xf32>
    %17 = tpu.matmul %14, %16, %cst_11 {dimension_numbers = #tpu.dot_dimension_numbers<[1], [0], [0], [1], [0, 0, 1, 1], [], []>} : vector<256x256xbf16>, vector<256x256xbf16>, vector<256x256xf32> -> vector<256x256xf32>
    %c0_12 = arith.constant 0 : index
    %c0_13 = arith.constant 0 : index
    %c0_14 = arith.constant 0 : index
    %18 = vector.load %arg6[%c0_12, %c0_13, %c0_14] : memref<7x1x256xf32, #tpu.memory_space<vmem>>, vector<1x1x256xf32>
    %19 = vector.shape_cast %18 : vector<1x1x256xf32> to vector<1x256xf32>
    %20 = vector.broadcast %19 : vector<1x256xf32> to vector<256x256xf32>
    %21 = arith.addf %17, %20 : vector<256x256xf32>
    %cst_15 = arith.constant 0.000000e+00 : f32
    %22 = vector.broadcast %cst_15 : f32 to vector<256x256xf32>
    %23 = arith.maximumf %21, %22 : vector<256x256xf32>
    %24 = arith.truncf %23 : vector<256x256xf32> to vector<256x256xbf16>
    %c1 = arith.constant 1 : index
    %c0_16 = arith.constant 0 : index
    %c0_17 = arith.constant 0 : index
    %25 = vector.load %arg5[%c1, %c0_16, %c0_17] : memref<7x256x256xbf16, #tpu.memory_space<vmem>>, vector<1x256x256xbf16>
    %26 = vector.shape_cast %25 : vector<1x256x256xbf16> to vector<256x256xbf16>
    %cst_18 = arith.constant dense<0.000000e+00> : vector<256x256xf32>
    %27 = tpu.matmul %24, %26, %cst_18 {dimension_numbers = #tpu.dot_dimension_numbers<[1], [0], [0], [1], [0, 0, 1, 1], [], []>} : vector<256x256xbf16>, vector<256x256xbf16>, vector<256x256xf32> -> vector<256x256xf32>
    %c1_19 = arith.constant 1 : index
    %c0_20 = arith.constant 0 : index
    %c0_21 = arith.constant 0 : index
    %28 = vector.load %arg6[%c1_19, %c0_20, %c0_21] : memref<7x1x256xf32, #tpu.memory_space<vmem>>, vector<1x1x256xf32>
    %29 = vector.shape_cast %28 : vector<1x1x256xf32> to vector<1x256xf32>
    %30 = vector.broadcast %29 : vector<1x256xf32> to vector<256x256xf32>
    %31 = arith.addf %27, %30 : vector<256x256xf32>
    %cst_22 = arith.constant 0.000000e+00 : f32
    %32 = vector.broadcast %cst_22 : f32 to vector<256x256xf32>
    %33 = arith.maximumf %31, %32 : vector<256x256xf32>
    %34 = arith.truncf %33 : vector<256x256xf32> to vector<256x256xbf16>
    %c2 = arith.constant 2 : index
    %c0_23 = arith.constant 0 : index
    %c0_24 = arith.constant 0 : index
    %35 = vector.load %arg5[%c2, %c0_23, %c0_24] : memref<7x256x256xbf16, #tpu.memory_space<vmem>>, vector<1x256x256xbf16>
    %36 = vector.shape_cast %35 : vector<1x256x256xbf16> to vector<256x256xbf16>
    %cst_25 = arith.constant dense<0.000000e+00> : vector<256x256xf32>
    %37 = tpu.matmul %34, %36, %cst_25 {dimension_numbers = #tpu.dot_dimension_numbers<[1], [0], [0], [1], [0, 0, 1, 1], [], []>} : vector<256x256xbf16>, vector<256x256xbf16>, vector<256x256xf32> -> vector<256x256xf32>
    %c2_26 = arith.constant 2 : index
    %c0_27 = arith.constant 0 : index
    %c0_28 = arith.constant 0 : index
    %38 = vector.load %arg6[%c2_26, %c0_27, %c0_28] : memref<7x1x256xf32, #tpu.memory_space<vmem>>, vector<1x1x256xf32>
    %39 = vector.shape_cast %38 : vector<1x1x256xf32> to vector<1x256xf32>
    %40 = vector.broadcast %39 : vector<1x256xf32> to vector<256x256xf32>
    %41 = arith.addf %37, %40 : vector<256x256xf32>
    %cst_29 = arith.constant 0.000000e+00 : f32
    %42 = vector.broadcast %cst_29 : f32 to vector<256x256xf32>
    %43 = arith.maximumf %41, %42 : vector<256x256xf32>
    %44 = arith.truncf %43 : vector<256x256xf32> to vector<256x256xbf16>
    %c3 = arith.constant 3 : index
    %c0_30 = arith.constant 0 : index
    %c0_31 = arith.constant 0 : index
    %45 = vector.load %arg5[%c3, %c0_30, %c0_31] : memref<7x256x256xbf16, #tpu.memory_space<vmem>>, vector<1x256x256xbf16>
    %46 = vector.shape_cast %45 : vector<1x256x256xbf16> to vector<256x256xbf16>
    %cst_32 = arith.constant dense<0.000000e+00> : vector<256x256xf32>
    %47 = tpu.matmul %44, %46, %cst_32 {dimension_numbers = #tpu.dot_dimension_numbers<[1], [0], [0], [1], [0, 0, 1, 1], [], []>} : vector<256x256xbf16>, vector<256x256xbf16>, vector<256x256xf32> -> vector<256x256xf32>
    %c3_33 = arith.constant 3 : index
    %c0_34 = arith.constant 0 : index
    %c0_35 = arith.constant 0 : index
    %48 = vector.load %arg6[%c3_33, %c0_34, %c0_35] : memref<7x1x256xf32, #tpu.memory_space<vmem>>, vector<1x1x256xf32>
    %49 = vector.shape_cast %48 : vector<1x1x256xf32> to vector<1x256xf32>
    %50 = vector.broadcast %49 : vector<1x256xf32> to vector<256x256xf32>
    %51 = arith.addf %47, %50 : vector<256x256xf32>
    %cst_36 = arith.constant 0.000000e+00 : f32
    %52 = vector.broadcast %cst_36 : f32 to vector<256x256xf32>
    %53 = arith.maximumf %51, %52 : vector<256x256xf32>
    %54 = arith.truncf %53 : vector<256x256xf32> to vector<256x256xbf16>
    %c4 = arith.constant 4 : index
    %c0_37 = arith.constant 0 : index
    %c0_38 = arith.constant 0 : index
    %55 = vector.load %arg5[%c4, %c0_37, %c0_38] : memref<7x256x256xbf16, #tpu.memory_space<vmem>>, vector<1x256x256xbf16>
    %56 = vector.shape_cast %55 : vector<1x256x256xbf16> to vector<256x256xbf16>
    %cst_39 = arith.constant dense<0.000000e+00> : vector<256x256xf32>
    %57 = tpu.matmul %54, %56, %cst_39 {dimension_numbers = #tpu.dot_dimension_numbers<[1], [0], [0], [1], [0, 0, 1, 1], [], []>} : vector<256x256xbf16>, vector<256x256xbf16>, vector<256x256xf32> -> vector<256x256xf32>
    %58 = arith.addf %57, %9 : vector<256x256xf32>
    %c4_40 = arith.constant 4 : index
    %c0_41 = arith.constant 0 : index
    %c0_42 = arith.constant 0 : index
    %59 = vector.load %arg6[%c4_40, %c0_41, %c0_42] : memref<7x1x256xf32, #tpu.memory_space<vmem>>, vector<1x1x256xf32>
    %60 = vector.shape_cast %59 : vector<1x1x256xf32> to vector<1x256xf32>
    %61 = vector.broadcast %60 : vector<1x256xf32> to vector<256x256xf32>
    %62 = arith.addf %58, %61 : vector<256x256xf32>
    %cst_43 = arith.constant 0.000000e+00 : f32
    %63 = vector.broadcast %cst_43 : f32 to vector<256x256xf32>
    %64 = arith.maximumf %62, %63 : vector<256x256xf32>
    %65 = arith.truncf %64 : vector<256x256xf32> to vector<256x256xbf16>
    %c5 = arith.constant 5 : index
    %c0_44 = arith.constant 0 : index
    %c0_45 = arith.constant 0 : index
    %66 = vector.load %arg5[%c5, %c0_44, %c0_45] : memref<7x256x256xbf16, #tpu.memory_space<vmem>>, vector<1x256x256xbf16>
    %67 = vector.shape_cast %66 : vector<1x256x256xbf16> to vector<256x256xbf16>
    %cst_46 = arith.constant dense<0.000000e+00> : vector<256x256xf32>
    %68 = tpu.matmul %65, %67, %cst_46 {dimension_numbers = #tpu.dot_dimension_numbers<[1], [0], [0], [1], [0, 0, 1, 1], [], []>} : vector<256x256xbf16>, vector<256x256xbf16>, vector<256x256xf32> -> vector<256x256xf32>
    %c5_47 = arith.constant 5 : index
    %c0_48 = arith.constant 0 : index
    %c0_49 = arith.constant 0 : index
    %69 = vector.load %arg6[%c5_47, %c0_48, %c0_49] : memref<7x1x256xf32, #tpu.memory_space<vmem>>, vector<1x1x256xf32>
    %70 = vector.shape_cast %69 : vector<1x1x256xf32> to vector<1x256xf32>
    %71 = vector.broadcast %70 : vector<1x256xf32> to vector<256x256xf32>
    %72 = arith.addf %68, %71 : vector<256x256xf32>
    %cst_50 = arith.constant 0.000000e+00 : f32
    %73 = vector.broadcast %cst_50 : f32 to vector<256x256xf32>
    %74 = arith.maximumf %72, %73 : vector<256x256xf32>
    %75 = arith.truncf %74 : vector<256x256xf32> to vector<256x256xbf16>
    %c6 = arith.constant 6 : index
    %c0_51 = arith.constant 0 : index
    %c0_52 = arith.constant 0 : index
    %76 = vector.load %arg5[%c6, %c0_51, %c0_52] : memref<7x256x256xbf16, #tpu.memory_space<vmem>>, vector<1x256x256xbf16>
    %77 = vector.shape_cast %76 : vector<1x256x256xbf16> to vector<256x256xbf16>
    %cst_53 = arith.constant dense<0.000000e+00> : vector<256x256xf32>
    %78 = tpu.matmul %75, %77, %cst_53 {dimension_numbers = #tpu.dot_dimension_numbers<[1], [0], [0], [1], [0, 0, 1, 1], [], []>} : vector<256x256xbf16>, vector<256x256xbf16>, vector<256x256xf32> -> vector<256x256xf32>
    %c6_54 = arith.constant 6 : index
    %c0_55 = arith.constant 0 : index
    %c0_56 = arith.constant 0 : index
    %79 = vector.load %arg6[%c6_54, %c0_55, %c0_56] : memref<7x1x256xf32, #tpu.memory_space<vmem>>, vector<1x1x256xf32>
    %80 = vector.shape_cast %79 : vector<1x1x256xf32> to vector<1x256xf32>
    %81 = vector.broadcast %80 : vector<1x256xf32> to vector<256x256xf32>
    %82 = arith.addf %78, %81 : vector<256x256xf32>
    %cst_57 = arith.constant 0.000000e+00 : f32
    %83 = vector.broadcast %cst_57 : f32 to vector<256x256xf32>
    %84 = arith.maximumf %82, %83 : vector<256x256xf32>
    %85 = arith.truncf %84 : vector<256x256xf32> to vector<256x256xbf16>
    %c0_58 = arith.constant 0 : index
    %c0_59 = arith.constant 0 : index
    %86 = vector.load %arg7[%c0_58, %c0_59] : memref<256x256xbf16, #tpu.memory_space<vmem>>, vector<256x256xbf16>
    %cst_60 = arith.constant dense<0.000000e+00> : vector<256x256xf32>
    %87 = tpu.matmul %85, %86, %cst_60 {dimension_numbers = #tpu.dot_dimension_numbers<[1], [0], [0], [1], [0, 0, 1, 1], [], []>} : vector<256x256xbf16>, vector<256x256xbf16>, vector<256x256xf32> -> vector<256x256xf32>
    %c0_61 = arith.constant 0 : index
    %c0_62 = arith.constant 0 : index
    %88 = vector.load %arg8[%c0_61, %c0_62] : memref<1x256xf32, #tpu.memory_space<vmem>>, vector<1x256xf32>
    %89 = vector.broadcast %88 : vector<1x256xf32> to vector<256x256xf32>
    %90 = arith.addf %87, %89 : vector<256x256xf32>
    %c0_63 = arith.constant 0 : index
    %c0_64 = arith.constant 0 : index
    %91 = vector.load %arg9[%c0_63, %c0_64] : memref<256x128xbf16, #tpu.memory_space<vmem>>, vector<256x128xbf16>
    %cst_65 = arith.constant dense<0.000000e+00> : vector<256x128xf32>
    %92 = tpu.matmul %85, %91, %cst_65 {dimension_numbers = #tpu.dot_dimension_numbers<[1], [0], [0], [1], [0, 0, 1, 1], [], []>} : vector<256x256xbf16>, vector<256x128xbf16>, vector<256x128xf32> -> vector<256x128xf32>
    %93 = arith.truncf %90 : vector<256x256xf32> to vector<256x256xbf16>
    %c0_66 = arith.constant 0 : index
    %c0_67 = arith.constant 0 : index
    %94 = vector.load %arg10[%c0_66, %c0_67] : memref<256x128xbf16, #tpu.memory_space<vmem>>, vector<256x128xbf16>
    %cst_68 = arith.constant dense<0.000000e+00> : vector<256x128xf32>
    %95 = tpu.matmul %93, %94, %cst_68 {dimension_numbers = #tpu.dot_dimension_numbers<[1], [0], [0], [1], [0, 0, 1, 1], [], []>} : vector<256x256xbf16>, vector<256x128xbf16>, vector<256x128xf32> -> vector<256x128xf32>
    %96 = arith.addf %95, %13 : vector<256x128xf32>
    %cst_69 = arith.constant 0.000000e+00 : f32
    %97 = vector.broadcast %cst_69 : f32 to vector<256x128xf32>
    %98 = arith.maximumf %96, %97 : vector<256x128xf32>
    %99 = arith.truncf %98 : vector<256x128xf32> to vector<256x128xbf16>
    %c0_70 = arith.constant 0 : index
    %c0_71 = arith.constant 0 : index
    %100 = vector.load %arg11[%c0_70, %c0_71] : memref<128x128xbf16, #tpu.memory_space<vmem>>, vector<128x128xbf16>
    %cst_72 = arith.constant dense<0.000000e+00> : vector<256x128xf32>
    %101 = tpu.matmul %99, %100, %cst_72 {dimension_numbers = #tpu.dot_dimension_numbers<[1], [0], [0], [1], [0, 0, 1, 1], [], []>} : vector<256x128xbf16>, vector<128x128xbf16>, vector<256x128xf32> -> vector<256x128xf32>
    %102 = arith.addf %101, %92 : vector<256x128xf32>
    %c0_73 = arith.constant 0 : index
    %c0_74 = arith.constant 0 : index
    %103 = vector.load %arg12[%c0_73, %c0_74] : memref<1x128xf32, #tpu.memory_space<vmem>>, vector<1x128xf32>
    %104 = vector.broadcast %103 : vector<1x128xf32> to vector<256x128xf32>
    %105 = arith.addf %102, %104 : vector<256x128xf32>
    %c0_75 = arith.constant 0 : index
    %c0_76 = arith.constant 0 : index
    %106 = vector.load %arg13[%c0_75, %c0_76] : memref<256x128xf32, #tpu.memory_space<vmem>>, vector<256x128xf32>
    tpu.vector_store %arg13[%c0_75, %c0_76], %105 {strides = array<i32>} : memref<256x128xf32, #tpu.memory_space<vmem>>, vector<256x128xf32>,
    %c0_77 = arith.constant 0 : index
    %c0_78 = arith.constant 0 : index
    %107 = vector.load %arg14[%c0_77, %c0_78] : memref<256x256xf32, #tpu.memory_space<vmem>>, vector<256x256xf32>
    tpu.vector_store %arg14[%c0_77, %c0_78], %84 {strides = array<i32>} : memref<256x256xf32, #tpu.memory_space<vmem>>, vector<256x256xf32>,
    return
  }
  func.func @transform_0(%arg0: i32) -> (i32, i32) {
    %c0_i32 = arith.constant 0 : i32
    %c0_i32_0 = arith.constant 0 : i32
    return %arg0, %c0_i32 : i32, i32
  }
  func.func @transform_1(%arg0: i32) -> (i32, i32) {
    %c0_i32 = arith.constant 0 : i32
    %c0_i32_0 = arith.constant 0 : i32
    %c0_i32_1 = arith.constant 0 : i32
    return %c0_i32, %c0_i32_0 : i32, i32
  }
  func.func @transform_2(%arg0: i32) -> (i32, i32) {
    %c0_i32 = arith.constant 0 : i32
    %c0_i32_0 = arith.constant 0 : i32
    %c0_i32_1 = arith.constant 0 : i32
    return %c0_i32, %c0_i32_0 : i32, i32
  }
  func.func @transform_3(%arg0: i32) -> (i32, i32) {
    %c0_i32 = arith.constant 0 : i32
    %c0_i32_0 = arith.constant 0 : i32
    %c0_i32_1 = arith.constant 0 : i32
    return %c0_i32, %c0_i32_0 : i32, i32
  }
  func.func @transform_4(%arg0: i32) -> (i32, i32, i32) {
    %c0_i32 = arith.constant 0 : i32
    %c0_i32_0 = arith.constant 0 : i32
    %c0_i32_1 = arith.constant 0 : i32
    %c0_i32_2 = arith.constant 0 : i32
    return %c0_i32, %c0_i32_0, %c0_i32_1 : i32, i32, i32
  }
  func.func @transform_5(%arg0: i32) -> (i32, i32, i32) {
    %c0_i32 = arith.constant 0 : i32
    %c0_i32_0 = arith.constant 0 : i32
    %c0_i32_1 = arith.constant 0 : i32
    %c0_i32_2 = arith.constant 0 : i32
    return %c0_i32, %c0_i32_0, %c0_i32_1 : i32, i32, i32
  }
  func.func @transform_6(%arg0: i32) -> (i32, i32) {
    %c0_i32 = arith.constant 0 : i32
    %c0_i32_0 = arith.constant 0 : i32
    %c0_i32_1 = arith.constant 0 : i32
    return %c0_i32, %c0_i32_0 : i32, i32
  }
  func.func @transform_7(%arg0: i32) -> (i32, i32) {
    %c0_i32 = arith.constant 0 : i32
    %c0_i32_0 = arith.constant 0 : i32
    %c0_i32_1 = arith.constant 0 : i32
    return %c0_i32, %c0_i32_0 : i32, i32
  }
  func.func @transform_8(%arg0: i32) -> (i32, i32) {
    %c0_i32 = arith.constant 0 : i32
    %c0_i32_0 = arith.constant 0 : i32
    %c0_i32_1 = arith.constant 0 : i32
    return %c0_i32, %c0_i32_0 : i32, i32
  }
  func.func @transform_9(%arg0: i32) -> (i32, i32) {
    %c0_i32 = arith.constant 0 : i32
    %c0_i32_0 = arith.constant 0 : i32
    %c0_i32_1 = arith.constant 0 : i32
    return %c0_i32, %c0_i32_0 : i32, i32
  }
  func.func @transform_10(%arg0: i32) -> (i32, i32) {
    %c0_i32 = arith.constant 0 : i32
    %c0_i32_0 = arith.constant 0 : i32
    %c0_i32_1 = arith.constant 0 : i32
    return %c0_i32, %c0_i32_0 : i32, i32
  }
  func.func @transform_11(%arg0: i32) -> (i32, i32) {
    %c0_i32 = arith.constant 0 : i32
    %c0_i32_0 = arith.constant 0 : i32
    %c0_i32_1 = arith.constant 0 : i32
    return %c0_i32, %c0_i32_0 : i32, i32
  }
  func.func @transform_12(%arg0: i32) -> (i32, i32) {
    %c0_i32 = arith.constant 0 : i32
    %c0_i32_0 = arith.constant 0 : i32
    return %arg0, %c0_i32 : i32, i32
  }
  func.func @transform_13(%arg0: i32) -> (i32, i32) {
    %c0_i32 = arith.constant 0 : i32
    %c0_i32_0 = arith.constant 0 : i32
    return %arg0, %c0_i32 : i32, i32
  }
}

</mosaic_0001>

<llo_original>
// kernel: tpu_custom_call.1
$region0: #{tpu_custom_call.1}
  #allocation0 [shape = 'u32[]', space=smem, size = 0x4, offset = 0x4, fixed_abs, tag = 'smem constant byte address 0x4 - core index']
  #allocation1 [shape = 'u32[144,128]{1,0:T(1,128)}', space=vmem, size = 0x12000, scoped, tag = 'internal scratch']
  %s0 = inlined_call_operand.hbm [shape: bf16[512,128], index: 0, kind: input, shape index: {}]
  %s1 = inlined_call_operand.hbm [shape: bf16[128,640], index: 1, kind: input, shape index: {}]
  %s2 = inlined_call_operand.vmem [shape: f32[1,256], index: 2, kind: input, shape index: {}]
  %s3 = inlined_call_operand.vmem [shape: f32[1,128], index: 3, kind: input, shape index: {}]
  %s4 = inlined_call_operand.hbm [shape: bf16[7,256,256], index: 4, kind: input, shape index: {}]
  %s5 = inlined_call_operand.hbm [shape: f32[7,1,256], index: 5, kind: input, shape index: {}]
  %s6 = inlined_call_operand.hbm [shape: bf16[256,256], index: 6, kind: input, shape index: {}]
  %s7 = inlined_call_operand.vmem [shape: f32[1,256], index: 7, kind: input, shape index: {}]
  %s8 = inlined_call_operand.hbm [shape: bf16[256,128], index: 8, kind: input, shape index: {}]
  %s9 = inlined_call_operand.hbm [shape: bf16[256,128], index: 9, kind: input, shape index: {}]
  %s10 = inlined_call_operand.hbm [shape: bf16[128,128], index: 10, kind: input, shape index: {}]
  %s11 = inlined_call_operand.vmem [shape: f32[1,128], index: 11, kind: input, shape index: {}]
  %s12 = inlined_call_operand.hbm [shape: f32[512,128], index: 12, kind: output, shape index: {0}]
  %s13 = inlined_call_operand.hbm [shape: f32[512,256], index: 13, kind: output, shape index: {1}]
  %14 = xla_tuple %s12, %s13
  %s15 = sld [smem:[#allocation0]]
  $region121: #{tpu_custom_call.1} parent=0
    _
  %s17 = ssub.s32 1, %s15
  %s18 = scalar_select 0, %s17, %s15
  $region1: #{tpu_custom_call.1} parent=0
    #allocation2 [shape = 'u8[131072]{0}', space=vmem, size = 0x20000, scoped, tag = 'input window, operand 0']
    #allocation3 [shape = 's32[2]{0}', space=sflag, size = 0x8, scoped, tag = 'scoped memory for tpu_custom_call.1']
    #allocation4 [shape = 's32[2]{0}', space=sflag, size = 0x8, scoped, tag = 'scoped memory for tpu_custom_call.1']
    #allocation5 [shape = 'u8[163840]{0}', space=vmem, size = 0x28000, scoped, tag = 'input window, operand 1, single buffered']
    #allocation6 [shape = 's32[1]{0}', space=sflag, size = 0x4, scoped, tag = 'scoped memory for tpu_custom_call.1']
    #allocation7 [shape = 'u8[917504]{0}', space=vmem, size = 0xe0000, scoped, tag = 'input window, operand 4, single buffered']
    #allocation8 [shape = 'u8[7168]{0}', space=vmem, size = 0x1c00, scoped, tag = 'input window, operand 5, single buffered']
    #allocation9 [shape = 's32[1]{0}', space=sflag, size = 0x4, scoped, tag = 'scoped memory for tpu_custom_call.1']
    #allocation10 [shape = 'u8[131072]{0}', space=vmem, size = 0x20000, scoped, tag = 'input window, operand 6, single buffered']
    #allocation11 [shape = 'u8[65536]{0}', space=vmem, size = 0x10000, scoped, tag = 'input window, operand 8, single buffered']
    #allocation12 [shape = 's32[1]{0}', space=sflag, size = 0x4, scoped, tag = 'scoped memory for tpu_custom_call.1']
    #allocation13 [shape = 'u8[65536]{0}', space=vmem, size = 0x10000, scoped, tag = 'input window, operand 9, single buffered']
    #allocation14 [shape = 'u8[32768]{0}', space=vmem, size = 0x8000, scoped, tag = 'input window, operand 10, single buffered']
    #allocation15 [shape = 's32[1]{0}', space=sflag, size = 0x4, scoped, tag = 'scoped memory for tpu_custom_call.1']
    #allocation16 [shape = 'u8[262144]{0}', space=vmem, size = 0x40000, scoped, tag = 'output window, operand 0']
    #allocation17 [shape = 'u8[524288]{0}', space=vmem, size = 0x80000, scoped, tag = 'output window, operand 1']
    #allocation18 [shape = 's32[2]{0}', space=sflag, size = 0x8, scoped, tag = 'scoped memory for tpu_custom_call.1']
    %19 = vsyncpa [#allocation3], 0
    %s20 = scalar_lea.sflag [#allocation3], 1
    %21 = vsyncpa %s20, 0
    %22 = vsyncpa [#allocation6], 0
    %23 = vsyncpa [#allocation9], 0
    %24 = vsyncpa [#allocation12], 0
    %25 = vsyncpa [#allocation15], 0
    %26 = vsyncpa [#allocation4], 0
    %s27 = scalar_lea.sflag [#allocation4], 1
    %28 = vsyncpa %s27, 0
    %29 = vsyncpa [#allocation18], 0
    %s30 = scalar_lea.sflag [#allocation18], 1
    %31 = vsyncpa %s30, 0
    loop: start=0, step=1, limit=4
    $region2: #{tpu_custom_call.1} parent=1 // loop_pre_header
      _
    $region3: #{tpu_custom_call.1} parent=1 // loop_header
      %s33 = sphi 0, %s37
      %p34 = scmp.ge.s32.totalorder %s33, 4
      %s43 = sphi 0, %s45
      %s46 = sphi 0, %s43
      %s47 = sphi 0, %s46
      %s63 = sphi 0, %s47
      %s67 = sphi 0, %s67
      %s69 = sphi 0, %s67
      %s70 = sphi 0, %s69
      %s84 = sphi 0, %s70
      %s88 = sphi 0, %s88
      %s90 = sphi 0, %s88
      %s91 = sphi 0, %s90
      %s105 = sphi 0, %s91
      %s109 = sphi 0, %s109
      %s111 = sphi 0, %s109
      %s112 = sphi 0, %s111
      %s126 = sphi 0, %s112
      %s130 = sphi 0, %s130
      %s132 = sphi 0, %s130
      %s133 = sphi 0, %s132
      %s147 = sphi 0, %s133
      %s151 = sphi 0, %s151
      %s153 = sphi 0, %s151
      %s154 = sphi 0, %s153
      %s168 = sphi 0, %s154
      %s172 = sphi 0, %s172
      %s174 = sphi 0, %s172
      %s175 = sphi 0, %s174
      %s189 = sphi 0, %s175
      %s193 = sphi 0, %s193
      %s195 = sphi 0, %s193
      %s196 = sphi 0, %s195
      %s210 = sphi 0, %s196
      %s214 = sphi 0, %s214
      %s216 = sphi 0, %s214
      %s217 = sphi 0, %s216
      %s231 = sphi 0, %s217
      %s235 = sphi 0, %s235
      %s237 = sphi 0, %s235
      %s238 = sphi 0, %s237
      %s252 = sphi 0, %s238
      %s256 = sphi 0, %s256
      %s258 = sphi 0, %s256
      %s259 = sphi 0, %s258
      %s273 = sphi 0, %s259
      %s277 = sphi 0, %s277
      %s279 = sphi 0, %s277
      %s280 = sphi 0, %s279
      %s294 = sphi 0, %s280
      %s300 = sphi 0, %s302
      %s303 = sphi 0, %s300
      %s304 = sphi 0, %s303
      %s320 = sphi 0, %s304
      %s326 = sphi 0, %s328
      %s329 = sphi 0, %s326
      %s330 = sphi 0, %s329
      %s346 = sphi 0, %s330
    $region4: #{tpu_custom_call.1} parent=1 // loop_header_branch
      %36 = sbr.rel (%p34) target = $region8
    $region5: #{tpu_custom_call.1} parent=1 // loop_body
      %s38 = ssub.s32 %s33, 1
      %s39 = ssub.s32 %s33, 2
      %s40 = sadd.s32 %s33, 1
      %s41 = ssub.s32 %s33, %s40
      %p42 = scmp.eq.s32.totalorder %s41, 0
      %s44 = sadd.s32 %s43, 1
      %s45 = scalar_select %p42, %s43, %s44
      %p48 = pneg %p42
      %p49 = scmp.eq.s32.totalorder %s33, 1
      %p50 = por %p48, %p49
      %p51 = scmp.ne.s32.totalorder %s43, %s46
      %p52 = scmp.eq.s32.totalorder %s33, 0
      %p53 = por %p51, %p52
      %p54 = scmp.ne.s32.totalorder %s43, %s46
      %p55 = scmp.eq.s32.totalorder %s38, 1
      %p56 = por %p54, %p55
      %p57 = scmp.ne.s32.totalorder %s46, %s47
      %p58 = scmp.eq.s32.totalorder %s38, 0
      %p59 = por %p57, %p58
      %p60 = scmp.ne.s32.totalorder %s46, %s47
      %p61 = scmp.eq.s32.totalorder %s39, 1
      %p62 = por %p60, %p61
      %p64 = scmp.ne.s32.totalorder %s47, %s63
      %p65 = scmp.eq.s32.totalorder %s39, 0
      %p66 = por %p64, %p65
      %s68 = sadd.s32 %s67, 1
      %p71 = scmp.eq.s32.totalorder %s33, 1
      %p72 = scmp.ne.s32.totalorder %s67, %s69
      %p73 = scmp.eq.s32.totalorder %s33, 0
      %p74 = por %p72, %p73
      %p75 = scmp.ne.s32.totalorder %s67, %s69
      %p76 = scmp.eq.s32.totalorder %s38, 1
      %p77 = por %p75, %p76
      %p78 = scmp.ne.s32.totalorder %s69, %s70
      %p79 = scmp.eq.s32.totalorder %s38, 0
      %p80 = por %p78, %p79
      %p81 = scmp.ne.s32.totalorder %s69, %s70
      %p82 = scmp.eq.s32.totalorder %s39, 1
      %p83 = por %p81, %p82
      %p85 = scmp.ne.s32.totalorder %s70, %s84
      %p86 = scmp.eq.s32.totalorder %s39, 0
      %p87 = por %p85, %p86
      %s89 = sadd.s32 %s88, 1
      %p92 = scmp.eq.s32.totalorder %s33, 1
      %p93 = scmp.ne.s32.totalorder %s88, %s90
      %p94 = scmp.eq.s32.totalorder %s33, 0
      %p95 = por %p93, %p94
      %p96 = scmp.ne.s32.totalorder %s88, %s90
      %p97 = scmp.eq.s32.totalorder %s38, 1
      %p98 = por %p96, %p97
      %p99 = scmp.ne.s32.totalorder %s90, %s91
      %p100 = scmp.eq.s32.totalorder %s38, 0
      %p101 = por %p99, %p100
      %p102 = scmp.ne.s32.totalorder %s90, %s91
      %p103 = scmp.eq.s32.totalorder %s39, 1
      %p104 = por %p102, %p103
      %p106 = scmp.ne.s32.totalorder %s91, %s105
      %p107 = scmp.eq.s32.totalorder %s39, 0
      %p108 = por %p106, %p107
      %s110 = sadd.s32 %s109, 1
      %p113 = scmp.eq.s32.totalorder %s33, 1
      %p114 = scmp.ne.s32.totalorder %s109, %s111
      %p115 = scmp.eq.s32.totalorder %s33, 0
      %p116 = por %p114, %p115
      %p117 = scmp.ne.s32.totalorder %s109, %s111
      %p118 = scmp.eq.s32.totalorder %s38, 1
      %p119 = por %p117, %p118
      %p120 = scmp.ne.s32.totalorder %s111, %s112
      %p121 = scmp.eq.s32.totalorder %s38, 0
      %p122 = por %p120, %p121
      %p123 = scmp.ne.s32.totalorder %s111, %s112
      %p124 = scmp.eq.s32.totalorder %s39, 1
      %p125 = por %p123, %p124
      %p127 = scmp.ne.s32.totalorder %s112, %s126
      %p128 = scmp.eq.s32.totalorder %s39, 0
      %p129 = por %p127, %p128
      %s131 = sadd.s32 %s130, 1
      %p134 = scmp.eq.s32.totalorder %s33, 1
      %p135 = scmp.ne.s32.totalorder %s130, %s132
      %p136 = scmp.eq.s32.totalorder %s33, 0
      %p137 = por %p135, %p136
      %p138 = scmp.ne.s32.totalorder %s130, %s132
      %p139 = scmp.eq.s32.totalorder %s38, 1
      %p140 = por %p138, %p139
      %p141 = scmp.ne.s32.totalorder %s132, %s133
      %p142 = scmp.eq.s32.totalorder %s38, 0
      %p143 = por %p141, %p142
      %p144 = scmp.ne.s32.totalorder %s132, %s133
      %p145 = scmp.eq.s32.totalorder %s39, 1
      %p146 = por %p144, %p145
      %p148 = scmp.ne.s32.totalorder %s133, %s147
      %p149 = scmp.eq.s32.totalorder %s39, 0
      %p150 = por %p148, %p149
      %s152 = sadd.s32 %s151, 1
      %p155 = scmp.eq.s32.totalorder %s33, 1
      %p156 = scmp.ne.s32.totalorder %s151, %s153
      %p157 = scmp.eq.s32.totalorder %s33, 0
      %p158 = por %p156, %p157
      %p159 = scmp.ne.s32.totalorder %s151, %s153
      %p160 = scmp.eq.s32.totalorder %s38, 1
      %p161 = por %p159, %p160
      %p162 = scmp.ne.s32.totalorder %s153, %s154
      %p163 = scmp.eq.s32.totalorder %s38, 0
      %p164 = por %p162, %p163
      %p165 = scmp.ne.s32.totalorder %s153, %s154
      %p166 = scmp.eq.s32.totalorder %s39, 1
      %p167 = por %p165, %p166
      %p169 = scmp.ne.s32.totalorder %s154, %s168
      %p170 = scmp.eq.s32.totalorder %s39, 0
      %p171 = por %p169, %p170
      %s173 = sadd.s32 %s172, 1
      %p176 = scmp.eq.s32.totalorder %s33, 1
      %p177 = scmp.ne.s32.totalorder %s172, %s174
      %p178 = scmp.eq.s32.totalorder %s33, 0
      %p179 = por %p177, %p178
      %p180 = scmp.ne.s32.totalorder %s172, %s174
      %p181 = scmp.eq.s32.totalorder %s38, 1
      %p182 = por %p180, %p181
      %p183 = scmp.ne.s32.totalorder %s174, %s175
      %p184 = scmp.eq.s32.totalorder %s38, 0
      %p185 = por %p183, %p184
      %p186 = scmp.ne.s32.totalorder %s174, %s175
      %p187 = scmp.eq.s32.totalorder %s39, 1
      %p188 = por %p186, %p187
      %p190 = scmp.ne.s32.totalorder %s175, %s189
      %p191 = scmp.eq.s32.totalorder %s39, 0
      %p192 = por %p190, %p191
      %s194 = sadd.s32 %s193, 1
      %p197 = scmp.eq.s32.totalorder %s33, 1
      %p198 = scmp.ne.s32.totalorder %s193, %s195
      %p199 = scmp.eq.s32.totalorder %s33, 0
      %p200 = por %p198, %p199
      %p201 = scmp.ne.s32.totalorder %s193, %s195
      %p202 = scmp.eq.s32.totalorder %s38, 1
      %p203 = por %p201, %p202
      %p204 = scmp.ne.s32.totalorder %s195, %s196
      %p205 = scmp.eq.s32.totalorder %s38, 0
      %p206 = por %p204, %p205
      %p207 = scmp.ne.s32.totalorder %s195, %s196
      %p208 = scmp.eq.s32.totalorder %s39, 1
      %p209 = por %p207, %p208
      %p211 = scmp.ne.s32.totalorder %s196, %s210
      %p212 = scmp.eq.s32.totalorder %s39, 0
      %p213 = por %p211, %p212
      %s215 = sadd.s32 %s214, 1
      %p218 = scmp.eq.s32.totalorder %s33, 1
      %p219 = scmp.ne.s32.totalorder %s214, %s216
      %p220 = scmp.eq.s32.totalorder %s33, 0
      %p221 = por %p219, %p220
      %p222 = scmp.ne.s32.totalorder %s214, %s216
      %p223 = scmp.eq.s32.totalorder %s38, 1
      %p224 = por %p222, %p223
      %p225 = scmp.ne.s32.totalorder %s216, %s217
      %p226 = scmp.eq.s32.totalorder %s38, 0
      %p227 = por %p225, %p226
      %p228 = scmp.ne.s32.totalorder %s216, %s217
      %p229 = scmp.eq.s32.totalorder %s39, 1
      %p230 = por %p228, %p229
      %p232 = scmp.ne.s32.totalorder %s217, %s231
      %p233 = scmp.eq.s32.totalorder %s39, 0
      %p234 = por %p232, %p233
      %s236 = sadd.s32 %s235, 1
      %p239 = scmp.eq.s32.totalorder %s33, 1
      %p240 = scmp.ne.s32.totalorder %s235, %s237
      %p241 = scmp.eq.s32.totalorder %s33, 0
      %p242 = por %p240, %p241
      %p243 = scmp.ne.s32.totalorder %s235, %s237
      %p244 = scmp.eq.s32.totalorder %s38, 1
      %p245 = por %p243, %p244
      %p246 = scmp.ne.s32.totalorder %s237, %s238
      %p247 = scmp.eq.s32.totalorder %s38, 0
      %p248 = por %p246, %p247
      %p249 = scmp.ne.s32.totalorder %s237, %s238
      %p250 = scmp.eq.s32.totalorder %s39, 1
      %p251 = por %p249, %p250
      %p253 = scmp.ne.s32.totalorder %s238, %s252
      %p254 = scmp.eq.s32.totalorder %s39, 0
      %p255 = por %p253, %p254
      %s257 = sadd.s32 %s256, 1
      %p260 = scmp.eq.s32.totalorder %s33, 1
      %p261 = scmp.ne.s32.totalorder %s256, %s258
      %p262 = scmp.eq.s32.totalorder %s33, 0
      %p263 = por %p261, %p262
      %p264 = scmp.ne.s32.totalorder %s256, %s258
      %p265 = scmp.eq.s32.totalorder %s38, 1
      %p266 = por %p264, %p265
      %p267 = scmp.ne.s32.totalorder %s258, %s259
      %p268 = scmp.eq.s32.totalorder %s38, 0
      %p269 = por %p267, %p268
      %p270 = scmp.ne.s32.totalorder %s258, %s259
      %p271 = scmp.eq.s32.totalorder %s39, 1
      %p272 = por %p270, %p271
      %p274 = scmp.ne.s32.totalorder %s259, %s273
      %p275 = scmp.eq.s32.totalorder %s39, 0
      %p276 = por %p274, %p275
      %s278 = sadd.s32 %s277, 1
      %p281 = scmp.eq.s32.totalorder %s33, 1
      %p282 = scmp.ne.s32.totalorder %s277, %s279
      %p283 = scmp.eq.s32.totalorder %s33, 0
      %p284 = por %p282, %p283
      %p285 = scmp.ne.s32.totalorder %s277, %s279
      %p286 = scmp.eq.s32.totalorder %s38, 1
      %p287 = por %p285, %p286
      %p288 = scmp.ne.s32.totalorder %s279, %s280
      %p289 = scmp.eq.s32.totalorder %s38, 0
      %p290 = por %p288, %p289
      %p291 = scmp.ne.s32.totalorder %s279, %s280
      %p292 = scmp.eq.s32.totalorder %s39, 1
      %p293 = por %p291, %p292
      %p295 = scmp.ne.s32.totalorder %s280, %s294
      %p296 = scmp.eq.s32.totalorder %s39, 0
      %p297 = por %p295, %p296
      %s298 = ssub.s32 %s33, %s40
      %p299 = scmp.eq.s32.totalorder %s298, 0
      %s301 = sadd.s32 %s300, 1
      %s302 = scalar_select %p299, %s300, %s301
      %p305 = pneg %p299
      %p306 = scmp.eq.s32.totalorder %s33, 1
      %p307 = por %p305, %p306
      %p308 = scmp.ne.s32.totalorder %s300, %s303
      %p309 = scmp.eq.s32.totalorder %s33, 0
      %p310 = por %p308, %p309
      %p311 = scmp.ne.s32.totalorder %s300, %s303
      %p312 = scmp.eq.s32.totalorder %s38, 1
      %p313 = por %p311, %p312
      %p314 = scmp.ne.s32.totalorder %s303, %s304
      %p315 = scmp.eq.s32.totalorder %s38, 0
      %p316 = por %p314, %p315
      %p317 = scmp.ne.s32.totalorder %s303, %s304
      %p318 = scmp.eq.s32.totalorder %s39, 1
      %p319 = por %p317, %p318
      %p321 = scmp.ne.s32.totalorder %s304, %s320
      %p322 = scmp.eq.s32.totalorder %s39, 0
      %p323 = por %p321, %p322
      %s324 = ssub.s32 %s33, %s40
      %p325 = scmp.eq.s32.totalorder %s324, 0
      %s327 = sadd.s32 %s326, 1
      %s328 = scalar_select %p325, %s326, %s327
      %p331 = pneg %p325
      %p332 = scmp.eq.s32.totalorder %s33, 1
      %p333 = por %p331, %p332
      %p334 = scmp.ne.s32.totalorder %s326, %s329
      %p335 = scmp.eq.s32.totalorder %s33, 0
      %p336 = por %p334, %p335
      %p337 = scmp.ne.s32.totalorder %s326, %s329
      %p338 = scmp.eq.s32.totalorder %s38, 1
      %p339 = por %p337, %p338
      %p340 = scmp.ne.s32.totalorder %s329, %s330
      %p341 = scmp.eq.s32.totalorder %s38, 0
      %p342 = por %p340, %p341
      %p343 = scmp.ne.s32.totalorder %s329, %s330
      %p344 = scmp.eq.s32.totalorder %s39, 1
      %p345 = por %p343, %p344
      %p347 = scmp.ne.s32.totalorder %s330, %s346
      %p348 = scmp.eq.s32.totalorder %s39, 0
      %p349 = por %p347, %p348
      %p350 = scmp.le.s32.totalorder 1, %s33
      %p351 = scmp.lt.s32.totalorder %s33, 3
      %p352 = pnand %p350, %p351
      %p353 = pneg %p352
      // Predicated region
      $region9: #{tpu_custom_call.1} parent=5 // pred_check
        _
      $region10: #{tpu_custom_call.1} parent=5 // pred_check_branch
        %355 = sbr.rel (%p352) target = $region12
      $region11: #{tpu_custom_call.1} parent=5 // pred_region
        %s356 = ssub.s32 %s33, 1
        // Predicated region
        $region13: #{tpu_custom_call.1} parent=11 // pred_check
          %p357 = pneg %p80
        $region14: #{tpu_custom_call.1} parent=11 // pred_check_branch
          %359 = sbr.rel (%p357) target = $region16
        $region15: #{tpu_custom_call.1} parent=11 // pred_region
          %s361 = ssub.s32 5120, 5120
          %362 = vsyncadd [#allocation6], %s361
          %s363 = sshll.u32 [#allocation5], 4
          %s364 = int_to_ptr.vmem [resolvable:$true] %s363
          %369 = dma.hbm_to_vmem [thread:$0]  %s1, 5120, %s364, [#allocation6], 320, 320, 20
        $region16: #{tpu_custom_call.1} parent=11 // pred_fallthru
          _
        // Predicated region
        $region17: #{tpu_custom_call.1} parent=11 // pred_check
          %p370 = pneg %p101
        $region18: #{tpu_custom_call.1} parent=11 // pred_check_branch
          %372 = sbr.rel (%p370) target = $region20
        $region19: #{tpu_custom_call.1} parent=11 // pred_region
          _
        $region20: #{tpu_custom_call.1} parent=11 // pred_fallthru
          _
        // Predicated region
        $region21: #{tpu_custom_call.1} parent=11 // pred_check
          %p373 = pneg %p122
        $region22: #{tpu_custom_call.1} parent=11 // pred_check_branch
          %375 = sbr.rel (%p373) target = $region24
        $region23: #{tpu_custom_call.1} parent=11 // pred_region
          _
        $region24: #{tpu_custom_call.1} parent=11 // pred_fallthru
          _
        // Predicated region
        $region25: #{tpu_custom_call.1} parent=11 // pred_check
          %p376 = pneg %p143
        $region26: #{tpu_custom_call.1} parent=11 // pred_check_branch
          %378 = sbr.rel (%p376) target = $region28
        $region27: #{tpu_custom_call.1} parent=11 // pred_region
          %s380 = ssub.s32 28672, 28672
          %381 = vsyncadd [#allocation6], %s380
          %s382 = sshll.u32 [#allocation7], 4
          %s383 = int_to_ptr.vmem [resolvable:$true] %s382
          %388 = dma.hbm_to_vmem [thread:$0]  %s4, 28672, %s383, [#allocation6], 128, 128, 8
        $region28: #{tpu_custom_call.1} parent=11 // pred_fallthru
          _
        // Predicated region
        $region29: #{tpu_custom_call.1} parent=11 // pred_check
          %p389 = pneg %p164
        $region30: #{tpu_custom_call.1} parent=11 // pred_check_branch
          %391 = sbr.rel (%p389) target = $region32
        $region31: #{tpu_custom_call.1} parent=11 // pred_region
          %s393 = ssub.s32 224, 224
          %394 = vsyncadd [#allocation9], %s393
          %s395 = sshll.u32 [#allocation8], 4
          %s396 = int_to_ptr.vmem [resolvable:$true] %s395
          %401 = dma.hbm_to_vmem [thread:$0]  %s5, 224, %s396, [#allocation9], 32, 32, 2
        $region32: #{tpu_custom_call.1} parent=11 // pred_fallthru
          _
        // Predicated region
        $region33: #{tpu_custom_call.1} parent=11 // pred_check
          %p402 = pneg %p185
        $region34: #{tpu_custom_call.1} parent=11 // pred_check_branch
          %404 = sbr.rel (%p402) target = $region36
        $region35: #{tpu_custom_call.1} parent=11 // pred_region
          %s406 = ssub.s32 4096, 4096
          %407 = vsyncadd [#allocation9], %s406
          %s408 = sshll.u32 [#allocation10], 4
          %s409 = int_to_ptr.vmem [resolvable:$true] %s408
          %414 = dma.hbm_to_vmem [thread:$0]  %s6, 4096, %s409, [#allocation9], 128, 128, 8
        $region36: #{tpu_custom_call.1} parent=11 // pred_fallthru
          _
        // Predicated region
        $region37: #{tpu_custom_call.1} parent=11 // pred_check
          %p415 = pneg %p206
        $region38: #{tpu_custom_call.1} parent=11 // pred_check_branch
          %417 = sbr.rel (%p415) target = $region40
        $region39: #{tpu_custom_call.1} parent=11 // pred_region
          _
        $region40: #{tpu_custom_call.1} parent=11 // pred_fallthru
          _
        // Predicated region
        $region41: #{tpu_custom_call.1} parent=11 // pred_check
          %p418 = pneg %p227
        $region42: #{tpu_custom_call.1} parent=11 // pred_check_branch
          %420 = sbr.rel (%p418) target = $region44
        $region43: #{tpu_custom_call.1} parent=11 // pred_region
          %s422 = ssub.s32 2048, 2048
          %423 = vsyncadd [#allocation12], %s422
          %s424 = sshll.u32 [#allocation11], 4
          %s425 = int_to_ptr.vmem [resolvable:$true] %s424
          %430 = dma.hbm_to_vmem [thread:$0]  %s8, 2048, %s425, [#allocation12], 64, 64, 4
        $region44: #{tpu_custom_call.1} parent=11 // pred_fallthru
          _
        // Predicated region
        $region45: #{tpu_custom_call.1} parent=11 // pred_check
          %p431 = pneg %p248
        $region46: #{tpu_custom_call.1} parent=11 // pred_check_branch
          %433 = sbr.rel (%p431) target = $region48
        $region47: #{tpu_custom_call.1} parent=11 // pred_region
          %s435 = ssub.s32 2048, 2048
          %436 = vsyncadd [#allocation12], %s435
          %s437 = sshll.u32 [#allocation13], 4
          %s438 = int_to_ptr.vmem [resolvable:$true] %s437
          %443 = dma.hbm_to_vmem [thread:$0]  %s9, 2048, %s438, [#allocation12], 64, 64, 4
        $region48: #{tpu_custom_call.1} parent=11 // pred_fallthru
          _
        // Predicated region
        $region49: #{tpu_custom_call.1} parent=11 // pred_check
          %p444 = pneg %p269
        $region50: #{tpu_custom_call.1} parent=11 // pred_check_branch
          %446 = sbr.rel (%p444) target = $region52
        $region51: #{tpu_custom_call.1} parent=11 // pred_region
          %s448 = ssub.s32 1024, 1024
          %449 = vsyncadd [#allocation15], %s448
          %s450 = sshll.u32 [#allocation14], 4
          %s451 = int_to_ptr.vmem [resolvable:$true] %s450
          %456 = dma.hbm_to_vmem [thread:$0]  %s10, 1024, %s451, [#allocation15], 64, 64, 4
        $region52: #{tpu_custom_call.1} parent=11 // pred_fallthru
          _
        // Predicated region
        $region53: #{tpu_custom_call.1} parent=11 // pred_check
          %p457 = pneg %p290
        $region54: #{tpu_custom_call.1} parent=11 // pred_check_branch
          %459 = sbr.rel (%p457) target = $region56
        $region55: #{tpu_custom_call.1} parent=11 // pred_region
          _
        $region56: #{tpu_custom_call.1} parent=11 // pred_fallthru
          _
      $region12: #{tpu_custom_call.1} parent=5 // pred_fallthru
        _
      %p460 = scmp.lt.s32.totalorder %s33, 2
      // Predicated region
      $region57: #{tpu_custom_call.1} parent=5 // pred_check
        %p461 = pneg %p460
      $region58: #{tpu_custom_call.1} parent=5 // pred_check_branch
        %463 = sbr.rel (%p461) target = $region60
      $region59: #{tpu_custom_call.1} parent=5 // pred_region
        // Predicated region
        $region61: #{tpu_custom_call.1} parent=59 // pred_check
          %p464 = pneg %p53
        $region62: #{tpu_custom_call.1} parent=59 // pred_check_branch
          %466 = sbr.rel (%p464) target = $region64
        $region63: #{tpu_custom_call.1} parent=59 // pred_region
          %s467 = sand.u32 %s43, 1
          %s468 = scalar_lea.sflag [#allocation3], %s467
          %s469 = sand.u32 %s43, 1
          %s470 = smul.addr %s469, 128
          %s471 = scalar_lea.vmem [#allocation2], %s470
          %s472 = smul.u32 32, %s33
          %s474 = ssub.s32 2048, 2048
          %475 = vsyncadd %s468, %s474
          %s476 = smul.addr %s472, 64
          %s477 = scalar_lea.hbm %s0, %s476
          %s478 = sshll.u32 %s471, 4
          %s479 = int_to_ptr.vmem [resolvable:$true] %s478
          %484 = dma.hbm_to_vmem [thread:$0]  %s477, 2048, %s479, %s468, 64, 64, 4
        $region64: #{tpu_custom_call.1} parent=59 // pred_fallthru
          _
      $region60: #{tpu_custom_call.1} parent=5 // pred_fallthru
        _
      %p485 = scmp.le.s32.totalorder 1, %s33
      %p486 = scmp.lt.s32.totalorder %s33, 3
      %p487 = pnand %p485, %p486
      %p488 = pneg %p487
      // Predicated region
      $region65: #{tpu_custom_call.1} parent=5 // pred_check
        _
      $region66: #{tpu_custom_call.1} parent=5 // pred_check_branch
        %490 = sbr.rel (%p487) target = $region68
      $region67: #{tpu_custom_call.1} parent=5 // pred_region
        %s491 = ssub.s32 %s33, 1
        %s492 = sand.u32 %s46, 1
        %s493 = scalar_lea.sflag [#allocation3], %s492
        %s494 = sand.u32 %s46, 1
        %s495 = smul.addr %s494, 128
        %s496 = scalar_lea.vmem [#allocation2], %s495
        // Predicated region
        $region69: #{tpu_custom_call.1} parent=67 // pred_check
          %p497 = pneg %p59
        $region70: #{tpu_custom_call.1} parent=67 // pred_check_branch
          %499 = sbr.rel (%p497) target = $region72
        $region71: #{tpu_custom_call.1} parent=67 // pred_region
          %500 = dma.done %s493, 2048
        $region72: #{tpu_custom_call.1} parent=67 // pred_fallthru
          _
        // Predicated region
        $region73: #{tpu_custom_call.1} parent=67 // pred_check
          %p501 = pneg %p80
        $region74: #{tpu_custom_call.1} parent=67 // pred_check_branch
          %503 = sbr.rel (%p501) target = $region76
        $region75: #{tpu_custom_call.1} parent=67 // pred_region
          %504 = dma.done [#allocation6], 5120
        $region76: #{tpu_custom_call.1} parent=67 // pred_fallthru
          _
        // Predicated region
        $region77: #{tpu_custom_call.1} parent=67 // pred_check
          %p505 = pneg %p143
        $region78: #{tpu_custom_call.1} parent=67 // pred_check_branch
          %507 = sbr.rel (%p505) target = $region80
        $region79: #{tpu_custom_call.1} parent=67 // pred_region
          %508 = dma.done [#allocation6], 28672
        $region80: #{tpu_custom_call.1} parent=67 // pred_fallthru
          _
        // Predicated region
        $region81: #{tpu_custom_call.1} parent=67 // pred_check
          %p509 = pneg %p164
        $region82: #{tpu_custom_call.1} parent=67 // pred_check_branch
          %511 = sbr.rel (%p509) target = $region84
        $region83: #{tpu_custom_call.1} parent=67 // pred_region
          %512 = dma.done [#allocation9], 224
        $region84: #{tpu_custom_call.1} parent=67 // pred_fallthru
          _
        // Predicated region
        $region85: #{tpu_custom_call.1} parent=67 // pred_check
          %p513 = pneg %p185
        $region86: #{tpu_custom_call.1} parent=67 // pred_check_branch
          %515 = sbr.rel (%p513) target = $region88
        $region87: #{tpu_custom_call.1} parent=67 // pred_region
          %516 = dma.done [#allocation9], 4096
        $region88: #{tpu_custom_call.1} parent=67 // pred_fallthru
          _
        // Predicated region
        $region89: #{tpu_custom_call.1} parent=67 // pred_check
          %p517 = pneg %p227
        $region90: #{tpu_custom_call.1} parent=67 // pred_check_branch
          %519 = sbr.rel (%p517) target = $region92
        $region91: #{tpu_custom_call.1} parent=67 // pred_region
          %520 = dma.done [#allocation12], 2048
        $region92: #{tpu_custom_call.1} parent=67 // pred_fallthru
          _
        // Predicated region
        $region93: #{tpu_custom_call.1} parent=67 // pred_check
          %p521 = pneg %p248
        $region94: #{tpu_custom_call.1} parent=67 // pred_check_branch
          %523 = sbr.rel (%p521) target = $region96
        $region95: #{tpu_custom_call.1} parent=67 // pred_region
          %524 = dma.done [#allocation12], 2048
        $region96: #{tpu_custom_call.1} parent=67 // pred_fallthru
          _
        // Predicated region
        $region97: #{tpu_custom_call.1} parent=67 // pred_check
          %p525 = pneg %p269
        $region98: #{tpu_custom_call.1} parent=67 // pred_check_branch
          %527 = sbr.rel (%p525) target = $region100
        $region99: #{tpu_custom_call.1} parent=67 // pred_region
          %528 = dma.done [#allocation15], 1024
        $region100: #{tpu_custom_call.1} parent=67 // pred_fallthru
          _
        %s529 = sand.u32 %s46, 1
        %s530 = scalar_lea.sflag [#allocation3], %s529
        %s531 = sand.u32 %s46, 1
        %s532 = smul.addr %s531, 128
        %s533 = scalar_lea.vmem [#allocation2], %s532
        %p534 = pneg %p59
        %p535 = pneg %p56
        %p536 = pneg %p80
        %p537 = pneg %p77
        %p538 = pneg %p101
        %p539 = pneg %p98
        %p540 = pneg %p122
        %p541 = pneg %p119
        %p542 = pneg %p143
        %p543 = pneg %p140
        %p544 = pneg %p164
        %p545 = pneg %p161
        %p546 = pneg %p185
        %p547 = pneg %p182
        %p548 = pneg %p206
        %p549 = pneg %p203
        %p550 = pneg %p227
        %p551 = pneg %p224
        %p552 = pneg %p248
        %p553 = pneg %p245
        %p554 = pneg %p269
        %p555 = pneg %p266
        %p556 = pneg %p290
        %p557 = pneg %p287
        %p558 = pneg %p316
        %p559 = pneg %p313
        %s560 = sand.u32 %s303, 1
        %s561 = scalar_lea.sflag [#allocation4], %s560
        %s562 = sand.u32 %s303, 1
        %s563 = smul.addr %s562, 256
        %s564 = scalar_lea.vmem [#allocation16], %s563
        %p565 = pneg %p342
        %p566 = pneg %p339
        %s567 = sand.u32 %s329, 1
        %s568 = scalar_lea.sflag [#allocation18], %s567
        %s569 = sand.u32 %s329, 1
        %s570 = smul.addr %s569, 512
        %s571 = scalar_lea.vmem [#allocation17], %s570
        %s572 = smul.u32 32, %s38
        %s573 = smul.u32 32, %s38
        %s574 = smul.u32 32, %s38
        %v576 = vld [vmem:[%s496] sm:$0xf]
        %v577 = vld [vmem:[%s496 + $0x4] sm:$0xf]
        %v578 = vld [vmem:[%s496 + $0x8] sm:$0xf]
        %v579 = vld [vmem:[%s496 + $0xc] sm:$0xf]
        %v580 = vld [vmem:[%s496 + $0x10] sm:$0xf]
        %v581 = vld [vmem:[%s496 + $0x14] sm:$0xf]
        %v582 = vld [vmem:[%s496 + $0x18] sm:$0xf]
        %v583 = vld [vmem:[%s496 + $0x1c] sm:$0xf]
        %v584 = vld [vmem:[%s496 + $0x20] sm:$0xf]
        %v585 = vld [vmem:[%s496 + $0x24] sm:$0xf]
        %v586 = vld [vmem:[%s496 + $0x28] sm:$0xf]
        %v587 = vld [vmem:[%s496 + $0x2c] sm:$0xf]
        %v588 = vld [vmem:[%s496 + $0x30] sm:$0xf]
        %v589 = vld [vmem:[%s496 + $0x34] sm:$0xf]
        %v590 = vld [vmem:[%s496 + $0x38] sm:$0xf]
        %v591 = vld [vmem:[%s496 + $0x3c] sm:$0xf]
        %v592 = vld [vmem:[%s496 + $0x40] sm:$0xf]
        %v593 = vld [vmem:[%s496 + $0x44] sm:$0xf]
        %v594 = vld [vmem:[%s496 + $0x48] sm:$0xf]
        %v595 = vld [vmem:[%s496 + $0x4c] sm:$0xf]
        %v596 = vld [vmem:[%s496 + $0x50] sm:$0xf]
        %v597 = vld [vmem:[%s496 + $0x54] sm:$0xf]
        %v598 = vld [vmem:[%s496 + $0x58] sm:$0xf]
        %v599 = vld [vmem:[%s496 + $0x5c] sm:$0xf]
        %v600 = vld [vmem:[%s496 + $0x60] sm:$0xf]
        %v601 = vld [vmem:[%s496 + $0x64] sm:$0xf]
        %v602 = vld [vmem:[%s496 + $0x68] sm:$0xf]
        %v603 = vld [vmem:[%s496 + $0x6c] sm:$0xf]
        %v604 = vld [vmem:[%s496 + $0x70] sm:$0xf]
        %v605 = vld [vmem:[%s496 + $0x74] sm:$0xf]
        %v606 = vld [vmem:[%s496 + $0x78] sm:$0xf]
        %v607 = vld [vmem:[%s496 + $0x7c] sm:$0xf]
        %v608 = vld [vmem:[#allocation5] sm:$0xff]
        %v609 = vld [vmem:[#allocation5 + $0x8] sm:$0xff]
        %v610 = vld [vmem:[#allocation5 + $0x10] sm:$0xf]
        %v611 = vld [vmem:[#allocation5 + $0x14] sm:$0xff]
        %v612 = vld [vmem:[#allocation5 + $0x1c] sm:$0xff]
        %v613 = vld [vmem:[#allocation5 + $0x24] sm:$0xf]
        %v614 = vld [vmem:[#allocation5 + $0x28] sm:$0xff]
        %v615 = vld [vmem:[#allocation5 + $0x30] sm:$0xff]
        %v616 = vld [vmem:[#allocation5 + $0x38] sm:$0xf]
        %v617 = vld [vmem:[#allocation5 + $0x3c] sm:$0xff]
        %v618 = vld [vmem:[#allocation5 + $0x44] sm:$0xff]
        %v619 = vld [vmem:[#allocation5 + $0x4c] sm:$0xf]
        %v620 = vld [vmem:[#allocation5 + $0x50] sm:$0xff]
        %v621 = vld [vmem:[#allocation5 + $0x58] sm:$0xff]
        %v622 = vld [vmem:[#allocation5 + $0x60] sm:$0xf]
        %v623 = vld [vmem:[#allocation5 + $0x64] sm:$0xff]
        %v624 = vld [vmem:[#allocation5 + $0x6c] sm:$0xff]
        %v625 = vld [vmem:[#allocation5 + $0x74] sm:$0xf]
        %v626 = vld [vmem:[#allocation5 + $0x78] sm:$0xff]
        %v627 = vld [vmem:[#allocation5 + $0x80] sm:$0xff]
        %v628 = vld [vmem:[#allocation5 + $0x88] sm:$0xf]
        %v629 = vld [vmem:[#allocation5 + $0x8c] sm:$0xff]
        %v630 = vld [vmem:[#allocation5 + $0x94] sm:$0xff]
        %v631 = vld [vmem:[#allocation5 + $0x9c] sm:$0xf]
        %v632 = vld [vmem:[#allocation5 + $0xa0] sm:$0xff]
        %v633 = vld [vmem:[#allocation5 + $0xa8] sm:$0xff]
        %v634 = vld [vmem:[#allocation5 + $0xb0] sm:$0xf]
        %v635 = vld [vmem:[#allocation5 + $0xb4] sm:$0xff]
        %v636 = vld [vmem:[#allocation5 + $0xbc] sm:$0xff]
        %v637 = vld [vmem:[#allocation5 + $0xc4] sm:$0xf]
        %v638 = vld [vmem:[#allocation5 + $0xc8] sm:$0xff]
        %v639 = vld [vmem:[#allocation5 + $0xd0] sm:$0xff]
        %v640 = vld [vmem:[#allocation5 + $0xd8] sm:$0xf]
        %v641 = vld [vmem:[#allocation5 + $0xdc] sm:$0xff]
        %v642 = vld [vmem:[#allocation5 + $0xe4] sm:$0xff]
        %v643 = vld [vmem:[#allocation5 + $0xec] sm:$0xf]
        %v644 = vld [vmem:[#allocation5 + $0xf0] sm:$0xff]
        %v645 = vld [vmem:[#allocation5 + $0xf8] sm:$0xff]
        %v646 = vld [vmem:[#allocation5 + $0x100] sm:$0xf]
        %v647 = vld [vmem:[#allocation5 + $0x104] sm:$0xff]
        %v648 = vld [vmem:[#allocation5 + $0x10c] sm:$0xff]
        %v649 = vld [vmem:[#allocation5 + $0x114] sm:$0xf]
        %v650 = vld [vmem:[#allocation5 + $0x118] sm:$0xff]
        %v651 = vld [vmem:[#allocation5 + $0x120] sm:$0xff]
        %v652 = vld [vmem:[#allocation5 + $0x128] sm:$0xf]
        %v653 = vld [vmem:[#allocation5 + $0x12c] sm:$0xff]
        %v654 = vld [vmem:[#allocation5 + $0x134] sm:$0xff]
        %v655 = vld [vmem:[#allocation5 + $0x13c] sm:$0xf]
        %v688 = vunpack.c.l.b16 %v576
        %v689 = vunpack.c.l.b16 %v577
        %v690 = vunpack.c.l.b16 %v578
        %v691 = vunpack.c.l.b16 %v579
        %v692 = vunpack.c.l.b16 %v580
        %v693 = vunpack.c.l.b16 %v581
        %v694 = vunpack.c.l.b16 %v582
        %v695 = vunpack.c.l.b16 %v583
        %v696 = vunpack.c.l.b16 %v584
        %v697 = vunpack.c.l.b16 %v585
        %v698 = vunpack.c.l.b16 %v586
        %v699 = vunpack.c.l.b16 %v587
        %v700 = vunpack.c.l.b16 %v588
        %v701 = vunpack.c.l.b16 %v589
        %v702 = vunpack.c.l.b16 %v590
        %v703 = vunpack.c.l.b16 %v591
        %v704 = vunpack.c.l.b16 %v592
        %v705 = vunpack.c.l.b16 %v593
        %v706 = vunpack.c.l.b16 %v594
        %v707 = vunpack.c.l.b16 %v595
        %v708 = vunpack.c.l.b16 %v596
        %v709 = vunpack.c.l.b16 %v597
        %v710 = vunpack.c.l.b16 %v598
        %v711 = vunpack.c.l.b16 %v599
        %v712 = vunpack.c.l.b16 %v600
        %v713 = vunpack.c.l.b16 %v601
        %v714 = vunpack.c.l.b16 %v602
        %v715 = vunpack.c.l.b16 %v603
        %v716 = vunpack.c.l.b16 %v604
        %v717 = vunpack.c.l.b16 %v605
        %v718 = vunpack.c.l.b16 %v606
        %v719 = vunpack.c.l.b16 %v607
        %v720 = vpack.c.b16 %v689, %v688
        %v721 = vpack.c.b16 %v691, %v690
        %v722 = vpack.c.b16 %v693, %v692
        %v723 = vpack.c.b16 %v695, %v694
        %v724 = vpack.c.b16 %v697, %v696
        %v725 = vpack.c.b16 %v699, %v698
        %v726 = vpack.c.b16 %v701, %v700
        %v727 = vpack.c.b16 %v703, %v702
        %v728 = vpack.c.b16 %v705, %v704
        %v729 = vpack.c.b16 %v707, %v706
        %v730 = vpack.c.b16 %v709, %v708
        %v731 = vpack.c.b16 %v711, %v710
        %v732 = vpack.c.b16 %v713, %v712
        %v733 = vpack.c.b16 %v715, %v714
        %v734 = vpack.c.b16 %v717, %v716
        %v735 = vpack.c.b16 %v719, %v718
        %v800 = vunpack.c.l.b16 %v608
        %v801 = vunpack.c.h.b16 %v608
        %v802 = vunpack.c.l.b16 %v609
        %v803 = vunpack.c.h.b16 %v609
        %v804 = vunpack.c.l.b16 %v610
        %v805 = vunpack.c.l.b16 %v611
        %v806 = vunpack.c.h.b16 %v611
        %v807 = vunpack.c.l.b16 %v612
        %v808 = vunpack.c.h.b16 %v612
        %v809 = vunpack.c.l.b16 %v613
        %v810 = vunpack.c.l.b16 %v614
        %v811 = vunpack.c.h.b16 %v614
        %v812 = vunpack.c.l.b16 %v615
        %v813 = vunpack.c.h.b16 %v615
        %v814 = vunpack.c.l.b16 %v616
        %v815 = vunpack.c.l.b16 %v617
        %v816 = vunpack.c.h.b16 %v617
        %v817 = vunpack.c.l.b16 %v618
        %v818 = vunpack.c.h.b16 %v618
        %v819 = vunpack.c.l.b16 %v619
        %v820 = vunpack.c.l.b16 %v620
        %v821 = vunpack.c.h.b16 %v620
        %v822 = vunpack.c.l.b16 %v621
        %v823 = vunpack.c.h.b16 %v621
        %v824 = vunpack.c.l.b16 %v622
        %v825 = vunpack.c.l.b16 %v623
        %v826 = vunpack.c.h.b16 %v623
        %v827 = vunpack.c.l.b16 %v624
        %v828 = vunpack.c.h.b16 %v624
        %v829 = vunpack.c.l.b16 %v625
        %v830 = vunpack.c.l.b16 %v626
        %v831 = vunpack.c.h.b16 %v626
        %v832 = vunpack.c.l.b16 %v627
        %v833 = vunpack.c.h.b16 %v627
        %v834 = vunpack.c.l.b16 %v628
        %v835 = vunpack.c.l.b16 %v629
        %v836 = vunpack.c.h.b16 %v629
        %v837 = vunpack.c.l.b16 %v630
        %v838 = vunpack.c.h.b16 %v630
        %v839 = vunpack.c.l.b16 %v631
        %v840 = vunpack.c.l.b16 %v632
        %v841 = vunpack.c.h.b16 %v632
        %v842 = vunpack.c.l.b16 %v633
        %v843 = vunpack.c.h.b16 %v633
        %v844 = vunpack.c.l.b16 %v634
        %v845 = vunpack.c.l.b16 %v635
        %v846 = vunpack.c.h.b16 %v635
        %v847 = vunpack.c.l.b16 %v636
        %v848 = vunpack.c.h.b16 %v636
        %v849 = vunpack.c.l.b16 %v637
        %v850 = vunpack.c.l.b16 %v638
        %v851 = vunpack.c.h.b16 %v638
        %v852 = vunpack.c.l.b16 %v639
        %v853 = vunpack.c.h.b16 %v639
        %v854 = vunpack.c.l.b16 %v640
        %v855 = vunpack.c.l.b16 %v641
        %v856 = vunpack.c.h.b16 %v641
        %v857 = vunpack.c.l.b16 %v642
        %v858 = vunpack.c.h.b16 %v642
        %v859 = vunpack.c.l.b16 %v643
        %v860 = vunpack.c.l.b16 %v644
        %v861 = vunpack.c.h.b16 %v644
        %v862 = vunpack.c.l.b16 %v645
        %v863 = vunpack.c.h.b16 %v645
        %v864 = vunpack.c.l.b16 %v646
        %v865 = vunpack.c.l.b16 %v647
        %v866 = vunpack.c.h.b16 %v647
        %v867 = vunpack.c.l.b16 %v648
        %v868 = vunpack.c.h.b16 %v648
        %v869 = vunpack.c.l.b16 %v649
        %v870 = vunpack.c.l.b16 %v650
        %v871 = vunpack.c.h.b16 %v650
        %v872 = vunpack.c.l.b16 %v651
        %v873 = vunpack.c.h.b16 %v651
        %v874 = vunpack.c.l.b16 %v652
        %v875 = vunpack.c.l.b16 %v653
        %v876 = vunpack.c.h.b16 %v653
        %v877 = vunpack.c.l.b16 %v654
        %v878 = vunpack.c.h.b16 %v654
        %v879 = vunpack.c.l.b16 %v655
        %v880 = vpack.c.b16 %v805, %v800
        %v881 = vpack.c.b16 %v806, %v801
        %v882 = vpack.c.b16 %v807, %v802
        %v883 = vpack.c.b16 %v808, %v803
        %v884 = vpack.c.b16 %v809, %v804
        %v885 = vpack.c.b16 %v815, %v810
        %v886 = vpack.c.b16 %v816, %v811
        %v887 = vpack.c.b16 %v817, %v812
        %v888 = vpack.c.b16 %v818, %v813
        %v889 = vpack.c.b16 %v819, %v814
        %v890 = vpack.c.b16 %v825, %v820
        %v891 = vpack.c.b16 %v826, %v821
        %v892 = vpack.c.b16 %v827, %v822
        %v893 = vpack.c.b16 %v828, %v823
        %v894 = vpack.c.b16 %v829, %v824
        %v895 = vpack.c.b16 %v835, %v830
        %v896 = vpack.c.b16 %v836, %v831
        %v897 = vpack.c.b16 %v837, %v832
        %v898 = vpack.c.b16 %v838, %v833
        %v899 = vpack.c.b16 %v839, %v834
        %v900 = vpack.c.b16 %v845, %v840
        %v901 = vpack.c.b16 %v846, %v841
        %v902 = vpack.c.b16 %v847, %v842
        %v903 = vpack.c.b16 %v848, %v843
        %v904 = vpack.c.b16 %v849, %v844
        %v905 = vpack.c.b16 %v855, %v850
        %v906 = vpack.c.b16 %v856, %v851
        %v907 = vpack.c.b16 %v857, %v852
        %v908 = vpack.c.b16 %v858, %v853
        %v909 = vpack.c.b16 %v859, %v854
        %v910 = vpack.c.b16 %v865, %v860
        %v911 = vpack.c.b16 %v866, %v861
        %v912 = vpack.c.b16 %v867, %v862
        %v913 = vpack.c.b16 %v868, %v863
        %v914 = vpack.c.b16 %v869, %v864
        %v915 = vpack.c.b16 %v875, %v870
        %v916 = vpack.c.b16 %v876, %v871
        %v917 = vpack.c.b16 %v877, %v872
        %v918 = vpack.c.b16 %v878, %v873
        %v919 = vpack.c.b16 %v879, %v874
        %960 = vmatprep.subr.bf16.mxu0 %v916
        %961 = vmatpush1.bf16.msra.mxu0 %v915
        %962 = vmatprep.subr.bf16.mxu0 %v911
        %963 = vmatpush1.bf16.msra.mxu0 %v910
        %964 = vmatprep.subr.bf16.mxu0 %v906
        %965 = vmatpush1.bf16.msra.mxu0 %v905
        %966 = vmatprep.subr.bf16.mxu0 %v901
        %967 = vmatpush1.bf16.msra.mxu0 %v900
        %968 = vmatprep.subr.bf16.mxu0 %v896
        %969 = vmatpush1.bf16.msra.mxu0 %v895
        %970 = vmatprep.subr.bf16.mxu0 %v891
        %971 = vmatpush1.bf16.msra.mxu0 %v890
        %972 = vmatprep.subr.bf16.mxu0 %v886
        %973 = vmatpush1.bf16.msra.mxu0 %v885
        %974 = vmatprep.subr.bf16.mxu0 %v881
        %975 = vmatpush1.bf16.msra.mxu0 %v880
        %976 = vmatprep.subr.bf16.mxu0 0
        %977 = vmatpush2.bf16.msra.mxu0 0
        %978 = vmatprep.subr.bf16.mxu0 0
        %979 = vmatpush2.bf16.msra.mxu0 0
        %980 = vmatprep.subr.bf16.mxu0 0
        %981 = vmatpush2.bf16.msra.mxu0 0
        %982 = vmatprep.subr.bf16.mxu0 0
        %983 = vmatpush2.bf16.msra.mxu0 0
        %984 = vmatprep.subr.bf16.mxu0 0
        %985 = vmatpush2.bf16.msra.mxu0 0
        %986 = vmatprep.subr.bf16.mxu0 0
        %987 = vmatpush2.bf16.msra.mxu0 0
        %988 = vmatprep.subr.bf16.mxu0 0
        %989 = vmatpush2.bf16.msra.mxu0 0
        %990 = vmatprep.subr.bf16.mxu0 0
        %991 = vmatpush2.bf16.msra.mxu0 0
        %992 = vmatprep.mubr.bf16.mxu0 0
        %993 = vmatmul.mubr.bf16.gmra.mxu0 %v720
        %v994 = vpop.f32.mrf.mxu0
        %v995 = vadd.f32 0.0, %v994
        %v996 = vpop.f32.mrf.mxu0
        %v997 = vadd.f32 0.0, %v996
        %v998 = vpop.f32.mrf.mxu0
        %v999 = vadd.f32 0.0, %v998
        %v1000 = vpop.f32.mrf.mxu0
        %v1001 = vadd.f32 0.0, %v1000
        %1002 = vmatprep.mubr.bf16.mxu0 0
        %1003 = vmatmul.mubr.bf16.gmra.mxu0 %v721
        %v1004 = vpop.f32.mrf.mxu0
        %v1005 = vadd.f32 0.0, %v1004
        %v1006 = vpop.f32.mrf.mxu0
        %v1007 = vadd.f32 0.0, %v1006
        %v1008 = vpop.f32.mrf.mxu0
        %v1009 = vadd.f32 0.0, %v1008
        %v1010 = vpop.f32.mrf.mxu0
        %v1011 = vadd.f32 0.0, %v1010
        %1012 = vmatprep.mubr.bf16.mxu0 0
        %1013 = vmatmul.mubr.bf16.gmra.mxu0 %v722
        %v1014 = vpop.f32.mrf.mxu0
        %v1015 = vadd.f32 0.0, %v1014
        %v1016 = vpop.f32.mrf.mxu0
        %v1017 = vadd.f32 0.0, %v1016
        %v1018 = vpop.f32.mrf.mxu0
        %v1019 = vadd.f32 0.0, %v1018
        %v1020 = vpop.f32.mrf.mxu0
        %v1021 = vadd.f32 0.0, %v1020
        %1022 = vmatprep.mubr.bf16.mxu0 0
        %1023 = vmatmul.mubr.bf16.gmra.mxu0 %v723
        %v1024 = vpop.f32.mrf.mxu0
        %v1025 = vadd.f32 0.0, %v1024
        %v1026 = vpop.f32.mrf.mxu0
        %v1027 = vadd.f32 0.0, %v1026
        %v1028 = vpop.f32.mrf.mxu0
        %v1029 = vadd.f32 0.0, %v1028
        %v1030 = vpop.f32.mrf.mxu0
        %v1031 = vadd.f32 0.0, %v1030
        %1032 = vmatprep.mubr.bf16.mxu0 0
        %1033 = vmatmul.mubr.bf16.gmra.mxu0 %v724
        %v1034 = vpop.f32.mrf.mxu0
        %v1035 = vadd.f32 0.0, %v1034
        %v1036 = vpop.f32.mrf.mxu0
        %v1037 = vadd.f32 0.0, %v1036
        %v1038 = vpop.f32.mrf.mxu0
        %v1039 = vadd.f32 0.0, %v1038
        %v1040 = vpop.f32.mrf.mxu0
        %v1041 = vadd.f32 0.0, %v1040
        %1042 = vmatprep.mubr.bf16.mxu0 0
        %1043 = vmatmul.mubr.bf16.gmra.mxu0 %v725
        %v1044 = vpop.f32.mrf.mxu0
        %v1045 = vadd.f32 0.0, %v1044
        %v1046 = vpop.f32.mrf.mxu0
        %v1047 = vadd.f32 0.0, %v1046
        %v1048 = vpop.f32.mrf.mxu0
        %v1049 = vadd.f32 0.0, %v1048
        %v1050 = vpop.f32.mrf.mxu0
        %v1051 = vadd.f32 0.0, %v1050
        %1052 = vmatprep.mubr.bf16.mxu0 0
        %1053 = vmatmul.mubr.bf16.gmra.mxu0 %v726
        %v1054 = vpop.f32.mrf.mxu0
        %v1055 = vadd.f32 0.0, %v1054
        %v1056 = vpop.f32.mrf.mxu0
        %v1057 = vadd.f32 0.0, %v1056
        %v1058 = vpop.f32.mrf.mxu0
        %v1059 = vadd.f32 0.0, %v1058
        %v1060 = vpop.f32.mrf.mxu0
        %v1061 = vadd.f32 0.0, %v1060
        %1062 = vmatprep.mubr.bf16.mxu0 0
        %1063 = vmatmul.mubr.bf16.gmra.mxu0 %v727
        %v1064 = vpop.f32.mrf.mxu0
        %v1065 = vadd.f32 0.0, %v1064
        %v1066 = vpop.f32.mrf.mxu0
        %v1067 = vadd.f32 0.0, %v1066
        %v1068 = vpop.f32.mrf.mxu0
        %v1069 = vadd.f32 0.0, %v1068
        %v1070 = vpop.f32.mrf.mxu0
        %v1071 = vadd.f32 0.0, %v1070
        %1072 = vmatprep.mubr.bf16.mxu0 0
        %1073 = vmatmul.mubr.bf16.gmra.mxu0 %v728
        %v1074 = vpop.f32.mrf.mxu0
        %v1075 = vadd.f32 0.0, %v1074
        %v1076 = vpop.f32.mrf.mxu0
        %v1077 = vadd.f32 0.0, %v1076
        %v1078 = vpop.f32.mrf.mxu0
        %v1079 = vadd.f32 0.0, %v1078
        %v1080 = vpop.f32.mrf.mxu0
        %v1081 = vadd.f32 0.0, %v1080
        %1082 = vmatprep.mubr.bf16.mxu0 0
        %1083 = vmatmul.mubr.bf16.gmra.mxu0 %v729
        %v1084 = vpop.f32.mrf.mxu0
        %v1085 = vadd.f32 0.0, %v1084
        %v1086 = vpop.f32.mrf.mxu0
        %v1087 = vadd.f32 0.0, %v1086
        %v1088 = vpop.f32.mrf.mxu0
        %v1089 = vadd.f32 0.0, %v1088
        %v1090 = vpop.f32.mrf.mxu0
        %v1091 = vadd.f32 0.0, %v1090
        %1092 = vmatprep.mubr.bf16.mxu0 0
        %1093 = vmatmul.mubr.bf16.gmra.mxu0 %v730
        %v1094 = vpop.f32.mrf.mxu0
        %v1095 = vadd.f32 0.0, %v1094
        %v1096 = vpop.f32.mrf.mxu0
        %v1097 = vadd.f32 0.0, %v1096
        %v1098 = vpop.f32.mrf.mxu0
        %v1099 = vadd.f32 0.0, %v1098
        %v1100 = vpop.f32.mrf.mxu0
        %v1101 = vadd.f32 0.0, %v1100
        %1102 = vmatprep.mubr.bf16.mxu0 0
        %1103 = vmatmul.mubr.bf16.gmra.mxu0 %v731
        %v1104 = vpop.f32.mrf.mxu0
        %v1105 = vadd.f32 0.0, %v1104
        %v1106 = vpop.f32.mrf.mxu0
        %v1107 = vadd.f32 0.0, %v1106
        %v1108 = vpop.f32.mrf.mxu0
        %v1109 = vadd.f32 0.0, %v1108
        %v1110 = vpop.f32.mrf.mxu0
        %v1111 = vadd.f32 0.0, %v1110
        %1112 = vmatprep.mubr.bf16.mxu0 0
        %1113 = vmatmul.mubr.bf16.gmra.mxu0 %v732
        %v1114 = vpop.f32.mrf.mxu0
        %v1115 = vadd.f32 0.0, %v1114
        %v1116 = vpop.f32.mrf.mxu0
        %v1117 = vadd.f32 0.0, %v1116
        %v1118 = vpop.f32.mrf.mxu0
        %v1119 = vadd.f32 0.0, %v1118
        %v1120 = vpop.f32.mrf.mxu0
        %v1121 = vadd.f32 0.0, %v1120
        %1122 = vmatprep.mubr.bf16.mxu0 0
        %1123 = vmatmul.mubr.bf16.gmra.mxu0 %v733
        %v1124 = vpop.f32.mrf.mxu0
        %v1125 = vadd.f32 0.0, %v1124
        %v1126 = vpop.f32.mrf.mxu0
        %v1127 = vadd.f32 0.0, %v1126
        %v1128 = vpop.f32.mrf.mxu0
        %v1129 = vadd.f32 0.0, %v1128
        %v1130 = vpop.f32.mrf.mxu0
        %v1131 = vadd.f32 0.0, %v1130
        %1132 = vmatprep.mubr.bf16.mxu0 0
        %1133 = vmatmul.mubr.bf16.gmra.mxu0 %v734
        %v1134 = vpop.f32.mrf.mxu0
        %v1135 = vadd.f32 0.0, %v1134
        %v1136 = vpop.f32.mrf.mxu0
        %v1137 = vadd.f32 0.0, %v1136
        %v1138 = vpop.f32.mrf.mxu0
        %v1139 = vadd.f32 0.0, %v1138
        %v1140 = vpop.f32.mrf.mxu0
        %v1141 = vadd.f32 0.0, %v1140
        %1142 = vmatprep.mubr.bf16.mxu0 0
        %1143 = vmatmul.mubr.bf16.gmra.mxu0 %v735
        %v1144 = vpop.f32.mrf.mxu0
        %v1145 = vadd.f32 0.0, %v1144
        %v1146 = vpop.f32.mrf.mxu0
        %v1147 = vadd.f32 0.0, %v1146
        %v1148 = vpop.f32.mrf.mxu0
        %v1149 = vadd.f32 0.0, %v1148
        %v1150 = vpop.f32.mrf.mxu0
        %v1151 = vadd.f32 0.0, %v1150
        %1152 = vdwg.mxu0
        %1153 = vmatprep.subr.bf16.mxu0 %v918
        %1154 = vmatpush1.bf16.msra.mxu0 %v917
        %1155 = vmatprep.subr.bf16.mxu0 %v913
        %1156 = vmatpush1.bf16.msra.mxu0 %v912
        %1157 = vmatprep.subr.bf16.mxu0 %v908
        %1158 = vmatpush1.bf16.msra.mxu0 %v907
        %1159 = vmatprep.subr.bf16.mxu0 %v903
        %1160 = vmatpush1.bf16.msra.mxu0 %v902
        %1161 = vmatprep.subr.bf16.mxu0 %v898
        %1162 = vmatpush1.bf16.msra.mxu0 %v897
        %1163 = vmatprep.subr.bf16.mxu0 %v893
        %1164 = vmatpush1.bf16.msra.mxu0 %v892
        %1165 = vmatprep.subr.bf16.mxu0 %v888
        %1166 = vmatpush1.bf16.msra.mxu0 %v887
        %1167 = vmatprep.subr.bf16.mxu0 %v883
        %1168 = vmatpush1.bf16.msra.mxu0 %v882
        %1169 = vmatprep.subr.bf16.mxu0 0
        %1170 = vmatpush2.bf16.msra.mxu0 0
        %1171 = vmatprep.subr.bf16.mxu0 0
        %1172 = vmatpush2.bf16.msra.mxu0 0
        %1173 = vmatprep.subr.bf16.mxu0 0
        %1174 = vmatpush2.bf16.msra.mxu0 0
        %1175 = vmatprep.subr.bf16.mxu0 0
        %1176 = vmatpush2.bf16.msra.mxu0 0
        %1177 = vmatprep.subr.bf16.mxu0 0
        %1178 = vmatpush2.bf16.msra.mxu0 0
        %1179 = vmatprep.subr.bf16.mxu0 0
        %1180 = vmatpush2.bf16.msra.mxu0 0
        %1181 = vmatprep.subr.bf16.mxu0 0
        %1182 = vmatpush2.bf16.msra.mxu0 0
        %1183 = vmatprep.subr.bf16.mxu0 0
        %1184 = vmatpush2.bf16.msra.mxu0 0
        %1185 = vmatprep.mubr.bf16.mxu0 0
        %1186 = vmatmul.mubr.bf16.gmra.mxu0 %v720
        %v1187 = vpop.f32.mrf.mxu0
        %v1188 = vadd.f32 0.0, %v1187
        %v1189 = vpop.f32.mrf.mxu0
        %v1190 = vadd.f32 0.0, %v1189
        %v1191 = vpop.f32.mrf.mxu0
        %v1192 = vadd.f32 0.0, %v1191
        %v1193 = vpop.f32.mrf.mxu0
        %v1194 = vadd.f32 0.0, %v1193
        %1195 = vmatprep.mubr.bf16.mxu0 0
        %1196 = vmatmul.mubr.bf16.gmra.mxu0 %v721
        %v1197 = vpop.f32.mrf.mxu0
        %v1198 = vadd.f32 0.0, %v1197
        %v1199 = vpop.f32.mrf.mxu0
        %v1200 = vadd.f32 0.0, %v1199
        %v1201 = vpop.f32.mrf.mxu0
        %v1202 = vadd.f32 0.0, %v1201
        %v1203 = vpop.f32.mrf.mxu0
        %v1204 = vadd.f32 0.0, %v1203
        %1205 = vmatprep.mubr.bf16.mxu0 0
        %1206 = vmatmul.mubr.bf16.gmra.mxu0 %v722
        %v1207 = vpop.f32.mrf.mxu0
        %v1208 = vadd.f32 0.0, %v1207
        %v1209 = vpop.f32.mrf.mxu0
        %v1210 = vadd.f32 0.0, %v1209
        %v1211 = vpop.f32.mrf.mxu0
        %v1212 = vadd.f32 0.0, %v1211
        %v1213 = vpop.f32.mrf.mxu0
        %v1214 = vadd.f32 0.0, %v1213
        %1215 = vmatprep.mubr.bf16.mxu0 0
        %1216 = vmatmul.mubr.bf16.gmra.mxu0 %v723
        %v1217 = vpop.f32.mrf.mxu0
        %v1218 = vadd.f32 0.0, %v1217
        %v1219 = vpop.f32.mrf.mxu0
        %v1220 = vadd.f32 0.0, %v1219
        %v1221 = vpop.f32.mrf.mxu0
        %v1222 = vadd.f32 0.0, %v1221
        %v1223 = vpop.f32.mrf.mxu0
        %v1224 = vadd.f32 0.0, %v1223
        %1225 = vmatprep.mubr.bf16.mxu0 0
        %1226 = vmatmul.mubr.bf16.gmra.mxu0 %v724
        %v1227 = vpop.f32.mrf.mxu0
        %v1228 = vadd.f32 0.0, %v1227
        %v1229 = vpop.f32.mrf.mxu0
        %v1230 = vadd.f32 0.0, %v1229
        %v1231 = vpop.f32.mrf.mxu0
        %v1232 = vadd.f32 0.0, %v1231
        %v1233 = vpop.f32.mrf.mxu0
        %v1234 = vadd.f32 0.0, %v1233
        %1235 = vmatprep.mubr.bf16.mxu0 0
        %1236 = vmatmul.mubr.bf16.gmra.mxu0 %v725
        %v1237 = vpop.f32.mrf.mxu0
        %v1238 = vadd.f32 0.0, %v1237
        %v1239 = vpop.f32.mrf.mxu0
        %v1240 = vadd.f32 0.0, %v1239
        %v1241 = vpop.f32.mrf.mxu0
        %v1242 = vadd.f32 0.0, %v1241
        %v1243 = vpop.f32.mrf.mxu0
        %v1244 = vadd.f32 0.0, %v1243
        %1245 = vmatprep.mubr.bf16.mxu0 0
        %1246 = vmatmul.mubr.bf16.gmra.mxu0 %v726
        %v1247 = vpop.f32.mrf.mxu0
        %v1248 = vadd.f32 0.0, %v1247
        %v1249 = vpop.f32.mrf.mxu0
        %v1250 = vadd.f32 0.0, %v1249
        %v1251 = vpop.f32.mrf.mxu0
        %v1252 = vadd.f32 0.0, %v1251
        %v1253 = vpop.f32.mrf.mxu0
        %v1254 = vadd.f32 0.0, %v1253
        %1255 = vmatprep.mubr.bf16.mxu0 0
        %1256 = vmatmul.mubr.bf16.gmra.mxu0 %v727
        %v1257 = vpop.f32.mrf.mxu0
        %v1258 = vadd.f32 0.0, %v1257
        %v1259 = vpop.f32.mrf.mxu0
        %v1260 = vadd.f32 0.0, %v1259
        %v1261 = vpop.f32.mrf.mxu0
        %v1262 = vadd.f32 0.0, %v1261
        %v1263 = vpop.f32.mrf.mxu0
        %v1264 = vadd.f32 0.0, %v1263
        %1265 = vmatprep.mubr.bf16.mxu0 0
        %1266 = vmatmul.mubr.bf16.gmra.mxu0 %v728
        %v1267 = vpop.f32.mrf.mxu0
        %v1268 = vadd.f32 0.0, %v1267
        %v1269 = vpop.f32.mrf.mxu0
        %v1270 = vadd.f32 0.0, %v1269
        %v1271 = vpop.f32.mrf.mxu0
        %v1272 = vadd.f32 0.0, %v1271
        %v1273 = vpop.f32.mrf.mxu0
        %v1274 = vadd.f32 0.0, %v1273
        %1275 = vmatprep.mubr.bf16.mxu0 0
        %1276 = vmatmul.mubr.bf16.gmra.mxu0 %v729
        %v1277 = vpop.f32.mrf.mxu0
        %v1278 = vadd.f32 0.0, %v1277
        %v1279 = vpop.f32.mrf.mxu0
        %v1280 = vadd.f32 0.0, %v1279
        %v1281 = vpop.f32.mrf.mxu0
        %v1282 = vadd.f32 0.0, %v1281
        %v1283 = vpop.f32.mrf.mxu0
        %v1284 = vadd.f32 0.0, %v1283
        %1285 = vmatprep.mubr.bf16.mxu0 0
        %1286 = vmatmul.mubr.bf16.gmra.mxu0 %v730
        %v1287 = vpop.f32.mrf.mxu0
        %v1288 = vadd.f32 0.0, %v1287
        %v1289 = vpop.f32.mrf.mxu0
        %v1290 = vadd.f32 0.0, %v1289
        %v1291 = vpop.f32.mrf.mxu0
        %v1292 = vadd.f32 0.0, %v1291
        %v1293 = vpop.f32.mrf.mxu0
        %v1294 = vadd.f32 0.0, %v1293
        %1295 = vmatprep.mubr.bf16.mxu0 0
        %1296 = vmatmul.mubr.bf16.gmra.mxu0 %v731
        %v1297 = vpop.f32.mrf.mxu0
        %v1298 = vadd.f32 0.0, %v1297
        %v1299 = vpop.f32.mrf.mxu0
        %v1300 = vadd.f32 0.0, %v1299
        %v1301 = vpop.f32.mrf.mxu0
        %v1302 = vadd.f32 0.0, %v1301
        %v1303 = vpop.f32.mrf.mxu0
        %v1304 = vadd.f32 0.0, %v1303
        %1305 = vmatprep.mubr.bf16.mxu0 0
        %1306 = vmatmul.mubr.bf16.gmra.mxu0 %v732
        %v1307 = vpop.f32.mrf.mxu0
        %v1308 = vadd.f32 0.0, %v1307
        %v1309 = vpop.f32.mrf.mxu0
        %v1310 = vadd.f32 0.0, %v1309
        %v1311 = vpop.f32.mrf.mxu0
        %v1312 = vadd.f32 0.0, %v1311
        %v1313 = vpop.f32.mrf.mxu0
        %v1314 = vadd.f32 0.0, %v1313
        %1315 = vmatprep.mubr.bf16.mxu0 0
        %1316 = vmatmul.mubr.bf16.gmra.mxu0 %v733
        %v1317 = vpop.f32.mrf.mxu0
        %v1318 = vadd.f32 0.0, %v1317
        %v1319 = vpop.f32.mrf.mxu0
        %v1320 = vadd.f32 0.0, %v1319
        %v1321 = vpop.f32.mrf.mxu0
        %v1322 = vadd.f32 0.0, %v1321
        %v1323 = vpop.f32.mrf.mxu0
        %v1324 = vadd.f32 0.0, %v1323
        %1325 = vmatprep.mubr.bf16.mxu0 0
        %1326 = vmatmul.mubr.bf16.gmra.mxu0 %v734
        %v1327 = vpop.f32.mrf.mxu0
        %v1328 = vadd.f32 0.0, %v1327
        %v1329 = vpop.f32.mrf.mxu0
        %v1330 = vadd.f32 0.0, %v1329
        %v1331 = vpop.f32.mrf.mxu0
        %v1332 = vadd.f32 0.0, %v1331
        %v1333 = vpop.f32.mrf.mxu0
        %v1334 = vadd.f32 0.0, %v1333
        %1335 = vmatprep.mubr.bf16.mxu0 0
        %1336 = vmatmul.mubr.bf16.gmra.mxu0 %v735
        %v1337 = vpop.f32.mrf.mxu0
        %v1338 = vadd.f32 0.0, %v1337
        %v1339 = vpop.f32.mrf.mxu0
        %v1340 = vadd.f32 0.0, %v1339
        %v1341 = vpop.f32.mrf.mxu0
        %v1342 = vadd.f32 0.0, %v1341
        %v1343 = vpop.f32.mrf.mxu0
        %v1344 = vadd.f32 0.0, %v1343
        %1345 = vdwg.mxu0
        %1346 = vmatprep.subr.bf16.mxu0 0
        %1347 = vmatpush1.bf16.msra.mxu0 %v919
        %1348 = vmatprep.subr.bf16.mxu0 0
        %1349 = vmatpush1.bf16.msra.mxu0 %v914
        %1350 = vmatprep.subr.bf16.mxu0 0
        %1351 = vmatpush1.bf16.msra.mxu0 %v909
        %1352 = vmatprep.subr.bf16.mxu0 0
        %1353 = vmatpush1.bf16.msra.mxu0 %v904
        %1354 = vmatprep.subr.bf16.mxu0 0
        %1355 = vmatpush1.bf16.msra.mxu0 %v899
        %1356 = vmatprep.subr.bf16.mxu0 0
        %1357 = vmatpush1.bf16.msra.mxu0 %v894
        %1358 = vmatprep.subr.bf16.mxu0 0
        %1359 = vmatpush1.bf16.msra.mxu0 %v889
        %1360 = vmatprep.subr.bf16.mxu0 0
        %1361 = vmatpush1.bf16.msra.mxu0 %v884
        %1362 = vmatprep.subr.bf16.mxu0 0
        %1363 = vmatpush2.bf16.msra.mxu0 0
        %1364 = vmatprep.subr.bf16.mxu0 0
        %1365 = vmatpush2.bf16.msra.mxu0 0
        %1366 = vmatprep.subr.bf16.mxu0 0
        %1367 = vmatpush2.bf16.msra.mxu0 0
        %1368 = vmatprep.subr.bf16.mxu0 0
        %1369 = vmatpush2.bf16.msra.mxu0 0
        %1370 = vmatprep.subr.bf16.mxu0 0
        %1371 = vmatpush2.bf16.msra.mxu0 0
        %1372 = vmatprep.subr.bf16.mxu0 0
        %1373 = vmatpush2.bf16.msra.mxu0 0
        %1374 = vmatprep.subr.bf16.mxu0 0
        %1375 = vmatpush2.bf16.msra.mxu0 0
        %1376 = vmatprep.subr.bf16.mxu0 0
        %1377 = vmatpush2.bf16.msra.mxu0 0
        %1378 = vmatprep.mubr.bf16.mxu0 0
        %1379 = vmatmul.mubr.bf16.gmra.mxu0 %v720
        %v1380 = vpop.f32.mrf.mxu0
        %v1381 = vadd.f32 0.0, %v1380
        %v1382 = vpop.f32.mrf.mxu0
        %v1383 = vpop.f32.mrf.mxu0
        %v1384 = vadd.f32 0.0, %v1383
        %v1385 = vpop.f32.mrf.mxu0
        %1386 = vmatprep.mubr.bf16.mxu0 0
        %1387 = vmatmul.mubr.bf16.gmra.mxu0 %v721
        %v1388 = vpop.f32.mrf.mxu0
        %v1389 = vadd.f32 0.0, %v1388
        %v1390 = vpop.f32.mrf.mxu0
        %v1391 = vpop.f32.mrf.mxu0
        %v1392 = vadd.f32 0.0, %v1391
        %v1393 = vpop.f32.mrf.mxu0
        %1394 = vmatprep.mubr.bf16.mxu0 0
        %1395 = vmatmul.mubr.bf16.gmra.mxu0 %v722
        %v1396 = vpop.f32.mrf.mxu0
        %v1397 = vadd.f32 0.0, %v1396
        %v1398 = vpop.f32.mrf.mxu0
        %v1399 = vpop.f32.mrf.mxu0
        %v1400 = vadd.f32 0.0, %v1399
        %v1401 = vpop.f32.mrf.mxu0
        %1402 = vmatprep.mubr.bf16.mxu0 0
        %1403 = vmatmul.mubr.bf16.gmra.mxu0 %v723
        %v1404 = vpop.f32.mrf.mxu0
        %v1405 = vadd.f32 0.0, %v1404
        %v1406 = vpop.f32.mrf.mxu0
        %v1407 = vpop.f32.mrf.mxu0
        %v1408 = vadd.f32 0.0, %v1407
        %v1409 = vpop.f32.mrf.mxu0
        %1410 = vmatprep.mubr.bf16.mxu0 0
        %1411 = vmatmul.mubr.bf16.gmra.mxu0 %v724
        %v1412 = vpop.f32.mrf.mxu0
        %v1413 = vadd.f32 0.0, %v1412
        %v1414 = vpop.f32.mrf.mxu0
        %v1415 = vpop.f32.mrf.mxu0
        %v1416 = vadd.f32 0.0, %v1415
        %v1417 = vpop.f32.mrf.mxu0
        %1418 = vmatprep.mubr.bf16.mxu0 0
        %1419 = vmatmul.mubr.bf16.gmra.mxu0 %v725
        %v1420 = vpop.f32.mrf.mxu0
        %v1421 = vadd.f32 0.0, %v1420
        %v1422 = vpop.f32.mrf.mxu0
        %v1423 = vpop.f32.mrf.mxu0
        %v1424 = vadd.f32 0.0, %v1423
        %v1425 = vpop.f32.mrf.mxu0
        %1426 = vmatprep.mubr.bf16.mxu0 0
        %1427 = vmatmul.mubr.bf16.gmra.mxu0 %v726
        %v1428 = vpop.f32.mrf.mxu0
        %v1429 = vadd.f32 0.0, %v1428
        %v1430 = vpop.f32.mrf.mxu0
        %v1431 = vpop.f32.mrf.mxu0
        %v1432 = vadd.f32 0.0, %v1431
        %v1433 = vpop.f32.mrf.mxu0
        %1434 = vmatprep.mubr.bf16.mxu0 0
        %1435 = vmatmul.mubr.bf16.gmra.mxu0 %v727
        %v1436 = vpop.f32.mrf.mxu0
        %v1437 = vadd.f32 0.0, %v1436
        %v1438 = vpop.f32.mrf.mxu0
        %v1439 = vpop.f32.mrf.mxu0
        %v1440 = vadd.f32 0.0, %v1439
        %v1441 = vpop.f32.mrf.mxu0
        %1442 = vmatprep.mubr.bf16.mxu0 0
        %1443 = vmatmul.mubr.bf16.gmra.mxu0 %v728
        %v1444 = vpop.f32.mrf.mxu0
        %v1445 = vadd.f32 0.0, %v1444
        %v1446 = vpop.f32.mrf.mxu0
        %v1447 = vpop.f32.mrf.mxu0
        %v1448 = vadd.f32 0.0, %v1447
        %v1449 = vpop.f32.mrf.mxu0
        %1450 = vmatprep.mubr.bf16.mxu0 0
        %1451 = vmatmul.mubr.bf16.gmra.mxu0 %v729
        %v1452 = vpop.f32.mrf.mxu0
        %v1453 = vadd.f32 0.0, %v1452
        %v1454 = vpop.f32.mrf.mxu0
        %v1455 = vpop.f32.mrf.mxu0
        %v1456 = vadd.f32 0.0, %v1455
        %v1457 = vpop.f32.mrf.mxu0
        %1458 = vmatprep.mubr.bf16.mxu0 0
        %1459 = vmatmul.mubr.bf16.gmra.mxu0 %v730
        %v1460 = vpop.f32.mrf.mxu0
        %v1461 = vadd.f32 0.0, %v1460
        %v1462 = vpop.f32.mrf.mxu0
        %v1463 = vpop.f32.mrf.mxu0
        %v1464 = vadd.f32 0.0, %v1463
        %v1465 = vpop.f32.mrf.mxu0
        %1466 = vmatprep.mubr.bf16.mxu0 0
        %1467 = vmatmul.mubr.bf16.gmra.mxu0 %v731
        %v1468 = vpop.f32.mrf.mxu0
        %v1469 = vadd.f32 0.0, %v1468
        %v1470 = vpop.f32.mrf.mxu0
        %v1471 = vpop.f32.mrf.mxu0
        %v1472 = vadd.f32 0.0, %v1471
        %v1473 = vpop.f32.mrf.mxu0
        %1474 = vmatprep.mubr.bf16.mxu0 0
        %1475 = vmatmul.mubr.bf16.gmra.mxu0 %v732
        %v1476 = vpop.f32.mrf.mxu0
        %v1477 = vadd.f32 0.0, %v1476
        %v1478 = vpop.f32.mrf.mxu0
        %v1479 = vpop.f32.mrf.mxu0
        %v1480 = vadd.f32 0.0, %v1479
        %v1481 = vpop.f32.mrf.mxu0
        %1482 = vmatprep.mubr.bf16.mxu0 0
        %1483 = vmatmul.mubr.bf16.gmra.mxu0 %v733
        %v1484 = vpop.f32.mrf.mxu0
        %v1485 = vadd.f32 0.0, %v1484
        %v1486 = vpop.f32.mrf.mxu0
        %v1487 = vpop.f32.mrf.mxu0
        %v1488 = vadd.f32 0.0, %v1487
        %v1489 = vpop.f32.mrf.mxu0
        %1490 = vmatprep.mubr.bf16.mxu0 0
        %1491 = vmatmul.mubr.bf16.gmra.mxu0 %v734
        %v1492 = vpop.f32.mrf.mxu0
        %v1493 = vadd.f32 0.0, %v1492
        %v1494 = vpop.f32.mrf.mxu0
        %v1495 = vpop.f32.mrf.mxu0
        %v1496 = vadd.f32 0.0, %v1495
        %v1497 = vpop.f32.mrf.mxu0
        %1498 = vmatprep.mubr.bf16.mxu0 0
        %1499 = vmatmul.mubr.bf16.gmra.mxu0 %v735
        %v1500 = vpop.f32.mrf.mxu0
        %v1501 = vadd.f32 0.0, %v1500
        %v1502 = vpop.f32.mrf.mxu0
        %v1503 = vpop.f32.mrf.mxu0
        %v1504 = vadd.f32 0.0, %v1503
        %v1505 = vpop.f32.mrf.mxu0
        %1506 = vdwg.mxu0
        %v1507 = vld [vmem:[%s2] sm:$0x3]
        %v1509 = vlaneseq
        %v1510 = vshrl.u32 %v1509, 7
        %v1511 = vsub.s32 0, %v1510
        %v1512 = vrot.slane %v1507, %v1511
        %v1513 = vlaneseq
        %v1514 = vshrl.u32 %v1513, 7
        %v1515 = vsub.s32 1, %v1514
        %v1516 = vrot.slane %v1507, %v1515
        %v1519 = vadd.f32 %v995, %v1512
        %v1520 = vadd.f32 %v997, %v1516
        %v1521 = vadd.f32 %v999, %v1512
        %v1522 = vadd.f32 %v1001, %v1516
        %v1523 = vadd.f32 %v1005, %v1512
        %v1524 = vadd.f32 %v1007, %v1516
        %v1525 = vadd.f32 %v1009, %v1512
        %v1526 = vadd.f32 %v1011, %v1516
        %v1527 = vadd.f32 %v1015, %v1512
        %v1528 = vadd.f32 %v1017, %v1516
        %v1529 = vadd.f32 %v1019, %v1512
        %v1530 = vadd.f32 %v1021, %v1516
        %v1531 = vadd.f32 %v1025, %v1512
        %v1532 = vadd.f32 %v1027, %v1516
        %v1533 = vadd.f32 %v1029, %v1512
        %v1534 = vadd.f32 %v1031, %v1516
        %v1535 = vadd.f32 %v1035, %v1512
        %v1536 = vadd.f32 %v1037, %v1516
        %v1537 = vadd.f32 %v1039, %v1512
        %v1538 = vadd.f32 %v1041, %v1516
        %v1539 = vadd.f32 %v1045, %v1512
        %v1540 = vadd.f32 %v1047, %v1516
        %v1541 = vadd.f32 %v1049, %v1512
        %v1542 = vadd.f32 %v1051, %v1516
        %v1543 = vadd.f32 %v1055, %v1512
        %v1544 = vadd.f32 %v1057, %v1516
        %v1545 = vadd.f32 %v1059, %v1512
        %v1546 = vadd.f32 %v1061, %v1516
        %v1547 = vadd.f32 %v1065, %v1512
        %v1548 = vadd.f32 %v1067, %v1516
        %v1549 = vadd.f32 %v1069, %v1512
        %v1550 = vadd.f32 %v1071, %v1516
        %v1551 = vadd.f32 %v1075, %v1512
        %v1552 = vadd.f32 %v1077, %v1516
        %v1553 = vadd.f32 %v1079, %v1512
        %v1554 = vadd.f32 %v1081, %v1516
        %v1555 = vadd.f32 %v1085, %v1512
        %v1556 = vadd.f32 %v1087, %v1516
        %v1557 = vadd.f32 %v1089, %v1512
        %v1558 = vadd.f32 %v1091, %v1516
        %v1559 = vadd.f32 %v1095, %v1512
        %v1560 = vadd.f32 %v1097, %v1516
        %v1561 = vadd.f32 %v1099, %v1512
        %v1562 = vadd.f32 %v1101, %v1516
        %v1563 = vadd.f32 %v1105, %v1512
        %v1564 = vadd.f32 %v1107, %v1516
        %v1565 = vadd.f32 %v1109, %v1512
        %v1566 = vadd.f32 %v1111, %v1516
        %v1567 = vadd.f32 %v1115, %v1512
        %v1568 = vadd.f32 %v1117, %v1516
        %v1569 = vadd.f32 %v1119, %v1512
        %v1570 = vadd.f32 %v1121, %v1516
        %v1571 = vadd.f32 %v1125, %v1512
        %v1572 = vadd.f32 %v1127, %v1516
        %v1573 = vadd.f32 %v1129, %v1512
        %v1574 = vadd.f32 %v1131, %v1516
        %v1575 = vadd.f32 %v1135, %v1512
        %v1576 = vadd.f32 %v1137, %v1516
        %v1577 = vadd.f32 %v1139, %v1512
        %v1578 = vadd.f32 %v1141, %v1516
        %v1579 = vadd.f32 %v1145, %v1512
        %v1580 = vadd.f32 %v1147, %v1516
        %v1581 = vadd.f32 %v1149, %v1512
        %v1582 = vadd.f32 %v1151, %v1516
        %v1583 = vmax.f32 %v1519, 0.0
        %v1584 = vmax.f32 %v1520, 0.0
        %v1585 = vmax.f32 %v1521, 0.0
        %v1586 = vmax.f32 %v1522, 0.0
        %v1587 = vmax.f32 %v1523, 0.0
        %v1588 = vmax.f32 %v1524, 0.0
        %v1589 = vmax.f32 %v1525, 0.0
        %v1590 = vmax.f32 %v1526, 0.0
        %v1591 = vmax.f32 %v1527, 0.0
        %v1592 = vmax.f32 %v1528, 0.0
        %v1593 = vmax.f32 %v1529, 0.0
        %v1594 = vmax.f32 %v1530, 0.0
        %v1595 = vmax.f32 %v1531, 0.0
        %v1596 = vmax.f32 %v1532, 0.0
        %v1597 = vmax.f32 %v1533, 0.0
        %v1598 = vmax.f32 %v1534, 0.0
        %v1599 = vmax.f32 %v1535, 0.0
        %v1600 = vmax.f32 %v1536, 0.0
        %v1601 = vmax.f32 %v1537, 0.0
        %v1602 = vmax.f32 %v1538, 0.0
        %v1603 = vmax.f32 %v1539, 0.0
        %v1604 = vmax.f32 %v1540, 0.0
        %v1605 = vmax.f32 %v1541, 0.0
        %v1606 = vmax.f32 %v1542, 0.0
        %v1607 = vmax.f32 %v1543, 0.0
        %v1608 = vmax.f32 %v1544, 0.0
        %v1609 = vmax.f32 %v1545, 0.0
        %v1610 = vmax.f32 %v1546, 0.0
        %v1611 = vmax.f32 %v1547, 0.0
        %v1612 = vmax.f32 %v1548, 0.0
        %v1613 = vmax.f32 %v1549, 0.0
        %v1614 = vmax.f32 %v1550, 0.0
        %v1615 = vmax.f32 %v1551, 0.0
        %v1616 = vmax.f32 %v1552, 0.0
        %v1617 = vmax.f32 %v1553, 0.0
        %v1618 = vmax.f32 %v1554, 0.0
        %v1619 = vmax.f32 %v1555, 0.0
        %v1620 = vmax.f32 %v1556, 0.0
        %v1621 = vmax.f32 %v1557, 0.0
        %v1622 = vmax.f32 %v1558, 0.0
        %v1623 = vmax.f32 %v1559, 0.0
        %v1624 = vmax.f32 %v1560, 0.0
        %v1625 = vmax.f32 %v1561, 0.0
        %v1626 = vmax.f32 %v1562, 0.0
        %v1627 = vmax.f32 %v1563, 0.0
        %v1628 = vmax.f32 %v1564, 0.0
        %v1629 = vmax.f32 %v1565, 0.0
        %v1630 = vmax.f32 %v1566, 0.0
        %v1631 = vmax.f32 %v1567, 0.0
        %v1632 = vmax.f32 %v1568, 0.0
        %v1633 = vmax.f32 %v1569, 0.0
        %v1634 = vmax.f32 %v1570, 0.0
        %v1635 = vmax.f32 %v1571, 0.0
        %v1636 = vmax.f32 %v1572, 0.0
        %v1637 = vmax.f32 %v1573, 0.0
        %v1638 = vmax.f32 %v1574, 0.0
        %v1639 = vmax.f32 %v1575, 0.0
        %v1640 = vmax.f32 %v1576, 0.0
        %v1641 = vmax.f32 %v1577, 0.0
        %v1642 = vmax.f32 %v1578, 0.0
        %v1643 = vmax.f32 %v1579, 0.0
        %v1644 = vmax.f32 %v1580, 0.0
        %v1645 = vmax.f32 %v1581, 0.0
        %v1646 = vmax.f32 %v1582, 0.0
        %v1647 = vld [vmem:[%s3] sm:$0x1]
        %v1649 = vlaneseq
        %v1650 = vshrl.u32 %v1649, 7
        %v1651 = vsub.s32 0, %v1650
        %v1652 = vrot.slane %v1647, %v1651
        %v1654 = vadd.f32 %v1381, %v1652
        %v1655 = vadd.f32 %v1384, %v1652
        %v1656 = vadd.f32 %v1389, %v1652
        %v1657 = vadd.f32 %v1392, %v1652
        %v1658 = vadd.f32 %v1397, %v1652
        %v1659 = vadd.f32 %v1400, %v1652
        %v1660 = vadd.f32 %v1405, %v1652
        %v1661 = vadd.f32 %v1408, %v1652
        %v1662 = vadd.f32 %v1413, %v1652
        %v1663 = vadd.f32 %v1416, %v1652
        %v1664 = vadd.f32 %v1421, %v1652
        %v1665 = vadd.f32 %v1424, %v1652
        %v1666 = vadd.f32 %v1429, %v1652
        %v1667 = vadd.f32 %v1432, %v1652
        %v1668 = vadd.f32 %v1437, %v1652
        %v1669 = vadd.f32 %v1440, %v1652
        %v1670 = vadd.f32 %v1445, %v1652
        %v1671 = vadd.f32 %v1448, %v1652
        %v1672 = vadd.f32 %v1453, %v1652
        %v1673 = vadd.f32 %v1456, %v1652
        %v1674 = vadd.f32 %v1461, %v1652
        %v1675 = vadd.f32 %v1464, %v1652
        %v1676 = vadd.f32 %v1469, %v1652
        %v1677 = vadd.f32 %v1472, %v1652
        %v1678 = vadd.f32 %v1477, %v1652
        %v1679 = vadd.f32 %v1480, %v1652
        %v1680 = vadd.f32 %v1485, %v1652
        %v1681 = vadd.f32 %v1488, %v1652
        %v1682 = vadd.f32 %v1493, %v1652
        %v1683 = vadd.f32 %v1496, %v1652
        %v1684 = vadd.f32 %v1501, %v1652
        %v1685 = vadd.f32 %v1504, %v1652
        %v1686 = vpack.c.bf16 %v1585, %v1583
        %v1687 = vpack.c.bf16 %v1586, %v1584
        %v1688 = vpack.c.bf16 %v1589, %v1587
        %v1689 = vpack.c.bf16 %v1590, %v1588
        %v1690 = vpack.c.bf16 %v1593, %v1591
        %v1691 = vpack.c.bf16 %v1594, %v1592
        %v1692 = vpack.c.bf16 %v1597, %v1595
        %v1693 = vpack.c.bf16 %v1598, %v1596
        %v1694 = vpack.c.bf16 %v1601, %v1599
        %v1695 = vpack.c.bf16 %v1602, %v1600
        %v1696 = vpack.c.bf16 %v1605, %v1603
        %v1697 = vpack.c.bf16 %v1606, %v1604
        %v1698 = vpack.c.bf16 %v1609, %v1607
        %v1699 = vpack.c.bf16 %v1610, %v1608
        %v1700 = vpack.c.bf16 %v1613, %v1611
        %v1701 = vpack.c.bf16 %v1614, %v1612
        %v1702 = vpack.c.bf16 %v1617, %v1615
        %v1703 = vpack.c.bf16 %v1618, %v1616
        %v1704 = vpack.c.bf16 %v1621, %v1619
        %v1705 = vpack.c.bf16 %v1622, %v1620
        %v1706 = vpack.c.bf16 %v1625, %v1623
        %v1707 = vpack.c.bf16 %v1626, %v1624
        %v1708 = vpack.c.bf16 %v1629, %v1627
        %v1709 = vpack.c.bf16 %v1630, %v1628
        %v1710 = vpack.c.bf16 %v1633, %v1631
        %v1711 = vpack.c.bf16 %v1634, %v1632
        %v1712 = vpack.c.bf16 %v1637, %v1635
        %v1713 = vpack.c.bf16 %v1638, %v1636
        %v1714 = vpack.c.bf16 %v1641, %v1639
        %v1715 = vpack.c.bf16 %v1642, %v1640
        %v1716 = vpack.c.bf16 %v1645, %v1643
        %v1717 = vpack.c.bf16 %v1646, %v1644
        %v1718 = vld [vmem:[#allocation7] sm:$0xff]
        %v1719 = vld [vmem:[#allocation7 + $0x8] sm:$0xff]
        %v1720 = vld [vmem:[#allocation7 + $0x10] sm:$0xff]
        %v1721 = vld [vmem:[#allocation7 + $0x18] sm:$0xff]
        %v1722 = vld [vmem:[#allocation7 + $0x20] sm:$0xff]
        %v1723 = vld [vmem:[#allocation7 + $0x28] sm:$0xff]
        %v1724 = vld [vmem:[#allocation7 + $0x30] sm:$0xff]
        %v1725 = vld [vmem:[#allocation7 + $0x38] sm:$0xff]
        %v1726 = vld [vmem:[#allocation7 + $0x40] sm:$0xff]
        %v1727 = vld [vmem:[#allocation7 + $0x48] sm:$0xff]
        %v1728 = vld [vmem:[#allocation7 + $0x50] sm:$0xff]
        %v1729 = vld [vmem:[#allocation7 + $0x58] sm:$0xff]
        %v1730 = vld [vmem:[#allocation7 + $0x60] sm:$0xff]
        %v1731 = vld [vmem:[#allocation7 + $0x68] sm:$0xff]
        %v1732 = vld [vmem:[#allocation7 + $0x70] sm:$0xff]
        %v1733 = vld [vmem:[#allocation7 + $0x78] sm:$0xff]
        %v1734 = vld [vmem:[#allocation7 + $0x80] sm:$0xff]
        %v1735 = vld [vmem:[#allocation7 + $0x88] sm:$0xff]
        %v1736 = vld [vmem:[#allocation7 + $0x90] sm:$0xff]
        %v1737 = vld [vmem:[#allocation7 + $0x98] sm:$0xff]
        %v1738 = vld [vmem:[#allocation7 + $0xa0] sm:$0xff]
        %v1739 = vld [vmem:[#allocation7 + $0xa8] sm:$0xff]
        %v1740 = vld [vmem:[#allocation7 + $0xb0] sm:$0xff]
        %v1741 = vld [vmem:[#allocation7 + $0xb8] sm:$0xff]
        %v1742 = vld [vmem:[#allocation7 + $0xc0] sm:$0xff]
        %v1743 = vld [vmem:[#allocation7 + $0xc8] sm:$0xff]
        %v1744 = vld [vmem:[#allocation7 + $0xd0] sm:$0xff]
        %v1745 = vld [vmem:[#allocation7 + $0xd8] sm:$0xff]
        %v1746 = vld [vmem:[#allocation7 + $0xe0] sm:$0xff]
        %v1747 = vld [vmem:[#allocation7 + $0xe8] sm:$0xff]
        %v1748 = vld [vmem:[#allocation7 + $0xf0] sm:$0xff]
        %v1749 = vld [vmem:[#allocation7 + $0xf8] sm:$0xff]
        %v1750 = vld [vmem:[#allocation8] sm:$0x3]
        %v1752 = vlaneseq
        %v1753 = vshrl.u32 %v1752, 7
        %v1754 = vsub.s32 0, %v1753
        %v1755 = vrot.slane %v1750, %v1754
        %v1756 = vlaneseq
        %v1757 = vshrl.u32 %v1756, 7
        %v1758 = vsub.s32 1, %v1757
        %v1759 = vrot.slane %v1750, %v1758
        %v1794 = vunpack.c.l.b16 %v1718
        %v1795 = vunpack.c.h.b16 %v1718
        %v1796 = vunpack.c.l.b16 %v1719
        %v1797 = vunpack.c.h.b16 %v1719
        %v1798 = vunpack.c.l.b16 %v1720
        %v1799 = vunpack.c.h.b16 %v1720
        %v1800 = vunpack.c.l.b16 %v1721
        %v1801 = vunpack.c.h.b16 %v1721
        %v1802 = vunpack.c.l.b16 %v1722
        %v1803 = vunpack.c.h.b16 %v1722
        %v1804 = vunpack.c.l.b16 %v1723
        %v1805 = vunpack.c.h.b16 %v1723
        %v1806 = vunpack.c.l.b16 %v1724
        %v1807 = vunpack.c.h.b16 %v1724
        %v1808 = vunpack.c.l.b16 %v1725
        %v1809 = vunpack.c.h.b16 %v1725
        %v1810 = vunpack.c.l.b16 %v1726
        %v1811 = vunpack.c.h.b16 %v1726
        %v1812 = vunpack.c.l.b16 %v1727
        %v1813 = vunpack.c.h.b16 %v1727
        %v1814 = vunpack.c.l.b16 %v1728
        %v1815 = vunpack.c.h.b16 %v1728
        %v1816 = vunpack.c.l.b16 %v1729
        %v1817 = vunpack.c.h.b16 %v1729
        %v1818 = vunpack.c.l.b16 %v1730
        %v1819 = vunpack.c.h.b16 %v1730
        %v1820 = vunpack.c.l.b16 %v1731
        %v1821 = vunpack.c.h.b16 %v1731
        %v1822 = vunpack.c.l.b16 %v1732
        %v1823 = vunpack.c.h.b16 %v1732
        %v1824 = vunpack.c.l.b16 %v1733
        %v1825 = vunpack.c.h.b16 %v1733
        %v1826 = vunpack.c.l.b16 %v1734
        %v1827 = vunpack.c.h.b16 %v1734
        %v1828 = vunpack.c.l.b16 %v1735
        %v1829 = vunpack.c.h.b16 %v1735
        %v1830 = vunpack.c.l.b16 %v1736
        %v1831 = vunpack.c.h.b16 %v1736
        %v1832 = vunpack.c.l.b16 %v1737
        %v1833 = vunpack.c.h.b16 %v1737
        %v1834 = vunpack.c.l.b16 %v1738
        %v1835 = vunpack.c.h.b16 %v1738
        %v1836 = vunpack.c.l.b16 %v1739
        %v1837 = vunpack.c.h.b16 %v1739
        %v1838 = vunpack.c.l.b16 %v1740
        %v1839 = vunpack.c.h.b16 %v1740
        %v1840 = vunpack.c.l.b16 %v1741
        %v1841 = vunpack.c.h.b16 %v1741
        %v1842 = vunpack.c.l.b16 %v1742
        %v1843 = vunpack.c.h.b16 %v1742
        %v1844 = vunpack.c.l.b16 %v1743
        %v1845 = vunpack.c.h.b16 %v1743
        %v1846 = vunpack.c.l.b16 %v1744
        %v1847 = vunpack.c.h.b16 %v1744
        %v1848 = vunpack.c.l.b16 %v1745
        %v1849 = vunpack.c.h.b16 %v1745
        %v1850 = vunpack.c.l.b16 %v1746
        %v1851 = vunpack.c.h.b16 %v1746
        %v1852 = vunpack.c.l.b16 %v1747
        %v1853 = vunpack.c.h.b16 %v1747
        %v1854 = vunpack.c.l.b16 %v1748
        %v1855 = vunpack.c.h.b16 %v1748
        %v1856 = vunpack.c.l.b16 %v1749
        %v1857 = vunpack.c.h.b16 %v1749
        %v1858 = vpack.c.b16 %v1796, %v1794
        %v1859 = vpack.c.b16 %v1797, %v1795
        %v1860 = vpack.c.b16 %v1800, %v1798
        %v1861 = vpack.c.b16 %v1801, %v1799
        %v1862 = vpack.c.b16 %v1804, %v1802
        %v1863 = vpack.c.b16 %v1805, %v1803
        %v1864 = vpack.c.b16 %v1808, %v1806
        %v1865 = vpack.c.b16 %v1809, %v1807
        %v1866 = vpack.c.b16 %v1812, %v1810
        %v1867 = vpack.c.b16 %v1813, %v1811
        %v1868 = vpack.c.b16 %v1816, %v1814
        %v1869 = vpack.c.b16 %v1817, %v1815
        %v1870 = vpack.c.b16 %v1820, %v1818
        %v1871 = vpack.c.b16 %v1821, %v1819
        %v1872 = vpack.c.b16 %v1824, %v1822
        %v1873 = vpack.c.b16 %v1825, %v1823
        %v1874 = vpack.c.b16 %v1828, %v1826
        %v1875 = vpack.c.b16 %v1829, %v1827
        %v1876 = vpack.c.b16 %v1832, %v1830
        %v1877 = vpack.c.b16 %v1833, %v1831
        %v1878 = vpack.c.b16 %v1836, %v1834
        %v1879 = vpack.c.b16 %v1837, %v1835
        %v1880 = vpack.c.b16 %v1840, %v1838
        %v1881 = vpack.c.b16 %v1841, %v1839
        %v1882 = vpack.c.b16 %v1844, %v1842
        %v1883 = vpack.c.b16 %v1845, %v1843
        %v1884 = vpack.c.b16 %v1848, %v1846
        %v1885 = vpack.c.b16 %v1849, %v1847
        %v1886 = vpack.c.b16 %v1852, %v1850
        %v1887 = vpack.c.b16 %v1853, %v1851
        %v1888 = vpack.c.b16 %v1856, %v1854
        %v1889 = vpack.c.b16 %v1857, %v1855
        %1922 = vmatprep.subr.bf16.mxu0 %v1873
        %1923 = vmatpush1.bf16.msra.mxu0 %v1872
        %1924 = vmatprep.subr.bf16.mxu0 %v1871
        %1925 = vmatpush1.bf16.msra.mxu0 %v1870
        %1926 = vmatprep.subr.bf16.mxu0 %v1869
        %1927 = vmatpush1.bf16.msra.mxu0 %v1868
        %1928 = vmatprep.subr.bf16.mxu0 %v1867
        %1929 = vmatpush1.bf16.msra.mxu0 %v1866
        %1930 = vmatprep.subr.bf16.mxu0 %v1865
        %1931 = vmatpush1.bf16.msra.mxu0 %v1864
        %1932 = vmatprep.subr.bf16.mxu0 %v1863
        %1933 = vmatpush1.bf16.msra.mxu0 %v1862
        %1934 = vmatprep.subr.bf16.mxu0 %v1861
        %1935 = vmatpush1.bf16.msra.mxu0 %v1860
        %1936 = vmatprep.subr.bf16.mxu0 %v1859
        %1937 = vmatpush1.bf16.msra.mxu0 %v1858
        %1938 = vmatprep.subr.bf16.mxu0 %v1889
        %1939 = vmatpush2.bf16.msra.mxu0 %v1888
        %1940 = vmatprep.subr.bf16.mxu0 %v1887
        %1941 = vmatpush2.bf16.msra.mxu0 %v1886
        %1942 = vmatprep.subr.bf16.mxu0 %v1885
        %1943 = vmatpush2.bf16.msra.mxu0 %v1884
        %1944 = vmatprep.subr.bf16.mxu0 %v1883
        %1945 = vmatpush2.bf16.msra.mxu0 %v1882
        %1946 = vmatprep.subr.bf16.mxu0 %v1881
        %1947 = vmatpush2.bf16.msra.mxu0 %v1880
        %1948 = vmatprep.subr.bf16.mxu0 %v1879
        %1949 = vmatpush2.bf16.msra.mxu0 %v1878
        %1950 = vmatprep.subr.bf16.mxu0 %v1877
        %1951 = vmatpush2.bf16.msra.mxu0 %v1876
        %1952 = vmatprep.subr.bf16.mxu0 %v1875
        %1953 = vmatpush2.bf16.msra.mxu0 %v1874
        %1954 = vmatprep.mubr.bf16.mxu0 %v1687
        %1955 = vmatmul.mubr.bf16.gmra.mxu0 %v1686
        %v1956 = vpop.f32.mrf.mxu0
        %v1957 = vadd.f32 %v1755, %v1956
        %v1958 = vpop.f32.mrf.mxu0
        %v1959 = vadd.f32 %v1759, %v1958
        %v1960 = vpop.f32.mrf.mxu0
        %v1961 = vadd.f32 %v1755, %v1960
        %v1962 = vpop.f32.mrf.mxu0
        %v1963 = vadd.f32 %v1759, %v1962
        %1964 = vmatprep.mubr.bf16.mxu0 %v1689
        %1965 = vmatmul.mubr.bf16.gmra.mxu0 %v1688
        %v1966 = vpop.f32.mrf.mxu0
        %v1967 = vadd.f32 %v1755, %v1966
        %v1968 = vpop.f32.mrf.mxu0
        %v1969 = vadd.f32 %v1759, %v1968
        %v1970 = vpop.f32.mrf.mxu0
        %v1971 = vadd.f32 %v1755, %v1970
        %v1972 = vpop.f32.mrf.mxu0
        %v1973 = vadd.f32 %v1759, %v1972
        %1974 = vmatprep.mubr.bf16.mxu0 %v1691
        %1975 = vmatmul.mubr.bf16.gmra.mxu0 %v1690
        %v1976 = vpop.f32.mrf.mxu0
        %v1977 = vadd.f32 %v1755, %v1976
        %v1978 = vpop.f32.mrf.mxu0
        %v1979 = vadd.f32 %v1759, %v1978
        %v1980 = vpop.f32.mrf.mxu0
        %v1981 = vadd.f32 %v1755, %v1980
        %v1982 = vpop.f32.mrf.mxu0
        %v1983 = vadd.f32 %v1759, %v1982
        %1984 = vmatprep.mubr.bf16.mxu0 %v1693
        %1985 = vmatmul.mubr.bf16.gmra.mxu0 %v1692
        %v1986 = vpop.f32.mrf.mxu0
        %v1987 = vadd.f32 %v1755, %v1986
        %v1988 = vpop.f32.mrf.mxu0
        %v1989 = vadd.f32 %v1759, %v1988
        %v1990 = vpop.f32.mrf.mxu0
        %v1991 = vadd.f32 %v1755, %v1990
        %v1992 = vpop.f32.mrf.mxu0
        %v1993 = vadd.f32 %v1759, %v1992
        %1994 = vmatprep.mubr.bf16.mxu0 %v1695
        %1995 = vmatmul.mubr.bf16.gmra.mxu0 %v1694
        %v1996 = vpop.f32.mrf.mxu0
        %v1997 = vadd.f32 %v1755, %v1996
        %v1998 = vpop.f32.mrf.mxu0
        %v1999 = vadd.f32 %v1759, %v1998
        %v2000 = vpop.f32.mrf.mxu0
        %v2001 = vadd.f32 %v1755, %v2000
        %v2002 = vpop.f32.mrf.mxu0
        %v2003 = vadd.f32 %v1759, %v2002
        %2004 = vmatprep.mubr.bf16.mxu0 %v1697
        %2005 = vmatmul.mubr.bf16.gmra.mxu0 %v1696
        %v2006 = vpop.f32.mrf.mxu0
        %v2007 = vadd.f32 %v1755, %v2006
        %v2008 = vpop.f32.mrf.mxu0
        %v2009 = vadd.f32 %v1759, %v2008
        %v2010 = vpop.f32.mrf.mxu0
        %v2011 = vadd.f32 %v1755, %v2010
        %v2012 = vpop.f32.mrf.mxu0
        %v2013 = vadd.f32 %v1759, %v2012
        %2014 = vmatprep.mubr.bf16.mxu0 %v1699
        %2015 = vmatmul.mubr.bf16.gmra.mxu0 %v1698
        %v2016 = vpop.f32.mrf.mxu0
        %v2017 = vadd.f32 %v1755, %v2016
        %v2018 = vpop.f32.mrf.mxu0
        %v2019 = vadd.f32 %v1759, %v2018
        %v2020 = vpop.f32.mrf.mxu0
        %v2021 = vadd.f32 %v1755, %v2020
        %v2022 = vpop.f32.mrf.mxu0
        %v2023 = vadd.f32 %v1759, %v2022
        %2024 = vmatprep.mubr.bf16.mxu0 %v1701
        %2025 = vmatmul.mubr.bf16.gmra.mxu0 %v1700
        %v2026 = vpop.f32.mrf.mxu0
        %v2027 = vadd.f32 %v1755, %v2026
        %v2028 = vpop.f32.mrf.mxu0
        %v2029 = vadd.f32 %v1759, %v2028
        %v2030 = vpop.f32.mrf.mxu0
        %v2031 = vadd.f32 %v1755, %v2030
        %v2032 = vpop.f32.mrf.mxu0
        %v2033 = vadd.f32 %v1759, %v2032
        %2034 = vmatprep.mubr.bf16.mxu0 %v1703
        %2035 = vmatmul.mubr.bf16.gmra.mxu0 %v1702
        %v2036 = vpop.f32.mrf.mxu0
        %v2037 = vadd.f32 %v1755, %v2036
        %v2038 = vpop.f32.mrf.mxu0
        %v2039 = vadd.f32 %v1759, %v2038
        %v2040 = vpop.f32.mrf.mxu0
        %v2041 = vadd.f32 %v1755, %v2040
        %v2042 = vpop.f32.mrf.mxu0
        %v2043 = vadd.f32 %v1759, %v2042
        %2044 = vmatprep.mubr.bf16.mxu0 %v1705
        %2045 = vmatmul.mubr.bf16.gmra.mxu0 %v1704
        %v2046 = vpop.f32.mrf.mxu0
        %v2047 = vadd.f32 %v1755, %v2046
        %v2048 = vpop.f32.mrf.mxu0
        %v2049 = vadd.f32 %v1759, %v2048
        %v2050 = vpop.f32.mrf.mxu0
        %v2051 = vadd.f32 %v1755, %v2050
        %v2052 = vpop.f32.mrf.mxu0
        %v2053 = vadd.f32 %v1759, %v2052
        %2054 = vmatprep.mubr.bf16.mxu0 %v1707
        %2055 = vmatmul.mubr.bf16.gmra.mxu0 %v1706
        %v2056 = vpop.f32.mrf.mxu0
        %v2057 = vadd.f32 %v1755, %v2056
        %v2058 = vpop.f32.mrf.mxu0
        %v2059 = vadd.f32 %v1759, %v2058
        %v2060 = vpop.f32.mrf.mxu0
        %v2061 = vadd.f32 %v1755, %v2060
        %v2062 = vpop.f32.mrf.mxu0
        %v2063 = vadd.f32 %v1759, %v2062
        %2064 = vmatprep.mubr.bf16.mxu0 %v1709
        %2065 = vmatmul.mubr.bf16.gmra.mxu0 %v1708
        %v2066 = vpop.f32.mrf.mxu0
        %v2067 = vadd.f32 %v1755, %v2066
        %v2068 = vpop.f32.mrf.mxu0
        %v2069 = vadd.f32 %v1759, %v2068
        %v2070 = vpop.f32.mrf.mxu0
        %v2071 = vadd.f32 %v1755, %v2070
        %v2072 = vpop.f32.mrf.mxu0
        %v2073 = vadd.f32 %v1759, %v2072
        %2074 = vmatprep.mubr.bf16.mxu0 %v1711
        %2075 = vmatmul.mubr.bf16.gmra.mxu0 %v1710
        %v2076 = vpop.f32.mrf.mxu0
        %v2077 = vadd.f32 %v1755, %v2076
        %v2078 = vpop.f32.mrf.mxu0
        %v2079 = vadd.f32 %v1759, %v2078
        %v2080 = vpop.f32.mrf.mxu0
        %v2081 = vadd.f32 %v1755, %v2080
        %v2082 = vpop.f32.mrf.mxu0
        %v2083 = vadd.f32 %v1759, %v2082
        %2084 = vmatprep.mubr.bf16.mxu0 %v1713
        %2085 = vmatmul.mubr.bf16.gmra.mxu0 %v1712
        %v2086 = vpop.f32.mrf.mxu0
        %v2087 = vadd.f32 %v1755, %v2086
        %v2088 = vpop.f32.mrf.mxu0
        %v2089 = vadd.f32 %v1759, %v2088
        %v2090 = vpop.f32.mrf.mxu0
        %v2091 = vadd.f32 %v1755, %v2090
        %v2092 = vpop.f32.mrf.mxu0
        %v2093 = vadd.f32 %v1759, %v2092
        %2094 = vmatprep.mubr.bf16.mxu0 %v1715
        %2095 = vmatmul.mubr.bf16.gmra.mxu0 %v1714
        %v2096 = vpop.f32.mrf.mxu0
        %v2097 = vadd.f32 %v1755, %v2096
        %v2098 = vpop.f32.mrf.mxu0
        %v2099 = vadd.f32 %v1759, %v2098
        %v2100 = vpop.f32.mrf.mxu0
        %v2101 = vadd.f32 %v1755, %v2100
        %v2102 = vpop.f32.mrf.mxu0
        %v2103 = vadd.f32 %v1759, %v2102
        %2104 = vmatprep.mubr.bf16.mxu0 %v1717
        %2105 = vmatmul.mubr.bf16.gmra.mxu0 %v1716
        %v2106 = vpop.f32.mrf.mxu0
        %v2107 = vadd.f32 %v1755, %v2106
        %v2108 = vpop.f32.mrf.mxu0
        %v2109 = vadd.f32 %v1759, %v2108
        %v2110 = vpop.f32.mrf.mxu0
        %v2111 = vadd.f32 %v1755, %v2110
        %v2112 = vpop.f32.mrf.mxu0
        %v2113 = vadd.f32 %v1759, %v2112
        %2114 = vdwg.mxu0
        %v2115 = vmax.f32 %v1957, 0.0
        %v2116 = vmax.f32 %v1959, 0.0
        %v2117 = vmax.f32 %v1961, 0.0
        %v2118 = vmax.f32 %v1963, 0.0
        %v2119 = vmax.f32 %v1967, 0.0
        %v2120 = vmax.f32 %v1969, 0.0
        %v2121 = vmax.f32 %v1971, 0.0
        %v2122 = vmax.f32 %v1973, 0.0
        %v2123 = vmax.f32 %v1977, 0.0
        %v2124 = vmax.f32 %v1979, 0.0
        %v2125 = vmax.f32 %v1981, 0.0
        %v2126 = vmax.f32 %v1983, 0.0
        %v2127 = vmax.f32 %v1987, 0.0
        %v2128 = vmax.f32 %v1989, 0.0
        %v2129 = vmax.f32 %v1991, 0.0
        %v2130 = vmax.f32 %v1993, 0.0
        %v2131 = vmax.f32 %v1997, 0.0
        %v2132 = vmax.f32 %v1999, 0.0
        %v2133 = vmax.f32 %v2001, 0.0
        %v2134 = vmax.f32 %v2003, 0.0
        %v2135 = vmax.f32 %v2007, 0.0
        %v2136 = vmax.f32 %v2009, 0.0
        %v2137 = vmax.f32 %v2011, 0.0
        %v2138 = vmax.f32 %v2013, 0.0
        %v2139 = vmax.f32 %v2017, 0.0
        %v2140 = vmax.f32 %v2019, 0.0
        %v2141 = vmax.f32 %v2021, 0.0
        %v2142 = vmax.f32 %v2023, 0.0
        %v2143 = vmax.f32 %v2027, 0.0
        %v2144 = vmax.f32 %v2029, 0.0
        %v2145 = vmax.f32 %v2031, 0.0
        %v2146 = vmax.f32 %v2033, 0.0
        %v2147 = vmax.f32 %v2037, 0.0
        %v2148 = vmax.f32 %v2039, 0.0
        %v2149 = vmax.f32 %v2041, 0.0
        %v2150 = vmax.f32 %v2043, 0.0
        %v2151 = vmax.f32 %v2047, 0.0
        %v2152 = vmax.f32 %v2049, 0.0
        %v2153 = vmax.f32 %v2051, 0.0
        %v2154 = vmax.f32 %v2053, 0.0
        %v2155 = vmax.f32 %v2057, 0.0
        %v2156 = vmax.f32 %v2059, 0.0
        %v2157 = vmax.f32 %v2061, 0.0
        %v2158 = vmax.f32 %v2063, 0.0
        %v2159 = vmax.f32 %v2067, 0.0
        %v2160 = vmax.f32 %v2069, 0.0
        %v2161 = vmax.f32 %v2071, 0.0
        %v2162 = vmax.f32 %v2073, 0.0
        %v2163 = vmax.f32 %v2077, 0.0
        %v2164 = vmax.f32 %v2079, 0.0
        %v2165 = vmax.f32 %v2081, 0.0
        %v2166 = vmax.f32 %v2083, 0.0
        %v2167 = vmax.f32 %v2087, 0.0
        %v2168 = vmax.f32 %v2089, 0.0
        %v2169 = vmax.f32 %v2091, 0.0
        %v2170 = vmax.f32 %v2093, 0.0
        %v2171 = vmax.f32 %v2097, 0.0
        %v2172 = vmax.f32 %v2099, 0.0
        %v2173 = vmax.f32 %v2101, 0.0
        %v2174 = vmax.f32 %v2103, 0.0
        %v2175 = vmax.f32 %v2107, 0.0
        %v2176 = vmax.f32 %v2109, 0.0
        %v2177 = vmax.f32 %v2111, 0.0
        %v2178 = vmax.f32 %v2113, 0.0
        %v2179 = vpack.c.bf16 %v2117, %v2115
        %v2180 = vpack.c.bf16 %v2118, %v2116
        %v2181 = vpack.c.bf16 %v2121, %v2119
        %v2182 = vpack.c.bf16 %v2122, %v2120
        %v2183 = vpack.c.bf16 %v2125, %v2123
        %v2184 = vpack.c.bf16 %v2126, %v2124
        %v2185 = vpack.c.bf16 %v2129, %v2127
        %v2186 = vpack.c.bf16 %v2130, %v2128
        %v2187 = vpack.c.bf16 %v2133, %v2131
        %v2188 = vpack.c.bf16 %v2134, %v2132
        %v2189 = vpack.c.bf16 %v2137, %v2135
        %v2190 = vpack.c.bf16 %v2138, %v2136
        %v2191 = vpack.c.bf16 %v2141, %v2139
        %v2192 = vpack.c.bf16 %v2142, %v2140
        %v2193 = vpack.c.bf16 %v2145, %v2143
        %v2194 = vpack.c.bf16 %v2146, %v2144
        %v2195 = vpack.c.bf16 %v2149, %v2147
        %v2196 = vpack.c.bf16 %v2150, %v2148
        %v2197 = vpack.c.bf16 %v2153, %v2151
        %v2198 = vpack.c.bf16 %v2154, %v2152
        %v2199 = vpack.c.bf16 %v2157, %v2155
        %v2200 = vpack.c.bf16 %v2158, %v2156
        %v2201 = vpack.c.bf16 %v2161, %v2159
        %v2202 = vpack.c.bf16 %v2162, %v2160
        %v2203 = vpack.c.bf16 %v2165, %v2163
        %v2204 = vpack.c.bf16 %v2166, %v2164
        %v2205 = vpack.c.bf16 %v2169, %v2167
        %v2206 = vpack.c.bf16 %v2170, %v2168
        %v2207 = vpack.c.bf16 %v2173, %v2171
        %v2208 = vpack.c.bf16 %v2174, %v2172
        %v2209 = vpack.c.bf16 %v2177, %v2175
        %v2210 = vpack.c.bf16 %v2178, %v2176
        %s2211 = scalar_lea.vmem [#allocation7], 256
        %v2212 = vld [vmem:[%s2211] sm:$0xff]
        %v2213 = vld [vmem:[%s2211 + $0x8] sm:$0xff]
        %v2214 = vld [vmem:[%s2211 + $0x10] sm:$0xff]
        %v2215 = vld [vmem:[%s2211 + $0x18] sm:$0xff]
        %v2216 = vld [vmem:[%s2211 + $0x20] sm:$0xff]
        %v2217 = vld [vmem:[%s2211 + $0x28] sm:$0xff]
        %v2218 = vld [vmem:[%s2211 + $0x30] sm:$0xff]
        %v2219 = vld [vmem:[%s2211 + $0x38] sm:$0xff]
        %v2220 = vld [vmem:[%s2211 + $0x40] sm:$0xff]
        %v2221 = vld [vmem:[%s2211 + $0x48] sm:$0xff]
        %v2222 = vld [vmem:[%s2211 + $0x50] sm:$0xff]
        %v2223 = vld [vmem:[%s2211 + $0x58] sm:$0xff]
        %v2224 = vld [vmem:[%s2211 + $0x60] sm:$0xff]
        %v2225 = vld [vmem:[%s2211 + $0x68] sm:$0xff]
        %v2226 = vld [vmem:[%s2211 + $0x70] sm:$0xff]
        %v2227 = vld [vmem:[%s2211 + $0x78] sm:$0xff]
        %v2228 = vld [vmem:[%s2211 + $0x80] sm:$0xff]
        %v2229 = vld [vmem:[%s2211 + $0x88] sm:$0xff]
        %v2230 = vld [vmem:[%s2211 + $0x90] sm:$0xff]
        %v2231 = vld [vmem:[%s2211 + $0x98] sm:$0xff]
        %v2232 = vld [vmem:[%s2211 + $0xa0] sm:$0xff]
        %v2233 = vld [vmem:[%s2211 + $0xa8] sm:$0xff]
        %v2234 = vld [vmem:[%s2211 + $0xb0] sm:$0xff]
        %v2235 = vld [vmem:[%s2211 + $0xb8] sm:$0xff]
        %v2236 = vld [vmem:[%s2211 + $0xc0] sm:$0xff]
        %v2237 = vld [vmem:[%s2211 + $0xc8] sm:$0xff]
        %v2238 = vld [vmem:[%s2211 + $0xd0] sm:$0xff]
        %v2239 = vld [vmem:[%s2211 + $0xd8] sm:$0xff]
        %v2240 = vld [vmem:[%s2211 + $0xe0] sm:$0xff]
        %v2241 = vld [vmem:[%s2211 + $0xe8] sm:$0xff]
        %v2242 = vld [vmem:[%s2211 + $0xf0] sm:$0xff]
        %v2243 = vld [vmem:[%s2211 + $0xf8] sm:$0xff]
        %s2244 = scalar_lea.vmem [#allocation8], 2
        %v2245 = vld [vmem:[%s2244] sm:$0x3]
        %v2247 = vlaneseq
        %v2248 = vshrl.u32 %v2247, 7
        %v2249 = vsub.s32 0, %v2248
        %v2250 = vrot.slane %v2245, %v2249
        %v2251 = vlaneseq
        %v2252 = vshrl.u32 %v2251, 7
        %v2253 = vsub.s32 1, %v2252
        %v2254 = vrot.slane %v2245, %v2253
        %v2289 = vunpack.c.l.b16 %v2212
        %v2290 = vunpack.c.h.b16 %v2212
        %v2291 = vunpack.c.l.b16 %v2213
        %v2292 = vunpack.c.h.b16 %v2213
        %v2293 = vunpack.c.l.b16 %v2214
        %v2294 = vunpack.c.h.b16 %v2214
        %v2295 = vunpack.c.l.b16 %v2215
        %v2296 = vunpack.c.h.b16 %v2215
        %v2297 = vunpack.c.l.b16 %v2216
        %v2298 = vunpack.c.h.b16 %v2216
        %v2299 = vunpack.c.l.b16 %v2217
        %v2300 = vunpack.c.h.b16 %v2217
        %v2301 = vunpack.c.l.b16 %v2218
        %v2302 = vunpack.c.h.b16 %v2218
        %v2303 = vunpack.c.l.b16 %v2219
        %v2304 = vunpack.c.h.b16 %v2219
        %v2305 = vunpack.c.l.b16 %v2220
        %v2306 = vunpack.c.h.b16 %v2220
        %v2307 = vunpack.c.l.b16 %v2221
        %v2308 = vunpack.c.h.b16 %v2221
        %v2309 = vunpack.c.l.b16 %v2222
        %v2310 = vunpack.c.h.b16 %v2222
        %v2311 = vunpack.c.l.b16 %v2223
        %v2312 = vunpack.c.h.b16 %v2223
        %v2313 = vunpack.c.l.b16 %v2224
        %v2314 = vunpack.c.h.b16 %v2224
        %v2315 = vunpack.c.l.b16 %v2225
        %v2316 = vunpack.c.h.b16 %v2225
        %v2317 = vunpack.c.l.b16 %v2226
        %v2318 = vunpack.c.h.b16 %v2226
        %v2319 = vunpack.c.l.b16 %v2227
        %v2320 = vunpack.c.h.b16 %v2227
        %v2321 = vunpack.c.l.b16 %v2228
        %v2322 = vunpack.c.h.b16 %v2228
        %v2323 = vunpack.c.l.b16 %v2229
        %v2324 = vunpack.c.h.b16 %v2229
        %v2325 = vunpack.c.l.b16 %v2230
        %v2326 = vunpack.c.h.b16 %v2230
        %v2327 = vunpack.c.l.b16 %v2231
        %v2328 = vunpack.c.h.b16 %v2231
        %v2329 = vunpack.c.l.b16 %v2232
        %v2330 = vunpack.c.h.b16 %v2232
        %v2331 = vunpack.c.l.b16 %v2233
        %v2332 = vunpack.c.h.b16 %v2233
        %v2333 = vunpack.c.l.b16 %v2234
        %v2334 = vunpack.c.h.b16 %v2234
        %v2335 = vunpack.c.l.b16 %v2235
        %v2336 = vunpack.c.h.b16 %v2235
        %v2337 = vunpack.c.l.b16 %v2236
        %v2338 = vunpack.c.h.b16 %v2236
        %v2339 = vunpack.c.l.b16 %v2237
        %v2340 = vunpack.c.h.b16 %v2237
        %v2341 = vunpack.c.l.b16 %v2238
        %v2342 = vunpack.c.h.b16 %v2238
        %v2343 = vunpack.c.l.b16 %v2239
        %v2344 = vunpack.c.h.b16 %v2239
        %v2345 = vunpack.c.l.b16 %v2240
        %v2346 = vunpack.c.h.b16 %v2240
        %v2347 = vunpack.c.l.b16 %v2241
        %v2348 = vunpack.c.h.b16 %v2241
        %v2349 = vunpack.c.l.b16 %v2242
        %v2350 = vunpack.c.h.b16 %v2242
        %v2351 = vunpack.c.l.b16 %v2243
        %v2352 = vunpack.c.h.b16 %v2243
        %v2353 = vpack.c.b16 %v2291, %v2289
        %v2354 = vpack.c.b16 %v2292, %v2290
        %v2355 = vpack.c.b16 %v2295, %v2293
        %v2356 = vpack.c.b16 %v2296, %v2294
        %v2357 = vpack.c.b16 %v2299, %v2297
        %v2358 = vpack.c.b16 %v2300, %v2298
        %v2359 = vpack.c.b16 %v2303, %v2301
        %v2360 = vpack.c.b16 %v2304, %v2302
        %v2361 = vpack.c.b16 %v2307, %v2305
        %v2362 = vpack.c.b16 %v2308, %v2306
        %v2363 = vpack.c.b16 %v2311, %v2309
        %v2364 = vpack.c.b16 %v2312, %v2310
        %v2365 = vpack.c.b16 %v2315, %v2313
        %v2366 = vpack.c.b16 %v2316, %v2314
        %v2367 = vpack.c.b16 %v2319, %v2317
        %v2368 = vpack.c.b16 %v2320, %v2318
        %v2369 = vpack.c.b16 %v2323, %v2321
        %v2370 = vpack.c.b16 %v2324, %v2322
        %v2371 = vpack.c.b16 %v2327, %v2325
        %v2372 = vpack.c.b16 %v2328, %v2326
        %v2373 = vpack.c.b16 %v2331, %v2329
        %v2374 = vpack.c.b16 %v2332, %v2330
        %v2375 = vpack.c.b16 %v2335, %v2333
        %v2376 = vpack.c.b16 %v2336, %v2334
        %v2377 = vpack.c.b16 %v2339, %v2337
        %v2378 = vpack.c.b16 %v2340, %v2338
        %v2379 = vpack.c.b16 %v2343, %v2341
        %v2380 = vpack.c.b16 %v2344, %v2342
        %v2381 = vpack.c.b16 %v2347, %v2345
        %v2382 = vpack.c.b16 %v2348, %v2346
        %v2383 = vpack.c.b16 %v2351, %v2349
        %v2384 = vpack.c.b16 %v2352, %v2350
        %2417 = vmatprep.subr.bf16.mxu0 %v2368
        %2418 = vmatpush1.bf16.msra.mxu0 %v2367
        %2419 = vmatprep.subr.bf16.mxu0 %v2366
        %2420 = vmatpush1.bf16.msra.mxu0 %v2365
        %2421 = vmatprep.subr.bf16.mxu0 %v2364
        %2422 = vmatpush1.bf16.msra.mxu0 %v2363
        %2423 = vmatprep.subr.bf16.mxu0 %v2362
        %2424 = vmatpush1.bf16.msra.mxu0 %v2361
        %2425 = vmatprep.subr.bf16.mxu0 %v2360
        %2426 = vmatpush1.bf16.msra.mxu0 %v2359
        %2427 = vmatprep.subr.bf16.mxu0 %v2358
        %2428 = vmatpush1.bf16.msra.mxu0 %v2357
        %2429 = vmatprep.subr.bf16.mxu0 %v2356
        %2430 = vmatpush1.bf16.msra.mxu0 %v2355
        %2431 = vmatprep.subr.bf16.mxu0 %v2354
        %2432 = vmatpush1.bf16.msra.mxu0 %v2353
        %2433 = vmatprep.subr.bf16.mxu0 %v2384
        %2434 = vmatpush2.bf16.msra.mxu0 %v2383
        %2435 = vmatprep.subr.bf16.mxu0 %v2382
        %2436 = vmatpush2.bf16.msra.mxu0 %v2381
        %2437 = vmatprep.subr.bf16.mxu0 %v2380
        %2438 = vmatpush2.bf16.msra.mxu0 %v2379
        %2439 = vmatprep.subr.bf16.mxu0 %v2378
        %2440 = vmatpush2.bf16.msra.mxu0 %v2377
        %2441 = vmatprep.subr.bf16.mxu0 %v2376
        %2442 = vmatpush2.bf16.msra.mxu0 %v2375
        %2443 = vmatprep.subr.bf16.mxu0 %v2374
        %2444 = vmatpush2.bf16.msra.mxu0 %v2373
        %2445 = vmatprep.subr.bf16.mxu0 %v2372
        %2446 = vmatpush2.bf16.msra.mxu0 %v2371
        %2447 = vmatprep.subr.bf16.mxu0 %v2370
        %2448 = vmatpush2.bf16.msra.mxu0 %v2369
        %2449 = vmatprep.mubr.bf16.mxu0 %v2180
        %2450 = vmatmul.mubr.bf16.gmra.mxu0 %v2179
        %v2451 = vpop.f32.mrf.mxu0
        %v2452 = vadd.f32 %v2250, %v2451
        %v2453 = vpop.f32.mrf.mxu0
        %v2454 = vadd.f32 %v2254, %v2453
        %v2455 = vpop.f32.mrf.mxu0
        %v2456 = vadd.f32 %v2250, %v2455
        %v2457 = vpop.f32.mrf.mxu0
        %v2458 = vadd.f32 %v2254, %v2457
        %2459 = vmatprep.mubr.bf16.mxu0 %v2182
        %2460 = vmatmul.mubr.bf16.gmra.mxu0 %v2181
        %v2461 = vpop.f32.mrf.mxu0
        %v2462 = vadd.f32 %v2250, %v2461
        %v2463 = vpop.f32.mrf.mxu0
        %v2464 = vadd.f32 %v2254, %v2463
        %v2465 = vpop.f32.mrf.mxu0
        %v2466 = vadd.f32 %v2250, %v2465
        %v2467 = vpop.f32.mrf.mxu0
        %v2468 = vadd.f32 %v2254, %v2467
        %2469 = vmatprep.mubr.bf16.mxu0 %v2184
        %2470 = vmatmul.mubr.bf16.gmra.mxu0 %v2183
        %v2471 = vpop.f32.mrf.mxu0
        %v2472 = vadd.f32 %v2250, %v2471
        %v2473 = vpop.f32.mrf.mxu0
        %v2474 = vadd.f32 %v2254, %v2473
        %v2475 = vpop.f32.mrf.mxu0
        %v2476 = vadd.f32 %v2250, %v2475
        %v2477 = vpop.f32.mrf.mxu0
        %v2478 = vadd.f32 %v2254, %v2477
        %2479 = vmatprep.mubr.bf16.mxu0 %v2186
        %2480 = vmatmul.mubr.bf16.gmra.mxu0 %v2185
        %v2481 = vpop.f32.mrf.mxu0
        %v2482 = vadd.f32 %v2250, %v2481
        %v2483 = vpop.f32.mrf.mxu0
        %v2484 = vadd.f32 %v2254, %v2483
        %v2485 = vpop.f32.mrf.mxu0
        %v2486 = vadd.f32 %v2250, %v2485
        %v2487 = vpop.f32.mrf.mxu0
        %v2488 = vadd.f32 %v2254, %v2487
        %2489 = vmatprep.mubr.bf16.mxu0 %v2188
        %2490 = vmatmul.mubr.bf16.gmra.mxu0 %v2187
        %v2491 = vpop.f32.mrf.mxu0
        %v2492 = vadd.f32 %v2250, %v2491
        %v2493 = vpop.f32.mrf.mxu0
        %v2494 = vadd.f32 %v2254, %v2493
        %v2495 = vpop.f32.mrf.mxu0
        %v2496 = vadd.f32 %v2250, %v2495
        %v2497 = vpop.f32.mrf.mxu0
        %v2498 = vadd.f32 %v2254, %v2497
        %2499 = vmatprep.mubr.bf16.mxu0 %v2190
        %2500 = vmatmul.mubr.bf16.gmra.mxu0 %v2189
        %v2501 = vpop.f32.mrf.mxu0
        %v2502 = vadd.f32 %v2250, %v2501
        %v2503 = vpop.f32.mrf.mxu0
        %v2504 = vadd.f32 %v2254, %v2503
        %v2505 = vpop.f32.mrf.mxu0
        %v2506 = vadd.f32 %v2250, %v2505
        %v2507 = vpop.f32.mrf.mxu0
        %v2508 = vadd.f32 %v2254, %v2507
        %2509 = vmatprep.mubr.bf16.mxu0 %v2192
        %2510 = vmatmul.mubr.bf16.gmra.mxu0 %v2191
        %v2511 = vpop.f32.mrf.mxu0
        %v2512 = vadd.f32 %v2250, %v2511
        %v2513 = vpop.f32.mrf.mxu0
        %v2514 = vadd.f32 %v2254, %v2513
        %v2515 = vpop.f32.mrf.mxu0
        %v2516 = vadd.f32 %v2250, %v2515
        %v2517 = vpop.f32.mrf.mxu0
        %v2518 = vadd.f32 %v2254, %v2517
        %2519 = vmatprep.mubr.bf16.mxu0 %v2194
        %2520 = vmatmul.mubr.bf16.gmra.mxu0 %v2193
        %v2521 = vpop.f32.mrf.mxu0
        %v2522 = vadd.f32 %v2250, %v2521
        %v2523 = vpop.f32.mrf.mxu0
        %v2524 = vadd.f32 %v2254, %v2523
        %v2525 = vpop.f32.mrf.mxu0
        %v2526 = vadd.f32 %v2250, %v2525
        %v2527 = vpop.f32.mrf.mxu0
        %v2528 = vadd.f32 %v2254, %v2527
        %2529 = vmatprep.mubr.bf16.mxu0 %v2196
        %2530 = vmatmul.mubr.bf16.gmra.mxu0 %v2195
        %v2531 = vpop.f32.mrf.mxu0
        %v2532 = vadd.f32 %v2250, %v2531
        %v2533 = vpop.f32.mrf.mxu0
        %v2534 = vadd.f32 %v2254, %v2533
        %v2535 = vpop.f32.mrf.mxu0
        %v2536 = vadd.f32 %v2250, %v2535
        %v2537 = vpop.f32.mrf.mxu0
        %v2538 = vadd.f32 %v2254, %v2537
        %2539 = vmatprep.mubr.bf16.mxu0 %v2198
        %2540 = vmatmul.mubr.bf16.gmra.mxu0 %v2197
        %v2541 = vpop.f32.mrf.mxu0
        %v2542 = vadd.f32 %v2250, %v2541
        %v2543 = vpop.f32.mrf.mxu0
        %v2544 = vadd.f32 %v2254, %v2543
        %v2545 = vpop.f32.mrf.mxu0
        %v2546 = vadd.f32 %v2250, %v2545
        %v2547 = vpop.f32.mrf.mxu0
        %v2548 = vadd.f32 %v2254, %v2547
        %2549 = vmatprep.mubr.bf16.mxu0 %v2200
        %2550 = vmatmul.mubr.bf16.gmra.mxu0 %v2199
        %v2551 = vpop.f32.mrf.mxu0
        %v2552 = vadd.f32 %v2250, %v2551
        %v2553 = vpop.f32.mrf.mxu0
        %v2554 = vadd.f32 %v2254, %v2553
        %v2555 = vpop.f32.mrf.mxu0
        %v2556 = vadd.f32 %v2250, %v2555
        %v2557 = vpop.f32.mrf.mxu0
        %v2558 = vadd.f32 %v2254, %v2557
        %2559 = vmatprep.mubr.bf16.mxu0 %v2202
        %2560 = vmatmul.mubr.bf16.gmra.mxu0 %v2201
        %v2561 = vpop.f32.mrf.mxu0
        %v2562 = vadd.f32 %v2250, %v2561
        %v2563 = vpop.f32.mrf.mxu0
        %v2564 = vadd.f32 %v2254, %v2563
        %v2565 = vpop.f32.mrf.mxu0
        %v2566 = vadd.f32 %v2250, %v2565
        %v2567 = vpop.f32.mrf.mxu0
        %v2568 = vadd.f32 %v2254, %v2567
        %2569 = vmatprep.mubr.bf16.mxu0 %v2204
        %2570 = vmatmul.mubr.bf16.gmra.mxu0 %v2203
        %v2571 = vpop.f32.mrf.mxu0
        %v2572 = vadd.f32 %v2250, %v2571
        %v2573 = vpop.f32.mrf.mxu0
        %v2574 = vadd.f32 %v2254, %v2573
        %v2575 = vpop.f32.mrf.mxu0
        %v2576 = vadd.f32 %v2250, %v2575
        %v2577 = vpop.f32.mrf.mxu0
        %v2578 = vadd.f32 %v2254, %v2577
        %2579 = vmatprep.mubr.bf16.mxu0 %v2206
        %2580 = vmatmul.mubr.bf16.gmra.mxu0 %v2205
        %v2581 = vpop.f32.mrf.mxu0
        %v2582 = vadd.f32 %v2250, %v2581
        %v2583 = vpop.f32.mrf.mxu0
        %v2584 = vadd.f32 %v2254, %v2583
        %v2585 = vpop.f32.mrf.mxu0
        %v2586 = vadd.f32 %v2250, %v2585
        %v2587 = vpop.f32.mrf.mxu0
        %v2588 = vadd.f32 %v2254, %v2587
        %2589 = vmatprep.mubr.bf16.mxu0 %v2208
        %2590 = vmatmul.mubr.bf16.gmra.mxu0 %v2207
        %v2591 = vpop.f32.mrf.mxu0
        %v2592 = vadd.f32 %v2250, %v2591
        %v2593 = vpop.f32.mrf.mxu0
        %v2594 = vadd.f32 %v2254, %v2593
        %v2595 = vpop.f32.mrf.mxu0
        %v2596 = vadd.f32 %v2250, %v2595
        %v2597 = vpop.f32.mrf.mxu0
        %v2598 = vadd.f32 %v2254, %v2597
        %2599 = vmatprep.mubr.bf16.mxu0 %v2210
        %2600 = vmatmul.mubr.bf16.gmra.mxu0 %v2209
        %v2601 = vpop.f32.mrf.mxu0
        %v2602 = vadd.f32 %v2250, %v2601
        %v2603 = vpop.f32.mrf.mxu0
        %v2604 = vadd.f32 %v2254, %v2603
        %v2605 = vpop.f32.mrf.mxu0
        %v2606 = vadd.f32 %v2250, %v2605
        %v2607 = vpop.f32.mrf.mxu0
        %v2608 = vadd.f32 %v2254, %v2607
        %2609 = vdwg.mxu0
        %v2610 = vmax.f32 %v2452, 0.0
        %v2611 = vmax.f32 %v2454, 0.0
        %v2612 = vmax.f32 %v2456, 0.0
        %v2613 = vmax.f32 %v2458, 0.0
        %v2614 = vmax.f32 %v2462, 0.0
        %v2615 = vmax.f32 %v2464, 0.0
        %v2616 = vmax.f32 %v2466, 0.0
        %v2617 = vmax.f32 %v2468, 0.0
        %v2618 = vmax.f32 %v2472, 0.0
        %v2619 = vmax.f32 %v2474, 0.0
        %v2620 = vmax.f32 %v2476, 0.0
        %v2621 = vmax.f32 %v2478, 0.0
        %v2622 = vmax.f32 %v2482, 0.0
        %v2623 = vmax.f32 %v2484, 0.0
        %v2624 = vmax.f32 %v2486, 0.0
        %v2625 = vmax.f32 %v2488, 0.0
        %v2626 = vmax.f32 %v2492, 0.0
        %v2627 = vmax.f32 %v2494, 0.0
        %v2628 = vmax.f32 %v2496, 0.0
        %v2629 = vmax.f32 %v2498, 0.0
        %v2630 = vmax.f32 %v2502, 0.0
        %v2631 = vmax.f32 %v2504, 0.0
        %v2632 = vmax.f32 %v2506, 0.0
        %v2633 = vmax.f32 %v2508, 0.0
        %v2634 = vmax.f32 %v2512, 0.0
        %v2635 = vmax.f32 %v2514, 0.0
        %v2636 = vmax.f32 %v2516, 0.0
        %v2637 = vmax.f32 %v2518, 0.0
        %v2638 = vmax.f32 %v2522, 0.0
        %v2639 = vmax.f32 %v2524, 0.0
        %v2640 = vmax.f32 %v2526, 0.0
        %v2641 = vmax.f32 %v2528, 0.0
        %v2642 = vmax.f32 %v2532, 0.0
        %v2643 = vmax.f32 %v2534, 0.0
        %v2644 = vmax.f32 %v2536, 0.0
        %v2645 = vmax.f32 %v2538, 0.0
        %v2646 = vmax.f32 %v2542, 0.0
        %v2647 = vmax.f32 %v2544, 0.0
        %v2648 = vmax.f32 %v2546, 0.0
        %v2649 = vmax.f32 %v2548, 0.0
        %v2650 = vmax.f32 %v2552, 0.0
        %v2651 = vmax.f32 %v2554, 0.0
        %v2652 = vmax.f32 %v2556, 0.0
        %v2653 = vmax.f32 %v2558, 0.0
        %v2654 = vmax.f32 %v2562, 0.0
        %v2655 = vmax.f32 %v2564, 0.0
        %v2656 = vmax.f32 %v2566, 0.0
        %v2657 = vmax.f32 %v2568, 0.0
        %v2658 = vmax.f32 %v2572, 0.0
        %v2659 = vmax.f32 %v2574, 0.0
        %v2660 = vmax.f32 %v2576, 0.0
        %v2661 = vmax.f32 %v2578, 0.0
        %v2662 = vmax.f32 %v2582, 0.0
        %v2663 = vmax.f32 %v2584, 0.0
        %v2664 = vmax.f32 %v2586, 0.0
        %v2665 = vmax.f32 %v2588, 0.0
        %v2666 = vmax.f32 %v2592, 0.0
        %v2667 = vmax.f32 %v2594, 0.0
        %v2668 = vmax.f32 %v2596, 0.0
        %v2669 = vmax.f32 %v2598, 0.0
        %v2670 = vmax.f32 %v2602, 0.0
        %v2671 = vmax.f32 %v2604, 0.0
        %v2672 = vmax.f32 %v2606, 0.0
        %v2673 = vmax.f32 %v2608, 0.0
        %v2674 = vpack.c.bf16 %v2612, %v2610
        %v2675 = vpack.c.bf16 %v2613, %v2611
        %v2676 = vpack.c.bf16 %v2616, %v2614
        %v2677 = vpack.c.bf16 %v2617, %v2615
        %v2678 = vpack.c.bf16 %v2620, %v2618
        %v2679 = vpack.c.bf16 %v2621, %v2619
        %v2680 = vpack.c.bf16 %v2624, %v2622
        %v2681 = vpack.c.bf16 %v2625, %v2623
        %v2682 = vpack.c.bf16 %v2628, %v2626
        %v2683 = vpack.c.bf16 %v2629, %v2627
        %v2684 = vpack.c.bf16 %v2632, %v2630
        %v2685 = vpack.c.bf16 %v2633, %v2631
        %v2686 = vpack.c.bf16 %v2636, %v2634
        %v2687 = vpack.c.bf16 %v2637, %v2635
        %v2688 = vpack.c.bf16 %v2640, %v2638
        %v2689 = vpack.c.bf16 %v2641, %v2639
        %v2690 = vpack.c.bf16 %v2644, %v2642
        %v2691 = vpack.c.bf16 %v2645, %v2643
        %v2692 = vpack.c.bf16 %v2648, %v2646
        %v2693 = vpack.c.bf16 %v2649, %v2647
        %v2694 = vpack.c.bf16 %v2652, %v2650
        %v2695 = vpack.c.bf16 %v2653, %v2651
        %v2696 = vpack.c.bf16 %v2656, %v2654
        %v2697 = vpack.c.bf16 %v2657, %v2655
        %v2698 = vpack.c.bf16 %v2660, %v2658
        %v2699 = vpack.c.bf16 %v2661, %v2659
        %v2700 = vpack.c.bf16 %v2664, %v2662
        %v2701 = vpack.c.bf16 %v2665, %v2663
        %v2702 = vpack.c.bf16 %v2668, %v2666
        %v2703 = vpack.c.bf16 %v2669, %v2667
        %v2704 = vpack.c.bf16 %v2672, %v2670
        %v2705 = vpack.c.bf16 %v2673, %v2671
        %s2706 = scalar_lea.vmem [#allocation7], 512
        %v2707 = vld [vmem:[%s2706] sm:$0xff]
        %v2708 = vld [vmem:[%s2706 + $0x8] sm:$0xff]
        %v2709 = vld [vmem:[%s2706 + $0x10] sm:$0xff]
        %v2710 = vld [vmem:[%s2706 + $0x18] sm:$0xff]
        %v2711 = vld [vmem:[%s2706 + $0x20] sm:$0xff]
        %v2712 = vld [vmem:[%s2706 + $0x28] sm:$0xff]
        %v2713 = vld [vmem:[%s2706 + $0x30] sm:$0xff]
        %v2714 = vld [vmem:[%s2706 + $0x38] sm:$0xff]
        %v2715 = vld [vmem:[%s2706 + $0x40] sm:$0xff]
        %v2716 = vld [vmem:[%s2706 + $0x48] sm:$0xff]
        %v2717 = vld [vmem:[%s2706 + $0x50] sm:$0xff]
        %v2718 = vld [vmem:[%s2706 + $0x58] sm:$0xff]
        %v2719 = vld [vmem:[%s2706 + $0x60] sm:$0xff]
        %v2720 = vld [vmem:[%s2706 + $0x68] sm:$0xff]
        %v2721 = vld [vmem:[%s2706 + $0x70] sm:$0xff]
        %v2722 = vld [vmem:[%s2706 + $0x78] sm:$0xff]
        %v2723 = vld [vmem:[%s2706 + $0x80] sm:$0xff]
        %v2724 = vld [vmem:[%s2706 + $0x88] sm:$0xff]
        %v2725 = vld [vmem:[%s2706 + $0x90] sm:$0xff]
        %v2726 = vld [vmem:[%s2706 + $0x98] sm:$0xff]
        %v2727 = vld [vmem:[%s2706 + $0xa0] sm:$0xff]
        %v2728 = vld [vmem:[%s2706 + $0xa8] sm:$0xff]
        %v2729 = vld [vmem:[%s2706 + $0xb0] sm:$0xff]
        %v2730 = vld [vmem:[%s2706 + $0xb8] sm:$0xff]
        %v2731 = vld [vmem:[%s2706 + $0xc0] sm:$0xff]
        %v2732 = vld [vmem:[%s2706 + $0xc8] sm:$0xff]
        %v2733 = vld [vmem:[%s2706 + $0xd0] sm:$0xff]
        %v2734 = vld [vmem:[%s2706 + $0xd8] sm:$0xff]
        %v2735 = vld [vmem:[%s2706 + $0xe0] sm:$0xff]
        %v2736 = vld [vmem:[%s2706 + $0xe8] sm:$0xff]
        %v2737 = vld [vmem:[%s2706 + $0xf0] sm:$0xff]
        %v2738 = vld [vmem:[%s2706 + $0xf8] sm:$0xff]
        %s2739 = scalar_lea.vmem [#allocation8], 4
        %v2740 = vld [vmem:[%s2739] sm:$0x3]
        %v2742 = vlaneseq
        %v2743 = vshrl.u32 %v2742, 7
        %v2744 = vsub.s32 0, %v2743
        %v2745 = vrot.slane %v2740, %v2744
        %v2746 = vlaneseq
        %v2747 = vshrl.u32 %v2746, 7
        %v2748 = vsub.s32 1, %v2747
        %v2749 = vrot.slane %v2740, %v2748
        %v2784 = vunpack.c.l.b16 %v2707
        %v2785 = vunpack.c.h.b16 %v2707
        %v2786 = vunpack.c.l.b16 %v2708
        %v2787 = vunpack.c.h.b16 %v2708
        %v2788 = vunpack.c.l.b16 %v2709
        %v2789 = vunpack.c.h.b16 %v2709
        %v2790 = vunpack.c.l.b16 %v2710
        %v2791 = vunpack.c.h.b16 %v2710
        %v2792 = vunpack.c.l.b16 %v2711
        %v2793 = vunpack.c.h.b16 %v2711
        %v2794 = vunpack.c.l.b16 %v2712
        %v2795 = vunpack.c.h.b16 %v2712
        %v2796 = vunpack.c.l.b16 %v2713
        %v2797 = vunpack.c.h.b16 %v2713
        %v2798 = vunpack.c.l.b16 %v2714
        %v2799 = vunpack.c.h.b16 %v2714
        %v2800 = vunpack.c.l.b16 %v2715
        %v2801 = vunpack.c.h.b16 %v2715
        %v2802 = vunpack.c.l.b16 %v2716
        %v2803 = vunpack.c.h.b16 %v2716
        %v2804 = vunpack.c.l.b16 %v2717
        %v2805 = vunpack.c.h.b16 %v2717
        %v2806 = vunpack.c.l.b16 %v2718
        %v2807 = vunpack.c.h.b16 %v2718
        %v2808 = vunpack.c.l.b16 %v2719
        %v2809 = vunpack.c.h.b16 %v2719
        %v2810 = vunpack.c.l.b16 %v2720
        %v2811 = vunpack.c.h.b16 %v2720
        %v2812 = vunpack.c.l.b16 %v2721
        %v2813 = vunpack.c.h.b16 %v2721
        %v2814 = vunpack.c.l.b16 %v2722
        %v2815 = vunpack.c.h.b16 %v2722
        %v2816 = vunpack.c.l.b16 %v2723
        %v2817 = vunpack.c.h.b16 %v2723
        %v2818 = vunpack.c.l.b16 %v2724
        %v2819 = vunpack.c.h.b16 %v2724
        %v2820 = vunpack.c.l.b16 %v2725
        %v2821 = vunpack.c.h.b16 %v2725
        %v2822 = vunpack.c.l.b16 %v2726
        %v2823 = vunpack.c.h.b16 %v2726
        %v2824 = vunpack.c.l.b16 %v2727
        %v2825 = vunpack.c.h.b16 %v2727
        %v2826 = vunpack.c.l.b16 %v2728
        %v2827 = vunpack.c.h.b16 %v2728
        %v2828 = vunpack.c.l.b16 %v2729
        %v2829 = vunpack.c.h.b16 %v2729
        %v2830 = vunpack.c.l.b16 %v2730
        %v2831 = vunpack.c.h.b16 %v2730
        %v2832 = vunpack.c.l.b16 %v2731
        %v2833 = vunpack.c.h.b16 %v2731
        %v2834 = vunpack.c.l.b16 %v2732
        %v2835 = vunpack.c.h.b16 %v2732
        %v2836 = vunpack.c.l.b16 %v2733
        %v2837 = vunpack.c.h.b16 %v2733
        %v2838 = vunpack.c.l.b16 %v2734
        %v2839 = vunpack.c.h.b16 %v2734
        %v2840 = vunpack.c.l.b16 %v2735
        %v2841 = vunpack.c.h.b16 %v2735
        %v2842 = vunpack.c.l.b16 %v2736
        %v2843 = vunpack.c.h.b16 %v2736
        %v2844 = vunpack.c.l.b16 %v2737
        %v2845 = vunpack.c.h.b16 %v2737
        %v2846 = vunpack.c.l.b16 %v2738
        %v2847 = vunpack.c.h.b16 %v2738
        %v2848 = vpack.c.b16 %v2786, %v2784
        %v2849 = vpack.c.b16 %v2787, %v2785
        %v2850 = vpack.c.b16 %v2790, %v2788
        %v2851 = vpack.c.b16 %v2791, %v2789
        %v2852 = vpack.c.b16 %v2794, %v2792
        %v2853 = vpack.c.b16 %v2795, %v2793
        %v2854 = vpack.c.b16 %v2798, %v2796
        %v2855 = vpack.c.b16 %v2799, %v2797
        %v2856 = vpack.c.b16 %v2802, %v2800
        %v2857 = vpack.c.b16 %v2803, %v2801
        %v2858 = vpack.c.b16 %v2806, %v2804
        %v2859 = vpack.c.b16 %v2807, %v2805
        %v2860 = vpack.c.b16 %v2810, %v2808
        %v2861 = vpack.c.b16 %v2811, %v2809
        %v2862 = vpack.c.b16 %v2814, %v2812
        %v2863 = vpack.c.b16 %v2815, %v2813
        %v2864 = vpack.c.b16 %v2818, %v2816
        %v2865 = vpack.c.b16 %v2819, %v2817
        %v2866 = vpack.c.b16 %v2822, %v2820
        %v2867 = vpack.c.b16 %v2823, %v2821
        %v2868 = vpack.c.b16 %v2826, %v2824
        %v2869 = vpack.c.b16 %v2827, %v2825
        %v2870 = vpack.c.b16 %v2830, %v2828
        %v2871 = vpack.c.b16 %v2831, %v2829
        %v2872 = vpack.c.b16 %v2834, %v2832
        %v2873 = vpack.c.b16 %v2835, %v2833
        %v2874 = vpack.c.b16 %v2838, %v2836
        %v2875 = vpack.c.b16 %v2839, %v2837
        %v2876 = vpack.c.b16 %v2842, %v2840
        %v2877 = vpack.c.b16 %v2843, %v2841
        %v2878 = vpack.c.b16 %v2846, %v2844
        %v2879 = vpack.c.b16 %v2847, %v2845
        %2912 = vmatprep.subr.bf16.mxu0 %v2863
        %2913 = vmatpush1.bf16.msra.mxu0 %v2862
        %2914 = vmatprep.subr.bf16.mxu0 %v2861
        %2915 = vmatpush1.bf16.msra.mxu0 %v2860
        %2916 = vmatprep.subr.bf16.mxu0 %v2859
        %2917 = vmatpush1.bf16.msra.mxu0 %v2858
        %2918 = vmatprep.subr.bf16.mxu0 %v2857
        %2919 = vmatpush1.bf16.msra.mxu0 %v2856
        %2920 = vmatprep.subr.bf16.mxu0 %v2855
        %2921 = vmatpush1.bf16.msra.mxu0 %v2854
        %2922 = vmatprep.subr.bf16.mxu0 %v2853
        %2923 = vmatpush1.bf16.msra.mxu0 %v2852
        %2924 = vmatprep.subr.bf16.mxu0 %v2851
        %2925 = vmatpush1.bf16.msra.mxu0 %v2850
        %2926 = vmatprep.subr.bf16.mxu0 %v2849
        %2927 = vmatpush1.bf16.msra.mxu0 %v2848
        %2928 = vmatprep.subr.bf16.mxu0 %v2879
        %2929 = vmatpush2.bf16.msra.mxu0 %v2878
        %2930 = vmatprep.subr.bf16.mxu0 %v2877
        %2931 = vmatpush2.bf16.msra.mxu0 %v2876
        %2932 = vmatprep.subr.bf16.mxu0 %v2875
        %2933 = vmatpush2.bf16.msra.mxu0 %v2874
        %2934 = vmatprep.subr.bf16.mxu0 %v2873
        %2935 = vmatpush2.bf16.msra.mxu0 %v2872
        %2936 = vmatprep.subr.bf16.mxu0 %v2871
        %2937 = vmatpush2.bf16.msra.mxu0 %v2870
        %2938 = vmatprep.subr.bf16.mxu0 %v2869
        %2939 = vmatpush2.bf16.msra.mxu0 %v2868
        %2940 = vmatprep.subr.bf16.mxu0 %v2867
        %2941 = vmatpush2.bf16.msra.mxu0 %v2866
        %2942 = vmatprep.subr.bf16.mxu0 %v2865
        %2943 = vmatpush2.bf16.msra.mxu0 %v2864
        %2944 = vmatprep.mubr.bf16.mxu0 %v2675
        %2945 = vmatmul.mubr.bf16.gmra.mxu0 %v2674
        %v2946 = vpop.f32.mrf.mxu0
        %v2947 = vadd.f32 %v2745, %v2946
        %v2948 = vpop.f32.mrf.mxu0
        %v2949 = vadd.f32 %v2749, %v2948
        %v2950 = vpop.f32.mrf.mxu0
        %v2951 = vadd.f32 %v2745, %v2950
        %v2952 = vpop.f32.mrf.mxu0
        %v2953 = vadd.f32 %v2749, %v2952
        %2954 = vmatprep.mubr.bf16.mxu0 %v2677
        %2955 = vmatmul.mubr.bf16.gmra.mxu0 %v2676
        %v2956 = vpop.f32.mrf.mxu0
        %v2957 = vadd.f32 %v2745, %v2956
        %v2958 = vpop.f32.mrf.mxu0
        %v2959 = vadd.f32 %v2749, %v2958
        %v2960 = vpop.f32.mrf.mxu0
        %v2961 = vadd.f32 %v2745, %v2960
        %v2962 = vpop.f32.mrf.mxu0
        %v2963 = vadd.f32 %v2749, %v2962
        %2964 = vmatprep.mubr.bf16.mxu0 %v2679
        %2965 = vmatmul.mubr.bf16.gmra.mxu0 %v2678
        %v2966 = vpop.f32.mrf.mxu0
        %v2967 = vadd.f32 %v2745, %v2966
        %v2968 = vpop.f32.mrf.mxu0
        %v2969 = vadd.f32 %v2749, %v2968
        %v2970 = vpop.f32.mrf.mxu0
        %v2971 = vadd.f32 %v2745, %v2970
        %v2972 = vpop.f32.mrf.mxu0
        %v2973 = vadd.f32 %v2749, %v2972
        %2974 = vmatprep.mubr.bf16.mxu0 %v2681
        %2975 = vmatmul.mubr.bf16.gmra.mxu0 %v2680
        %v2976 = vpop.f32.mrf.mxu0
        %v2977 = vadd.f32 %v2745, %v2976
        %v2978 = vpop.f32.mrf.mxu0
        %v2979 = vadd.f32 %v2749, %v2978
        %v2980 = vpop.f32.mrf.mxu0
        %v2981 = vadd.f32 %v2745, %v2980
        %v2982 = vpop.f32.mrf.mxu0
        %v2983 = vadd.f32 %v2749, %v2982
        %2984 = vmatprep.mubr.bf16.mxu0 %v2683
        %2985 = vmatmul.mubr.bf16.gmra.mxu0 %v2682
        %v2986 = vpop.f32.mrf.mxu0
        %v2987 = vadd.f32 %v2745, %v2986
        %v2988 = vpop.f32.mrf.mxu0
        %v2989 = vadd.f32 %v2749, %v2988
        %v2990 = vpop.f32.mrf.mxu0
        %v2991 = vadd.f32 %v2745, %v2990
        %v2992 = vpop.f32.mrf.mxu0
        %v2993 = vadd.f32 %v2749, %v2992
        %2994 = vmatprep.mubr.bf16.mxu0 %v2685
        %2995 = vmatmul.mubr.bf16.gmra.mxu0 %v2684
        %v2996 = vpop.f32.mrf.mxu0
        %v2997 = vadd.f32 %v2745, %v2996
        %v2998 = vpop.f32.mrf.mxu0
        %v2999 = vadd.f32 %v2749, %v2998
        %v3000 = vpop.f32.mrf.mxu0
        %v3001 = vadd.f32 %v2745, %v3000
        %v3002 = vpop.f32.mrf.mxu0
        %v3003 = vadd.f32 %v2749, %v3002
        %3004 = vmatprep.mubr.bf16.mxu0 %v2687
        %3005 = vmatmul.mubr.bf16.gmra.mxu0 %v2686
        %v3006 = vpop.f32.mrf.mxu0
        %v3007 = vadd.f32 %v2745, %v3006
        %v3008 = vpop.f32.mrf.mxu0
        %v3009 = vadd.f32 %v2749, %v3008
        %v3010 = vpop.f32.mrf.mxu0
        %v3011 = vadd.f32 %v2745, %v3010
        %v3012 = vpop.f32.mrf.mxu0
        %v3013 = vadd.f32 %v2749, %v3012
        %3014 = vmatprep.mubr.bf16.mxu0 %v2689
        %3015 = vmatmul.mubr.bf16.gmra.mxu0 %v2688
        %v3016 = vpop.f32.mrf.mxu0
        %v3017 = vadd.f32 %v2745, %v3016
        %v3018 = vpop.f32.mrf.mxu0
        %v3019 = vadd.f32 %v2749, %v3018
        %v3020 = vpop.f32.mrf.mxu0
        %v3021 = vadd.f32 %v2745, %v3020
        %v3022 = vpop.f32.mrf.mxu0
        %v3023 = vadd.f32 %v2749, %v3022
        %3024 = vmatprep.mubr.bf16.mxu0 %v2691
        %3025 = vmatmul.mubr.bf16.gmra.mxu0 %v2690
        %v3026 = vpop.f32.mrf.mxu0
        %v3027 = vadd.f32 %v2745, %v3026
        %v3028 = vpop.f32.mrf.mxu0
        %v3029 = vadd.f32 %v2749, %v3028
        %v3030 = vpop.f32.mrf.mxu0
        %v3031 = vadd.f32 %v2745, %v3030
        %v3032 = vpop.f32.mrf.mxu0
        %v3033 = vadd.f32 %v2749, %v3032
        %3034 = vmatprep.mubr.bf16.mxu0 %v2693
        %3035 = vmatmul.mubr.bf16.gmra.mxu0 %v2692
        %v3036 = vpop.f32.mrf.mxu0
        %v3037 = vadd.f32 %v2745, %v3036
        %v3038 = vpop.f32.mrf.mxu0
        %v3039 = vadd.f32 %v2749, %v3038
        %v3040 = vpop.f32.mrf.mxu0
        %v3041 = vadd.f32 %v2745, %v3040
        %v3042 = vpop.f32.mrf.mxu0
        %v3043 = vadd.f32 %v2749, %v3042
        %3044 = vmatprep.mubr.bf16.mxu0 %v2695
        %3045 = vmatmul.mubr.bf16.gmra.mxu0 %v2694
        %v3046 = vpop.f32.mrf.mxu0
        %v3047 = vadd.f32 %v2745, %v3046
        %v3048 = vpop.f32.mrf.mxu0
        %v3049 = vadd.f32 %v2749, %v3048
        %v3050 = vpop.f32.mrf.mxu0
        %v3051 = vadd.f32 %v2745, %v3050
        %v3052 = vpop.f32.mrf.mxu0
        %v3053 = vadd.f32 %v2749, %v3052
        %3054 = vmatprep.mubr.bf16.mxu0 %v2697
        %3055 = vmatmul.mubr.bf16.gmra.mxu0 %v2696
        %v3056 = vpop.f32.mrf.mxu0
        %v3057 = vadd.f32 %v2745, %v3056
        %v3058 = vpop.f32.mrf.mxu0
        %v3059 = vadd.f32 %v2749, %v3058
        %v3060 = vpop.f32.mrf.mxu0
        %v3061 = vadd.f32 %v2745, %v3060
        %v3062 = vpop.f32.mrf.mxu0
        %v3063 = vadd.f32 %v2749, %v3062
        %3064 = vmatprep.mubr.bf16.mxu0 %v2699
        %3065 = vmatmul.mubr.bf16.gmra.mxu0 %v2698
        %v3066 = vpop.f32.mrf.mxu0
        %v3067 = vadd.f32 %v2745, %v3066
        %v3068 = vpop.f32.mrf.mxu0
        %v3069 = vadd.f32 %v2749, %v3068
        %v3070 = vpop.f32.mrf.mxu0
        %v3071 = vadd.f32 %v2745, %v3070
        %v3072 = vpop.f32.mrf.mxu0
        %v3073 = vadd.f32 %v2749, %v3072
        %3074 = vmatprep.mubr.bf16.mxu0 %v2701
        %3075 = vmatmul.mubr.bf16.gmra.mxu0 %v2700
        %v3076 = vpop.f32.mrf.mxu0
        %v3077 = vadd.f32 %v2745, %v3076
        %v3078 = vpop.f32.mrf.mxu0
        %v3079 = vadd.f32 %v2749, %v3078
        %v3080 = vpop.f32.mrf.mxu0
        %v3081 = vadd.f32 %v2745, %v3080
        %v3082 = vpop.f32.mrf.mxu0
        %v3083 = vadd.f32 %v2749, %v3082
        %3084 = vmatprep.mubr.bf16.mxu0 %v2703
        %3085 = vmatmul.mubr.bf16.gmra.mxu0 %v2702
        %v3086 = vpop.f32.mrf.mxu0
        %v3087 = vadd.f32 %v2745, %v3086
        %v3088 = vpop.f32.mrf.mxu0
        %v3089 = vadd.f32 %v2749, %v3088
        %v3090 = vpop.f32.mrf.mxu0
        %v3091 = vadd.f32 %v2745, %v3090
        %v3092 = vpop.f32.mrf.mxu0
        %v3093 = vadd.f32 %v2749, %v3092
        %3094 = vmatprep.mubr.bf16.mxu0 %v2705
        %3095 = vmatmul.mubr.bf16.gmra.mxu0 %v2704
        %v3096 = vpop.f32.mrf.mxu0
        %v3097 = vadd.f32 %v2745, %v3096
        %v3098 = vpop.f32.mrf.mxu0
        %v3099 = vadd.f32 %v2749, %v3098
        %v3100 = vpop.f32.mrf.mxu0
        %v3101 = vadd.f32 %v2745, %v3100
        %v3102 = vpop.f32.mrf.mxu0
        %v3103 = vadd.f32 %v2749, %v3102
        %3104 = vdwg.mxu0
        %v3105 = vmax.f32 %v2947, 0.0
        %v3106 = vmax.f32 %v2949, 0.0
        %v3107 = vmax.f32 %v2951, 0.0
        %v3108 = vmax.f32 %v2953, 0.0
        %v3109 = vmax.f32 %v2957, 0.0
        %v3110 = vmax.f32 %v2959, 0.0
        %v3111 = vmax.f32 %v2961, 0.0
        %v3112 = vmax.f32 %v2963, 0.0
        %v3113 = vmax.f32 %v2967, 0.0
        %v3114 = vmax.f32 %v2969, 0.0
        %v3115 = vmax.f32 %v2971, 0.0
        %v3116 = vmax.f32 %v2973, 0.0
        %v3117 = vmax.f32 %v2977, 0.0
        %v3118 = vmax.f32 %v2979, 0.0
        %v3119 = vmax.f32 %v2981, 0.0
        %v3120 = vmax.f32 %v2983, 0.0
        %v3121 = vmax.f32 %v2987, 0.0
        %v3122 = vmax.f32 %v2989, 0.0
        %v3123 = vmax.f32 %v2991, 0.0
        %v3124 = vmax.f32 %v2993, 0.0
        %v3125 = vmax.f32 %v2997, 0.0
        %v3126 = vmax.f32 %v2999, 0.0
        %v3127 = vmax.f32 %v3001, 0.0
        %v3128 = vmax.f32 %v3003, 0.0
        %v3129 = vmax.f32 %v3007, 0.0
        %v3130 = vmax.f32 %v3009, 0.0
        %v3131 = vmax.f32 %v3011, 0.0
        %v3132 = vmax.f32 %v3013, 0.0
        %v3133 = vmax.f32 %v3017, 0.0
        %v3134 = vmax.f32 %v3019, 0.0
        %v3135 = vmax.f32 %v3021, 0.0
        %v3136 = vmax.f32 %v3023, 0.0
        %v3137 = vmax.f32 %v3027, 0.0
        %v3138 = vmax.f32 %v3029, 0.0
        %v3139 = vmax.f32 %v3031, 0.0
        %v3140 = vmax.f32 %v3033, 0.0
        %v3141 = vmax.f32 %v3037, 0.0
        %v3142 = vmax.f32 %v3039, 0.0
        %v3143 = vmax.f32 %v3041, 0.0
        %v3144 = vmax.f32 %v3043, 0.0
        %v3145 = vmax.f32 %v3047, 0.0
        %v3146 = vmax.f32 %v3049, 0.0
        %v3147 = vmax.f32 %v3051, 0.0
        %v3148 = vmax.f32 %v3053, 0.0
        %v3149 = vmax.f32 %v3057, 0.0
        %v3150 = vmax.f32 %v3059, 0.0
        %v3151 = vmax.f32 %v3061, 0.0
        %v3152 = vmax.f32 %v3063, 0.0
        %v3153 = vmax.f32 %v3067, 0.0
        %v3154 = vmax.f32 %v3069, 0.0
        %v3155 = vmax.f32 %v3071, 0.0
        %v3156 = vmax.f32 %v3073, 0.0
        %v3157 = vmax.f32 %v3077, 0.0
        %v3158 = vmax.f32 %v3079, 0.0
        %v3159 = vmax.f32 %v3081, 0.0
        %v3160 = vmax.f32 %v3083, 0.0
        %v3161 = vmax.f32 %v3087, 0.0
        %v3162 = vmax.f32 %v3089, 0.0
        %v3163 = vmax.f32 %v3091, 0.0
        %v3164 = vmax.f32 %v3093, 0.0
        %v3165 = vmax.f32 %v3097, 0.0
        %v3166 = vmax.f32 %v3099, 0.0
        %v3167 = vmax.f32 %v3101, 0.0
        %v3168 = vmax.f32 %v3103, 0.0
        %v3169 = vpack.c.bf16 %v3107, %v3105
        %v3170 = vpack.c.bf16 %v3108, %v3106
        %v3171 = vpack.c.bf16 %v3111, %v3109
        %v3172 = vpack.c.bf16 %v3112, %v3110
        %v3173 = vpack.c.bf16 %v3115, %v3113
        %v3174 = vpack.c.bf16 %v3116, %v3114
        %v3175 = vpack.c.bf16 %v3119, %v3117
        %v3176 = vpack.c.bf16 %v3120, %v3118
        %v3177 = vpack.c.bf16 %v3123, %v3121
        %v3178 = vpack.c.bf16 %v3124, %v3122
        %v3179 = vpack.c.bf16 %v3127, %v3125
        %v3180 = vpack.c.bf16 %v3128, %v3126
        %v3181 = vpack.c.bf16 %v3131, %v3129
        %v3182 = vpack.c.bf16 %v3132, %v3130
        %v3183 = vpack.c.bf16 %v3135, %v3133
        %v3184 = vpack.c.bf16 %v3136, %v3134
        %v3185 = vpack.c.bf16 %v3139, %v3137
        %v3186 = vpack.c.bf16 %v3140, %v3138
        %v3187 = vpack.c.bf16 %v3143, %v3141
        %v3188 = vpack.c.bf16 %v3144, %v3142
        %v3189 = vpack.c.bf16 %v3147, %v3145
        %v3190 = vpack.c.bf16 %v3148, %v3146
        %v3191 = vpack.c.bf16 %v3151, %v3149
        %v3192 = vpack.c.bf16 %v3152, %v3150
        %v3193 = vpack.c.bf16 %v3155, %v3153
        %v3194 = vpack.c.bf16 %v3156, %v3154
        %v3195 = vpack.c.bf16 %v3159, %v3157
        %v3196 = vpack.c.bf16 %v3160, %v3158
        %v3197 = vpack.c.bf16 %v3163, %v3161
        %v3198 = vpack.c.bf16 %v3164, %v3162
        %v3199 = vpack.c.bf16 %v3167, %v3165
        %v3200 = vpack.c.bf16 %v3168, %v3166
        %s3201 = scalar_lea.vmem [#allocation7], 768
        %v3202 = vld [vmem:[%s3201] sm:$0xff]
        %v3203 = vld [vmem:[%s3201 + $0x8] sm:$0xff]
        %v3204 = vld [vmem:[%s3201 + $0x10] sm:$0xff]
        %v3205 = vld [vmem:[%s3201 + $0x18] sm:$0xff]
        %v3206 = vld [vmem:[%s3201 + $0x20] sm:$0xff]
        %v3207 = vld [vmem:[%s3201 + $0x28] sm:$0xff]
        %v3208 = vld [vmem:[%s3201 + $0x30] sm:$0xff]
        %v3209 = vld [vmem:[%s3201 + $0x38] sm:$0xff]
        %v3210 = vld [vmem:[%s3201 + $0x40] sm:$0xff]
        %v3211 = vld [vmem:[%s3201 + $0x48] sm:$0xff]
        %v3212 = vld [vmem:[%s3201 + $0x50] sm:$0xff]
        %v3213 = vld [vmem:[%s3201 + $0x58] sm:$0xff]
        %v3214 = vld [vmem:[%s3201 + $0x60] sm:$0xff]
        %v3215 = vld [vmem:[%s3201 + $0x68] sm:$0xff]
        %v3216 = vld [vmem:[%s3201 + $0x70] sm:$0xff]
        %v3217 = vld [vmem:[%s3201 + $0x78] sm:$0xff]
        %v3218 = vld [vmem:[%s3201 + $0x80] sm:$0xff]
        %v3219 = vld [vmem:[%s3201 + $0x88] sm:$0xff]
        %v3220 = vld [vmem:[%s3201 + $0x90] sm:$0xff]
        %v3221 = vld [vmem:[%s3201 + $0x98] sm:$0xff]
        %v3222 = vld [vmem:[%s3201 + $0xa0] sm:$0xff]
        %v3223 = vld [vmem:[%s3201 + $0xa8] sm:$0xff]
        %v3224 = vld [vmem:[%s3201 + $0xb0] sm:$0xff]
        %v3225 = vld [vmem:[%s3201 + $0xb8] sm:$0xff]
        %v3226 = vld [vmem:[%s3201 + $0xc0] sm:$0xff]
        %v3227 = vld [vmem:[%s3201 + $0xc8] sm:$0xff]
        %v3228 = vld [vmem:[%s3201 + $0xd0] sm:$0xff]
        %v3229 = vld [vmem:[%s3201 + $0xd8] sm:$0xff]
        %v3230 = vld [vmem:[%s3201 + $0xe0] sm:$0xff]
        %v3231 = vld [vmem:[%s3201 + $0xe8] sm:$0xff]
        %v3232 = vld [vmem:[%s3201 + $0xf0] sm:$0xff]
        %v3233 = vld [vmem:[%s3201 + $0xf8] sm:$0xff]
        %s3234 = scalar_lea.vmem [#allocation8], 6
        %v3235 = vld [vmem:[%s3234] sm:$0x3]
        %v3237 = vlaneseq
        %v3238 = vshrl.u32 %v3237, 7
        %v3239 = vsub.s32 0, %v3238
        %v3240 = vrot.slane %v3235, %v3239
        %v3241 = vlaneseq
        %v3242 = vshrl.u32 %v3241, 7
        %v3243 = vsub.s32 1, %v3242
        %v3244 = vrot.slane %v3235, %v3243
        %v3279 = vunpack.c.l.b16 %v3202
        %v3280 = vunpack.c.h.b16 %v3202
        %v3281 = vunpack.c.l.b16 %v3203
        %v3282 = vunpack.c.h.b16 %v3203
        %v3283 = vunpack.c.l.b16 %v3204
        %v3284 = vunpack.c.h.b16 %v3204
        %v3285 = vunpack.c.l.b16 %v3205
        %v3286 = vunpack.c.h.b16 %v3205
        %v3287 = vunpack.c.l.b16 %v3206
        %v3288 = vunpack.c.h.b16 %v3206
        %v3289 = vunpack.c.l.b16 %v3207
        %v3290 = vunpack.c.h.b16 %v3207
        %v3291 = vunpack.c.l.b16 %v3208
        %v3292 = vunpack.c.h.b16 %v3208
        %v3293 = vunpack.c.l.b16 %v3209
        %v3294 = vunpack.c.h.b16 %v3209
        %v3295 = vunpack.c.l.b16 %v3210
        %v3296 = vunpack.c.h.b16 %v3210
        %v3297 = vunpack.c.l.b16 %v3211
        %v3298 = vunpack.c.h.b16 %v3211
        %v3299 = vunpack.c.l.b16 %v3212
        %v3300 = vunpack.c.h.b16 %v3212
        %v3301 = vunpack.c.l.b16 %v3213
        %v3302 = vunpack.c.h.b16 %v3213
        %v3303 = vunpack.c.l.b16 %v3214
        %v3304 = vunpack.c.h.b16 %v3214
        %v3305 = vunpack.c.l.b16 %v3215
        %v3306 = vunpack.c.h.b16 %v3215
        %v3307 = vunpack.c.l.b16 %v3216
        %v3308 = vunpack.c.h.b16 %v3216
        %v3309 = vunpack.c.l.b16 %v3217
        %v3310 = vunpack.c.h.b16 %v3217
        %v3311 = vunpack.c.l.b16 %v3218
        %v3312 = vunpack.c.h.b16 %v3218
        %v3313 = vunpack.c.l.b16 %v3219
        %v3314 = vunpack.c.h.b16 %v3219
        %v3315 = vunpack.c.l.b16 %v3220
        %v3316 = vunpack.c.h.b16 %v3220
        %v3317 = vunpack.c.l.b16 %v3221
        %v3318 = vunpack.c.h.b16 %v3221
        %v3319 = vunpack.c.l.b16 %v3222
        %v3320 = vunpack.c.h.b16 %v3222
        %v3321 = vunpack.c.l.b16 %v3223
        %v3322 = vunpack.c.h.b16 %v3223
        %v3323 = vunpack.c.l.b16 %v3224
        %v3324 = vunpack.c.h.b16 %v3224
        %v3325 = vunpack.c.l.b16 %v3225
        %v3326 = vunpack.c.h.b16 %v3225
        %v3327 = vunpack.c.l.b16 %v3226
        %v3328 = vunpack.c.h.b16 %v3226
        %v3329 = vunpack.c.l.b16 %v3227
        %v3330 = vunpack.c.h.b16 %v3227
        %v3331 = vunpack.c.l.b16 %v3228
        %v3332 = vunpack.c.h.b16 %v3228
        %v3333 = vunpack.c.l.b16 %v3229
        %v3334 = vunpack.c.h.b16 %v3229
        %v3335 = vunpack.c.l.b16 %v3230
        %v3336 = vunpack.c.h.b16 %v3230
        %v3337 = vunpack.c.l.b16 %v3231
        %v3338 = vunpack.c.h.b16 %v3231
        %v3339 = vunpack.c.l.b16 %v3232
        %v3340 = vunpack.c.h.b16 %v3232
        %v3341 = vunpack.c.l.b16 %v3233
        %v3342 = vunpack.c.h.b16 %v3233
        %v3343 = vpack.c.b16 %v3281, %v3279
        %v3344 = vpack.c.b16 %v3282, %v3280
        %v3345 = vpack.c.b16 %v3285, %v3283
        %v3346 = vpack.c.b16 %v3286, %v3284
        %v3347 = vpack.c.b16 %v3289, %v3287
        %v3348 = vpack.c.b16 %v3290, %v3288
        %v3349 = vpack.c.b16 %v3293, %v3291
        %v3350 = vpack.c.b16 %v3294, %v3292
        %v3351 = vpack.c.b16 %v3297, %v3295
        %v3352 = vpack.c.b16 %v3298, %v3296
        %v3353 = vpack.c.b16 %v3301, %v3299
        %v3354 = vpack.c.b16 %v3302, %v3300
        %v3355 = vpack.c.b16 %v3305, %v3303
        %v3356 = vpack.c.b16 %v3306, %v3304
        %v3357 = vpack.c.b16 %v3309, %v3307
        %v3358 = vpack.c.b16 %v3310, %v3308
        %v3359 = vpack.c.b16 %v3313, %v3311
        %v3360 = vpack.c.b16 %v3314, %v3312
        %v3361 = vpack.c.b16 %v3317, %v3315
        %v3362 = vpack.c.b16 %v3318, %v3316
        %v3363 = vpack.c.b16 %v3321, %v3319
        %v3364 = vpack.c.b16 %v3322, %v3320
        %v3365 = vpack.c.b16 %v3325, %v3323
        %v3366 = vpack.c.b16 %v3326, %v3324
        %v3367 = vpack.c.b16 %v3329, %v3327
        %v3368 = vpack.c.b16 %v3330, %v3328
        %v3369 = vpack.c.b16 %v3333, %v3331
        %v3370 = vpack.c.b16 %v3334, %v3332
        %v3371 = vpack.c.b16 %v3337, %v3335
        %v3372 = vpack.c.b16 %v3338, %v3336
        %v3373 = vpack.c.b16 %v3341, %v3339
        %v3374 = vpack.c.b16 %v3342, %v3340
        %3407 = vmatprep.subr.bf16.mxu0 %v3358
        %3408 = vmatpush1.bf16.msra.mxu0 %v3357
        %3409 = vmatprep.subr.bf16.mxu0 %v3356
        %3410 = vmatpush1.bf16.msra.mxu0 %v3355
        %3411 = vmatprep.subr.bf16.mxu0 %v3354
        %3412 = vmatpush1.bf16.msra.mxu0 %v3353
        %3413 = vmatprep.subr.bf16.mxu0 %v3352
        %3414 = vmatpush1.bf16.msra.mxu0 %v3351
        %3415 = vmatprep.subr.bf16.mxu0 %v3350
        %3416 = vmatpush1.bf16.msra.mxu0 %v3349
        %3417 = vmatprep.subr.bf16.mxu0 %v3348
        %3418 = vmatpush1.bf16.msra.mxu0 %v3347
        %3419 = vmatprep.subr.bf16.mxu0 %v3346
        %3420 = vmatpush1.bf16.msra.mxu0 %v3345
        %3421 = vmatprep.subr.bf16.mxu0 %v3344
        %3422 = vmatpush1.bf16.msra.mxu0 %v3343
        %3423 = vmatprep.subr.bf16.mxu0 %v3374
        %3424 = vmatpush2.bf16.msra.mxu0 %v3373
        %3425 = vmatprep.subr.bf16.mxu0 %v3372
        %3426 = vmatpush2.bf16.msra.mxu0 %v3371
        %3427 = vmatprep.subr.bf16.mxu0 %v3370
        %3428 = vmatpush2.bf16.msra.mxu0 %v3369
        %3429 = vmatprep.subr.bf16.mxu0 %v3368
        %3430 = vmatpush2.bf16.msra.mxu0 %v3367
        %3431 = vmatprep.subr.bf16.mxu0 %v3366
        %3432 = vmatpush2.bf16.msra.mxu0 %v3365
        %3433 = vmatprep.subr.bf16.mxu0 %v3364
        %3434 = vmatpush2.bf16.msra.mxu0 %v3363
        %3435 = vmatprep.subr.bf16.mxu0 %v3362
        %3436 = vmatpush2.bf16.msra.mxu0 %v3361
        %3437 = vmatprep.subr.bf16.mxu0 %v3360
        %3438 = vmatpush2.bf16.msra.mxu0 %v3359
        %3439 = vmatprep.mubr.bf16.mxu0 %v3170
        %3440 = vmatmul.mubr.bf16.gmra.mxu0 %v3169
        %v3441 = vpop.f32.mrf.mxu0
        %v3442 = vadd.f32 %v3240, %v3441
        %v3443 = vpop.f32.mrf.mxu0
        %v3444 = vadd.f32 %v3244, %v3443
        %v3445 = vpop.f32.mrf.mxu0
        %v3446 = vadd.f32 %v3240, %v3445
        %v3447 = vpop.f32.mrf.mxu0
        %v3448 = vadd.f32 %v3244, %v3447
        %3449 = vmatprep.mubr.bf16.mxu0 %v3172
        %3450 = vmatmul.mubr.bf16.gmra.mxu0 %v3171
        %v3451 = vpop.f32.mrf.mxu0
        %v3452 = vadd.f32 %v3240, %v3451
        %v3453 = vpop.f32.mrf.mxu0
        %v3454 = vadd.f32 %v3244, %v3453
        %v3455 = vpop.f32.mrf.mxu0
        %v3456 = vadd.f32 %v3240, %v3455
        %v3457 = vpop.f32.mrf.mxu0
        %v3458 = vadd.f32 %v3244, %v3457
        %3459 = vmatprep.mubr.bf16.mxu0 %v3174
        %3460 = vmatmul.mubr.bf16.gmra.mxu0 %v3173
        %v3461 = vpop.f32.mrf.mxu0
        %v3462 = vadd.f32 %v3240, %v3461
        %v3463 = vpop.f32.mrf.mxu0
        %v3464 = vadd.f32 %v3244, %v3463
        %v3465 = vpop.f32.mrf.mxu0
        %v3466 = vadd.f32 %v3240, %v3465
        %v3467 = vpop.f32.mrf.mxu0
        %v3468 = vadd.f32 %v3244, %v3467
        %3469 = vmatprep.mubr.bf16.mxu0 %v3176
        %3470 = vmatmul.mubr.bf16.gmra.mxu0 %v3175
        %v3471 = vpop.f32.mrf.mxu0
        %v3472 = vadd.f32 %v3240, %v3471
        %v3473 = vpop.f32.mrf.mxu0
        %v3474 = vadd.f32 %v3244, %v3473
        %v3475 = vpop.f32.mrf.mxu0
        %v3476 = vadd.f32 %v3240, %v3475
        %v3477 = vpop.f32.mrf.mxu0
        %v3478 = vadd.f32 %v3244, %v3477
        %3479 = vmatprep.mubr.bf16.mxu0 %v3178
        %3480 = vmatmul.mubr.bf16.gmra.mxu0 %v3177
        %v3481 = vpop.f32.mrf.mxu0
        %v3482 = vadd.f32 %v3240, %v3481
        %v3483 = vpop.f32.mrf.mxu0
        %v3484 = vadd.f32 %v3244, %v3483
        %v3485 = vpop.f32.mrf.mxu0
        %v3486 = vadd.f32 %v3240, %v3485
        %v3487 = vpop.f32.mrf.mxu0
        %v3488 = vadd.f32 %v3244, %v3487
        %3489 = vmatprep.mubr.bf16.mxu0 %v3180
        %3490 = vmatmul.mubr.bf16.gmra.mxu0 %v3179
        %v3491 = vpop.f32.mrf.mxu0
        %v3492 = vadd.f32 %v3240, %v3491
        %v3493 = vpop.f32.mrf.mxu0
        %v3494 = vadd.f32 %v3244, %v3493
        %v3495 = vpop.f32.mrf.mxu0
        %v3496 = vadd.f32 %v3240, %v3495
        %v3497 = vpop.f32.mrf.mxu0
        %v3498 = vadd.f32 %v3244, %v3497
        %3499 = vmatprep.mubr.bf16.mxu0 %v3182
        %3500 = vmatmul.mubr.bf16.gmra.mxu0 %v3181
        %v3501 = vpop.f32.mrf.mxu0
        %v3502 = vadd.f32 %v3240, %v3501
        %v3503 = vpop.f32.mrf.mxu0
        %v3504 = vadd.f32 %v3244, %v3503
        %v3505 = vpop.f32.mrf.mxu0
        %v3506 = vadd.f32 %v3240, %v3505
        %v3507 = vpop.f32.mrf.mxu0
        %v3508 = vadd.f32 %v3244, %v3507
        %3509 = vmatprep.mubr.bf16.mxu0 %v3184
        %3510 = vmatmul.mubr.bf16.gmra.mxu0 %v3183
        %v3511 = vpop.f32.mrf.mxu0
        %v3512 = vadd.f32 %v3240, %v3511
        %v3513 = vpop.f32.mrf.mxu0
        %v3514 = vadd.f32 %v3244, %v3513
        %v3515 = vpop.f32.mrf.mxu0
        %v3516 = vadd.f32 %v3240, %v3515
        %v3517 = vpop.f32.mrf.mxu0
        %v3518 = vadd.f32 %v3244, %v3517
        %3519 = vmatprep.mubr.bf16.mxu0 %v3186
        %3520 = vmatmul.mubr.bf16.gmra.mxu0 %v3185
        %v3521 = vpop.f32.mrf.mxu0
        %v3522 = vadd.f32 %v3240, %v3521
        %v3523 = vpop.f32.mrf.mxu0
        %v3524 = vadd.f32 %v3244, %v3523
        %v3525 = vpop.f32.mrf.mxu0
        %v3526 = vadd.f32 %v3240, %v3525
        %v3527 = vpop.f32.mrf.mxu0
        %v3528 = vadd.f32 %v3244, %v3527
        %3529 = vmatprep.mubr.bf16.mxu0 %v3188
        %3530 = vmatmul.mubr.bf16.gmra.mxu0 %v3187
        %v3531 = vpop.f32.mrf.mxu0
        %v3532 = vadd.f32 %v3240, %v3531
        %v3533 = vpop.f32.mrf.mxu0
        %v3534 = vadd.f32 %v3244, %v3533
        %v3535 = vpop.f32.mrf.mxu0
        %v3536 = vadd.f32 %v3240, %v3535
        %v3537 = vpop.f32.mrf.mxu0
        %v3538 = vadd.f32 %v3244, %v3537
        %3539 = vmatprep.mubr.bf16.mxu0 %v3190
        %3540 = vmatmul.mubr.bf16.gmra.mxu0 %v3189
        %v3541 = vpop.f32.mrf.mxu0
        %v3542 = vadd.f32 %v3240, %v3541
        %v3543 = vpop.f32.mrf.mxu0
        %v3544 = vadd.f32 %v3244, %v3543
        %v3545 = vpop.f32.mrf.mxu0
        %v3546 = vadd.f32 %v3240, %v3545
        %v3547 = vpop.f32.mrf.mxu0
        %v3548 = vadd.f32 %v3244, %v3547
        %3549 = vmatprep.mubr.bf16.mxu0 %v3192
        %3550 = vmatmul.mubr.bf16.gmra.mxu0 %v3191
        %v3551 = vpop.f32.mrf.mxu0
        %v3552 = vadd.f32 %v3240, %v3551
        %v3553 = vpop.f32.mrf.mxu0
        %v3554 = vadd.f32 %v3244, %v3553
        %v3555 = vpop.f32.mrf.mxu0
        %v3556 = vadd.f32 %v3240, %v3555
        %v3557 = vpop.f32.mrf.mxu0
        %v3558 = vadd.f32 %v3244, %v3557
        %3559 = vmatprep.mubr.bf16.mxu0 %v3194
        %3560 = vmatmul.mubr.bf16.gmra.mxu0 %v3193
        %v3561 = vpop.f32.mrf.mxu0
        %v3562 = vadd.f32 %v3240, %v3561
        %v3563 = vpop.f32.mrf.mxu0
        %v3564 = vadd.f32 %v3244, %v3563
        %v3565 = vpop.f32.mrf.mxu0
        %v3566 = vadd.f32 %v3240, %v3565
        %v3567 = vpop.f32.mrf.mxu0
        %v3568 = vadd.f32 %v3244, %v3567
        %3569 = vmatprep.mubr.bf16.mxu0 %v3196
        %3570 = vmatmul.mubr.bf16.gmra.mxu0 %v3195
        %v3571 = vpop.f32.mrf.mxu0
        %v3572 = vadd.f32 %v3240, %v3571
        %v3573 = vpop.f32.mrf.mxu0
        %v3574 = vadd.f32 %v3244, %v3573
        %v3575 = vpop.f32.mrf.mxu0
        %v3576 = vadd.f32 %v3240, %v3575
        %v3577 = vpop.f32.mrf.mxu0
        %v3578 = vadd.f32 %v3244, %v3577
        %3579 = vmatprep.mubr.bf16.mxu0 %v3198
        %3580 = vmatmul.mubr.bf16.gmra.mxu0 %v3197
        %v3581 = vpop.f32.mrf.mxu0
        %v3582 = vadd.f32 %v3240, %v3581
        %v3583 = vpop.f32.mrf.mxu0
        %v3584 = vadd.f32 %v3244, %v3583
        %v3585 = vpop.f32.mrf.mxu0
        %v3586 = vadd.f32 %v3240, %v3585
        %v3587 = vpop.f32.mrf.mxu0
        %v3588 = vadd.f32 %v3244, %v3587
        %3589 = vmatprep.mubr.bf16.mxu0 %v3200
        %3590 = vmatmul.mubr.bf16.gmra.mxu0 %v3199
        %v3591 = vpop.f32.mrf.mxu0
        %v3592 = vadd.f32 %v3240, %v3591
        %v3593 = vpop.f32.mrf.mxu0
        %v3594 = vadd.f32 %v3244, %v3593
        %v3595 = vpop.f32.mrf.mxu0
        %v3596 = vadd.f32 %v3240, %v3595
        %v3597 = vpop.f32.mrf.mxu0
        %v3598 = vadd.f32 %v3244, %v3597
        %3599 = vdwg.mxu0
        %v3600 = vmax.f32 %v3442, 0.0
        %v3601 = vmax.f32 %v3444, 0.0
        %v3602 = vmax.f32 %v3446, 0.0
        %v3603 = vmax.f32 %v3448, 0.0
        %v3604 = vmax.f32 %v3452, 0.0
        %v3605 = vmax.f32 %v3454, 0.0
        %v3606 = vmax.f32 %v3456, 0.0
        %v3607 = vmax.f32 %v3458, 0.0
        %v3608 = vmax.f32 %v3462, 0.0
        %v3609 = vmax.f32 %v3464, 0.0
        %v3610 = vmax.f32 %v3466, 0.0
        %v3611 = vmax.f32 %v3468, 0.0
        %v3612 = vmax.f32 %v3472, 0.0
        %v3613 = vmax.f32 %v3474, 0.0
        %v3614 = vmax.f32 %v3476, 0.0
        %v3615 = vmax.f32 %v3478, 0.0
        %v3616 = vmax.f32 %v3482, 0.0
        %v3617 = vmax.f32 %v3484, 0.0
        %v3618 = vmax.f32 %v3486, 0.0
        %v3619 = vmax.f32 %v3488, 0.0
        %v3620 = vmax.f32 %v3492, 0.0
        %v3621 = vmax.f32 %v3494, 0.0
        %v3622 = vmax.f32 %v3496, 0.0
        %v3623 = vmax.f32 %v3498, 0.0
        %v3624 = vmax.f32 %v3502, 0.0
        %v3625 = vmax.f32 %v3504, 0.0
        %v3626 = vmax.f32 %v3506, 0.0
        %v3627 = vmax.f32 %v3508, 0.0
        %v3628 = vmax.f32 %v3512, 0.0
        %v3629 = vmax.f32 %v3514, 0.0
        %v3630 = vmax.f32 %v3516, 0.0
        %v3631 = vmax.f32 %v3518, 0.0
        %v3632 = vmax.f32 %v3522, 0.0
        %v3633 = vmax.f32 %v3524, 0.0
        %v3634 = vmax.f32 %v3526, 0.0
        %v3635 = vmax.f32 %v3528, 0.0
        %v3636 = vmax.f32 %v3532, 0.0
        %v3637 = vmax.f32 %v3534, 0.0
        %v3638 = vmax.f32 %v3536, 0.0
        %v3639 = vmax.f32 %v3538, 0.0
        %v3640 = vmax.f32 %v3542, 0.0
        %v3641 = vmax.f32 %v3544, 0.0
        %v3642 = vmax.f32 %v3546, 0.0
        %v3643 = vmax.f32 %v3548, 0.0
        %v3644 = vmax.f32 %v3552, 0.0
        %v3645 = vmax.f32 %v3554, 0.0
        %v3646 = vmax.f32 %v3556, 0.0
        %v3647 = vmax.f32 %v3558, 0.0
        %v3648 = vmax.f32 %v3562, 0.0
        %v3649 = vmax.f32 %v3564, 0.0
        %v3650 = vmax.f32 %v3566, 0.0
        %v3651 = vmax.f32 %v3568, 0.0
        %v3652 = vmax.f32 %v3572, 0.0
        %v3653 = vmax.f32 %v3574, 0.0
        %v3654 = vmax.f32 %v3576, 0.0
        %v3655 = vmax.f32 %v3578, 0.0
        %v3656 = vmax.f32 %v3582, 0.0
        %v3657 = vmax.f32 %v3584, 0.0
        %v3658 = vmax.f32 %v3586, 0.0
        %v3659 = vmax.f32 %v3588, 0.0
        %v3660 = vmax.f32 %v3592, 0.0
        %v3661 = vmax.f32 %v3594, 0.0
        %v3662 = vmax.f32 %v3596, 0.0
        %v3663 = vmax.f32 %v3598, 0.0
        %v3664 = vpack.c.bf16 %v3602, %v3600
        %v3665 = vpack.c.bf16 %v3603, %v3601
        %v3666 = vpack.c.bf16 %v3606, %v3604
        %v3667 = vpack.c.bf16 %v3607, %v3605
        %v3668 = vpack.c.bf16 %v3610, %v3608
        %v3669 = vpack.c.bf16 %v3611, %v3609
        %v3670 = vpack.c.bf16 %v3614, %v3612
        %v3671 = vpack.c.bf16 %v3615, %v3613
        %v3672 = vpack.c.bf16 %v3618, %v3616
        %v3673 = vpack.c.bf16 %v3619, %v3617
        %v3674 = vpack.c.bf16 %v3622, %v3620
        %v3675 = vpack.c.bf16 %v3623, %v3621
        %v3676 = vpack.c.bf16 %v3626, %v3624
        %v3677 = vpack.c.bf16 %v3627, %v3625
        %v3678 = vpack.c.bf16 %v3630, %v3628
        %v3679 = vpack.c.bf16 %v3631, %v3629
        %v3680 = vpack.c.bf16 %v3634, %v3632
        %v3681 = vpack.c.bf16 %v3635, %v3633
        %v3682 = vpack.c.bf16 %v3638, %v3636
        %v3683 = vpack.c.bf16 %v3639, %v3637
        %v3684 = vpack.c.bf16 %v3642, %v3640
        %v3685 = vpack.c.bf16 %v3643, %v3641
        %v3686 = vpack.c.bf16 %v3646, %v3644
        %v3687 = vpack.c.bf16 %v3647, %v3645
        %v3688 = vpack.c.bf16 %v3650, %v3648
        %v3689 = vpack.c.bf16 %v3651, %v3649
        %v3690 = vpack.c.bf16 %v3654, %v3652
        %v3691 = vpack.c.bf16 %v3655, %v3653
        %v3692 = vpack.c.bf16 %v3658, %v3656
        %v3693 = vpack.c.bf16 %v3659, %v3657
        %v3694 = vpack.c.bf16 %v3662, %v3660
        %v3695 = vpack.c.bf16 %v3663, %v3661
        %s3696 = scalar_lea.vmem [#allocation7], 1024
        %v3697 = vld [vmem:[%s3696] sm:$0xff]
        %v3698 = vld [vmem:[%s3696 + $0x8] sm:$0xff]
        %v3699 = vld [vmem:[%s3696 + $0x10] sm:$0xff]
        %v3700 = vld [vmem:[%s3696 + $0x18] sm:$0xff]
        %v3701 = vld [vmem:[%s3696 + $0x20] sm:$0xff]
        %v3702 = vld [vmem:[%s3696 + $0x28] sm:$0xff]
        %v3703 = vld [vmem:[%s3696 + $0x30] sm:$0xff]
        %v3704 = vld [vmem:[%s3696 + $0x38] sm:$0xff]
        %v3705 = vld [vmem:[%s3696 + $0x40] sm:$0xff]
        %v3706 = vld [vmem:[%s3696 + $0x48] sm:$0xff]
        %v3707 = vld [vmem:[%s3696 + $0x50] sm:$0xff]
        %v3708 = vld [vmem:[%s3696 + $0x58] sm:$0xff]
        %v3709 = vld [vmem:[%s3696 + $0x60] sm:$0xff]
        %v3710 = vld [vmem:[%s3696 + $0x68] sm:$0xff]
        %v3711 = vld [vmem:[%s3696 + $0x70] sm:$0xff]
        %v3712 = vld [vmem:[%s3696 + $0x78] sm:$0xff]
        %v3713 = vld [vmem:[%s3696 + $0x80] sm:$0xff]
        %v3714 = vld [vmem:[%s3696 + $0x88] sm:$0xff]
        %v3715 = vld [vmem:[%s3696 + $0x90] sm:$0xff]
        %v3716 = vld [vmem:[%s3696 + $0x98] sm:$0xff]
        %v3717 = vld [vmem:[%s3696 + $0xa0] sm:$0xff]
        %v3718 = vld [vmem:[%s3696 + $0xa8] sm:$0xff]
        %v3719 = vld [vmem:[%s3696 + $0xb0] sm:$0xff]
        %v3720 = vld [vmem:[%s3696 + $0xb8] sm:$0xff]
        %v3721 = vld [vmem:[%s3696 + $0xc0] sm:$0xff]
        %v3722 = vld [vmem:[%s3696 + $0xc8] sm:$0xff]
        %v3723 = vld [vmem:[%s3696 + $0xd0] sm:$0xff]
        %v3724 = vld [vmem:[%s3696 + $0xd8] sm:$0xff]
        %v3725 = vld [vmem:[%s3696 + $0xe0] sm:$0xff]
        %v3726 = vld [vmem:[%s3696 + $0xe8] sm:$0xff]
        %v3727 = vld [vmem:[%s3696 + $0xf0] sm:$0xff]
        %v3728 = vld [vmem:[%s3696 + $0xf8] sm:$0xff]
        %v3761 = vunpack.c.l.b16 %v3697
        %v3762 = vunpack.c.h.b16 %v3697
        %v3763 = vunpack.c.l.b16 %v3698
        %v3764 = vunpack.c.h.b16 %v3698
        %v3765 = vunpack.c.l.b16 %v3699
        %v3766 = vunpack.c.h.b16 %v3699
        %v3767 = vunpack.c.l.b16 %v3700
        %v3768 = vunpack.c.h.b16 %v3700
        %v3769 = vunpack.c.l.b16 %v3701
        %v3770 = vunpack.c.h.b16 %v3701
        %v3771 = vunpack.c.l.b16 %v3702
        %v3772 = vunpack.c.h.b16 %v3702
        %v3773 = vunpack.c.l.b16 %v3703
        %v3774 = vunpack.c.h.b16 %v3703
        %v3775 = vunpack.c.l.b16 %v3704
        %v3776 = vunpack.c.h.b16 %v3704
        %v3777 = vunpack.c.l.b16 %v3705
        %v3778 = vunpack.c.h.b16 %v3705
        %v3779 = vunpack.c.l.b16 %v3706
        %v3780 = vunpack.c.h.b16 %v3706
        %v3781 = vunpack.c.l.b16 %v3707
        %v3782 = vunpack.c.h.b16 %v3707
        %v3783 = vunpack.c.l.b16 %v3708
        %v3784 = vunpack.c.h.b16 %v3708
        %v3785 = vunpack.c.l.b16 %v3709
        %v3786 = vunpack.c.h.b16 %v3709
        %v3787 = vunpack.c.l.b16 %v3710
        %v3788 = vunpack.c.h.b16 %v3710
        %v3789 = vunpack.c.l.b16 %v3711
        %v3790 = vunpack.c.h.b16 %v3711
        %v3791 = vunpack.c.l.b16 %v3712
        %v3792 = vunpack.c.h.b16 %v3712
        %v3793 = vunpack.c.l.b16 %v3713
        %v3794 = vunpack.c.h.b16 %v3713
        %v3795 = vunpack.c.l.b16 %v3714
        %v3796 = vunpack.c.h.b16 %v3714
        %v3797 = vunpack.c.l.b16 %v3715
        %v3798 = vunpack.c.h.b16 %v3715
        %v3799 = vunpack.c.l.b16 %v3716
        %v3800 = vunpack.c.h.b16 %v3716
        %v3801 = vunpack.c.l.b16 %v3717
        %v3802 = vunpack.c.h.b16 %v3717
        %v3803 = vunpack.c.l.b16 %v3718
        %v3804 = vunpack.c.h.b16 %v3718
        %v3805 = vunpack.c.l.b16 %v3719
        %v3806 = vunpack.c.h.b16 %v3719
        %v3807 = vunpack.c.l.b16 %v3720
        %v3808 = vunpack.c.h.b16 %v3720
        %v3809 = vunpack.c.l.b16 %v3721
        %v3810 = vunpack.c.h.b16 %v3721
        %v3811 = vunpack.c.l.b16 %v3722
        %v3812 = vunpack.c.h.b16 %v3722
        %v3813 = vunpack.c.l.b16 %v3723
        %v3814 = vunpack.c.h.b16 %v3723
        %v3815 = vunpack.c.l.b16 %v3724
        %v3816 = vunpack.c.h.b16 %v3724
        %v3817 = vunpack.c.l.b16 %v3725
        %v3818 = vunpack.c.h.b16 %v3725
        %v3819 = vunpack.c.l.b16 %v3726
        %v3820 = vunpack.c.h.b16 %v3726
        %v3821 = vunpack.c.l.b16 %v3727
        %v3822 = vunpack.c.h.b16 %v3727
        %v3823 = vunpack.c.l.b16 %v3728
        %v3824 = vunpack.c.h.b16 %v3728
        %v3825 = vpack.c.b16 %v3763, %v3761
        %v3826 = vpack.c.b16 %v3764, %v3762
        %v3827 = vpack.c.b16 %v3767, %v3765
        %v3828 = vpack.c.b16 %v3768, %v3766
        %v3829 = vpack.c.b16 %v3771, %v3769
        %v3830 = vpack.c.b16 %v3772, %v3770
        %v3831 = vpack.c.b16 %v3775, %v3773
        %v3832 = vpack.c.b16 %v3776, %v3774
        %v3833 = vpack.c.b16 %v3779, %v3777
        %v3834 = vpack.c.b16 %v3780, %v3778
        %v3835 = vpack.c.b16 %v3783, %v3781
        %v3836 = vpack.c.b16 %v3784, %v3782
        %v3837 = vpack.c.b16 %v3787, %v3785
        %v3838 = vpack.c.b16 %v3788, %v3786
        %v3839 = vpack.c.b16 %v3791, %v3789
        %v3840 = vpack.c.b16 %v3792, %v3790
        %v3841 = vpack.c.b16 %v3795, %v3793
        %v3842 = vpack.c.b16 %v3796, %v3794
        %v3843 = vpack.c.b16 %v3799, %v3797
        %v3844 = vpack.c.b16 %v3800, %v3798
        %v3845 = vpack.c.b16 %v3803, %v3801
        %v3846 = vpack.c.b16 %v3804, %v3802
        %v3847 = vpack.c.b16 %v3807, %v3805
        %v3848 = vpack.c.b16 %v3808, %v3806
        %v3849 = vpack.c.b16 %v3811, %v3809
        %v3850 = vpack.c.b16 %v3812, %v3810
        %v3851 = vpack.c.b16 %v3815, %v3813
        %v3852 = vpack.c.b16 %v3816, %v3814
        %v3853 = vpack.c.b16 %v3819, %v3817
        %v3854 = vpack.c.b16 %v3820, %v3818
        %v3855 = vpack.c.b16 %v3823, %v3821
        %v3856 = vpack.c.b16 %v3824, %v3822
        %3889 = vmatprep.subr.bf16.mxu0 %v3840
        %3890 = vmatpush1.bf16.msra.mxu0 %v3839
        %3891 = vmatprep.subr.bf16.mxu0 %v3838
        %3892 = vmatpush1.bf16.msra.mxu0 %v3837
        %3893 = vmatprep.subr.bf16.mxu0 %v3836
        %3894 = vmatpush1.bf16.msra.mxu0 %v3835
        %3895 = vmatprep.subr.bf16.mxu0 %v3834
        %3896 = vmatpush1.bf16.msra.mxu0 %v3833
        %3897 = vmatprep.subr.bf16.mxu0 %v3832
        %3898 = vmatpush1.bf16.msra.mxu0 %v3831
        %3899 = vmatprep.subr.bf16.mxu0 %v3830
        %3900 = vmatpush1.bf16.msra.mxu0 %v3829
        %3901 = vmatprep.subr.bf16.mxu0 %v3828
        %3902 = vmatpush1.bf16.msra.mxu0 %v3827
        %3903 = vmatprep.subr.bf16.mxu0 %v3826
        %3904 = vmatpush1.bf16.msra.mxu0 %v3825
        %3905 = vmatprep.subr.bf16.mxu0 %v3856
        %3906 = vmatpush2.bf16.msra.mxu0 %v3855
        %3907 = vmatprep.subr.bf16.mxu0 %v3854
        %3908 = vmatpush2.bf16.msra.mxu0 %v3853
        %3909 = vmatprep.subr.bf16.mxu0 %v3852
        %3910 = vmatpush2.bf16.msra.mxu0 %v3851
        %3911 = vmatprep.subr.bf16.mxu0 %v3850
        %3912 = vmatpush2.bf16.msra.mxu0 %v3849
        %3913 = vmatprep.subr.bf16.mxu0 %v3848
        %3914 = vmatpush2.bf16.msra.mxu0 %v3847
        %3915 = vmatprep.subr.bf16.mxu0 %v3846
        %3916 = vmatpush2.bf16.msra.mxu0 %v3845
        %3917 = vmatprep.subr.bf16.mxu0 %v3844
        %3918 = vmatpush2.bf16.msra.mxu0 %v3843
        %3919 = vmatprep.subr.bf16.mxu0 %v3842
        %3920 = vmatpush2.bf16.msra.mxu0 %v3841
        %3921 = vmatprep.mubr.bf16.mxu0 %v3665
        %3922 = vmatmul.mubr.bf16.gmra.mxu0 %v3664
        %v3923 = vpop.f32.mrf.mxu0
        %v3924 = vadd.f32 %v1188, %v3923
        %v3925 = vpop.f32.mrf.mxu0
        %v3926 = vadd.f32 %v1190, %v3925
        %v3927 = vpop.f32.mrf.mxu0
        %v3928 = vadd.f32 %v1192, %v3927
        %v3929 = vpop.f32.mrf.mxu0
        %v3930 = vadd.f32 %v1194, %v3929
        %3931 = vmatprep.mubr.bf16.mxu0 %v3667
        %3932 = vmatmul.mubr.bf16.gmra.mxu0 %v3666
        %v3933 = vpop.f32.mrf.mxu0
        %v3934 = vadd.f32 %v1198, %v3933
        %v3935 = vpop.f32.mrf.mxu0
        %v3936 = vadd.f32 %v1200, %v3935
        %v3937 = vpop.f32.mrf.mxu0
        %v3938 = vadd.f32 %v1202, %v3937
        %v3939 = vpop.f32.mrf.mxu0
        %v3940 = vadd.f32 %v1204, %v3939
        %3941 = vmatprep.mubr.bf16.mxu0 %v3669
        %3942 = vmatmul.mubr.bf16.gmra.mxu0 %v3668
        %v3943 = vpop.f32.mrf.mxu0
        %v3944 = vadd.f32 %v1208, %v3943
        %v3945 = vpop.f32.mrf.mxu0
        %v3946 = vadd.f32 %v1210, %v3945
        %v3947 = vpop.f32.mrf.mxu0
        %v3948 = vadd.f32 %v1212, %v3947
        %v3949 = vpop.f32.mrf.mxu0
        %v3950 = vadd.f32 %v1214, %v3949
        %3951 = vmatprep.mubr.bf16.mxu0 %v3671
        %3952 = vmatmul.mubr.bf16.gmra.mxu0 %v3670
        %v3953 = vpop.f32.mrf.mxu0
        %v3954 = vadd.f32 %v1218, %v3953
        %v3955 = vpop.f32.mrf.mxu0
        %v3956 = vadd.f32 %v1220, %v3955
        %v3957 = vpop.f32.mrf.mxu0
        %v3958 = vadd.f32 %v1222, %v3957
        %v3959 = vpop.f32.mrf.mxu0
        %v3960 = vadd.f32 %v1224, %v3959
        %3961 = vmatprep.mubr.bf16.mxu0 %v3673
        %3962 = vmatmul.mubr.bf16.gmra.mxu0 %v3672
        %v3963 = vpop.f32.mrf.mxu0
        %v3964 = vadd.f32 %v1228, %v3963
        %v3965 = vpop.f32.mrf.mxu0
        %v3966 = vadd.f32 %v1230, %v3965
        %v3967 = vpop.f32.mrf.mxu0
        %v3968 = vadd.f32 %v1232, %v3967
        %v3969 = vpop.f32.mrf.mxu0
        %v3970 = vadd.f32 %v1234, %v3969
        %3971 = vmatprep.mubr.bf16.mxu0 %v3675
        %3972 = vmatmul.mubr.bf16.gmra.mxu0 %v3674
        %v3973 = vpop.f32.mrf.mxu0
        %v3974 = vadd.f32 %v1238, %v3973
        %v3975 = vpop.f32.mrf.mxu0
        %v3976 = vadd.f32 %v1240, %v3975
        %v3977 = vpop.f32.mrf.mxu0
        %v3978 = vadd.f32 %v1242, %v3977
        %v3979 = vpop.f32.mrf.mxu0
        %v3980 = vadd.f32 %v1244, %v3979
        %3981 = vmatprep.mubr.bf16.mxu0 %v3677
        %3982 = vmatmul.mubr.bf16.gmra.mxu0 %v3676
        %v3983 = vpop.f32.mrf.mxu0
        %v3984 = vadd.f32 %v1248, %v3983
        %v3985 = vpop.f32.mrf.mxu0
        %v3986 = vadd.f32 %v1250, %v3985
        %v3987 = vpop.f32.mrf.mxu0
        %v3988 = vadd.f32 %v1252, %v3987
        %v3989 = vpop.f32.mrf.mxu0
        %v3990 = vadd.f32 %v1254, %v3989
        %3991 = vmatprep.mubr.bf16.mxu0 %v3679
        %3992 = vmatmul.mubr.bf16.gmra.mxu0 %v3678
        %v3993 = vpop.f32.mrf.mxu0
        %v3994 = vadd.f32 %v1258, %v3993
        %v3995 = vpop.f32.mrf.mxu0
        %v3996 = vadd.f32 %v1260, %v3995
        %v3997 = vpop.f32.mrf.mxu0
        %v3998 = vadd.f32 %v1262, %v3997
        %v3999 = vpop.f32.mrf.mxu0
        %v4000 = vadd.f32 %v1264, %v3999
        %4001 = vmatprep.mubr.bf16.mxu0 %v3681
        %4002 = vmatmul.mubr.bf16.gmra.mxu0 %v3680
        %v4003 = vpop.f32.mrf.mxu0
        %v4004 = vadd.f32 %v1268, %v4003
        %v4005 = vpop.f32.mrf.mxu0
        %v4006 = vadd.f32 %v1270, %v4005
        %v4007 = vpop.f32.mrf.mxu0
        %v4008 = vadd.f32 %v1272, %v4007
        %v4009 = vpop.f32.mrf.mxu0
        %v4010 = vadd.f32 %v1274, %v4009
        %4011 = vmatprep.mubr.bf16.mxu0 %v3683
        %4012 = vmatmul.mubr.bf16.gmra.mxu0 %v3682
        %v4013 = vpop.f32.mrf.mxu0
        %v4014 = vadd.f32 %v1278, %v4013
        %v4015 = vpop.f32.mrf.mxu0
        %v4016 = vadd.f32 %v1280, %v4015
        %v4017 = vpop.f32.mrf.mxu0
        %v4018 = vadd.f32 %v1282, %v4017
        %v4019 = vpop.f32.mrf.mxu0
        %v4020 = vadd.f32 %v1284, %v4019
        %4021 = vmatprep.mubr.bf16.mxu0 %v3685
        %4022 = vmatmul.mubr.bf16.gmra.mxu0 %v3684
        %v4023 = vpop.f32.mrf.mxu0
        %v4024 = vadd.f32 %v1288, %v4023
        %v4025 = vpop.f32.mrf.mxu0
        %v4026 = vadd.f32 %v1290, %v4025
        %v4027 = vpop.f32.mrf.mxu0
        %v4028 = vadd.f32 %v1292, %v4027
        %v4029 = vpop.f32.mrf.mxu0
        %v4030 = vadd.f32 %v1294, %v4029
        %4031 = vmatprep.mubr.bf16.mxu0 %v3687
        %4032 = vmatmul.mubr.bf16.gmra.mxu0 %v3686
        %v4033 = vpop.f32.mrf.mxu0
        %v4034 = vadd.f32 %v1298, %v4033
        %v4035 = vpop.f32.mrf.mxu0
        %v4036 = vadd.f32 %v1300, %v4035
        %v4037 = vpop.f32.mrf.mxu0
        %v4038 = vadd.f32 %v1302, %v4037
        %v4039 = vpop.f32.mrf.mxu0
        %v4040 = vadd.f32 %v1304, %v4039
        %4041 = vmatprep.mubr.bf16.mxu0 %v3689
        %4042 = vmatmul.mubr.bf16.gmra.mxu0 %v3688
        %v4043 = vpop.f32.mrf.mxu0
        %v4044 = vadd.f32 %v1308, %v4043
        %v4045 = vpop.f32.mrf.mxu0
        %v4046 = vadd.f32 %v1310, %v4045
        %v4047 = vpop.f32.mrf.mxu0
        %v4048 = vadd.f32 %v1312, %v4047
        %v4049 = vpop.f32.mrf.mxu0
        %v4050 = vadd.f32 %v1314, %v4049
        %4051 = vmatprep.mubr.bf16.mxu0 %v3691
        %4052 = vmatmul.mubr.bf16.gmra.mxu0 %v3690
        %v4053 = vpop.f32.mrf.mxu0
        %v4054 = vadd.f32 %v1318, %v4053
        %v4055 = vpop.f32.mrf.mxu0
        %v4056 = vadd.f32 %v1320, %v4055
        %v4057 = vpop.f32.mrf.mxu0
        %v4058 = vadd.f32 %v1322, %v4057
        %v4059 = vpop.f32.mrf.mxu0
        %v4060 = vadd.f32 %v1324, %v4059
        %4061 = vmatprep.mubr.bf16.mxu0 %v3693
        %4062 = vmatmul.mubr.bf16.gmra.mxu0 %v3692
        %v4063 = vpop.f32.mrf.mxu0
        %v4064 = vadd.f32 %v1328, %v4063
        %v4065 = vpop.f32.mrf.mxu0
        %v4066 = vadd.f32 %v1330, %v4065
        %v4067 = vpop.f32.mrf.mxu0
        %v4068 = vadd.f32 %v1332, %v4067
        %v4069 = vpop.f32.mrf.mxu0
        %v4070 = vadd.f32 %v1334, %v4069
        %4071 = vmatprep.mubr.bf16.mxu0 %v3695
        %4072 = vmatmul.mubr.bf16.gmra.mxu0 %v3694
        %v4073 = vpop.f32.mrf.mxu0
        %v4074 = vadd.f32 %v1338, %v4073
        %v4075 = vpop.f32.mrf.mxu0
        %v4076 = vadd.f32 %v1340, %v4075
        %v4077 = vpop.f32.mrf.mxu0
        %v4078 = vadd.f32 %v1342, %v4077
        %v4079 = vpop.f32.mrf.mxu0
        %v4080 = vadd.f32 %v1344, %v4079
        %4081 = vdwg.mxu0
        %s4082 = scalar_lea.vmem [#allocation8], 8
        %v4083 = vld [vmem:[%s4082] sm:$0x3]
        %v4085 = vlaneseq
        %v4086 = vshrl.u32 %v4085, 7
        %v4087 = vsub.s32 0, %v4086
        %v4088 = vrot.slane %v4083, %v4087
        %v4089 = vlaneseq
        %v4090 = vshrl.u32 %v4089, 7
        %v4091 = vsub.s32 1, %v4090
        %v4092 = vrot.slane %v4083, %v4091
        %v4095 = vadd.f32 %v3924, %v4088
        %v4096 = vadd.f32 %v3926, %v4092
        %v4097 = vadd.f32 %v3928, %v4088
        %v4098 = vadd.f32 %v3930, %v4092
        %v4099 = vadd.f32 %v3934, %v4088
        %v4100 = vadd.f32 %v3936, %v4092
        %v4101 = vadd.f32 %v3938, %v4088
        %v4102 = vadd.f32 %v3940, %v4092
        %v4103 = vadd.f32 %v3944, %v4088
        %v4104 = vadd.f32 %v3946, %v4092
        %v4105 = vadd.f32 %v3948, %v4088
        %v4106 = vadd.f32 %v3950, %v4092
        %v4107 = vadd.f32 %v3954, %v4088
        %v4108 = vadd.f32 %v3956, %v4092
        %v4109 = vadd.f32 %v3958, %v4088
        %v4110 = vadd.f32 %v3960, %v4092
        %v4111 = vadd.f32 %v3964, %v4088
        %v4112 = vadd.f32 %v3966, %v4092
        %v4113 = vadd.f32 %v3968, %v4088
        %v4114 = vadd.f32 %v3970, %v4092
        %v4115 = vadd.f32 %v3974, %v4088
        %v4116 = vadd.f32 %v3976, %v4092
        %v4117 = vadd.f32 %v3978, %v4088
        %v4118 = vadd.f32 %v3980, %v4092
        %v4119 = vadd.f32 %v3984, %v4088
        %v4120 = vadd.f32 %v3986, %v4092
        %v4121 = vadd.f32 %v3988, %v4088
        %v4122 = vadd.f32 %v3990, %v4092
        %v4123 = vadd.f32 %v3994, %v4088
        %v4124 = vadd.f32 %v3996, %v4092
        %v4125 = vadd.f32 %v3998, %v4088
        %v4126 = vadd.f32 %v4000, %v4092
        %v4127 = vadd.f32 %v4004, %v4088
        %v4128 = vadd.f32 %v4006, %v4092
        %v4129 = vadd.f32 %v4008, %v4088
        %v4130 = vadd.f32 %v4010, %v4092
        %v4131 = vadd.f32 %v4014, %v4088
        %v4132 = vadd.f32 %v4016, %v4092
        %v4133 = vadd.f32 %v4018, %v4088
        %v4134 = vadd.f32 %v4020, %v4092
        %v4135 = vadd.f32 %v4024, %v4088
        %v4136 = vadd.f32 %v4026, %v4092
        %v4137 = vadd.f32 %v4028, %v4088
        %v4138 = vadd.f32 %v4030, %v4092
        %v4139 = vadd.f32 %v4034, %v4088
        %v4140 = vadd.f32 %v4036, %v4092
        %v4141 = vadd.f32 %v4038, %v4088
        %v4142 = vadd.f32 %v4040, %v4092
        %v4143 = vadd.f32 %v4044, %v4088
        %v4144 = vadd.f32 %v4046, %v4092
        %v4145 = vadd.f32 %v4048, %v4088
        %v4146 = vadd.f32 %v4050, %v4092
        %v4147 = vadd.f32 %v4054, %v4088
        %v4148 = vadd.f32 %v4056, %v4092
        %v4149 = vadd.f32 %v4058, %v4088
        %v4150 = vadd.f32 %v4060, %v4092
        %v4151 = vadd.f32 %v4064, %v4088
        %v4152 = vadd.f32 %v4066, %v4092
        %v4153 = vadd.f32 %v4068, %v4088
        %v4154 = vadd.f32 %v4070, %v4092
        %v4155 = vadd.f32 %v4074, %v4088
        %v4156 = vadd.f32 %v4076, %v4092
        %v4157 = vadd.f32 %v4078, %v4088
        %v4158 = vadd.f32 %v4080, %v4092
        %v4159 = vmax.f32 %v4095, 0.0
        %v4160 = vmax.f32 %v4096, 0.0
        %v4161 = vmax.f32 %v4097, 0.0
        %v4162 = vmax.f32 %v4098, 0.0
        %v4163 = vmax.f32 %v4099, 0.0
        %v4164 = vmax.f32 %v4100, 0.0
        %v4165 = vmax.f32 %v4101, 0.0
        %v4166 = vmax.f32 %v4102, 0.0
        %v4167 = vmax.f32 %v4103, 0.0
        %v4168 = vmax.f32 %v4104, 0.0
        %v4169 = vmax.f32 %v4105, 0.0
        %v4170 = vmax.f32 %v4106, 0.0
        %v4171 = vmax.f32 %v4107, 0.0
        %v4172 = vmax.f32 %v4108, 0.0
        %v4173 = vmax.f32 %v4109, 0.0
        %v4174 = vmax.f32 %v4110, 0.0
        %v4175 = vmax.f32 %v4111, 0.0
        %v4176 = vmax.f32 %v4112, 0.0
        %v4177 = vmax.f32 %v4113, 0.0
        %v4178 = vmax.f32 %v4114, 0.0
        %v4179 = vmax.f32 %v4115, 0.0
        %v4180 = vmax.f32 %v4116, 0.0
        %v4181 = vmax.f32 %v4117, 0.0
        %v4182 = vmax.f32 %v4118, 0.0
        %v4183 = vmax.f32 %v4119, 0.0
        %v4184 = vmax.f32 %v4120, 0.0
        %v4185 = vmax.f32 %v4121, 0.0
        %v4186 = vmax.f32 %v4122, 0.0
        %v4187 = vmax.f32 %v4123, 0.0
        %v4188 = vmax.f32 %v4124, 0.0
        %v4189 = vmax.f32 %v4125, 0.0
        %v4190 = vmax.f32 %v4126, 0.0
        %v4191 = vmax.f32 %v4127, 0.0
        %v4192 = vmax.f32 %v4128, 0.0
        %v4193 = vmax.f32 %v4129, 0.0
        %v4194 = vmax.f32 %v4130, 0.0
        %v4195 = vmax.f32 %v4131, 0.0
        %v4196 = vmax.f32 %v4132, 0.0
        %v4197 = vmax.f32 %v4133, 0.0
        %v4198 = vmax.f32 %v4134, 0.0
        %v4199 = vmax.f32 %v4135, 0.0
        %v4200 = vmax.f32 %v4136, 0.0
        %v4201 = vmax.f32 %v4137, 0.0
        %v4202 = vmax.f32 %v4138, 0.0
        %v4203 = vmax.f32 %v4139, 0.0
        %v4204 = vmax.f32 %v4140, 0.0
        %v4205 = vmax.f32 %v4141, 0.0
        %v4206 = vmax.f32 %v4142, 0.0
        %v4207 = vmax.f32 %v4143, 0.0
        %v4208 = vmax.f32 %v4144, 0.0
        %v4209 = vmax.f32 %v4145, 0.0
        %v4210 = vmax.f32 %v4146, 0.0
        %v4211 = vmax.f32 %v4147, 0.0
        %v4212 = vmax.f32 %v4148, 0.0
        %v4213 = vmax.f32 %v4149, 0.0
        %v4214 = vmax.f32 %v4150, 0.0
        %v4215 = vmax.f32 %v4151, 0.0
        %v4216 = vmax.f32 %v4152, 0.0
        %v4217 = vmax.f32 %v4153, 0.0
        %v4218 = vmax.f32 %v4154, 0.0
        %v4219 = vmax.f32 %v4155, 0.0
        %v4220 = vmax.f32 %v4156, 0.0
        %v4221 = vmax.f32 %v4157, 0.0
        %v4222 = vmax.f32 %v4158, 0.0
        %v4223 = vpack.c.bf16 %v4161, %v4159
        %v4224 = vpack.c.bf16 %v4162, %v4160
        %v4225 = vpack.c.bf16 %v4165, %v4163
        %v4226 = vpack.c.bf16 %v4166, %v4164
        %v4227 = vpack.c.bf16 %v4169, %v4167
        %v4228 = vpack.c.bf16 %v4170, %v4168
        %v4229 = vpack.c.bf16 %v4173, %v4171
        %v4230 = vpack.c.bf16 %v4174, %v4172
        %v4231 = vpack.c.bf16 %v4177, %v4175
        %v4232 = vpack.c.bf16 %v4178, %v4176
        %v4233 = vpack.c.bf16 %v4181, %v4179
        %v4234 = vpack.c.bf16 %v4182, %v4180
        %v4235 = vpack.c.bf16 %v4185, %v4183
        %v4236 = vpack.c.bf16 %v4186, %v4184
        %v4237 = vpack.c.bf16 %v4189, %v4187
        %v4238 = vpack.c.bf16 %v4190, %v4188
        %v4239 = vpack.c.bf16 %v4193, %v4191
        %v4240 = vpack.c.bf16 %v4194, %v4192
        %v4241 = vpack.c.bf16 %v4197, %v4195
        %v4242 = vpack.c.bf16 %v4198, %v4196
        %v4243 = vpack.c.bf16 %v4201, %v4199
        %v4244 = vpack.c.bf16 %v4202, %v4200
        %v4245 = vpack.c.bf16 %v4205, %v4203
        %v4246 = vpack.c.bf16 %v4206, %v4204
        %v4247 = vpack.c.bf16 %v4209, %v4207
        %v4248 = vpack.c.bf16 %v4210, %v4208
        %v4249 = vpack.c.bf16 %v4213, %v4211
        %v4250 = vpack.c.bf16 %v4214, %v4212
        %v4251 = vpack.c.bf16 %v4217, %v4215
        %v4252 = vpack.c.bf16 %v4218, %v4216
        %v4253 = vpack.c.bf16 %v4221, %v4219
        %v4254 = vpack.c.bf16 %v4222, %v4220
        %s4255 = scalar_lea.vmem [#allocation7], 1280
        %v4256 = vld [vmem:[%s4255] sm:$0xff]
        %v4257 = vld [vmem:[%s4255 + $0x8] sm:$0xff]
        %v4258 = vld [vmem:[%s4255 + $0x10] sm:$0xff]
        %v4259 = vld [vmem:[%s4255 + $0x18] sm:$0xff]
        %v4260 = vld [vmem:[%s4255 + $0x20] sm:$0xff]
        %v4261 = vld [vmem:[%s4255 + $0x28] sm:$0xff]
        %v4262 = vld [vmem:[%s4255 + $0x30] sm:$0xff]
        %v4263 = vld [vmem:[%s4255 + $0x38] sm:$0xff]
        %v4264 = vld [vmem:[%s4255 + $0x40] sm:$0xff]
        %v4265 = vld [vmem:[%s4255 + $0x48] sm:$0xff]
        %v4266 = vld [vmem:[%s4255 + $0x50] sm:$0xff]
        %v4267 = vld [vmem:[%s4255 + $0x58] sm:$0xff]
        %v4268 = vld [vmem:[%s4255 + $0x60] sm:$0xff]
        %v4269 = vld [vmem:[%s4255 + $0x68] sm:$0xff]
        %v4270 = vld [vmem:[%s4255 + $0x70] sm:$0xff]
        %v4271 = vld [vmem:[%s4255 + $0x78] sm:$0xff]
        %v4272 = vld [vmem:[%s4255 + $0x80] sm:$0xff]
        %v4273 = vld [vmem:[%s4255 + $0x88] sm:$0xff]
        %v4274 = vld [vmem:[%s4255 + $0x90] sm:$0xff]
        %v4275 = vld [vmem:[%s4255 + $0x98] sm:$0xff]
        %v4276 = vld [vmem:[%s4255 + $0xa0] sm:$0xff]
        %v4277 = vld [vmem:[%s4255 + $0xa8] sm:$0xff]
        %v4278 = vld [vmem:[%s4255 + $0xb0] sm:$0xff]
        %v4279 = vld [vmem:[%s4255 + $0xb8] sm:$0xff]
        %v4280 = vld [vmem:[%s4255 + $0xc0] sm:$0xff]
        %v4281 = vld [vmem:[%s4255 + $0xc8] sm:$0xff]
        %v4282 = vld [vmem:[%s4255 + $0xd0] sm:$0xff]
        %v4283 = vld [vmem:[%s4255 + $0xd8] sm:$0xff]
        %v4284 = vld [vmem:[%s4255 + $0xe0] sm:$0xff]
        %v4285 = vld [vmem:[%s4255 + $0xe8] sm:$0xff]
        %v4286 = vld [vmem:[%s4255 + $0xf0] sm:$0xff]
        %v4287 = vld [vmem:[%s4255 + $0xf8] sm:$0xff]
        %s4288 = scalar_lea.vmem [#allocation8], 10
        %v4289 = vld [vmem:[%s4288] sm:$0x3]
        %v4291 = vlaneseq
        %v4292 = vshrl.u32 %v4291, 7
        %v4293 = vsub.s32 0, %v4292
        %v4294 = vrot.slane %v4289, %v4293
        %v4295 = vlaneseq
        %v4296 = vshrl.u32 %v4295, 7
        %v4297 = vsub.s32 1, %v4296
        %v4298 = vrot.slane %v4289, %v4297
        %v4333 = vunpack.c.l.b16 %v4256
        %v4334 = vunpack.c.h.b16 %v4256
        %v4335 = vunpack.c.l.b16 %v4257
        %v4336 = vunpack.c.h.b16 %v4257
        %v4337 = vunpack.c.l.b16 %v4258
        %v4338 = vunpack.c.h.b16 %v4258
        %v4339 = vunpack.c.l.b16 %v4259
        %v4340 = vunpack.c.h.b16 %v4259
        %v4341 = vunpack.c.l.b16 %v4260
        %v4342 = vunpack.c.h.b16 %v4260
        %v4343 = vunpack.c.l.b16 %v4261
        %v4344 = vunpack.c.h.b16 %v4261
        %v4345 = vunpack.c.l.b16 %v4262
        %v4346 = vunpack.c.h.b16 %v4262
        %v4347 = vunpack.c.l.b16 %v4263
        %v4348 = vunpack.c.h.b16 %v4263
        %v4349 = vunpack.c.l.b16 %v4264
        %v4350 = vunpack.c.h.b16 %v4264
        %v4351 = vunpack.c.l.b16 %v4265
        %v4352 = vunpack.c.h.b16 %v4265
        %v4353 = vunpack.c.l.b16 %v4266
        %v4354 = vunpack.c.h.b16 %v4266
        %v4355 = vunpack.c.l.b16 %v4267
        %v4356 = vunpack.c.h.b16 %v4267
        %v4357 = vunpack.c.l.b16 %v4268
        %v4358 = vunpack.c.h.b16 %v4268
        %v4359 = vunpack.c.l.b16 %v4269
        %v4360 = vunpack.c.h.b16 %v4269
        %v4361 = vunpack.c.l.b16 %v4270
        %v4362 = vunpack.c.h.b16 %v4270
        %v4363 = vunpack.c.l.b16 %v4271
        %v4364 = vunpack.c.h.b16 %v4271
        %v4365 = vunpack.c.l.b16 %v4272
        %v4366 = vunpack.c.h.b16 %v4272
        %v4367 = vunpack.c.l.b16 %v4273
        %v4368 = vunpack.c.h.b16 %v4273
        %v4369 = vunpack.c.l.b16 %v4274
        %v4370 = vunpack.c.h.b16 %v4274
        %v4371 = vunpack.c.l.b16 %v4275
        %v4372 = vunpack.c.h.b16 %v4275
        %v4373 = vunpack.c.l.b16 %v4276
        %v4374 = vunpack.c.h.b16 %v4276
        %v4375 = vunpack.c.l.b16 %v4277
        %v4376 = vunpack.c.h.b16 %v4277
        %v4377 = vunpack.c.l.b16 %v4278
        %v4378 = vunpack.c.h.b16 %v4278
        %v4379 = vunpack.c.l.b16 %v4279
        %v4380 = vunpack.c.h.b16 %v4279
        %v4381 = vunpack.c.l.b16 %v4280
        %v4382 = vunpack.c.h.b16 %v4280
        %v4383 = vunpack.c.l.b16 %v4281
        %v4384 = vunpack.c.h.b16 %v4281
        %v4385 = vunpack.c.l.b16 %v4282
        %v4386 = vunpack.c.h.b16 %v4282
        %v4387 = vunpack.c.l.b16 %v4283
        %v4388 = vunpack.c.h.b16 %v4283
        %v4389 = vunpack.c.l.b16 %v4284
        %v4390 = vunpack.c.h.b16 %v4284
        %v4391 = vunpack.c.l.b16 %v4285
        %v4392 = vunpack.c.h.b16 %v4285
        %v4393 = vunpack.c.l.b16 %v4286
        %v4394 = vunpack.c.h.b16 %v4286
        %v4395 = vunpack.c.l.b16 %v4287
        %v4396 = vunpack.c.h.b16 %v4287
        %v4397 = vpack.c.b16 %v4335, %v4333
        %v4398 = vpack.c.b16 %v4336, %v4334
        %v4399 = vpack.c.b16 %v4339, %v4337
        %v4400 = vpack.c.b16 %v4340, %v4338
        %v4401 = vpack.c.b16 %v4343, %v4341
        %v4402 = vpack.c.b16 %v4344, %v4342
        %v4403 = vpack.c.b16 %v4347, %v4345
        %v4404 = vpack.c.b16 %v4348, %v4346
        %v4405 = vpack.c.b16 %v4351, %v4349
        %v4406 = vpack.c.b16 %v4352, %v4350
        %v4407 = vpack.c.b16 %v4355, %v4353
        %v4408 = vpack.c.b16 %v4356, %v4354
        %v4409 = vpack.c.b16 %v4359, %v4357
        %v4410 = vpack.c.b16 %v4360, %v4358
        %v4411 = vpack.c.b16 %v4363, %v4361
        %v4412 = vpack.c.b16 %v4364, %v4362
        %v4413 = vpack.c.b16 %v4367, %v4365
        %v4414 = vpack.c.b16 %v4368, %v4366
        %v4415 = vpack.c.b16 %v4371, %v4369
        %v4416 = vpack.c.b16 %v4372, %v4370
        %v4417 = vpack.c.b16 %v4375, %v4373
        %v4418 = vpack.c.b16 %v4376, %v4374
        %v4419 = vpack.c.b16 %v4379, %v4377
        %v4420 = vpack.c.b16 %v4380, %v4378
        %v4421 = vpack.c.b16 %v4383, %v4381
        %v4422 = vpack.c.b16 %v4384, %v4382
        %v4423 = vpack.c.b16 %v4387, %v4385
        %v4424 = vpack.c.b16 %v4388, %v4386
        %v4425 = vpack.c.b16 %v4391, %v4389
        %v4426 = vpack.c.b16 %v4392, %v4390
        %v4427 = vpack.c.b16 %v4395, %v4393
        %v4428 = vpack.c.b16 %v4396, %v4394
        %4461 = vmatprep.subr.bf16.mxu0 %v4412
        %4462 = vmatpush1.bf16.msra.mxu0 %v4411
        %4463 = vmatprep.subr.bf16.mxu0 %v4410
        %4464 = vmatpush1.bf16.msra.mxu0 %v4409
        %4465 = vmatprep.subr.bf16.mxu0 %v4408
        %4466 = vmatpush1.bf16.msra.mxu0 %v4407
        %4467 = vmatprep.subr.bf16.mxu0 %v4406
        %4468 = vmatpush1.bf16.msra.mxu0 %v4405
        %4469 = vmatprep.subr.bf16.mxu0 %v4404
        %4470 = vmatpush1.bf16.msra.mxu0 %v4403
        %4471 = vmatprep.subr.bf16.mxu0 %v4402
        %4472 = vmatpush1.bf16.msra.mxu0 %v4401
        %4473 = vmatprep.subr.bf16.mxu0 %v4400
        %4474 = vmatpush1.bf16.msra.mxu0 %v4399
        %4475 = vmatprep.subr.bf16.mxu0 %v4398
        %4476 = vmatpush1.bf16.msra.mxu0 %v4397
        %4477 = vmatprep.subr.bf16.mxu0 %v4428
        %4478 = vmatpush2.bf16.msra.mxu0 %v4427
        %4479 = vmatprep.subr.bf16.mxu0 %v4426
        %4480 = vmatpush2.bf16.msra.mxu0 %v4425
        %4481 = vmatprep.subr.bf16.mxu0 %v4424
        %4482 = vmatpush2.bf16.msra.mxu0 %v4423
        %4483 = vmatprep.subr.bf16.mxu0 %v4422
        %4484 = vmatpush2.bf16.msra.mxu0 %v4421
        %4485 = vmatprep.subr.bf16.mxu0 %v4420
        %4486 = vmatpush2.bf16.msra.mxu0 %v4419
        %4487 = vmatprep.subr.bf16.mxu0 %v4418
        %4488 = vmatpush2.bf16.msra.mxu0 %v4417
        %4489 = vmatprep.subr.bf16.mxu0 %v4416
        %4490 = vmatpush2.bf16.msra.mxu0 %v4415
        %4491 = vmatprep.subr.bf16.mxu0 %v4414
        %4492 = vmatpush2.bf16.msra.mxu0 %v4413
        %4493 = vmatprep.mubr.bf16.mxu0 %v4224
        %4494 = vmatmul.mubr.bf16.gmra.mxu0 %v4223
        %v4495 = vpop.f32.mrf.mxu0
        %v4496 = vadd.f32 %v4294, %v4495
        %v4497 = vpop.f32.mrf.mxu0
        %v4498 = vadd.f32 %v4298, %v4497
        %v4499 = vpop.f32.mrf.mxu0
        %v4500 = vadd.f32 %v4294, %v4499
        %v4501 = vpop.f32.mrf.mxu0
        %v4502 = vadd.f32 %v4298, %v4501
        %4503 = vmatprep.mubr.bf16.mxu0 %v4226
        %4504 = vmatmul.mubr.bf16.gmra.mxu0 %v4225
        %v4505 = vpop.f32.mrf.mxu0
        %v4506 = vadd.f32 %v4294, %v4505
        %v4507 = vpop.f32.mrf.mxu0
        %v4508 = vadd.f32 %v4298, %v4507
        %v4509 = vpop.f32.mrf.mxu0
        %v4510 = vadd.f32 %v4294, %v4509
        %v4511 = vpop.f32.mrf.mxu0
        %v4512 = vadd.f32 %v4298, %v4511
        %4513 = vmatprep.mubr.bf16.mxu0 %v4228
        %4514 = vmatmul.mubr.bf16.gmra.mxu0 %v4227
        %v4515 = vpop.f32.mrf.mxu0
        %v4516 = vadd.f32 %v4294, %v4515
        %v4517 = vpop.f32.mrf.mxu0
        %v4518 = vadd.f32 %v4298, %v4517
        %v4519 = vpop.f32.mrf.mxu0
        %v4520 = vadd.f32 %v4294, %v4519
        %v4521 = vpop.f32.mrf.mxu0
        %v4522 = vadd.f32 %v4298, %v4521
        %4523 = vmatprep.mubr.bf16.mxu0 %v4230
        %4524 = vmatmul.mubr.bf16.gmra.mxu0 %v4229
        %v4525 = vpop.f32.mrf.mxu0
        %v4526 = vadd.f32 %v4294, %v4525
        %v4527 = vpop.f32.mrf.mxu0
        %v4528 = vadd.f32 %v4298, %v4527
        %v4529 = vpop.f32.mrf.mxu0
        %v4530 = vadd.f32 %v4294, %v4529
        %v4531 = vpop.f32.mrf.mxu0
        %v4532 = vadd.f32 %v4298, %v4531
        %4533 = vmatprep.mubr.bf16.mxu0 %v4232
        %4534 = vmatmul.mubr.bf16.gmra.mxu0 %v4231
        %v4535 = vpop.f32.mrf.mxu0
        %v4536 = vadd.f32 %v4294, %v4535
        %v4537 = vpop.f32.mrf.mxu0
        %v4538 = vadd.f32 %v4298, %v4537
        %v4539 = vpop.f32.mrf.mxu0
        %v4540 = vadd.f32 %v4294, %v4539
        %v4541 = vpop.f32.mrf.mxu0
        %v4542 = vadd.f32 %v4298, %v4541
        %4543 = vmatprep.mubr.bf16.mxu0 %v4234
        %4544 = vmatmul.mubr.bf16.gmra.mxu0 %v4233
        %v4545 = vpop.f32.mrf.mxu0
        %v4546 = vadd.f32 %v4294, %v4545
        %v4547 = vpop.f32.mrf.mxu0
        %v4548 = vadd.f32 %v4298, %v4547
        %v4549 = vpop.f32.mrf.mxu0
        %v4550 = vadd.f32 %v4294, %v4549
        %v4551 = vpop.f32.mrf.mxu0
        %v4552 = vadd.f32 %v4298, %v4551
        %4553 = vmatprep.mubr.bf16.mxu0 %v4236
        %4554 = vmatmul.mubr.bf16.gmra.mxu0 %v4235
        %v4555 = vpop.f32.mrf.mxu0
        %v4556 = vadd.f32 %v4294, %v4555
        %v4557 = vpop.f32.mrf.mxu0
        %v4558 = vadd.f32 %v4298, %v4557
        %v4559 = vpop.f32.mrf.mxu0
        %v4560 = vadd.f32 %v4294, %v4559
        %v4561 = vpop.f32.mrf.mxu0
        %v4562 = vadd.f32 %v4298, %v4561
        %4563 = vmatprep.mubr.bf16.mxu0 %v4238
        %4564 = vmatmul.mubr.bf16.gmra.mxu0 %v4237
        %v4565 = vpop.f32.mrf.mxu0
        %v4566 = vadd.f32 %v4294, %v4565
        %v4567 = vpop.f32.mrf.mxu0
        %v4568 = vadd.f32 %v4298, %v4567
        %v4569 = vpop.f32.mrf.mxu0
        %v4570 = vadd.f32 %v4294, %v4569
        %v4571 = vpop.f32.mrf.mxu0
        %v4572 = vadd.f32 %v4298, %v4571
        %4573 = vmatprep.mubr.bf16.mxu0 %v4240
        %4574 = vmatmul.mubr.bf16.gmra.mxu0 %v4239
        %v4575 = vpop.f32.mrf.mxu0
        %v4576 = vadd.f32 %v4294, %v4575
        %v4577 = vpop.f32.mrf.mxu0
        %v4578 = vadd.f32 %v4298, %v4577
        %v4579 = vpop.f32.mrf.mxu0
        %v4580 = vadd.f32 %v4294, %v4579
        %v4581 = vpop.f32.mrf.mxu0
        %v4582 = vadd.f32 %v4298, %v4581
        %4583 = vmatprep.mubr.bf16.mxu0 %v4242
        %4584 = vmatmul.mubr.bf16.gmra.mxu0 %v4241
        %v4585 = vpop.f32.mrf.mxu0
        %v4586 = vadd.f32 %v4294, %v4585
        %v4587 = vpop.f32.mrf.mxu0
        %v4588 = vadd.f32 %v4298, %v4587
        %v4589 = vpop.f32.mrf.mxu0
        %v4590 = vadd.f32 %v4294, %v4589
        %v4591 = vpop.f32.mrf.mxu0
        %v4592 = vadd.f32 %v4298, %v4591
        %4593 = vmatprep.mubr.bf16.mxu0 %v4244
        %4594 = vmatmul.mubr.bf16.gmra.mxu0 %v4243
        %v4595 = vpop.f32.mrf.mxu0
        %v4596 = vadd.f32 %v4294, %v4595
        %v4597 = vpop.f32.mrf.mxu0
        %v4598 = vadd.f32 %v4298, %v4597
        %v4599 = vpop.f32.mrf.mxu0
        %v4600 = vadd.f32 %v4294, %v4599
        %v4601 = vpop.f32.mrf.mxu0
        %v4602 = vadd.f32 %v4298, %v4601
        %4603 = vmatprep.mubr.bf16.mxu0 %v4246
        %4604 = vmatmul.mubr.bf16.gmra.mxu0 %v4245
        %v4605 = vpop.f32.mrf.mxu0
        %v4606 = vadd.f32 %v4294, %v4605
        %v4607 = vpop.f32.mrf.mxu0
        %v4608 = vadd.f32 %v4298, %v4607
        %v4609 = vpop.f32.mrf.mxu0
        %v4610 = vadd.f32 %v4294, %v4609
        %v4611 = vpop.f32.mrf.mxu0
        %v4612 = vadd.f32 %v4298, %v4611
        %4613 = vmatprep.mubr.bf16.mxu0 %v4248
        %4614 = vmatmul.mubr.bf16.gmra.mxu0 %v4247
        %v4615 = vpop.f32.mrf.mxu0
        %v4616 = vadd.f32 %v4294, %v4615
        %v4617 = vpop.f32.mrf.mxu0
        %v4618 = vadd.f32 %v4298, %v4617
        %v4619 = vpop.f32.mrf.mxu0
        %v4620 = vadd.f32 %v4294, %v4619
        %v4621 = vpop.f32.mrf.mxu0
        %v4622 = vadd.f32 %v4298, %v4621
        %4623 = vmatprep.mubr.bf16.mxu0 %v4250
        %4624 = vmatmul.mubr.bf16.gmra.mxu0 %v4249
        %v4625 = vpop.f32.mrf.mxu0
        %v4626 = vadd.f32 %v4294, %v4625
        %v4627 = vpop.f32.mrf.mxu0
        %v4628 = vadd.f32 %v4298, %v4627
        %v4629 = vpop.f32.mrf.mxu0
        %v4630 = vadd.f32 %v4294, %v4629
        %v4631 = vpop.f32.mrf.mxu0
        %v4632 = vadd.f32 %v4298, %v4631
        %4633 = vmatprep.mubr.bf16.mxu0 %v4252
        %4634 = vmatmul.mubr.bf16.gmra.mxu0 %v4251
        %v4635 = vpop.f32.mrf.mxu0
        %v4636 = vadd.f32 %v4294, %v4635
        %v4637 = vpop.f32.mrf.mxu0
        %v4638 = vadd.f32 %v4298, %v4637
        %v4639 = vpop.f32.mrf.mxu0
        %v4640 = vadd.f32 %v4294, %v4639
        %v4641 = vpop.f32.mrf.mxu0
        %v4642 = vadd.f32 %v4298, %v4641
        %4643 = vmatprep.mubr.bf16.mxu0 %v4254
        %4644 = vmatmul.mubr.bf16.gmra.mxu0 %v4253
        %v4645 = vpop.f32.mrf.mxu0
        %v4646 = vadd.f32 %v4294, %v4645
        %v4647 = vpop.f32.mrf.mxu0
        %v4648 = vadd.f32 %v4298, %v4647
        %v4649 = vpop.f32.mrf.mxu0
        %v4650 = vadd.f32 %v4294, %v4649
        %v4651 = vpop.f32.mrf.mxu0
        %v4652 = vadd.f32 %v4298, %v4651
        %4653 = vdwg.mxu0
        %v4654 = vmax.f32 %v4496, 0.0
        %v4655 = vmax.f32 %v4498, 0.0
        %v4656 = vmax.f32 %v4500, 0.0
        %v4657 = vmax.f32 %v4502, 0.0
        %v4658 = vmax.f32 %v4506, 0.0
        %v4659 = vmax.f32 %v4508, 0.0
        %v4660 = vmax.f32 %v4510, 0.0
        %v4661 = vmax.f32 %v4512, 0.0
        %v4662 = vmax.f32 %v4516, 0.0
        %v4663 = vmax.f32 %v4518, 0.0
        %v4664 = vmax.f32 %v4520, 0.0
        %v4665 = vmax.f32 %v4522, 0.0
        %v4666 = vmax.f32 %v4526, 0.0
        %v4667 = vmax.f32 %v4528, 0.0
        %v4668 = vmax.f32 %v4530, 0.0
        %v4669 = vmax.f32 %v4532, 0.0
        %v4670 = vmax.f32 %v4536, 0.0
        %v4671 = vmax.f32 %v4538, 0.0
        %v4672 = vmax.f32 %v4540, 0.0
        %v4673 = vmax.f32 %v4542, 0.0
        %v4674 = vmax.f32 %v4546, 0.0
        %v4675 = vmax.f32 %v4548, 0.0
        %v4676 = vmax.f32 %v4550, 0.0
        %v4677 = vmax.f32 %v4552, 0.0
        %v4678 = vmax.f32 %v4556, 0.0
        %v4679 = vmax.f32 %v4558, 0.0
        %v4680 = vmax.f32 %v4560, 0.0
        %v4681 = vmax.f32 %v4562, 0.0
        %v4682 = vmax.f32 %v4566, 0.0
        %v4683 = vmax.f32 %v4568, 0.0
        %v4684 = vmax.f32 %v4570, 0.0
        %v4685 = vmax.f32 %v4572, 0.0
        %v4686 = vmax.f32 %v4576, 0.0
        %v4687 = vmax.f32 %v4578, 0.0
        %v4688 = vmax.f32 %v4580, 0.0
        %v4689 = vmax.f32 %v4582, 0.0
        %v4690 = vmax.f32 %v4586, 0.0
        %v4691 = vmax.f32 %v4588, 0.0
        %v4692 = vmax.f32 %v4590, 0.0
        %v4693 = vmax.f32 %v4592, 0.0
        %v4694 = vmax.f32 %v4596, 0.0
        %v4695 = vmax.f32 %v4598, 0.0
        %v4696 = vmax.f32 %v4600, 0.0
        %v4697 = vmax.f32 %v4602, 0.0
        %v4698 = vmax.f32 %v4606, 0.0
        %v4699 = vmax.f32 %v4608, 0.0
        %v4700 = vmax.f32 %v4610, 0.0
        %v4701 = vmax.f32 %v4612, 0.0
        %v4702 = vmax.f32 %v4616, 0.0
        %v4703 = vmax.f32 %v4618, 0.0
        %v4704 = vmax.f32 %v4620, 0.0
        %v4705 = vmax.f32 %v4622, 0.0
        %v4706 = vmax.f32 %v4626, 0.0
        %v4707 = vmax.f32 %v4628, 0.0
        %v4708 = vmax.f32 %v4630, 0.0
        %v4709 = vmax.f32 %v4632, 0.0
        %v4710 = vmax.f32 %v4636, 0.0
        %v4711 = vmax.f32 %v4638, 0.0
        %v4712 = vmax.f32 %v4640, 0.0
        %v4713 = vmax.f32 %v4642, 0.0
        %v4714 = vmax.f32 %v4646, 0.0
        %v4715 = vmax.f32 %v4648, 0.0
        %v4716 = vmax.f32 %v4650, 0.0
        %v4717 = vmax.f32 %v4652, 0.0
        %v4718 = vpack.c.bf16 %v4656, %v4654
        %v4719 = vpack.c.bf16 %v4657, %v4655
        %v4720 = vpack.c.bf16 %v4660, %v4658
        %v4721 = vpack.c.bf16 %v4661, %v4659
        %v4722 = vpack.c.bf16 %v4664, %v4662
        %v4723 = vpack.c.bf16 %v4665, %v4663
        %v4724 = vpack.c.bf16 %v4668, %v4666
        %v4725 = vpack.c.bf16 %v4669, %v4667
        %v4726 = vpack.c.bf16 %v4672, %v4670
        %v4727 = vpack.c.bf16 %v4673, %v4671
        %v4728 = vpack.c.bf16 %v4676, %v4674
        %v4729 = vpack.c.bf16 %v4677, %v4675
        %v4730 = vpack.c.bf16 %v4680, %v4678
        %v4731 = vpack.c.bf16 %v4681, %v4679
        %v4732 = vpack.c.bf16 %v4684, %v4682
        %v4733 = vpack.c.bf16 %v4685, %v4683
        %v4734 = vpack.c.bf16 %v4688, %v4686
        %v4735 = vpack.c.bf16 %v4689, %v4687
        %v4736 = vpack.c.bf16 %v4692, %v4690
        %v4737 = vpack.c.bf16 %v4693, %v4691
        %v4738 = vpack.c.bf16 %v4696, %v4694
        %v4739 = vpack.c.bf16 %v4697, %v4695
        %v4740 = vpack.c.bf16 %v4700, %v4698
        %v4741 = vpack.c.bf16 %v4701, %v4699
        %v4742 = vpack.c.bf16 %v4704, %v4702
        %v4743 = vpack.c.bf16 %v4705, %v4703
        %v4744 = vpack.c.bf16 %v4708, %v4706
        %v4745 = vpack.c.bf16 %v4709, %v4707
        %v4746 = vpack.c.bf16 %v4712, %v4710
        %v4747 = vpack.c.bf16 %v4713, %v4711
        %v4748 = vpack.c.bf16 %v4716, %v4714
        %v4749 = vpack.c.bf16 %v4717, %v4715
        %s4750 = scalar_lea.vmem [#allocation7], 1536
        %v4751 = vld [vmem:[%s4750] sm:$0xff]
        %v4752 = vld [vmem:[%s4750 + $0x8] sm:$0xff]
        %v4753 = vld [vmem:[%s4750 + $0x10] sm:$0xff]
        %v4754 = vld [vmem:[%s4750 + $0x18] sm:$0xff]
        %v4755 = vld [vmem:[%s4750 + $0x20] sm:$0xff]
        %v4756 = vld [vmem:[%s4750 + $0x28] sm:$0xff]
        %v4757 = vld [vmem:[%s4750 + $0x30] sm:$0xff]
        %v4758 = vld [vmem:[%s4750 + $0x38] sm:$0xff]
        %v4759 = vld [vmem:[%s4750 + $0x40] sm:$0xff]
        %v4760 = vld [vmem:[%s4750 + $0x48] sm:$0xff]
        %v4761 = vld [vmem:[%s4750 + $0x50] sm:$0xff]
        %v4762 = vld [vmem:[%s4750 + $0x58] sm:$0xff]
        %v4763 = vld [vmem:[%s4750 + $0x60] sm:$0xff]
        %v4764 = vld [vmem:[%s4750 + $0x68] sm:$0xff]
        %v4765 = vld [vmem:[%s4750 + $0x70] sm:$0xff]
        %v4766 = vld [vmem:[%s4750 + $0x78] sm:$0xff]
        %v4767 = vld [vmem:[%s4750 + $0x80] sm:$0xff]
        %v4768 = vld [vmem:[%s4750 + $0x88] sm:$0xff]
        %v4769 = vld [vmem:[%s4750 + $0x90] sm:$0xff]
        %v4770 = vld [vmem:[%s4750 + $0x98] sm:$0xff]
        %v4771 = vld [vmem:[%s4750 + $0xa0] sm:$0xff]
        %v4772 = vld [vmem:[%s4750 + $0xa8] sm:$0xff]
        %v4773 = vld [vmem:[%s4750 + $0xb0] sm:$0xff]
        %v4774 = vld [vmem:[%s4750 + $0xb8] sm:$0xff]
        %v4775 = vld [vmem:[%s4750 + $0xc0] sm:$0xff]
        %v4776 = vld [vmem:[%s4750 + $0xc8] sm:$0xff]
        %v4777 = vld [vmem:[%s4750 + $0xd0] sm:$0xff]
        %v4778 = vld [vmem:[%s4750 + $0xd8] sm:$0xff]
        %v4779 = vld [vmem:[%s4750 + $0xe0] sm:$0xff]
        %v4780 = vld [vmem:[%s4750 + $0xe8] sm:$0xff]
        %v4781 = vld [vmem:[%s4750 + $0xf0] sm:$0xff]
        %v4782 = vld [vmem:[%s4750 + $0xf8] sm:$0xff]
        %s4783 = scalar_lea.vmem [#allocation8], 12
        %v4784 = vld [vmem:[%s4783] sm:$0x3]
        %v4786 = vlaneseq
        %v4787 = vshrl.u32 %v4786, 7
        %v4788 = vsub.s32 0, %v4787
        %v4789 = vrot.slane %v4784, %v4788
        %v4790 = vlaneseq
        %v4791 = vshrl.u32 %v4790, 7
        %v4792 = vsub.s32 1, %v4791
        %v4793 = vrot.slane %v4784, %v4792
        %v4828 = vunpack.c.l.b16 %v4751
        %v4829 = vunpack.c.h.b16 %v4751
        %v4830 = vunpack.c.l.b16 %v4752
        %v4831 = vunpack.c.h.b16 %v4752
        %v4832 = vunpack.c.l.b16 %v4753
        %v4833 = vunpack.c.h.b16 %v4753
        %v4834 = vunpack.c.l.b16 %v4754
        %v4835 = vunpack.c.h.b16 %v4754
        %v4836 = vunpack.c.l.b16 %v4755
        %v4837 = vunpack.c.h.b16 %v4755
        %v4838 = vunpack.c.l.b16 %v4756
        %v4839 = vunpack.c.h.b16 %v4756
        %v4840 = vunpack.c.l.b16 %v4757
        %v4841 = vunpack.c.h.b16 %v4757
        %v4842 = vunpack.c.l.b16 %v4758
        %v4843 = vunpack.c.h.b16 %v4758
        %v4844 = vunpack.c.l.b16 %v4759
        %v4845 = vunpack.c.h.b16 %v4759
        %v4846 = vunpack.c.l.b16 %v4760
        %v4847 = vunpack.c.h.b16 %v4760
        %v4848 = vunpack.c.l.b16 %v4761
        %v4849 = vunpack.c.h.b16 %v4761
        %v4850 = vunpack.c.l.b16 %v4762
        %v4851 = vunpack.c.h.b16 %v4762
        %v4852 = vunpack.c.l.b16 %v4763
        %v4853 = vunpack.c.h.b16 %v4763
        %v4854 = vunpack.c.l.b16 %v4764
        %v4855 = vunpack.c.h.b16 %v4764
        %v4856 = vunpack.c.l.b16 %v4765
        %v4857 = vunpack.c.h.b16 %v4765
        %v4858 = vunpack.c.l.b16 %v4766
        %v4859 = vunpack.c.h.b16 %v4766
        %v4860 = vunpack.c.l.b16 %v4767
        %v4861 = vunpack.c.h.b16 %v4767
        %v4862 = vunpack.c.l.b16 %v4768
        %v4863 = vunpack.c.h.b16 %v4768
        %v4864 = vunpack.c.l.b16 %v4769
        %v4865 = vunpack.c.h.b16 %v4769
        %v4866 = vunpack.c.l.b16 %v4770
        %v4867 = vunpack.c.h.b16 %v4770
        %v4868 = vunpack.c.l.b16 %v4771
        %v4869 = vunpack.c.h.b16 %v4771
        %v4870 = vunpack.c.l.b16 %v4772
        %v4871 = vunpack.c.h.b16 %v4772
        %v4872 = vunpack.c.l.b16 %v4773
        %v4873 = vunpack.c.h.b16 %v4773
        %v4874 = vunpack.c.l.b16 %v4774
        %v4875 = vunpack.c.h.b16 %v4774
        %v4876 = vunpack.c.l.b16 %v4775
        %v4877 = vunpack.c.h.b16 %v4775
        %v4878 = vunpack.c.l.b16 %v4776
        %v4879 = vunpack.c.h.b16 %v4776
        %v4880 = vunpack.c.l.b16 %v4777
        %v4881 = vunpack.c.h.b16 %v4777
        %v4882 = vunpack.c.l.b16 %v4778
        %v4883 = vunpack.c.h.b16 %v4778
        %v4884 = vunpack.c.l.b16 %v4779
        %v4885 = vunpack.c.h.b16 %v4779
        %v4886 = vunpack.c.l.b16 %v4780
        %v4887 = vunpack.c.h.b16 %v4780
        %v4888 = vunpack.c.l.b16 %v4781
        %v4889 = vunpack.c.h.b16 %v4781
        %v4890 = vunpack.c.l.b16 %v4782
        %v4891 = vunpack.c.h.b16 %v4782
        %v4892 = vpack.c.b16 %v4830, %v4828
        %v4893 = vpack.c.b16 %v4831, %v4829
        %v4894 = vpack.c.b16 %v4834, %v4832
        %v4895 = vpack.c.b16 %v4835, %v4833
        %v4896 = vpack.c.b16 %v4838, %v4836
        %v4897 = vpack.c.b16 %v4839, %v4837
        %v4898 = vpack.c.b16 %v4842, %v4840
        %v4899 = vpack.c.b16 %v4843, %v4841
        %v4900 = vpack.c.b16 %v4846, %v4844
        %v4901 = vpack.c.b16 %v4847, %v4845
        %v4902 = vpack.c.b16 %v4850, %v4848
        %v4903 = vpack.c.b16 %v4851, %v4849
        %v4904 = vpack.c.b16 %v4854, %v4852
        %v4905 = vpack.c.b16 %v4855, %v4853
        %v4906 = vpack.c.b16 %v4858, %v4856
        %v4907 = vpack.c.b16 %v4859, %v4857
        %v4908 = vpack.c.b16 %v4862, %v4860
        %v4909 = vpack.c.b16 %v4863, %v4861
        %v4910 = vpack.c.b16 %v4866, %v4864
        %v4911 = vpack.c.b16 %v4867, %v4865
        %v4912 = vpack.c.b16 %v4870, %v4868
        %v4913 = vpack.c.b16 %v4871, %v4869
        %v4914 = vpack.c.b16 %v4874, %v4872
        %v4915 = vpack.c.b16 %v4875, %v4873
        %v4916 = vpack.c.b16 %v4878, %v4876
        %v4917 = vpack.c.b16 %v4879, %v4877
        %v4918 = vpack.c.b16 %v4882, %v4880
        %v4919 = vpack.c.b16 %v4883, %v4881
        %v4920 = vpack.c.b16 %v4886, %v4884
        %v4921 = vpack.c.b16 %v4887, %v4885
        %v4922 = vpack.c.b16 %v4890, %v4888
        %v4923 = vpack.c.b16 %v4891, %v4889
        %4956 = vmatprep.subr.bf16.mxu0 %v4907
        %4957 = vmatpush1.bf16.msra.mxu0 %v4906
        %4958 = vmatprep.subr.bf16.mxu0 %v4905
        %4959 = vmatpush1.bf16.msra.mxu0 %v4904
        %4960 = vmatprep.subr.bf16.mxu0 %v4903
        %4961 = vmatpush1.bf16.msra.mxu0 %v4902
        %4962 = vmatprep.subr.bf16.mxu0 %v4901
        %4963 = vmatpush1.bf16.msra.mxu0 %v4900
        %4964 = vmatprep.subr.bf16.mxu0 %v4899
        %4965 = vmatpush1.bf16.msra.mxu0 %v4898
        %4966 = vmatprep.subr.bf16.mxu0 %v4897
        %4967 = vmatpush1.bf16.msra.mxu0 %v4896
        %4968 = vmatprep.subr.bf16.mxu0 %v4895
        %4969 = vmatpush1.bf16.msra.mxu0 %v4894
        %4970 = vmatprep.subr.bf16.mxu0 %v4893
        %4971 = vmatpush1.bf16.msra.mxu0 %v4892
        %4972 = vmatprep.subr.bf16.mxu0 %v4923
        %4973 = vmatpush2.bf16.msra.mxu0 %v4922
        %4974 = vmatprep.subr.bf16.mxu0 %v4921
        %4975 = vmatpush2.bf16.msra.mxu0 %v4920
        %4976 = vmatprep.subr.bf16.mxu0 %v4919
        %4977 = vmatpush2.bf16.msra.mxu0 %v4918
        %4978 = vmatprep.subr.bf16.mxu0 %v4917
        %4979 = vmatpush2.bf16.msra.mxu0 %v4916
        %4980 = vmatprep.subr.bf16.mxu0 %v4915
        %4981 = vmatpush2.bf16.msra.mxu0 %v4914
        %4982 = vmatprep.subr.bf16.mxu0 %v4913
        %4983 = vmatpush2.bf16.msra.mxu0 %v4912
        %4984 = vmatprep.subr.bf16.mxu0 %v4911
        %4985 = vmatpush2.bf16.msra.mxu0 %v4910
        %4986 = vmatprep.subr.bf16.mxu0 %v4909
        %4987 = vmatpush2.bf16.msra.mxu0 %v4908
        %4988 = vmatprep.mubr.bf16.mxu0 %v4719
        %4989 = vmatmul.mubr.bf16.gmra.mxu0 %v4718
        %v4990 = vpop.f32.mrf.mxu0
        %v4991 = vadd.f32 %v4789, %v4990
        %v4992 = vpop.f32.mrf.mxu0
        %v4993 = vadd.f32 %v4793, %v4992
        %v4994 = vpop.f32.mrf.mxu0
        %v4995 = vadd.f32 %v4789, %v4994
        %v4996 = vpop.f32.mrf.mxu0
        %v4997 = vadd.f32 %v4793, %v4996
        %4998 = vmatprep.mubr.bf16.mxu0 %v4721
        %4999 = vmatmul.mubr.bf16.gmra.mxu0 %v4720
        %v5000 = vpop.f32.mrf.mxu0
        %v5001 = vadd.f32 %v4789, %v5000
        %v5002 = vpop.f32.mrf.mxu0
        %v5003 = vadd.f32 %v4793, %v5002
        %v5004 = vpop.f32.mrf.mxu0
        %v5005 = vadd.f32 %v4789, %v5004
        %v5006 = vpop.f32.mrf.mxu0
        %v5007 = vadd.f32 %v4793, %v5006
        %5008 = vmatprep.mubr.bf16.mxu0 %v4723
        %5009 = vmatmul.mubr.bf16.gmra.mxu0 %v4722
        %v5010 = vpop.f32.mrf.mxu0
        %v5011 = vadd.f32 %v4789, %v5010
        %v5012 = vpop.f32.mrf.mxu0
        %v5013 = vadd.f32 %v4793, %v5012
        %v5014 = vpop.f32.mrf.mxu0
        %v5015 = vadd.f32 %v4789, %v5014
        %v5016 = vpop.f32.mrf.mxu0
        %v5017 = vadd.f32 %v4793, %v5016
        %5018 = vmatprep.mubr.bf16.mxu0 %v4725
        %5019 = vmatmul.mubr.bf16.gmra.mxu0 %v4724
        %v5020 = vpop.f32.mrf.mxu0
        %v5021 = vadd.f32 %v4789, %v5020
        %v5022 = vpop.f32.mrf.mxu0
        %v5023 = vadd.f32 %v4793, %v5022
        %v5024 = vpop.f32.mrf.mxu0
        %v5025 = vadd.f32 %v4789, %v5024
        %v5026 = vpop.f32.mrf.mxu0
        %v5027 = vadd.f32 %v4793, %v5026
        %5028 = vmatprep.mubr.bf16.mxu0 %v4727
        %5029 = vmatmul.mubr.bf16.gmra.mxu0 %v4726
        %v5030 = vpop.f32.mrf.mxu0
        %v5031 = vadd.f32 %v4789, %v5030
        %v5032 = vpop.f32.mrf.mxu0
        %v5033 = vadd.f32 %v4793, %v5032
        %v5034 = vpop.f32.mrf.mxu0
        %v5035 = vadd.f32 %v4789, %v5034
        %v5036 = vpop.f32.mrf.mxu0
        %v5037 = vadd.f32 %v4793, %v5036
        %5038 = vmatprep.mubr.bf16.mxu0 %v4729
        %5039 = vmatmul.mubr.bf16.gmra.mxu0 %v4728
        %v5040 = vpop.f32.mrf.mxu0
        %v5041 = vadd.f32 %v4789, %v5040
        %v5042 = vpop.f32.mrf.mxu0
        %v5043 = vadd.f32 %v4793, %v5042
        %v5044 = vpop.f32.mrf.mxu0
        %v5045 = vadd.f32 %v4789, %v5044
        %v5046 = vpop.f32.mrf.mxu0
        %v5047 = vadd.f32 %v4793, %v5046
        %5048 = vmatprep.mubr.bf16.mxu0 %v4731
        %5049 = vmatmul.mubr.bf16.gmra.mxu0 %v4730
        %v5050 = vpop.f32.mrf.mxu0
        %v5051 = vadd.f32 %v4789, %v5050
        %v5052 = vpop.f32.mrf.mxu0
        %v5053 = vadd.f32 %v4793, %v5052
        %v5054 = vpop.f32.mrf.mxu0
        %v5055 = vadd.f32 %v4789, %v5054
        %v5056 = vpop.f32.mrf.mxu0
        %v5057 = vadd.f32 %v4793, %v5056
        %5058 = vmatprep.mubr.bf16.mxu0 %v4733
        %5059 = vmatmul.mubr.bf16.gmra.mxu0 %v4732
        %v5060 = vpop.f32.mrf.mxu0
        %v5061 = vadd.f32 %v4789, %v5060
        %v5062 = vpop.f32.mrf.mxu0
        %v5063 = vadd.f32 %v4793, %v5062
        %v5064 = vpop.f32.mrf.mxu0
        %v5065 = vadd.f32 %v4789, %v5064
        %v5066 = vpop.f32.mrf.mxu0
        %v5067 = vadd.f32 %v4793, %v5066
        %5068 = vmatprep.mubr.bf16.mxu0 %v4735
        %5069 = vmatmul.mubr.bf16.gmra.mxu0 %v4734
        %v5070 = vpop.f32.mrf.mxu0
        %v5071 = vadd.f32 %v4789, %v5070
        %v5072 = vpop.f32.mrf.mxu0
        %v5073 = vadd.f32 %v4793, %v5072
        %v5074 = vpop.f32.mrf.mxu0
        %v5075 = vadd.f32 %v4789, %v5074
        %v5076 = vpop.f32.mrf.mxu0
        %v5077 = vadd.f32 %v4793, %v5076
        %5078 = vmatprep.mubr.bf16.mxu0 %v4737
        %5079 = vmatmul.mubr.bf16.gmra.mxu0 %v4736
        %v5080 = vpop.f32.mrf.mxu0
        %v5081 = vadd.f32 %v4789, %v5080
        %v5082 = vpop.f32.mrf.mxu0
        %v5083 = vadd.f32 %v4793, %v5082
        %v5084 = vpop.f32.mrf.mxu0
        %v5085 = vadd.f32 %v4789, %v5084
        %v5086 = vpop.f32.mrf.mxu0
        %v5087 = vadd.f32 %v4793, %v5086
        %5088 = vmatprep.mubr.bf16.mxu0 %v4739
        %5089 = vmatmul.mubr.bf16.gmra.mxu0 %v4738
        %v5090 = vpop.f32.mrf.mxu0
        %v5091 = vadd.f32 %v4789, %v5090
        %v5092 = vpop.f32.mrf.mxu0
        %v5093 = vadd.f32 %v4793, %v5092
        %v5094 = vpop.f32.mrf.mxu0
        %v5095 = vadd.f32 %v4789, %v5094
        %v5096 = vpop.f32.mrf.mxu0
        %v5097 = vadd.f32 %v4793, %v5096
        %5098 = vmatprep.mubr.bf16.mxu0 %v4741
        %5099 = vmatmul.mubr.bf16.gmra.mxu0 %v4740
        %v5100 = vpop.f32.mrf.mxu0
        %v5101 = vadd.f32 %v4789, %v5100
        %v5102 = vpop.f32.mrf.mxu0
        %v5103 = vadd.f32 %v4793, %v5102
        %v5104 = vpop.f32.mrf.mxu0
        %v5105 = vadd.f32 %v4789, %v5104
        %v5106 = vpop.f32.mrf.mxu0
        %v5107 = vadd.f32 %v4793, %v5106
        %5108 = vmatprep.mubr.bf16.mxu0 %v4743
        %5109 = vmatmul.mubr.bf16.gmra.mxu0 %v4742
        %v5110 = vpop.f32.mrf.mxu0
        %v5111 = vadd.f32 %v4789, %v5110
        %v5112 = vpop.f32.mrf.mxu0
        %v5113 = vadd.f32 %v4793, %v5112
        %v5114 = vpop.f32.mrf.mxu0
        %v5115 = vadd.f32 %v4789, %v5114
        %v5116 = vpop.f32.mrf.mxu0
        %v5117 = vadd.f32 %v4793, %v5116
        %5118 = vmatprep.mubr.bf16.mxu0 %v4745
        %5119 = vmatmul.mubr.bf16.gmra.mxu0 %v4744
        %v5120 = vpop.f32.mrf.mxu0
        %v5121 = vadd.f32 %v4789, %v5120
        %v5122 = vpop.f32.mrf.mxu0
        %v5123 = vadd.f32 %v4793, %v5122
        %v5124 = vpop.f32.mrf.mxu0
        %v5125 = vadd.f32 %v4789, %v5124
        %v5126 = vpop.f32.mrf.mxu0
        %v5127 = vadd.f32 %v4793, %v5126
        %5128 = vmatprep.mubr.bf16.mxu0 %v4747
        %5129 = vmatmul.mubr.bf16.gmra.mxu0 %v4746
        %v5130 = vpop.f32.mrf.mxu0
        %v5131 = vadd.f32 %v4789, %v5130
        %v5132 = vpop.f32.mrf.mxu0
        %v5133 = vadd.f32 %v4793, %v5132
        %v5134 = vpop.f32.mrf.mxu0
        %v5135 = vadd.f32 %v4789, %v5134
        %v5136 = vpop.f32.mrf.mxu0
        %v5137 = vadd.f32 %v4793, %v5136
        %5138 = vmatprep.mubr.bf16.mxu0 %v4749
        %5139 = vmatmul.mubr.bf16.gmra.mxu0 %v4748
        %v5140 = vpop.f32.mrf.mxu0
        %v5141 = vadd.f32 %v4789, %v5140
        %v5142 = vpop.f32.mrf.mxu0
        %v5143 = vadd.f32 %v4793, %v5142
        %v5144 = vpop.f32.mrf.mxu0
        %v5145 = vadd.f32 %v4789, %v5144
        %v5146 = vpop.f32.mrf.mxu0
        %v5147 = vadd.f32 %v4793, %v5146
        %5148 = vdwg.mxu0
        %v5149 = vmax.f32 %v4991, 0.0
        %v5150 = vmax.f32 %v4993, 0.0
        %v5151 = vmax.f32 %v4995, 0.0
        %v5152 = vmax.f32 %v4997, 0.0
        %v5153 = vmax.f32 %v5001, 0.0
        %v5154 = vmax.f32 %v5003, 0.0
        %v5155 = vmax.f32 %v5005, 0.0
        %v5156 = vmax.f32 %v5007, 0.0
        %v5157 = vmax.f32 %v5011, 0.0
        %v5158 = vmax.f32 %v5013, 0.0
        %v5159 = vmax.f32 %v5015, 0.0
        %v5160 = vmax.f32 %v5017, 0.0
        %v5161 = vmax.f32 %v5021, 0.0
        %v5162 = vmax.f32 %v5023, 0.0
        %v5163 = vmax.f32 %v5025, 0.0
        %v5164 = vmax.f32 %v5027, 0.0
        %v5165 = vmax.f32 %v5031, 0.0
        %v5166 = vmax.f32 %v5033, 0.0
        %v5167 = vmax.f32 %v5035, 0.0
        %v5168 = vmax.f32 %v5037, 0.0
        %v5169 = vmax.f32 %v5041, 0.0
        %v5170 = vmax.f32 %v5043, 0.0
        %v5171 = vmax.f32 %v5045, 0.0
        %v5172 = vmax.f32 %v5047, 0.0
        %v5173 = vmax.f32 %v5051, 0.0
        %v5174 = vmax.f32 %v5053, 0.0
        %v5175 = vmax.f32 %v5055, 0.0
        %v5176 = vmax.f32 %v5057, 0.0
        %v5177 = vmax.f32 %v5061, 0.0
        %v5178 = vmax.f32 %v5063, 0.0
        %v5179 = vmax.f32 %v5065, 0.0
        %v5180 = vmax.f32 %v5067, 0.0
        %v5181 = vmax.f32 %v5071, 0.0
        %v5182 = vmax.f32 %v5073, 0.0
        %v5183 = vmax.f32 %v5075, 0.0
        %v5184 = vmax.f32 %v5077, 0.0
        %v5185 = vmax.f32 %v5081, 0.0
        %v5186 = vmax.f32 %v5083, 0.0
        %v5187 = vmax.f32 %v5085, 0.0
        %v5188 = vmax.f32 %v5087, 0.0
        %v5189 = vmax.f32 %v5091, 0.0
        %v5190 = vmax.f32 %v5093, 0.0
        %v5191 = vmax.f32 %v5095, 0.0
        %v5192 = vmax.f32 %v5097, 0.0
        %v5193 = vmax.f32 %v5101, 0.0
        %v5194 = vmax.f32 %v5103, 0.0
        %v5195 = vmax.f32 %v5105, 0.0
        %v5196 = vmax.f32 %v5107, 0.0
        %v5197 = vmax.f32 %v5111, 0.0
        %v5198 = vmax.f32 %v5113, 0.0
        %v5199 = vmax.f32 %v5115, 0.0
        %v5200 = vmax.f32 %v5117, 0.0
        %v5201 = vmax.f32 %v5121, 0.0
        %v5202 = vmax.f32 %v5123, 0.0
        %v5203 = vmax.f32 %v5125, 0.0
        %v5204 = vmax.f32 %v5127, 0.0
        %v5205 = vmax.f32 %v5131, 0.0
        %v5206 = vmax.f32 %v5133, 0.0
        %v5207 = vmax.f32 %v5135, 0.0
        %v5208 = vmax.f32 %v5137, 0.0
        %v5209 = vmax.f32 %v5141, 0.0
        %v5210 = vmax.f32 %v5143, 0.0
        %v5211 = vmax.f32 %v5145, 0.0
        %v5212 = vmax.f32 %v5147, 0.0
        %v5213 = vpack.c.bf16 %v5151, %v5149
        %v5214 = vpack.c.bf16 %v5152, %v5150
        %v5215 = vpack.c.bf16 %v5155, %v5153
        %v5216 = vpack.c.bf16 %v5156, %v5154
        %v5217 = vpack.c.bf16 %v5159, %v5157
        %v5218 = vpack.c.bf16 %v5160, %v5158
        %v5219 = vpack.c.bf16 %v5163, %v5161
        %v5220 = vpack.c.bf16 %v5164, %v5162
        %v5221 = vpack.c.bf16 %v5167, %v5165
        %v5222 = vpack.c.bf16 %v5168, %v5166
        %v5223 = vpack.c.bf16 %v5171, %v5169
        %v5224 = vpack.c.bf16 %v5172, %v5170
        %v5225 = vpack.c.bf16 %v5175, %v5173
        %v5226 = vpack.c.bf16 %v5176, %v5174
        %v5227 = vpack.c.bf16 %v5179, %v5177
        %v5228 = vpack.c.bf16 %v5180, %v5178
        %v5229 = vpack.c.bf16 %v5183, %v5181
        %v5230 = vpack.c.bf16 %v5184, %v5182
        %v5231 = vpack.c.bf16 %v5187, %v5185
        %v5232 = vpack.c.bf16 %v5188, %v5186
        %v5233 = vpack.c.bf16 %v5191, %v5189
        %v5234 = vpack.c.bf16 %v5192, %v5190
        %v5235 = vpack.c.bf16 %v5195, %v5193
        %v5236 = vpack.c.bf16 %v5196, %v5194
        %v5237 = vpack.c.bf16 %v5199, %v5197
        %v5238 = vpack.c.bf16 %v5200, %v5198
        %v5239 = vpack.c.bf16 %v5203, %v5201
        %v5240 = vpack.c.bf16 %v5204, %v5202
        %v5241 = vpack.c.bf16 %v5207, %v5205
        %v5242 = vpack.c.bf16 %v5208, %v5206
        %v5243 = vpack.c.bf16 %v5211, %v5209
        %v5244 = vpack.c.bf16 %v5212, %v5210
        %v5245 = vld [vmem:[#allocation10] sm:$0xff]
        %v5246 = vld [vmem:[#allocation10 + $0x8] sm:$0xff]
        %v5247 = vld [vmem:[#allocation10 + $0x10] sm:$0xff]
        %v5248 = vld [vmem:[#allocation10 + $0x18] sm:$0xff]
        %v5249 = vld [vmem:[#allocation10 + $0x20] sm:$0xff]
        %v5250 = vld [vmem:[#allocation10 + $0x28] sm:$0xff]
        %v5251 = vld [vmem:[#allocation10 + $0x30] sm:$0xff]
        %v5252 = vld [vmem:[#allocation10 + $0x38] sm:$0xff]
        %v5253 = vld [vmem:[#allocation10 + $0x40] sm:$0xff]
        %v5254 = vld [vmem:[#allocation10 + $0x48] sm:$0xff]
        %v5255 = vld [vmem:[#allocation10 + $0x50] sm:$0xff]
        %v5256 = vld [vmem:[#allocation10 + $0x58] sm:$0xff]
        %v5257 = vld [vmem:[#allocation10 + $0x60] sm:$0xff]
        %v5258 = vld [vmem:[#allocation10 + $0x68] sm:$0xff]
        %v5259 = vld [vmem:[#allocation10 + $0x70] sm:$0xff]
        %v5260 = vld [vmem:[#allocation10 + $0x78] sm:$0xff]
        %v5261 = vld [vmem:[#allocation10 + $0x80] sm:$0xff]
        %v5262 = vld [vmem:[#allocation10 + $0x88] sm:$0xff]
        %v5263 = vld [vmem:[#allocation10 + $0x90] sm:$0xff]
        %v5264 = vld [vmem:[#allocation10 + $0x98] sm:$0xff]
        %v5265 = vld [vmem:[#allocation10 + $0xa0] sm:$0xff]
        %v5266 = vld [vmem:[#allocation10 + $0xa8] sm:$0xff]
        %v5267 = vld [vmem:[#allocation10 + $0xb0] sm:$0xff]
        %v5268 = vld [vmem:[#allocation10 + $0xb8] sm:$0xff]
        %v5269 = vld [vmem:[#allocation10 + $0xc0] sm:$0xff]
        %v5270 = vld [vmem:[#allocation10 + $0xc8] sm:$0xff]
        %v5271 = vld [vmem:[#allocation10 + $0xd0] sm:$0xff]
        %v5272 = vld [vmem:[#allocation10 + $0xd8] sm:$0xff]
        %v5273 = vld [vmem:[#allocation10 + $0xe0] sm:$0xff]
        %v5274 = vld [vmem:[#allocation10 + $0xe8] sm:$0xff]
        %v5275 = vld [vmem:[#allocation10 + $0xf0] sm:$0xff]
        %v5276 = vld [vmem:[#allocation10 + $0xf8] sm:$0xff]
        %v5277 = vld [vmem:[%s7] sm:$0x3]
        %v5279 = vlaneseq
        %v5280 = vshrl.u32 %v5279, 7
        %v5281 = vsub.s32 0, %v5280
        %v5282 = vrot.slane %v5277, %v5281
        %v5283 = vlaneseq
        %v5284 = vshrl.u32 %v5283, 7
        %v5285 = vsub.s32 1, %v5284
        %v5286 = vrot.slane %v5277, %v5285
        %v5321 = vunpack.c.l.b16 %v5245
        %v5322 = vunpack.c.h.b16 %v5245
        %v5323 = vunpack.c.l.b16 %v5246
        %v5324 = vunpack.c.h.b16 %v5246
        %v5325 = vunpack.c.l.b16 %v5247
        %v5326 = vunpack.c.h.b16 %v5247
        %v5327 = vunpack.c.l.b16 %v5248
        %v5328 = vunpack.c.h.b16 %v5248
        %v5329 = vunpack.c.l.b16 %v5249
        %v5330 = vunpack.c.h.b16 %v5249
        %v5331 = vunpack.c.l.b16 %v5250
        %v5332 = vunpack.c.h.b16 %v5250
        %v5333 = vunpack.c.l.b16 %v5251
        %v5334 = vunpack.c.h.b16 %v5251
        %v5335 = vunpack.c.l.b16 %v5252
        %v5336 = vunpack.c.h.b16 %v5252
        %v5337 = vunpack.c.l.b16 %v5253
        %v5338 = vunpack.c.h.b16 %v5253
        %v5339 = vunpack.c.l.b16 %v5254
        %v5340 = vunpack.c.h.b16 %v5254
        %v5341 = vunpack.c.l.b16 %v5255
        %v5342 = vunpack.c.h.b16 %v5255
        %v5343 = vunpack.c.l.b16 %v5256
        %v5344 = vunpack.c.h.b16 %v5256
        %v5345 = vunpack.c.l.b16 %v5257
        %v5346 = vunpack.c.h.b16 %v5257
        %v5347 = vunpack.c.l.b16 %v5258
        %v5348 = vunpack.c.h.b16 %v5258
        %v5349 = vunpack.c.l.b16 %v5259
        %v5350 = vunpack.c.h.b16 %v5259
        %v5351 = vunpack.c.l.b16 %v5260
        %v5352 = vunpack.c.h.b16 %v5260
        %v5353 = vunpack.c.l.b16 %v5261
        %v5354 = vunpack.c.h.b16 %v5261
        %v5355 = vunpack.c.l.b16 %v5262
        %v5356 = vunpack.c.h.b16 %v5262
        %v5357 = vunpack.c.l.b16 %v5263
        %v5358 = vunpack.c.h.b16 %v5263
        %v5359 = vunpack.c.l.b16 %v5264
        %v5360 = vunpack.c.h.b16 %v5264
        %v5361 = vunpack.c.l.b16 %v5265
        %v5362 = vunpack.c.h.b16 %v5265
        %v5363 = vunpack.c.l.b16 %v5266
        %v5364 = vunpack.c.h.b16 %v5266
        %v5365 = vunpack.c.l.b16 %v5267
        %v5366 = vunpack.c.h.b16 %v5267
        %v5367 = vunpack.c.l.b16 %v5268
        %v5368 = vunpack.c.h.b16 %v5268
        %v5369 = vunpack.c.l.b16 %v5269
        %v5370 = vunpack.c.h.b16 %v5269
        %v5371 = vunpack.c.l.b16 %v5270
        %v5372 = vunpack.c.h.b16 %v5270
        %v5373 = vunpack.c.l.b16 %v5271
        %v5374 = vunpack.c.h.b16 %v5271
        %v5375 = vunpack.c.l.b16 %v5272
        %v5376 = vunpack.c.h.b16 %v5272
        %v5377 = vunpack.c.l.b16 %v5273
        %v5378 = vunpack.c.h.b16 %v5273
        %v5379 = vunpack.c.l.b16 %v5274
        %v5380 = vunpack.c.h.b16 %v5274
        %v5381 = vunpack.c.l.b16 %v5275
        %v5382 = vunpack.c.h.b16 %v5275
        %v5383 = vunpack.c.l.b16 %v5276
        %v5384 = vunpack.c.h.b16 %v5276
        %v5385 = vpack.c.b16 %v5323, %v5321
        %v5386 = vpack.c.b16 %v5324, %v5322
        %v5387 = vpack.c.b16 %v5327, %v5325
        %v5388 = vpack.c.b16 %v5328, %v5326
        %v5389 = vpack.c.b16 %v5331, %v5329
        %v5390 = vpack.c.b16 %v5332, %v5330
        %v5391 = vpack.c.b16 %v5335, %v5333
        %v5392 = vpack.c.b16 %v5336, %v5334
        %v5393 = vpack.c.b16 %v5339, %v5337
        %v5394 = vpack.c.b16 %v5340, %v5338
        %v5395 = vpack.c.b16 %v5343, %v5341
        %v5396 = vpack.c.b16 %v5344, %v5342
        %v5397 = vpack.c.b16 %v5347, %v5345
        %v5398 = vpack.c.b16 %v5348, %v5346
        %v5399 = vpack.c.b16 %v5351, %v5349
        %v5400 = vpack.c.b16 %v5352, %v5350
        %v5401 = vpack.c.b16 %v5355, %v5353
        %v5402 = vpack.c.b16 %v5356, %v5354
        %v5403 = vpack.c.b16 %v5359, %v5357
        %v5404 = vpack.c.b16 %v5360, %v5358
        %v5405 = vpack.c.b16 %v5363, %v5361
        %v5406 = vpack.c.b16 %v5364, %v5362
        %v5407 = vpack.c.b16 %v5367, %v5365
        %v5408 = vpack.c.b16 %v5368, %v5366
        %v5409 = vpack.c.b16 %v5371, %v5369
        %v5410 = vpack.c.b16 %v5372, %v5370
        %v5411 = vpack.c.b16 %v5375, %v5373
        %v5412 = vpack.c.b16 %v5376, %v5374
        %v5413 = vpack.c.b16 %v5379, %v5377
        %v5414 = vpack.c.b16 %v5380, %v5378
        %v5415 = vpack.c.b16 %v5383, %v5381
        %v5416 = vpack.c.b16 %v5384, %v5382
        %5449 = vmatprep.subr.bf16.mxu0 %v5400
        %5450 = vmatpush1.bf16.msra.mxu0 %v5399
        %5451 = vmatprep.subr.bf16.mxu0 %v5398
        %5452 = vmatpush1.bf16.msra.mxu0 %v5397
        %5453 = vmatprep.subr.bf16.mxu0 %v5396
        %5454 = vmatpush1.bf16.msra.mxu0 %v5395
        %5455 = vmatprep.subr.bf16.mxu0 %v5394
        %5456 = vmatpush1.bf16.msra.mxu0 %v5393
        %5457 = vmatprep.subr.bf16.mxu0 %v5392
        %5458 = vmatpush1.bf16.msra.mxu0 %v5391
        %5459 = vmatprep.subr.bf16.mxu0 %v5390
        %5460 = vmatpush1.bf16.msra.mxu0 %v5389
        %5461 = vmatprep.subr.bf16.mxu0 %v5388
        %5462 = vmatpush1.bf16.msra.mxu0 %v5387
        %5463 = vmatprep.subr.bf16.mxu0 %v5386
        %5464 = vmatpush1.bf16.msra.mxu0 %v5385
        %5465 = vmatprep.subr.bf16.mxu0 %v5416
        %5466 = vmatpush2.bf16.msra.mxu0 %v5415
        %5467 = vmatprep.subr.bf16.mxu0 %v5414
        %5468 = vmatpush2.bf16.msra.mxu0 %v5413
        %5469 = vmatprep.subr.bf16.mxu0 %v5412
        %5470 = vmatpush2.bf16.msra.mxu0 %v5411
        %5471 = vmatprep.subr.bf16.mxu0 %v5410
        %5472 = vmatpush2.bf16.msra.mxu0 %v5409
        %5473 = vmatprep.subr.bf16.mxu0 %v5408
        %5474 = vmatpush2.bf16.msra.mxu0 %v5407
        %5475 = vmatprep.subr.bf16.mxu0 %v5406
        %5476 = vmatpush2.bf16.msra.mxu0 %v5405
        %5477 = vmatprep.subr.bf16.mxu0 %v5404
        %5478 = vmatpush2.bf16.msra.mxu0 %v5403
        %5479 = vmatprep.subr.bf16.mxu0 %v5402
        %5480 = vmatpush2.bf16.msra.mxu0 %v5401
        %5481 = vmatprep.mubr.bf16.mxu0 %v5214
        %5482 = vmatmul.mubr.bf16.gmra.mxu0 %v5213
        %v5483 = vpop.f32.mrf.mxu0
        %v5484 = vadd.f32 %v5282, %v5483
        %v5485 = vpop.f32.mrf.mxu0
        %v5486 = vadd.f32 %v5286, %v5485
        %v5487 = vpop.f32.mrf.mxu0
        %v5488 = vadd.f32 %v5282, %v5487
        %v5489 = vpop.f32.mrf.mxu0
        %v5490 = vadd.f32 %v5286, %v5489
        %5491 = vmatprep.mubr.bf16.mxu0 %v5216
        %5492 = vmatmul.mubr.bf16.gmra.mxu0 %v5215
        %v5493 = vpop.f32.mrf.mxu0
        %v5494 = vadd.f32 %v5282, %v5493
        %v5495 = vpop.f32.mrf.mxu0
        %v5496 = vadd.f32 %v5286, %v5495
        %v5497 = vpop.f32.mrf.mxu0
        %v5498 = vadd.f32 %v5282, %v5497
        %v5499 = vpop.f32.mrf.mxu0
        %v5500 = vadd.f32 %v5286, %v5499
        %5501 = vmatprep.mubr.bf16.mxu0 %v5218
        %5502 = vmatmul.mubr.bf16.gmra.mxu0 %v5217
        %v5503 = vpop.f32.mrf.mxu0
        %v5504 = vadd.f32 %v5282, %v5503
        %v5505 = vpop.f32.mrf.mxu0
        %v5506 = vadd.f32 %v5286, %v5505
        %v5507 = vpop.f32.mrf.mxu0
        %v5508 = vadd.f32 %v5282, %v5507
        %v5509 = vpop.f32.mrf.mxu0
        %v5510 = vadd.f32 %v5286, %v5509
        %5511 = vmatprep.mubr.bf16.mxu0 %v5220
        %5512 = vmatmul.mubr.bf16.gmra.mxu0 %v5219
        %v5513 = vpop.f32.mrf.mxu0
        %v5514 = vadd.f32 %v5282, %v5513
        %v5515 = vpop.f32.mrf.mxu0
        %v5516 = vadd.f32 %v5286, %v5515
        %v5517 = vpop.f32.mrf.mxu0
        %v5518 = vadd.f32 %v5282, %v5517
        %v5519 = vpop.f32.mrf.mxu0
        %v5520 = vadd.f32 %v5286, %v5519
        %5521 = vmatprep.mubr.bf16.mxu0 %v5222
        %5522 = vmatmul.mubr.bf16.gmra.mxu0 %v5221
        %v5523 = vpop.f32.mrf.mxu0
        %v5524 = vadd.f32 %v5282, %v5523
        %v5525 = vpop.f32.mrf.mxu0
        %v5526 = vadd.f32 %v5286, %v5525
        %v5527 = vpop.f32.mrf.mxu0
        %v5528 = vadd.f32 %v5282, %v5527
        %v5529 = vpop.f32.mrf.mxu0
        %v5530 = vadd.f32 %v5286, %v5529
        %5531 = vmatprep.mubr.bf16.mxu0 %v5224
        %5532 = vmatmul.mubr.bf16.gmra.mxu0 %v5223
        %v5533 = vpop.f32.mrf.mxu0
        %v5534 = vadd.f32 %v5282, %v5533
        %v5535 = vpop.f32.mrf.mxu0
        %v5536 = vadd.f32 %v5286, %v5535
        %v5537 = vpop.f32.mrf.mxu0
        %v5538 = vadd.f32 %v5282, %v5537
        %v5539 = vpop.f32.mrf.mxu0
        %v5540 = vadd.f32 %v5286, %v5539
        %5541 = vmatprep.mubr.bf16.mxu0 %v5226
        %5542 = vmatmul.mubr.bf16.gmra.mxu0 %v5225
        %v5543 = vpop.f32.mrf.mxu0
        %v5544 = vadd.f32 %v5282, %v5543
        %v5545 = vpop.f32.mrf.mxu0
        %v5546 = vadd.f32 %v5286, %v5545
        %v5547 = vpop.f32.mrf.mxu0
        %v5548 = vadd.f32 %v5282, %v5547
        %v5549 = vpop.f32.mrf.mxu0
        %v5550 = vadd.f32 %v5286, %v5549
        %5551 = vmatprep.mubr.bf16.mxu0 %v5228
        %5552 = vmatmul.mubr.bf16.gmra.mxu0 %v5227
        %v5553 = vpop.f32.mrf.mxu0
        %v5554 = vadd.f32 %v5282, %v5553
        %v5555 = vpop.f32.mrf.mxu0
        %v5556 = vadd.f32 %v5286, %v5555
        %v5557 = vpop.f32.mrf.mxu0
        %v5558 = vadd.f32 %v5282, %v5557
        %v5559 = vpop.f32.mrf.mxu0
        %v5560 = vadd.f32 %v5286, %v5559
        %5561 = vmatprep.mubr.bf16.mxu0 %v5230
        %5562 = vmatmul.mubr.bf16.gmra.mxu0 %v5229
        %v5563 = vpop.f32.mrf.mxu0
        %v5564 = vadd.f32 %v5282, %v5563
        %v5565 = vpop.f32.mrf.mxu0
        %v5566 = vadd.f32 %v5286, %v5565
        %v5567 = vpop.f32.mrf.mxu0
        %v5568 = vadd.f32 %v5282, %v5567
        %v5569 = vpop.f32.mrf.mxu0
        %v5570 = vadd.f32 %v5286, %v5569
        %5571 = vmatprep.mubr.bf16.mxu0 %v5232
        %5572 = vmatmul.mubr.bf16.gmra.mxu0 %v5231
        %v5573 = vpop.f32.mrf.mxu0
        %v5574 = vadd.f32 %v5282, %v5573
        %v5575 = vpop.f32.mrf.mxu0
        %v5576 = vadd.f32 %v5286, %v5575
        %v5577 = vpop.f32.mrf.mxu0
        %v5578 = vadd.f32 %v5282, %v5577
        %v5579 = vpop.f32.mrf.mxu0
        %v5580 = vadd.f32 %v5286, %v5579
        %5581 = vmatprep.mubr.bf16.mxu0 %v5234
        %5582 = vmatmul.mubr.bf16.gmra.mxu0 %v5233
        %v5583 = vpop.f32.mrf.mxu0
        %v5584 = vadd.f32 %v5282, %v5583
        %v5585 = vpop.f32.mrf.mxu0
        %v5586 = vadd.f32 %v5286, %v5585
        %v5587 = vpop.f32.mrf.mxu0
        %v5588 = vadd.f32 %v5282, %v5587
        %v5589 = vpop.f32.mrf.mxu0
        %v5590 = vadd.f32 %v5286, %v5589
        %5591 = vmatprep.mubr.bf16.mxu0 %v5236
        %5592 = vmatmul.mubr.bf16.gmra.mxu0 %v5235
        %v5593 = vpop.f32.mrf.mxu0
        %v5594 = vadd.f32 %v5282, %v5593
        %v5595 = vpop.f32.mrf.mxu0
        %v5596 = vadd.f32 %v5286, %v5595
        %v5597 = vpop.f32.mrf.mxu0
        %v5598 = vadd.f32 %v5282, %v5597
        %v5599 = vpop.f32.mrf.mxu0
        %v5600 = vadd.f32 %v5286, %v5599
        %5601 = vmatprep.mubr.bf16.mxu0 %v5238
        %5602 = vmatmul.mubr.bf16.gmra.mxu0 %v5237
        %v5603 = vpop.f32.mrf.mxu0
        %v5604 = vadd.f32 %v5282, %v5603
        %v5605 = vpop.f32.mrf.mxu0
        %v5606 = vadd.f32 %v5286, %v5605
        %v5607 = vpop.f32.mrf.mxu0
        %v5608 = vadd.f32 %v5282, %v5607
        %v5609 = vpop.f32.mrf.mxu0
        %v5610 = vadd.f32 %v5286, %v5609
        %5611 = vmatprep.mubr.bf16.mxu0 %v5240
        %5612 = vmatmul.mubr.bf16.gmra.mxu0 %v5239
        %v5613 = vpop.f32.mrf.mxu0
        %v5614 = vadd.f32 %v5282, %v5613
        %v5615 = vpop.f32.mrf.mxu0
        %v5616 = vadd.f32 %v5286, %v5615
        %v5617 = vpop.f32.mrf.mxu0
        %v5618 = vadd.f32 %v5282, %v5617
        %v5619 = vpop.f32.mrf.mxu0
        %v5620 = vadd.f32 %v5286, %v5619
        %5621 = vmatprep.mubr.bf16.mxu0 %v5242
        %5622 = vmatmul.mubr.bf16.gmra.mxu0 %v5241
        %v5623 = vpop.f32.mrf.mxu0
        %v5624 = vadd.f32 %v5282, %v5623
        %v5625 = vpop.f32.mrf.mxu0
        %v5626 = vadd.f32 %v5286, %v5625
        %v5627 = vpop.f32.mrf.mxu0
        %v5628 = vadd.f32 %v5282, %v5627
        %v5629 = vpop.f32.mrf.mxu0
        %v5630 = vadd.f32 %v5286, %v5629
        %5631 = vmatprep.mubr.bf16.mxu0 %v5244
        %5632 = vmatmul.mubr.bf16.gmra.mxu0 %v5243
        %v5633 = vpop.f32.mrf.mxu0
        %v5634 = vadd.f32 %v5282, %v5633
        %v5635 = vpop.f32.mrf.mxu0
        %v5636 = vadd.f32 %v5286, %v5635
        %v5637 = vpop.f32.mrf.mxu0
        %v5638 = vadd.f32 %v5282, %v5637
        %v5639 = vpop.f32.mrf.mxu0
        %v5640 = vadd.f32 %v5286, %v5639
        %5641 = vdwg.mxu0
        %v5642 = vld [vmem:[#allocation11] sm:$0xf]
        %v5643 = vld [vmem:[#allocation11 + $0x4] sm:$0xf]
        %v5644 = vld [vmem:[#allocation11 + $0x8] sm:$0xf]
        %v5645 = vld [vmem:[#allocation11 + $0xc] sm:$0xf]
        %v5646 = vld [vmem:[#allocation11 + $0x10] sm:$0xf]
        %v5647 = vld [vmem:[#allocation11 + $0x14] sm:$0xf]
        %v5648 = vld [vmem:[#allocation11 + $0x18] sm:$0xf]
        %v5649 = vld [vmem:[#allocation11 + $0x1c] sm:$0xf]
        %v5650 = vld [vmem:[#allocation11 + $0x20] sm:$0xf]
        %v5651 = vld [vmem:[#allocation11 + $0x24] sm:$0xf]
        %v5652 = vld [vmem:[#allocation11 + $0x28] sm:$0xf]
        %v5653 = vld [vmem:[#allocation11 + $0x2c] sm:$0xf]
        %v5654 = vld [vmem:[#allocation11 + $0x30] sm:$0xf]
        %v5655 = vld [vmem:[#allocation11 + $0x34] sm:$0xf]
        %v5656 = vld [vmem:[#allocation11 + $0x38] sm:$0xf]
        %v5657 = vld [vmem:[#allocation11 + $0x3c] sm:$0xf]
        %v5658 = vld [vmem:[#allocation11 + $0x40] sm:$0xf]
        %v5659 = vld [vmem:[#allocation11 + $0x44] sm:$0xf]
        %v5660 = vld [vmem:[#allocation11 + $0x48] sm:$0xf]
        %v5661 = vld [vmem:[#allocation11 + $0x4c] sm:$0xf]
        %v5662 = vld [vmem:[#allocation11 + $0x50] sm:$0xf]
        %v5663 = vld [vmem:[#allocation11 + $0x54] sm:$0xf]
        %v5664 = vld [vmem:[#allocation11 + $0x58] sm:$0xf]
        %v5665 = vld [vmem:[#allocation11 + $0x5c] sm:$0xf]
        %v5666 = vld [vmem:[#allocation11 + $0x60] sm:$0xf]
        %v5667 = vld [vmem:[#allocation11 + $0x64] sm:$0xf]
        %v5668 = vld [vmem:[#allocation11 + $0x68] sm:$0xf]
        %v5669 = vld [vmem:[#allocation11 + $0x6c] sm:$0xf]
        %v5670 = vld [vmem:[#allocation11 + $0x70] sm:$0xf]
        %v5671 = vld [vmem:[#allocation11 + $0x74] sm:$0xf]
        %v5672 = vld [vmem:[#allocation11 + $0x78] sm:$0xf]
        %v5673 = vld [vmem:[#allocation11 + $0x7c] sm:$0xf]
        %v5706 = vunpack.c.l.b16 %v5642
        %v5707 = vunpack.c.l.b16 %v5643
        %v5708 = vunpack.c.l.b16 %v5644
        %v5709 = vunpack.c.l.b16 %v5645
        %v5710 = vunpack.c.l.b16 %v5646
        %v5711 = vunpack.c.l.b16 %v5647
        %v5712 = vunpack.c.l.b16 %v5648
        %v5713 = vunpack.c.l.b16 %v5649
        %v5714 = vunpack.c.l.b16 %v5650
        %v5715 = vunpack.c.l.b16 %v5651
        %v5716 = vunpack.c.l.b16 %v5652
        %v5717 = vunpack.c.l.b16 %v5653
        %v5718 = vunpack.c.l.b16 %v5654
        %v5719 = vunpack.c.l.b16 %v5655
        %v5720 = vunpack.c.l.b16 %v5656
        %v5721 = vunpack.c.l.b16 %v5657
        %v5722 = vunpack.c.l.b16 %v5658
        %v5723 = vunpack.c.l.b16 %v5659
        %v5724 = vunpack.c.l.b16 %v5660
        %v5725 = vunpack.c.l.b16 %v5661
        %v5726 = vunpack.c.l.b16 %v5662
        %v5727 = vunpack.c.l.b16 %v5663
        %v5728 = vunpack.c.l.b16 %v5664
        %v5729 = vunpack.c.l.b16 %v5665
        %v5730 = vunpack.c.l.b16 %v5666
        %v5731 = vunpack.c.l.b16 %v5667
        %v5732 = vunpack.c.l.b16 %v5668
        %v5733 = vunpack.c.l.b16 %v5669
        %v5734 = vunpack.c.l.b16 %v5670
        %v5735 = vunpack.c.l.b16 %v5671
        %v5736 = vunpack.c.l.b16 %v5672
        %v5737 = vunpack.c.l.b16 %v5673
        %v5738 = vpack.c.b16 %v5707, %v5706
        %v5739 = vpack.c.b16 %v5709, %v5708
        %v5740 = vpack.c.b16 %v5711, %v5710
        %v5741 = vpack.c.b16 %v5713, %v5712
        %v5742 = vpack.c.b16 %v5715, %v5714
        %v5743 = vpack.c.b16 %v5717, %v5716
        %v5744 = vpack.c.b16 %v5719, %v5718
        %v5745 = vpack.c.b16 %v5721, %v5720
        %v5746 = vpack.c.b16 %v5723, %v5722
        %v5747 = vpack.c.b16 %v5725, %v5724
        %v5748 = vpack.c.b16 %v5727, %v5726
        %v5749 = vpack.c.b16 %v5729, %v5728
        %v5750 = vpack.c.b16 %v5731, %v5730
        %v5751 = vpack.c.b16 %v5733, %v5732
        %v5752 = vpack.c.b16 %v5735, %v5734
        %v5753 = vpack.c.b16 %v5737, %v5736
        %5770 = vmatprep.subr.bf16.mxu0 0
        %5771 = vmatpush1.bf16.msra.mxu0 %v5745
        %5772 = vmatprep.subr.bf16.mxu0 0
        %5773 = vmatpush1.bf16.msra.mxu0 %v5744
        %5774 = vmatprep.subr.bf16.mxu0 0
        %5775 = vmatpush1.bf16.msra.mxu0 %v5743
        %5776 = vmatprep.subr.bf16.mxu0 0
        %5777 = vmatpush1.bf16.msra.mxu0 %v5742
        %5778 = vmatprep.subr.bf16.mxu0 0
        %5779 = vmatpush1.bf16.msra.mxu0 %v5741
        %5780 = vmatprep.subr.bf16.mxu0 0
        %5781 = vmatpush1.bf16.msra.mxu0 %v5740
        %5782 = vmatprep.subr.bf16.mxu0 0
        %5783 = vmatpush1.bf16.msra.mxu0 %v5739
        %5784 = vmatprep.subr.bf16.mxu0 0
        %5785 = vmatpush1.bf16.msra.mxu0 %v5738
        %5786 = vmatprep.subr.bf16.mxu0 0
        %5787 = vmatpush2.bf16.msra.mxu0 %v5753
        %5788 = vmatprep.subr.bf16.mxu0 0
        %5789 = vmatpush2.bf16.msra.mxu0 %v5752
        %5790 = vmatprep.subr.bf16.mxu0 0
        %5791 = vmatpush2.bf16.msra.mxu0 %v5751
        %5792 = vmatprep.subr.bf16.mxu0 0
        %5793 = vmatpush2.bf16.msra.mxu0 %v5750
        %5794 = vmatprep.subr.bf16.mxu0 0
        %5795 = vmatpush2.bf16.msra.mxu0 %v5749
        %5796 = vmatprep.subr.bf16.mxu0 0
        %5797 = vmatpush2.bf16.msra.mxu0 %v5748
        %5798 = vmatprep.subr.bf16.mxu0 0
        %5799 = vmatpush2.bf16.msra.mxu0 %v5747
        %5800 = vmatprep.subr.bf16.mxu0 0
        %5801 = vmatpush2.bf16.msra.mxu0 %v5746
        %5802 = vmatprep.mubr.bf16.mxu0 %v5214
        %5803 = vmatmul.mubr.bf16.gmra.mxu0 %v5213
        %v5804 = vpop.f32.mrf.mxu0
        %v5805 = vadd.f32 0.0, %v5804
        %v5806 = vpop.f32.mrf.mxu0
        %v5807 = vpop.f32.mrf.mxu0
        %v5808 = vadd.f32 0.0, %v5807
        %v5809 = vpop.f32.mrf.mxu0
        %5810 = vmatprep.mubr.bf16.mxu0 %v5216
        %5811 = vmatmul.mubr.bf16.gmra.mxu0 %v5215
        %v5812 = vpop.f32.mrf.mxu0
        %v5813 = vadd.f32 0.0, %v5812
        %v5814 = vpop.f32.mrf.mxu0
        %v5815 = vpop.f32.mrf.mxu0
        %v5816 = vadd.f32 0.0, %v5815
        %v5817 = vpop.f32.mrf.mxu0
        %5818 = vmatprep.mubr.bf16.mxu0 %v5218
        %5819 = vmatmul.mubr.bf16.gmra.mxu0 %v5217
        %v5820 = vpop.f32.mrf.mxu0
        %v5821 = vadd.f32 0.0, %v5820
        %v5822 = vpop.f32.mrf.mxu0
        %v5823 = vpop.f32.mrf.mxu0
        %v5824 = vadd.f32 0.0, %v5823
        %v5825 = vpop.f32.mrf.mxu0
        %5826 = vmatprep.mubr.bf16.mxu0 %v5220
        %5827 = vmatmul.mubr.bf16.gmra.mxu0 %v5219
        %v5828 = vpop.f32.mrf.mxu0
        %v5829 = vadd.f32 0.0, %v5828
        %v5830 = vpop.f32.mrf.mxu0
        %v5831 = vpop.f32.mrf.mxu0
        %v5832 = vadd.f32 0.0, %v5831
        %v5833 = vpop.f32.mrf.mxu0
        %5834 = vmatprep.mubr.bf16.mxu0 %v5222
        %5835 = vmatmul.mubr.bf16.gmra.mxu0 %v5221
        %v5836 = vpop.f32.mrf.mxu0
        %v5837 = vadd.f32 0.0, %v5836
        %v5838 = vpop.f32.mrf.mxu0
        %v5839 = vpop.f32.mrf.mxu0
        %v5840 = vadd.f32 0.0, %v5839
        %v5841 = vpop.f32.mrf.mxu0
        %5842 = vmatprep.mubr.bf16.mxu0 %v5224
        %5843 = vmatmul.mubr.bf16.gmra.mxu0 %v5223
        %v5844 = vpop.f32.mrf.mxu0
        %v5845 = vadd.f32 0.0, %v5844
        %v5846 = vpop.f32.mrf.mxu0
        %v5847 = vpop.f32.mrf.mxu0
        %v5848 = vadd.f32 0.0, %v5847
        %v5849 = vpop.f32.mrf.mxu0
        %5850 = vmatprep.mubr.bf16.mxu0 %v5226
        %5851 = vmatmul.mubr.bf16.gmra.mxu0 %v5225
        %v5852 = vpop.f32.mrf.mxu0
        %v5853 = vadd.f32 0.0, %v5852
        %v5854 = vpop.f32.mrf.mxu0
        %v5855 = vpop.f32.mrf.mxu0
        %v5856 = vadd.f32 0.0, %v5855
        %v5857 = vpop.f32.mrf.mxu0
        %5858 = vmatprep.mubr.bf16.mxu0 %v5228
        %5859 = vmatmul.mubr.bf16.gmra.mxu0 %v5227
        %v5860 = vpop.f32.mrf.mxu0
        %v5861 = vadd.f32 0.0, %v5860
        %v5862 = vpop.f32.mrf.mxu0
        %v5863 = vpop.f32.mrf.mxu0
        %v5864 = vadd.f32 0.0, %v5863
        %v5865 = vpop.f32.mrf.mxu0
        %5866 = vmatprep.mubr.bf16.mxu0 %v5230
        %5867 = vmatmul.mubr.bf16.gmra.mxu0 %v5229
        %v5868 = vpop.f32.mrf.mxu0
        %v5869 = vadd.f32 0.0, %v5868
        %v5870 = vpop.f32.mrf.mxu0
        %v5871 = vpop.f32.mrf.mxu0
        %v5872 = vadd.f32 0.0, %v5871
        %v5873 = vpop.f32.mrf.mxu0
        %5874 = vmatprep.mubr.bf16.mxu0 %v5232
        %5875 = vmatmul.mubr.bf16.gmra.mxu0 %v5231
        %v5876 = vpop.f32.mrf.mxu0
        %v5877 = vadd.f32 0.0, %v5876
        %v5878 = vpop.f32.mrf.mxu0
        %v5879 = vpop.f32.mrf.mxu0
        %v5880 = vadd.f32 0.0, %v5879
        %v5881 = vpop.f32.mrf.mxu0
        %5882 = vmatprep.mubr.bf16.mxu0 %v5234
        %5883 = vmatmul.mubr.bf16.gmra.mxu0 %v5233
        %v5884 = vpop.f32.mrf.mxu0
        %v5885 = vadd.f32 0.0, %v5884
        %v5886 = vpop.f32.mrf.mxu0
        %v5887 = vpop.f32.mrf.mxu0
        %v5888 = vadd.f32 0.0, %v5887
        %v5889 = vpop.f32.mrf.mxu0
        %5890 = vmatprep.mubr.bf16.mxu0 %v5236
        %5891 = vmatmul.mubr.bf16.gmra.mxu0 %v5235
        %v5892 = vpop.f32.mrf.mxu0
        %v5893 = vadd.f32 0.0, %v5892
        %v5894 = vpop.f32.mrf.mxu0
        %v5895 = vpop.f32.mrf.mxu0
        %v5896 = vadd.f32 0.0, %v5895
        %v5897 = vpop.f32.mrf.mxu0
        %5898 = vmatprep.mubr.bf16.mxu0 %v5238
        %5899 = vmatmul.mubr.bf16.gmra.mxu0 %v5237
        %v5900 = vpop.f32.mrf.mxu0
        %v5901 = vadd.f32 0.0, %v5900
        %v5902 = vpop.f32.mrf.mxu0
        %v5903 = vpop.f32.mrf.mxu0
        %v5904 = vadd.f32 0.0, %v5903
        %v5905 = vpop.f32.mrf.mxu0
        %5906 = vmatprep.mubr.bf16.mxu0 %v5240
        %5907 = vmatmul.mubr.bf16.gmra.mxu0 %v5239
        %v5908 = vpop.f32.mrf.mxu0
        %v5909 = vadd.f32 0.0, %v5908
        %v5910 = vpop.f32.mrf.mxu0
        %v5911 = vpop.f32.mrf.mxu0
        %v5912 = vadd.f32 0.0, %v5911
        %v5913 = vpop.f32.mrf.mxu0
        %5914 = vmatprep.mubr.bf16.mxu0 %v5242
        %5915 = vmatmul.mubr.bf16.gmra.mxu0 %v5241
        %v5916 = vpop.f32.mrf.mxu0
        %v5917 = vadd.f32 0.0, %v5916
        %v5918 = vpop.f32.mrf.mxu0
        %v5919 = vpop.f32.mrf.mxu0
        %v5920 = vadd.f32 0.0, %v5919
        %v5921 = vpop.f32.mrf.mxu0
        %5922 = vmatprep.mubr.bf16.mxu0 %v5244
        %5923 = vmatmul.mubr.bf16.gmra.mxu0 %v5243
        %v5924 = vpop.f32.mrf.mxu0
        %v5925 = vadd.f32 0.0, %v5924
        %v5926 = vpop.f32.mrf.mxu0
        %v5927 = vpop.f32.mrf.mxu0
        %v5928 = vadd.f32 0.0, %v5927
        %v5929 = vpop.f32.mrf.mxu0
        %5930 = vdwg.mxu0
        %v5931 = vpack.c.bf16 %v5488, %v5484
        %v5932 = vpack.c.bf16 %v5490, %v5486
        %v5933 = vpack.c.bf16 %v5498, %v5494
        %v5934 = vpack.c.bf16 %v5500, %v5496
        %v5935 = vpack.c.bf16 %v5508, %v5504
        %v5936 = vpack.c.bf16 %v5510, %v5506
        %v5937 = vpack.c.bf16 %v5518, %v5514
        %v5938 = vpack.c.bf16 %v5520, %v5516
        %v5939 = vpack.c.bf16 %v5528, %v5524
        %v5940 = vpack.c.bf16 %v5530, %v5526
        %v5941 = vpack.c.bf16 %v5538, %v5534
        %v5942 = vpack.c.bf16 %v5540, %v5536
        %v5943 = vpack.c.bf16 %v5548, %v5544
        %v5944 = vpack.c.bf16 %v5550, %v5546
        %v5945 = vpack.c.bf16 %v5558, %v5554
        %v5946 = vpack.c.bf16 %v5560, %v5556
        %v5947 = vpack.c.bf16 %v5568, %v5564
        %v5948 = vpack.c.bf16 %v5570, %v5566
        %v5949 = vpack.c.bf16 %v5578, %v5574
        %v5950 = vpack.c.bf16 %v5580, %v5576
        %v5951 = vpack.c.bf16 %v5588, %v5584
        %v5952 = vpack.c.bf16 %v5590, %v5586
        %v5953 = vpack.c.bf16 %v5598, %v5594
        %v5954 = vpack.c.bf16 %v5600, %v5596
        %v5955 = vpack.c.bf16 %v5608, %v5604
        %v5956 = vpack.c.bf16 %v5610, %v5606
        %v5957 = vpack.c.bf16 %v5618, %v5614
        %v5958 = vpack.c.bf16 %v5620, %v5616
        %v5959 = vpack.c.bf16 %v5628, %v5624
        %v5960 = vpack.c.bf16 %v5630, %v5626
        %v5961 = vpack.c.bf16 %v5638, %v5634
        %v5962 = vpack.c.bf16 %v5640, %v5636
        %v5963 = vld [vmem:[#allocation13] sm:$0xf]
        %v5964 = vld [vmem:[#allocation13 + $0x4] sm:$0xf]
        %v5965 = vld [vmem:[#allocation13 + $0x8] sm:$0xf]
        %v5966 = vld [vmem:[#allocation13 + $0xc] sm:$0xf]
        %v5967 = vld [vmem:[#allocation13 + $0x10] sm:$0xf]
        %v5968 = vld [vmem:[#allocation13 + $0x14] sm:$0xf]
        %v5969 = vld [vmem:[#allocation13 + $0x18] sm:$0xf]
        %v5970 = vld [vmem:[#allocation13 + $0x1c] sm:$0xf]
        %v5971 = vld [vmem:[#allocation13 + $0x20] sm:$0xf]
        %v5972 = vld [vmem:[#allocation13 + $0x24] sm:$0xf]
        %v5973 = vld [vmem:[#allocation13 + $0x28] sm:$0xf]
        %v5974 = vld [vmem:[#allocation13 + $0x2c] sm:$0xf]
        %v5975 = vld [vmem:[#allocation13 + $0x30] sm:$0xf]
        %v5976 = vld [vmem:[#allocation13 + $0x34] sm:$0xf]
        %v5977 = vld [vmem:[#allocation13 + $0x38] sm:$0xf]
        %v5978 = vld [vmem:[#allocation13 + $0x3c] sm:$0xf]
        %v5979 = vld [vmem:[#allocation13 + $0x40] sm:$0xf]
        %v5980 = vld [vmem:[#allocation13 + $0x44] sm:$0xf]
        %v5981 = vld [vmem:[#allocation13 + $0x48] sm:$0xf]
        %v5982 = vld [vmem:[#allocation13 + $0x4c] sm:$0xf]
        %v5983 = vld [vmem:[#allocation13 + $0x50] sm:$0xf]
        %v5984 = vld [vmem:[#allocation13 + $0x54] sm:$0xf]
        %v5985 = vld [vmem:[#allocation13 + $0x58] sm:$0xf]
        %v5986 = vld [vmem:[#allocation13 + $0x5c] sm:$0xf]
        %v5987 = vld [vmem:[#allocation13 + $0x60] sm:$0xf]
        %v5988 = vld [vmem:[#allocation13 + $0x64] sm:$0xf]
        %v5989 = vld [vmem:[#allocation13 + $0x68] sm:$0xf]
        %v5990 = vld [vmem:[#allocation13 + $0x6c] sm:$0xf]
        %v5991 = vld [vmem:[#allocation13 + $0x70] sm:$0xf]
        %v5992 = vld [vmem:[#allocation13 + $0x74] sm:$0xf]
        %v5993 = vld [vmem:[#allocation13 + $0x78] sm:$0xf]
        %v5994 = vld [vmem:[#allocation13 + $0x7c] sm:$0xf]
        %v6027 = vunpack.c.l.b16 %v5963
        %v6028 = vunpack.c.l.b16 %v5964
        %v6029 = vunpack.c.l.b16 %v5965
        %v6030 = vunpack.c.l.b16 %v5966
        %v6031 = vunpack.c.l.b16 %v5967
        %v6032 = vunpack.c.l.b16 %v5968
        %v6033 = vunpack.c.l.b16 %v5969
        %v6034 = vunpack.c.l.b16 %v5970
        %v6035 = vunpack.c.l.b16 %v5971
        %v6036 = vunpack.c.l.b16 %v5972
        %v6037 = vunpack.c.l.b16 %v5973
        %v6038 = vunpack.c.l.b16 %v5974
        %v6039 = vunpack.c.l.b16 %v5975
        %v6040 = vunpack.c.l.b16 %v5976
        %v6041 = vunpack.c.l.b16 %v5977
        %v6042 = vunpack.c.l.b16 %v5978
        %v6043 = vunpack.c.l.b16 %v5979
        %v6044 = vunpack.c.l.b16 %v5980
        %v6045 = vunpack.c.l.b16 %v5981
        %v6046 = vunpack.c.l.b16 %v5982
        %v6047 = vunpack.c.l.b16 %v5983
        %v6048 = vunpack.c.l.b16 %v5984
        %v6049 = vunpack.c.l.b16 %v5985
        %v6050 = vunpack.c.l.b16 %v5986
        %v6051 = vunpack.c.l.b16 %v5987
        %v6052 = vunpack.c.l.b16 %v5988
        %v6053 = vunpack.c.l.b16 %v5989
        %v6054 = vunpack.c.l.b16 %v5990
        %v6055 = vunpack.c.l.b16 %v5991
        %v6056 = vunpack.c.l.b16 %v5992
        %v6057 = vunpack.c.l.b16 %v5993
        %v6058 = vunpack.c.l.b16 %v5994
        %v6059 = vpack.c.b16 %v6028, %v6027
        %v6060 = vpack.c.b16 %v6030, %v6029
        %v6061 = vpack.c.b16 %v6032, %v6031
        %v6062 = vpack.c.b16 %v6034, %v6033
        %v6063 = vpack.c.b16 %v6036, %v6035
        %v6064 = vpack.c.b16 %v6038, %v6037
        %v6065 = vpack.c.b16 %v6040, %v6039
        %v6066 = vpack.c.b16 %v6042, %v6041
        %v6067 = vpack.c.b16 %v6044, %v6043
        %v6068 = vpack.c.b16 %v6046, %v6045
        %v6069 = vpack.c.b16 %v6048, %v6047
        %v6070 = vpack.c.b16 %v6050, %v6049
        %v6071 = vpack.c.b16 %v6052, %v6051
        %v6072 = vpack.c.b16 %v6054, %v6053
        %v6073 = vpack.c.b16 %v6056, %v6055
        %v6074 = vpack.c.b16 %v6058, %v6057
        %6091 = vmatprep.subr.bf16.mxu0 0
        %6092 = vmatpush1.bf16.msra.mxu0 %v6066
        %6093 = vmatprep.subr.bf16.mxu0 0
        %6094 = vmatpush1.bf16.msra.mxu0 %v6065
        %6095 = vmatprep.subr.bf16.mxu0 0
        %6096 = vmatpush1.bf16.msra.mxu0 %v6064
        %6097 = vmatprep.subr.bf16.mxu0 0
        %6098 = vmatpush1.bf16.msra.mxu0 %v6063
        %6099 = vmatprep.subr.bf16.mxu0 0
        %6100 = vmatpush1.bf16.msra.mxu0 %v6062
        %6101 = vmatprep.subr.bf16.mxu0 0
        %6102 = vmatpush1.bf16.msra.mxu0 %v6061
        %6103 = vmatprep.subr.bf16.mxu0 0
        %6104 = vmatpush1.bf16.msra.mxu0 %v6060
        %6105 = vmatprep.subr.bf16.mxu0 0
        %6106 = vmatpush1.bf16.msra.mxu0 %v6059
        %6107 = vmatprep.subr.bf16.mxu0 0
        %6108 = vmatpush2.bf16.msra.mxu0 %v6074
        %6109 = vmatprep.subr.bf16.mxu0 0
        %6110 = vmatpush2.bf16.msra.mxu0 %v6073
        %6111 = vmatprep.subr.bf16.mxu0 0
        %6112 = vmatpush2.bf16.msra.mxu0 %v6072
        %6113 = vmatprep.subr.bf16.mxu0 0
        %6114 = vmatpush2.bf16.msra.mxu0 %v6071
        %6115 = vmatprep.subr.bf16.mxu0 0
        %6116 = vmatpush2.bf16.msra.mxu0 %v6070
        %6117 = vmatprep.subr.bf16.mxu0 0
        %6118 = vmatpush2.bf16.msra.mxu0 %v6069
        %6119 = vmatprep.subr.bf16.mxu0 0
        %6120 = vmatpush2.bf16.msra.mxu0 %v6068
        %6121 = vmatprep.subr.bf16.mxu0 0
        %6122 = vmatpush2.bf16.msra.mxu0 %v6067
        %6123 = vmatprep.mubr.bf16.mxu0 %v5932
        %6124 = vmatmul.mubr.bf16.gmra.mxu0 %v5931
        %v6125 = vpop.f32.mrf.mxu0
        %v6126 = vadd.f32 %v1654, %v6125
        %v6127 = vpop.f32.mrf.mxu0
        %v6128 = vpop.f32.mrf.mxu0
        %v6129 = vadd.f32 %v1655, %v6128
        %v6130 = vpop.f32.mrf.mxu0
        %6131 = vmatprep.mubr.bf16.mxu0 %v5934
        %6132 = vmatmul.mubr.bf16.gmra.mxu0 %v5933
        %v6133 = vpop.f32.mrf.mxu0
        %v6134 = vadd.f32 %v1656, %v6133
        %v6135 = vpop.f32.mrf.mxu0
        %v6136 = vpop.f32.mrf.mxu0
        %v6137 = vadd.f32 %v1657, %v6136
        %v6138 = vpop.f32.mrf.mxu0
        %6139 = vmatprep.mubr.bf16.mxu0 %v5936
        %6140 = vmatmul.mubr.bf16.gmra.mxu0 %v5935
        %v6141 = vpop.f32.mrf.mxu0
        %v6142 = vadd.f32 %v1658, %v6141
        %v6143 = vpop.f32.mrf.mxu0
        %v6144 = vpop.f32.mrf.mxu0
        %v6145 = vadd.f32 %v1659, %v6144
        %v6146 = vpop.f32.mrf.mxu0
        %6147 = vmatprep.mubr.bf16.mxu0 %v5938
        %6148 = vmatmul.mubr.bf16.gmra.mxu0 %v5937
        %v6149 = vpop.f32.mrf.mxu0
        %v6150 = vadd.f32 %v1660, %v6149
        %v6151 = vpop.f32.mrf.mxu0
        %v6152 = vpop.f32.mrf.mxu0
        %v6153 = vadd.f32 %v1661, %v6152
        %v6154 = vpop.f32.mrf.mxu0
        %6155 = vmatprep.mubr.bf16.mxu0 %v5940
        %6156 = vmatmul.mubr.bf16.gmra.mxu0 %v5939
        %v6157 = vpop.f32.mrf.mxu0
        %v6158 = vadd.f32 %v1662, %v6157
        %v6159 = vpop.f32.mrf.mxu0
        %v6160 = vpop.f32.mrf.mxu0
        %v6161 = vadd.f32 %v1663, %v6160
        %v6162 = vpop.f32.mrf.mxu0
        %6163 = vmatprep.mubr.bf16.mxu0 %v5942
        %6164 = vmatmul.mubr.bf16.gmra.mxu0 %v5941
        %v6165 = vpop.f32.mrf.mxu0
        %v6166 = vadd.f32 %v1664, %v6165
        %v6167 = vpop.f32.mrf.mxu0
        %v6168 = vpop.f32.mrf.mxu0
        %v6169 = vadd.f32 %v1665, %v6168
        %v6170 = vpop.f32.mrf.mxu0
        %6171 = vmatprep.mubr.bf16.mxu0 %v5944
        %6172 = vmatmul.mubr.bf16.gmra.mxu0 %v5943
        %v6173 = vpop.f32.mrf.mxu0
        %v6174 = vadd.f32 %v1666, %v6173
        %v6175 = vpop.f32.mrf.mxu0
        %v6176 = vpop.f32.mrf.mxu0
        %v6177 = vadd.f32 %v1667, %v6176
        %v6178 = vpop.f32.mrf.mxu0
        %6179 = vmatprep.mubr.bf16.mxu0 %v5946
        %6180 = vmatmul.mubr.bf16.gmra.mxu0 %v5945
        %v6181 = vpop.f32.mrf.mxu0
        %v6182 = vadd.f32 %v1668, %v6181
        %v6183 = vpop.f32.mrf.mxu0
        %v6184 = vpop.f32.mrf.mxu0
        %v6185 = vadd.f32 %v1669, %v6184
        %v6186 = vpop.f32.mrf.mxu0
        %6187 = vmatprep.mubr.bf16.mxu0 %v5948
        %6188 = vmatmul.mubr.bf16.gmra.mxu0 %v5947
        %v6189 = vpop.f32.mrf.mxu0
        %v6190 = vadd.f32 %v1670, %v6189
        %v6191 = vpop.f32.mrf.mxu0
        %v6192 = vpop.f32.mrf.mxu0
        %v6193 = vadd.f32 %v1671, %v6192
        %v6194 = vpop.f32.mrf.mxu0
        %6195 = vmatprep.mubr.bf16.mxu0 %v5950
        %6196 = vmatmul.mubr.bf16.gmra.mxu0 %v5949
        %v6197 = vpop.f32.mrf.mxu0
        %v6198 = vadd.f32 %v1672, %v6197
        %v6199 = vpop.f32.mrf.mxu0
        %v6200 = vpop.f32.mrf.mxu0
        %v6201 = vadd.f32 %v1673, %v6200
        %v6202 = vpop.f32.mrf.mxu0
        %6203 = vmatprep.mubr.bf16.mxu0 %v5952
        %6204 = vmatmul.mubr.bf16.gmra.mxu0 %v5951
        %v6205 = vpop.f32.mrf.mxu0
        %v6206 = vadd.f32 %v1674, %v6205
        %v6207 = vpop.f32.mrf.mxu0
        %v6208 = vpop.f32.mrf.mxu0
        %v6209 = vadd.f32 %v1675, %v6208
        %v6210 = vpop.f32.mrf.mxu0
        %6211 = vmatprep.mubr.bf16.mxu0 %v5954
        %6212 = vmatmul.mubr.bf16.gmra.mxu0 %v5953
        %v6213 = vpop.f32.mrf.mxu0
        %v6214 = vadd.f32 %v1676, %v6213
        %v6215 = vpop.f32.mrf.mxu0
        %v6216 = vpop.f32.mrf.mxu0
        %v6217 = vadd.f32 %v1677, %v6216
        %v6218 = vpop.f32.mrf.mxu0
        %6219 = vmatprep.mubr.bf16.mxu0 %v5956
        %6220 = vmatmul.mubr.bf16.gmra.mxu0 %v5955
        %v6221 = vpop.f32.mrf.mxu0
        %v6222 = vadd.f32 %v1678, %v6221
        %v6223 = vpop.f32.mrf.mxu0
        %v6224 = vpop.f32.mrf.mxu0
        %v6225 = vadd.f32 %v1679, %v6224
        %v6226 = vpop.f32.mrf.mxu0
        %6227 = vmatprep.mubr.bf16.mxu0 %v5958
        %6228 = vmatmul.mubr.bf16.gmra.mxu0 %v5957
        %v6229 = vpop.f32.mrf.mxu0
        %v6230 = vadd.f32 %v1680, %v6229
        %v6231 = vpop.f32.mrf.mxu0
        %v6232 = vpop.f32.mrf.mxu0
        %v6233 = vadd.f32 %v1681, %v6232
        %v6234 = vpop.f32.mrf.mxu0
        %6235 = vmatprep.mubr.bf16.mxu0 %v5960
        %6236 = vmatmul.mubr.bf16.gmra.mxu0 %v5959
        %v6237 = vpop.f32.mrf.mxu0
        %v6238 = vadd.f32 %v1682, %v6237
        %v6239 = vpop.f32.mrf.mxu0
        %v6240 = vpop.f32.mrf.mxu0
        %v6241 = vadd.f32 %v1683, %v6240
        %v6242 = vpop.f32.mrf.mxu0
        %6243 = vmatprep.mubr.bf16.mxu0 %v5962
        %6244 = vmatmul.mubr.bf16.gmra.mxu0 %v5961
        %v6245 = vpop.f32.mrf.mxu0
        %v6246 = vadd.f32 %v1684, %v6245
        %v6247 = vpop.f32.mrf.mxu0
        %v6248 = vpop.f32.mrf.mxu0
        %v6249 = vadd.f32 %v1685, %v6248
        %v6250 = vpop.f32.mrf.mxu0
        %6251 = vdwg.mxu0
        %v6252 = vmax.f32 %v6126, 0.0
        %v6253 = vmax.f32 %v6129, 0.0
        %v6254 = vmax.f32 %v6134, 0.0
        %v6255 = vmax.f32 %v6137, 0.0
        %v6256 = vmax.f32 %v6142, 0.0
        %v6257 = vmax.f32 %v6145, 0.0
        %v6258 = vmax.f32 %v6150, 0.0
        %v6259 = vmax.f32 %v6153, 0.0
        %v6260 = vmax.f32 %v6158, 0.0
        %v6261 = vmax.f32 %v6161, 0.0
        %v6262 = vmax.f32 %v6166, 0.0
        %v6263 = vmax.f32 %v6169, 0.0
        %v6264 = vmax.f32 %v6174, 0.0
        %v6265 = vmax.f32 %v6177, 0.0
        %v6266 = vmax.f32 %v6182, 0.0
        %v6267 = vmax.f32 %v6185, 0.0
        %v6268 = vmax.f32 %v6190, 0.0
        %v6269 = vmax.f32 %v6193, 0.0
        %v6270 = vmax.f32 %v6198, 0.0
        %v6271 = vmax.f32 %v6201, 0.0
        %v6272 = vmax.f32 %v6206, 0.0
        %v6273 = vmax.f32 %v6209, 0.0
        %v6274 = vmax.f32 %v6214, 0.0
        %v6275 = vmax.f32 %v6217, 0.0
        %v6276 = vmax.f32 %v6222, 0.0
        %v6277 = vmax.f32 %v6225, 0.0
        %v6278 = vmax.f32 %v6230, 0.0
        %v6279 = vmax.f32 %v6233, 0.0
        %v6280 = vmax.f32 %v6238, 0.0
        %v6281 = vmax.f32 %v6241, 0.0
        %v6282 = vmax.f32 %v6246, 0.0
        %v6283 = vmax.f32 %v6249, 0.0
        %v6284 = vpack.c.bf16 %v6253, %v6252
        %v6285 = vpack.c.bf16 %v6255, %v6254
        %v6286 = vpack.c.bf16 %v6257, %v6256
        %v6287 = vpack.c.bf16 %v6259, %v6258
        %v6288 = vpack.c.bf16 %v6261, %v6260
        %v6289 = vpack.c.bf16 %v6263, %v6262
        %v6290 = vpack.c.bf16 %v6265, %v6264
        %v6291 = vpack.c.bf16 %v6267, %v6266
        %v6292 = vpack.c.bf16 %v6269, %v6268
        %v6293 = vpack.c.bf16 %v6271, %v6270
        %v6294 = vpack.c.bf16 %v6273, %v6272
        %v6295 = vpack.c.bf16 %v6275, %v6274
        %v6296 = vpack.c.bf16 %v6277, %v6276
        %v6297 = vpack.c.bf16 %v6279, %v6278
        %v6298 = vpack.c.bf16 %v6281, %v6280
        %v6299 = vpack.c.bf16 %v6283, %v6282
        %v6300 = vld [vmem:[#allocation14] sm:$0xf]
        %v6301 = vld [vmem:[#allocation14 + $0x4] sm:$0xf]
        %v6302 = vld [vmem:[#allocation14 + $0x8] sm:$0xf]
        %v6303 = vld [vmem:[#allocation14 + $0xc] sm:$0xf]
        %v6304 = vld [vmem:[#allocation14 + $0x10] sm:$0xf]
        %v6305 = vld [vmem:[#allocation14 + $0x14] sm:$0xf]
        %v6306 = vld [vmem:[#allocation14 + $0x18] sm:$0xf]
        %v6307 = vld [vmem:[#allocation14 + $0x1c] sm:$0xf]
        %v6308 = vld [vmem:[#allocation14 + $0x20] sm:$0xf]
        %v6309 = vld [vmem:[#allocation14 + $0x24] sm:$0xf]
        %v6310 = vld [vmem:[#allocation14 + $0x28] sm:$0xf]
        %v6311 = vld [vmem:[#allocation14 + $0x2c] sm:$0xf]
        %v6312 = vld [vmem:[#allocation14 + $0x30] sm:$0xf]
        %v6313 = vld [vmem:[#allocation14 + $0x34] sm:$0xf]
        %v6314 = vld [vmem:[#allocation14 + $0x38] sm:$0xf]
        %v6315 = vld [vmem:[#allocation14 + $0x3c] sm:$0xf]
        %v6332 = vunpack.c.l.b16 %v6300
        %v6333 = vunpack.c.l.b16 %v6301
        %v6334 = vunpack.c.l.b16 %v6302
        %v6335 = vunpack.c.l.b16 %v6303
        %v6336 = vunpack.c.l.b16 %v6304
        %v6337 = vunpack.c.l.b16 %v6305
        %v6338 = vunpack.c.l.b16 %v6306
        %v6339 = vunpack.c.l.b16 %v6307
        %v6340 = vunpack.c.l.b16 %v6308
        %v6341 = vunpack.c.l.b16 %v6309
        %v6342 = vunpack.c.l.b16 %v6310
        %v6343 = vunpack.c.l.b16 %v6311
        %v6344 = vunpack.c.l.b16 %v6312
        %v6345 = vunpack.c.l.b16 %v6313
        %v6346 = vunpack.c.l.b16 %v6314
        %v6347 = vunpack.c.l.b16 %v6315
        %v6348 = vpack.c.b16 %v6333, %v6332
        %v6349 = vpack.c.b16 %v6335, %v6334
        %v6350 = vpack.c.b16 %v6337, %v6336
        %v6351 = vpack.c.b16 %v6339, %v6338
        %v6352 = vpack.c.b16 %v6341, %v6340
        %v6353 = vpack.c.b16 %v6343, %v6342
        %v6354 = vpack.c.b16 %v6345, %v6344
        %v6355 = vpack.c.b16 %v6347, %v6346
        %6364 = vmatprep.subr.bf16.mxu0 0
        %6365 = vmatpush1.bf16.msra.mxu0 %v6355
        %6366 = vmatprep.subr.bf16.mxu0 0
        %6367 = vmatpush1.bf16.msra.mxu0 %v6354
        %6368 = vmatprep.subr.bf16.mxu0 0
        %6369 = vmatpush1.bf16.msra.mxu0 %v6353
        %6370 = vmatprep.subr.bf16.mxu0 0
        %6371 = vmatpush1.bf16.msra.mxu0 %v6352
        %6372 = vmatprep.subr.bf16.mxu0 0
        %6373 = vmatpush1.bf16.msra.mxu0 %v6351
        %6374 = vmatprep.subr.bf16.mxu0 0
        %6375 = vmatpush1.bf16.msra.mxu0 %v6350
        %6376 = vmatprep.subr.bf16.mxu0 0
        %6377 = vmatpush1.bf16.msra.mxu0 %v6349
        %6378 = vmatprep.subr.bf16.mxu0 0
        %6379 = vmatpush1.bf16.msra.mxu0 %v6348
        %6380 = vmatprep.subr.bf16.mxu0 0
        %6381 = vmatpush2.bf16.msra.mxu0 0
        %6382 = vmatprep.subr.bf16.mxu0 0
        %6383 = vmatpush2.bf16.msra.mxu0 0
        %6384 = vmatprep.subr.bf16.mxu0 0
        %6385 = vmatpush2.bf16.msra.mxu0 0
        %6386 = vmatprep.subr.bf16.mxu0 0
        %6387 = vmatpush2.bf16.msra.mxu0 0
        %6388 = vmatprep.subr.bf16.mxu0 0
        %6389 = vmatpush2.bf16.msra.mxu0 0
        %6390 = vmatprep.subr.bf16.mxu0 0
        %6391 = vmatpush2.bf16.msra.mxu0 0
        %6392 = vmatprep.subr.bf16.mxu0 0
        %6393 = vmatpush2.bf16.msra.mxu0 0
        %6394 = vmatprep.subr.bf16.mxu0 0
        %6395 = vmatpush2.bf16.msra.mxu0 0
        %6396 = vmatprep.mubr.bf16.mxu0 0
        %6397 = vmatmul.mubr.bf16.gmra.mxu0 %v6284
        %v6398 = vpop.f32.mrf.mxu0
        %v6399 = vadd.f32 %v5805, %v6398
        %v6400 = vpop.f32.mrf.mxu0
        %v6401 = vpop.f32.mrf.mxu0
        %v6402 = vadd.f32 %v5808, %v6401
        %v6403 = vpop.f32.mrf.mxu0
        %6404 = vmatprep.mubr.bf16.mxu0 0
        %6405 = vmatmul.mubr.bf16.gmra.mxu0 %v6285
        %v6406 = vpop.f32.mrf.mxu0
        %v6407 = vadd.f32 %v5813, %v6406
        %v6408 = vpop.f32.mrf.mxu0
        %v6409 = vpop.f32.mrf.mxu0
        %v6410 = vadd.f32 %v5816, %v6409
        %v6411 = vpop.f32.mrf.mxu0
        %6412 = vmatprep.mubr.bf16.mxu0 0
        %6413 = vmatmul.mubr.bf16.gmra.mxu0 %v6286
        %v6414 = vpop.f32.mrf.mxu0
        %v6415 = vadd.f32 %v5821, %v6414
        %v6416 = vpop.f32.mrf.mxu0
        %v6417 = vpop.f32.mrf.mxu0
        %v6418 = vadd.f32 %v5824, %v6417
        %v6419 = vpop.f32.mrf.mxu0
        %6420 = vmatprep.mubr.bf16.mxu0 0
        %6421 = vmatmul.mubr.bf16.gmra.mxu0 %v6287
        %v6422 = vpop.f32.mrf.mxu0
        %v6423 = vadd.f32 %v5829, %v6422
        %v6424 = vpop.f32.mrf.mxu0
        %v6425 = vpop.f32.mrf.mxu0
        %v6426 = vadd.f32 %v5832, %v6425
        %v6427 = vpop.f32.mrf.mxu0
        %6428 = vmatprep.mubr.bf16.mxu0 0
        %6429 = vmatmul.mubr.bf16.gmra.mxu0 %v6288
        %v6430 = vpop.f32.mrf.mxu0
        %v6431 = vadd.f32 %v5837, %v6430
        %v6432 = vpop.f32.mrf.mxu0
        %v6433 = vpop.f32.mrf.mxu0
        %v6434 = vadd.f32 %v5840, %v6433
        %v6435 = vpop.f32.mrf.mxu0
        %6436 = vmatprep.mubr.bf16.mxu0 0
        %6437 = vmatmul.mubr.bf16.gmra.mxu0 %v6289
        %v6438 = vpop.f32.mrf.mxu0
        %v6439 = vadd.f32 %v5845, %v6438
        %v6440 = vpop.f32.mrf.mxu0
        %v6441 = vpop.f32.mrf.mxu0
        %v6442 = vadd.f32 %v5848, %v6441
        %v6443 = vpop.f32.mrf.mxu0
        %6444 = vmatprep.mubr.bf16.mxu0 0
        %6445 = vmatmul.mubr.bf16.gmra.mxu0 %v6290
        %v6446 = vpop.f32.mrf.mxu0
        %v6447 = vadd.f32 %v5853, %v6446
        %v6448 = vpop.f32.mrf.mxu0
        %v6449 = vpop.f32.mrf.mxu0
        %v6450 = vadd.f32 %v5856, %v6449
        %v6451 = vpop.f32.mrf.mxu0
        %6452 = vmatprep.mubr.bf16.mxu0 0
        %6453 = vmatmul.mubr.bf16.gmra.mxu0 %v6291
        %v6454 = vpop.f32.mrf.mxu0
        %v6455 = vadd.f32 %v5861, %v6454
        %v6456 = vpop.f32.mrf.mxu0
        %v6457 = vpop.f32.mrf.mxu0
        %v6458 = vadd.f32 %v5864, %v6457
        %v6459 = vpop.f32.mrf.mxu0
        %6460 = vmatprep.mubr.bf16.mxu0 0
        %6461 = vmatmul.mubr.bf16.gmra.mxu0 %v6292
        %v6462 = vpop.f32.mrf.mxu0
        %v6463 = vadd.f32 %v5869, %v6462
        %v6464 = vpop.f32.mrf.mxu0
        %v6465 = vpop.f32.mrf.mxu0
        %v6466 = vadd.f32 %v5872, %v6465
        %v6467 = vpop.f32.mrf.mxu0
        %6468 = vmatprep.mubr.bf16.mxu0 0
        %6469 = vmatmul.mubr.bf16.gmra.mxu0 %v6293
        %v6470 = vpop.f32.mrf.mxu0
        %v6471 = vadd.f32 %v5877, %v6470
        %v6472 = vpop.f32.mrf.mxu0
        %v6473 = vpop.f32.mrf.mxu0
        %v6474 = vadd.f32 %v5880, %v6473
        %v6475 = vpop.f32.mrf.mxu0
        %6476 = vmatprep.mubr.bf16.mxu0 0
        %6477 = vmatmul.mubr.bf16.gmra.mxu0 %v6294
        %v6478 = vpop.f32.mrf.mxu0
        %v6479 = vadd.f32 %v5885, %v6478
        %v6480 = vpop.f32.mrf.mxu0
        %v6481 = vpop.f32.mrf.mxu0
        %v6482 = vadd.f32 %v5888, %v6481
        %v6483 = vpop.f32.mrf.mxu0
        %6484 = vmatprep.mubr.bf16.mxu0 0
        %6485 = vmatmul.mubr.bf16.gmra.mxu0 %v6295
        %v6486 = vpop.f32.mrf.mxu0
        %v6487 = vadd.f32 %v5893, %v6486
        %v6488 = vpop.f32.mrf.mxu0
        %v6489 = vpop.f32.mrf.mxu0
        %v6490 = vadd.f32 %v5896, %v6489
        %v6491 = vpop.f32.mrf.mxu0
        %6492 = vmatprep.mubr.bf16.mxu0 0
        %6493 = vmatmul.mubr.bf16.gmra.mxu0 %v6296
        %v6494 = vpop.f32.mrf.mxu0
        %v6495 = vadd.f32 %v5901, %v6494
        %v6496 = vpop.f32.mrf.mxu0
        %v6497 = vpop.f32.mrf.mxu0
        %v6498 = vadd.f32 %v5904, %v6497
        %v6499 = vpop.f32.mrf.mxu0
        %6500 = vmatprep.mubr.bf16.mxu0 0
        %6501 = vmatmul.mubr.bf16.gmra.mxu0 %v6297
        %v6502 = vpop.f32.mrf.mxu0
        %v6503 = vadd.f32 %v5909, %v6502
        %v6504 = vpop.f32.mrf.mxu0
        %v6505 = vpop.f32.mrf.mxu0
        %v6506 = vadd.f32 %v5912, %v6505
        %v6507 = vpop.f32.mrf.mxu0
        %6508 = vmatprep.mubr.bf16.mxu0 0
        %6509 = vmatmul.mubr.bf16.gmra.mxu0 %v6298
        %v6510 = vpop.f32.mrf.mxu0
        %v6511 = vadd.f32 %v5917, %v6510
        %v6512 = vpop.f32.mrf.mxu0
        %v6513 = vpop.f32.mrf.mxu0
        %v6514 = vadd.f32 %v5920, %v6513
        %v6515 = vpop.f32.mrf.mxu0
        %6516 = vmatprep.mubr.bf16.mxu0 0
        %6517 = vmatmul.mubr.bf16.gmra.mxu0 %v6299
        %v6518 = vpop.f32.mrf.mxu0
        %v6519 = vadd.f32 %v5925, %v6518
        %v6520 = vpop.f32.mrf.mxu0
        %v6521 = vpop.f32.mrf.mxu0
        %v6522 = vadd.f32 %v5928, %v6521
        %v6523 = vpop.f32.mrf.mxu0
        %6524 = vdwg.mxu0
        %v6525 = vld [vmem:[%s11] sm:$0x1]
        %v6527 = vlaneseq
        %v6528 = vshrl.u32 %v6527, 7
        %v6529 = vsub.s32 0, %v6528
        %v6530 = vrot.slane %v6525, %v6529
        %v6532 = vadd.f32 %v6399, %v6530
        %v6533 = vadd.f32 %v6402, %v6530
        %v6534 = vadd.f32 %v6407, %v6530
        %v6535 = vadd.f32 %v6410, %v6530
        %v6536 = vadd.f32 %v6415, %v6530
        %v6537 = vadd.f32 %v6418, %v6530
        %v6538 = vadd.f32 %v6423, %v6530
        %v6539 = vadd.f32 %v6426, %v6530
        %v6540 = vadd.f32 %v6431, %v6530
        %v6541 = vadd.f32 %v6434, %v6530
        %v6542 = vadd.f32 %v6439, %v6530
        %v6543 = vadd.f32 %v6442, %v6530
        %v6544 = vadd.f32 %v6447, %v6530
        %v6545 = vadd.f32 %v6450, %v6530
        %v6546 = vadd.f32 %v6455, %v6530
        %v6547 = vadd.f32 %v6458, %v6530
        %v6548 = vadd.f32 %v6463, %v6530
        %v6549 = vadd.f32 %v6466, %v6530
        %v6550 = vadd.f32 %v6471, %v6530
        %v6551 = vadd.f32 %v6474, %v6530
        %v6552 = vadd.f32 %v6479, %v6530
        %v6553 = vadd.f32 %v6482, %v6530
        %v6554 = vadd.f32 %v6487, %v6530
        %v6555 = vadd.f32 %v6490, %v6530
        %v6556 = vadd.f32 %v6495, %v6530
        %v6557 = vadd.f32 %v6498, %v6530
        %v6558 = vadd.f32 %v6503, %v6530
        %v6559 = vadd.f32 %v6506, %v6530
        %v6560 = vadd.f32 %v6511, %v6530
        %v6561 = vadd.f32 %v6514, %v6530
        %v6562 = vadd.f32 %v6519, %v6530
        %v6563 = vadd.f32 %v6522, %v6530
        %6564 = vst [vmem:[%s564] sm:$0xff] %v6532
        %6565 = vst [vmem:[%s564 + $0x8] sm:$0xff] %v6533
        %6566 = vst [vmem:[%s564 + $0x10] sm:$0xff] %v6534
        %6567 = vst [vmem:[%s564 + $0x18] sm:$0xff] %v6535
        %6568 = vst [vmem:[%s564 + $0x20] sm:$0xff] %v6536
        %6569 = vst [vmem:[%s564 + $0x28] sm:$0xff] %v6537
        %6570 = vst [vmem:[%s564 + $0x30] sm:$0xff] %v6538
        %6571 = vst [vmem:[%s564 + $0x38] sm:$0xff] %v6539
        %6572 = vst [vmem:[%s564 + $0x40] sm:$0xff] %v6540
        %6573 = vst [vmem:[%s564 + $0x48] sm:$0xff] %v6541
        %6574 = vst [vmem:[%s564 + $0x50] sm:$0xff] %v6542
        %6575 = vst [vmem:[%s564 + $0x58] sm:$0xff] %v6543
        %6576 = vst [vmem:[%s564 + $0x60] sm:$0xff] %v6544
        %6577 = vst [vmem:[%s564 + $0x68] sm:$0xff] %v6545
        %6578 = vst [vmem:[%s564 + $0x70] sm:$0xff] %v6546
        %6579 = vst [vmem:[%s564 + $0x78] sm:$0xff] %v6547
        %6580 = vst [vmem:[%s564 + $0x80] sm:$0xff] %v6548
        %6581 = vst [vmem:[%s564 + $0x88] sm:$0xff] %v6549
        %6582 = vst [vmem:[%s564 + $0x90] sm:$0xff] %v6550
        %6583 = vst [vmem:[%s564 + $0x98] sm:$0xff] %v6551
        %6584 = vst [vmem:[%s564 + $0xa0] sm:$0xff] %v6552
        %6585 = vst [vmem:[%s564 + $0xa8] sm:$0xff] %v6553
        %6586 = vst [vmem:[%s564 + $0xb0] sm:$0xff] %v6554
        %6587 = vst [vmem:[%s564 + $0xb8] sm:$0xff] %v6555
        %6588 = vst [vmem:[%s564 + $0xc0] sm:$0xff] %v6556
        %6589 = vst [vmem:[%s564 + $0xc8] sm:$0xff] %v6557
        %6590 = vst [vmem:[%s564 + $0xd0] sm:$0xff] %v6558
        %6591 = vst [vmem:[%s564 + $0xd8] sm:$0xff] %v6559
        %6592 = vst [vmem:[%s564 + $0xe0] sm:$0xff] %v6560
        %6593 = vst [vmem:[%s564 + $0xe8] sm:$0xff] %v6561
        %6594 = vst [vmem:[%s564 + $0xf0] sm:$0xff] %v6562
        %6595 = vst [vmem:[%s564 + $0xf8] sm:$0xff] %v6563
        %6596 = vst [vmem:[%s571] sm:$0xff] %v5149
        %6597 = vst [vmem:[%s571 + $0x8] sm:$0xff] %v5150
        %6598 = vst [vmem:[%s571 + $0x10] sm:$0xff] %v5151
        %6599 = vst [vmem:[%s571 + $0x18] sm:$0xff] %v5152
        %6600 = vst [vmem:[%s571 + $0x20] sm:$0xff] %v5153
        %6601 = vst [vmem:[%s571 + $0x28] sm:$0xff] %v5154
        %6602 = vst [vmem:[%s571 + $0x30] sm:$0xff] %v5155
        %6603 = vst [vmem:[%s571 + $0x38] sm:$0xff] %v5156
        %6604 = vst [vmem:[%s571 + $0x40] sm:$0xff] %v5157
        %6605 = vst [vmem:[%s571 + $0x48] sm:$0xff] %v5158
        %6606 = vst [vmem:[%s571 + $0x50] sm:$0xff] %v5159
        %6607 = vst [vmem:[%s571 + $0x58] sm:$0xff] %v5160
        %6608 = vst [vmem:[%s571 + $0x60] sm:$0xff] %v5161
        %6609 = vst [vmem:[%s571 + $0x68] sm:$0xff] %v5162
        %6610 = vst [vmem:[%s571 + $0x70] sm:$0xff] %v5163
        %6611 = vst [vmem:[%s571 + $0x78] sm:$0xff] %v5164
        %6612 = vst [vmem:[%s571 + $0x80] sm:$0xff] %v5165
        %6613 = vst [vmem:[%s571 + $0x88] sm:$0xff] %v5166
        %6614 = vst [vmem:[%s571 + $0x90] sm:$0xff] %v5167
        %6615 = vst [vmem:[%s571 + $0x98] sm:$0xff] %v5168
        %6616 = vst [vmem:[%s571 + $0xa0] sm:$0xff] %v5169
        %6617 = vst [vmem:[%s571 + $0xa8] sm:$0xff] %v5170
        %6618 = vst [vmem:[%s571 + $0xb0] sm:$0xff] %v5171
        %6619 = vst [vmem:[%s571 + $0xb8] sm:$0xff] %v5172
        %6620 = vst [vmem:[%s571 + $0xc0] sm:$0xff] %v5173
        %6621 = vst [vmem:[%s571 + $0xc8] sm:$0xff] %v5174
        %6622 = vst [vmem:[%s571 + $0xd0] sm:$0xff] %v5175
        %6623 = vst [vmem:[%s571 + $0xd8] sm:$0xff] %v5176
        %6624 = vst [vmem:[%s571 + $0xe0] sm:$0xff] %v5177
        %6625 = vst [vmem:[%s571 + $0xe8] sm:$0xff] %v5178
        %6626 = vst [vmem:[%s571 + $0xf0] sm:$0xff] %v5179
        %6627 = vst [vmem:[%s571 + $0xf8] sm:$0xff] %v5180
        %6628 = vst [vmem:[%s571 + $0x100] sm:$0xff] %v5181
        %6629 = vst [vmem:[%s571 + $0x108] sm:$0xff] %v5182
        %6630 = vst [vmem:[%s571 + $0x110] sm:$0xff] %v5183
        %6631 = vst [vmem:[%s571 + $0x118] sm:$0xff] %v5184
        %6632 = vst [vmem:[%s571 + $0x120] sm:$0xff] %v5185
        %6633 = vst [vmem:[%s571 + $0x128] sm:$0xff] %v5186
        %6634 = vst [vmem:[%s571 + $0x130] sm:$0xff] %v5187
        %6635 = vst [vmem:[%s571 + $0x138] sm:$0xff] %v5188
        %6636 = vst [vmem:[%s571 + $0x140] sm:$0xff] %v5189
        %6637 = vst [vmem:[%s571 + $0x148] sm:$0xff] %v5190
        %6638 = vst [vmem:[%s571 + $0x150] sm:$0xff] %v5191
        %6639 = vst [vmem:[%s571 + $0x158] sm:$0xff] %v5192
        %6640 = vst [vmem:[%s571 + $0x160] sm:$0xff] %v5193
        %6641 = vst [vmem:[%s571 + $0x168] sm:$0xff] %v5194
        %6642 = vst [vmem:[%s571 + $0x170] sm:$0xff] %v5195
        %6643 = vst [vmem:[%s571 + $0x178] sm:$0xff] %v5196
        %6644 = vst [vmem:[%s571 + $0x180] sm:$0xff] %v5197
        %6645 = vst [vmem:[%s571 + $0x188] sm:$0xff] %v5198
        %6646 = vst [vmem:[%s571 + $0x190] sm:$0xff] %v5199
        %6647 = vst [vmem:[%s571 + $0x198] sm:$0xff] %v5200
        %6648 = vst [vmem:[%s571 + $0x1a0] sm:$0xff] %v5201
        %6649 = vst [vmem:[%s571 + $0x1a8] sm:$0xff] %v5202
        %6650 = vst [vmem:[%s571 + $0x1b0] sm:$0xff] %v5203
        %6651 = vst [vmem:[%s571 + $0x1b8] sm:$0xff] %v5204
        %6652 = vst [vmem:[%s571 + $0x1c0] sm:$0xff] %v5205
        %6653 = vst [vmem:[%s571 + $0x1c8] sm:$0xff] %v5206
        %6654 = vst [vmem:[%s571 + $0x1d0] sm:$0xff] %v5207
        %6655 = vst [vmem:[%s571 + $0x1d8] sm:$0xff] %v5208
        %6656 = vst [vmem:[%s571 + $0x1e0] sm:$0xff] %v5209
        %6657 = vst [vmem:[%s571 + $0x1e8] sm:$0xff] %v5210
        %6658 = vst [vmem:[%s571 + $0x1f0] sm:$0xff] %v5211
        %6659 = vst [vmem:[%s571 + $0x1f8] sm:$0xff] %v5212
        %s6660 = sand.u32 %s303, 1
        %s6661 = scalar_lea.sflag [#allocation4], %s6660
        %s6662 = sand.u32 %s303, 1
        %s6663 = smul.addr %s6662, 256
        %s6664 = scalar_lea.vmem [#allocation16], %s6663
        %s6665 = sand.u32 %s329, 1
        %s6666 = scalar_lea.sflag [#allocation18], %s6665
        %s6667 = sand.u32 %s329, 1
        %s6668 = smul.addr %s6667, 512
        %s6669 = scalar_lea.vmem [#allocation17], %s6668
        // Predicated region
        $region101: #{tpu_custom_call.1} parent=67 // pred_check
          %p6670 = pneg %p313
        $region102: #{tpu_custom_call.1} parent=67 // pred_check_branch
          %6672 = sbr.rel (%p6670) target = $region104
        $region103: #{tpu_custom_call.1} parent=67 // pred_region
          %s6673 = smul.u32 32, %s38
          %s6675 = ssub.s32 4096, 4096
          %6676 = vsyncadd %s6661, %s6675
          %s6677 = smul.addr %s6673, 128
          %s6678 = scalar_lea.hbm %s12, %s6677
          %s6679 = sshll.u32 %s6664, 4
          %s6680 = int_to_ptr.vmem [resolvable:$true] %s6679
          %6685 = dma.vmem_to_hbm [thread:$0]  %s6680, 4096, %s6678, %s6661, 128, 128, 8
        $region104: #{tpu_custom_call.1} parent=67 // pred_fallthru
          _
        // Predicated region
        $region105: #{tpu_custom_call.1} parent=67 // pred_check
          %p6686 = pneg %p339
        $region106: #{tpu_custom_call.1} parent=67 // pred_check_branch
          %6688 = sbr.rel (%p6686) target = $region108
        $region107: #{tpu_custom_call.1} parent=67 // pred_region
          %s6689 = smul.u32 32, %s38
          %s6691 = ssub.s32 8192, 8192
          %6692 = vsyncadd %s6666, %s6691
          %s6693 = smul.addr %s6689, 2
          %s6694 = smul.addr %s6693, 128
          %s6695 = scalar_lea.hbm %s13, %s6694
          %s6696 = sshll.u32 %s6669, 4
          %s6697 = int_to_ptr.vmem [resolvable:$true] %s6696
          %6702 = dma.vmem_to_hbm [thread:$0]  %s6697, 8192, %s6695, %s6666, 256, 256, 16
        $region108: #{tpu_custom_call.1} parent=67 // pred_fallthru
          _
      $region68: #{tpu_custom_call.1} parent=5 // pred_fallthru
        _
      %p6703 = scmp.le.s32.totalorder 2, %s33
      // Predicated region
      $region109: #{tpu_custom_call.1} parent=5 // pred_check
        %p6704 = pneg %p6703
      $region110: #{tpu_custom_call.1} parent=5 // pred_check_branch
        %6706 = sbr.rel (%p6704) target = $region112
      $region111: #{tpu_custom_call.1} parent=5 // pred_region
        %s6707 = ssub.s32 %s33, 2
        // Predicated region
        $region113: #{tpu_custom_call.1} parent=111 // pred_check
          %p6708 = pneg %p319
        $region114: #{tpu_custom_call.1} parent=111 // pred_check_branch
          %6710 = sbr.rel (%p6708) target = $region116
        $region115: #{tpu_custom_call.1} parent=111 // pred_region
          %s6711 = sand.u32 %s304, 1
          %s6712 = scalar_lea.sflag [#allocation4], %s6711
          %s6713 = sand.u32 %s304, 1
          %s6714 = smul.addr %s6713, 256
          %s6715 = scalar_lea.vmem [#allocation16], %s6714
          %6716 = dma.done %s6712, 4096
        $region116: #{tpu_custom_call.1} parent=111 // pred_fallthru
          _
        // Predicated region
        $region117: #{tpu_custom_call.1} parent=111 // pred_check
          %p6717 = pneg %p345
        $region118: #{tpu_custom_call.1} parent=111 // pred_check_branch
          %6719 = sbr.rel (%p6717) target = $region120
        $region119: #{tpu_custom_call.1} parent=111 // pred_region
          %s6720 = sand.u32 %s330, 1
          %s6721 = scalar_lea.sflag [#allocation18], %s6720
          %s6722 = sand.u32 %s330, 1
          %s6723 = smul.addr %s6722, 512
          %s6724 = scalar_lea.vmem [#allocation17], %s6723
          %6725 = dma.done %s6721, 8192
        $region120: #{tpu_custom_call.1} parent=111 // pred_fallthru
          _
      $region112: #{tpu_custom_call.1} parent=5 // pred_fallthru
        _
    $region6: #{tpu_custom_call.1} parent=1 // loop_footer
      %s37 = sadd.s32 1, %s33
    $region7: #{tpu_custom_call.1} parent=1 // loop_footer_branch
      %32 = sbr.rel target = $region3
    $region8: #{tpu_custom_call.1} parent=1 // loop_exit
      _
    %6726 = vsyncpa [#allocation3], 1
    %s6727 = scalar_lea.sflag [#allocation3], 1
    %6728 = vsyncpa %s6727, 1
    %6729 = vsyncpa [#allocation6], 1
    %6730 = vsyncpa [#allocation9], 1
    %6731 = vsyncpa [#allocation12], 1
    %6732 = vsyncpa [#allocation15], 1
    %6733 = vsyncpa [#allocation4], 1
    %s6734 = scalar_lea.sflag [#allocation4], 1
    %6735 = vsyncpa %s6734, 1
    %6736 = vsyncpa [#allocation18], 1
    %s6737 = scalar_lea.sflag [#allocation18], 1
    %6738 = vsyncpa %s6737, 1

</llo_original>
